<compile_context>
chip_gen: v7x
topology: tpu7x:2x2x1
jax: 0.10.0
libtpu: 0.0.40
codegen_flags: <defaults>
</compile_context>

<pallas_src>
import math
import functools

import numpy as np
import jax
import jax.numpy as jnp
from jax import lax
from jax.experimental import pallas as pl
from jax.experimental.pallas import tpu as pltpu

HIDDEN = 128
HEADS = 4
NUM_SEEDS_1 = math.ceil(300 * 0.25)   # 75 seeds (GMT default num_nodes=300, ratio=0.25)
NUM_SEEDS_3 = 1                       # last pool always has 1 seed
NEG_INF = -1e9
F32 = jnp.float32
BF16 = jnp.bfloat16


# ----------------------------- small helpers --------------------------------

def _full(shape):
    """BlockSpec covering the whole array, independent of grid index."""
    n = len(shape)
    return pl.BlockSpec(tuple(shape), lambda *_, _n=n: (0,) * _n)


def _b(bias):
    """(C,) bias -> (1, C) for lane-dense broadcast inside kernels."""
    return bias.reshape(1, bias.shape[-1])


def _mm(x, w):
    """bf16-input / f32-accumulate matmul (MXU)."""
    return jnp.dot(x.astype(BF16), w.astype(BF16), preferred_element_type=F32)


def _mha_core(q, k, v, mask_add, *, heads, scale):
    """GMT MAB attention core: per head  q_h + softmax_over_queries(q_h k_h^T * scale [+mask]) v_h."""
    Sq, D = q.shape
    dh = D // heads
    qs = (q * scale).astype(BF16)      # scale folded into q for the score dot only
    kb = k.astype(BF16)
    vb = v.astype(BF16)
    outs = []
    for h in range(heads):
        sl = slice(h * dh, (h + 1) * dh)
        # contract last dims of both operands (no explicit k transpose)
        s = lax.dot_general(qs[:, sl], kb[:, sl],
                            dimension_numbers=(((1,), (1,)), ((), ())),
                            preferred_element_type=F32)            # (Sq, Sk) f32
        if mask_add is not None:
            s = s + mask_add                                       # f32 mask add
        # NOTE: softmax over the *query* axis (dim=1 of (B*H,Sq,Sk)), matching
        # torch_geometric<=2.2 GMT's MAB.  Valid only with zero-padded V rows.
        s = s - jnp.max(s, axis=0, keepdims=True)
        e = jnp.exp(s)
        a = e * pl.reciprocal(jnp.sum(e, axis=0, keepdims=True), approx=True)
        o = jnp.dot(a.astype(BF16), vb[:, sl], preferred_element_type=F32)
        outs.append(q[:, sl] + o)                                  # residual uses unscaled q
    return jnp.concatenate(outs, axis=-1)                          # (Sq, D)


def _residual_ff(h, wo, bo):
    """MAB output block: h + relu(h @ Wo + bo)   (D==D so residual is valid)."""
    return h + jnp.maximum(_mm(h, wo) + bo, 0.0)


# ------------------- kernel 1: fused GCN stack + seed projections ------------

def _gcn_stack_kernel(a_ref, x_ref,
                      w1_ref, b1_ref, w2_ref, b2_ref, w3_ref, b3_ref,
                      wl_ref, bl_ref, wk_ref, bk_ref, wv_ref, bv_ref,
                      s1_ref, wq1_ref, bq1_ref, s3_ref, wq3_ref, bq3_ref,
                      kn_ref, vn_ref, qp1_ref, qp3_ref):
    a = a_ref[...].astype(BF16)                                    # (N,N) normalized adjacency

    def gcn(x, w_ref, b_ref, relu):
        y = jnp.dot(a, _mm(x, w_ref[...]).astype(BF16),
                    preferred_element_type=F32) + b_ref[...]
        return jnp.maximum(y, 0.0) if relu else y

    h = gcn(x_ref[...], w1_ref, b1_ref, True)                      # conv1 + relu
    h = gcn(h, w2_ref, b2_ref, True)                               # conv2 + relu
    h = gcn(h, w3_ref, b3_ref, True)                               # conv3 + relu
    xg = _mm(h, wl_ref[...]) + bl_ref[...]                         # gmt.lin1
    kn_ref[...] = gcn(xg, wk_ref, bk_ref, False)                   # pma1.layer_k (GCNConv)
    vn_ref[...] = gcn(xg, wv_ref, bv_ref, False)                   # pma1.layer_v (GCNConv)
    qp1_ref[...] = _mm(s1_ref[...], wq1_ref[...]) + bq1_ref[...]   # pma1.fc_q(S1), once
    qp3_ref[...] = _mm(s3_ref[...], wq3_ref[...]) + bq3_ref[...]   # pma3.fc_q(S3), once


def fused_gcn_stack(ahat, x, params):
    N = x.shape[0]
    D = HIDDEN
    p1, p3 = params["pma1"], params["pma3"]
    args = [
        ahat, x,
        params["conv1"][0], _b(params["conv1"][1]),
        params["conv2"][0], _b(params["conv2"][1]),
        params["conv3"][0], _b(params["conv3"][1]),
        params["gmt_lin1"][0], _b(params["gmt_lin1"][1]),
        p1["layer_k"][0], _b(p1["layer_k"][1]),
        p1["layer_v"][0], _b(p1["layer_v"][1]),
        p1["S"], p1["fc_q"][0], _b(p1["fc_q"][1]),
        p3["S"], p3["fc_q"][0], _b(p3["fc_q"][1]),
    ]
    out_shape = (
        jax.ShapeDtypeStruct((N, D), F32),              # kn
        jax.ShapeDtypeStruct((N, D), F32),              # vn
        jax.ShapeDtypeStruct((NUM_SEEDS_1, D), F32),    # projected seed Q, pool 1
        jax.ShapeDtypeStruct((NUM_SEEDS_3, D), F32),    # projected seed Q, pool 3
    )
    return pl.pallas_call(
        _gcn_stack_kernel,
        out_shape=out_shape,
        grid=(1,),
        in_specs=[_full(a.shape) for a in args],
        out_specs=tuple(_full(s.shape) for s in out_shape),
    )(*args)


# ------------------- kernel 2: GMPool_G (PMA, masked) ------------------------

def _pma_g_kernel(lens_ref, q_ref, k_ref, v_ref, wo_ref, bo_ref, o_ref,
                  *, heads, scale):
    n_valid = lens_ref[pl.program_id(0)]                           # SMEM scalar
    sk = k_ref.shape[0]
    col = lax.broadcasted_iota(jnp.int32, (1, sk), 1)
    mask_add = jnp.where(col < n_valid, 0.0, NEG_INF).astype(F32)  # (1, Sk) f32
    h = _mha_core(q_ref[...], k_ref[...], v_ref[...], mask_add,
                  heads=heads, scale=scale)
    o_ref[...] = _residual_ff(h, wo_ref[...], bo_ref[...])


def pallas_pma_g(lens, qp, kd, vd, fc_o):
    B, Sk, D = kd.shape
    Sq = qp.shape[0]
    kern = functools.partial(_pma_g_kernel, heads=HEADS, scale=1.0 / math.sqrt(D))
    grid_spec = pltpu.PrefetchScalarGridSpec(
        num_scalar_prefetch=1,
        grid=(B,),
        in_specs=[
            pl.BlockSpec((Sq, D), lambda b, lens: (0, 0)),
            pl.BlockSpec((None, Sk, D), lambda b, lens: (b, 0, 0)),
            pl.BlockSpec((None, Sk, D), lambda b, lens: (b, 0, 0)),
            pl.BlockSpec((D, D), lambda b, lens: (0, 0)),
            pl.BlockSpec((1, D), lambda b, lens: (0, 0)),
        ],
        out_specs=pl.BlockSpec((None, Sq, D), lambda b, lens: (b, 0, 0)),
    )
    return pl.pallas_call(
        kern,
        out_shape=jax.ShapeDtypeStruct((B, Sq, D), F32),
        grid_spec=grid_spec,
        compiler_params=pltpu.CompilerParams(dimension_semantics=("parallel",)),
    )(lens, qp, kd, vd, fc_o[0], _b(fc_o[1]))


# ------------------- kernel 3: SelfAtt (SAB) ----------------------------------

def _sab_kernel(x_ref, wq_ref, bq_ref, wk_ref, bk_ref, wv_ref, bv_ref,
                wo_ref, bo_ref, o_ref, *, heads, scale):
    x = x_ref[...]
    q = _mm(x, wq_ref[...]) + bq_ref[...]
    k = _mm(x, wk_ref[...]) + bk_ref[...]
    v = _mm(x, wv_ref[...]) + bv_ref[...]
    h = _mha_core(q, k, v, None, heads=heads, scale=scale)
    o_ref[...] = _residual_ff(h, wo_ref[...], bo_ref[...])


def pallas_sab(x, p):
    B, S, D = x.shape
    kern = functools.partial(_sab_kernel, heads=HEADS, scale=1.0 / math.sqrt(D))
    w = pl.BlockSpec((D, D), lambda b: (0, 0))
    bb = pl.BlockSpec((1, D), lambda b: (0, 0))
    xs = pl.BlockSpec((None, S, D), lambda b: (b, 0, 0))
    return pl.pallas_call(
        kern,
        out_shape=jax.ShapeDtypeStruct((B, S, D), F32),
        grid=(B,),
        in_specs=[xs, w, bb, w, bb, w, bb, w, bb],
        out_specs=pl.BlockSpec((None, S, D), lambda b: (b, 0, 0)),
        compiler_params=pltpu.CompilerParams(dimension_semantics=("parallel",)),
    )(x,
      p["fc_q"][0], _b(p["fc_q"][1]),
      p["layer_k"][0], _b(p["layer_k"][1]),
      p["layer_v"][0], _b(p["layer_v"][1]),
      p["fc_o"][0], _b(p["fc_o"][1]))


# ------------------- kernel 4: GMPool_I + gmt_lin2 + MLP tail -----------------

def _pma_i_tail_kernel(q_ref, x_ref, wk_ref, bk_ref, wv_ref, bv_ref, wo_ref, bo_ref,
                       wl2_ref, bl2_ref, wm0_ref, bm0_ref, wm1_ref, bm1_ref,
                       o_ref, *, heads, scale):
    x = x_ref[...]
    k = _mm(x, wk_ref[...]) + bk_ref[...]                          # layer_k (Linear)
    v = _mm(x, wv_ref[...]) + bv_ref[...]                          # layer_v (Linear)
    h = _mha_core(q_ref[...], k, v, None, heads=heads, scale=scale)  # (1, D)
    g = _residual_ff(h, wo_ref[...], bo_ref[...])                  # (1, D)
    g = _mm(g, wl2_ref[...]) + bl2_ref[...]                        # gmt.lin2
    g = jnp.maximum(_mm(g, wm0_ref[...]) + bm0_ref[...], 0.0)      # mlp[0] + relu
    o_ref[...] = _mm(g, wm1_ref[...]) + bm1_ref[...]               # mlp[1]


def pallas_pma_i_tail(qp3, x, p3, lin2, mlp0, mlp1):
    B, S, D = x.shape
    out_dim = mlp1[0].shape[1]
    kern = functools.partial(_pma_i_tail_kernel, heads=HEADS, scale=1.0 / math.sqrt(D))
    w = pl.BlockSpec((D, D), lambda b: (0, 0))
    bb = pl.BlockSpec((1, D), lambda b: (0, 0))
    return pl.pallas_call(
        kern,
        out_shape=jax.ShapeDtypeStruct((B, NUM_SEEDS_3, out_dim), F32),
        grid=(B,),
        in_specs=[
            pl.BlockSpec((NUM_SEEDS_3, D), lambda b: (0, 0)),       # projected seed (shared)
            pl.BlockSpec((None, S, D), lambda b: (b, 0, 0)),        # per-graph K/V source
            w, bb, w, bb, w, bb,                                    # layer_k, layer_v, fc_o
            w, bb,                                                  # gmt_lin2
            w, bb,                                                  # mlp[0]
            pl.BlockSpec((D, out_dim), lambda b: (0, 0)),           # mlp[1] W
            pl.BlockSpec((1, out_dim), lambda b: (0, 0)),           # mlp[1] b
        ],
        out_specs=pl.BlockSpec((None, NUM_SEEDS_3, out_dim), lambda b: (b, 0, 0)),
        compiler_params=pltpu.CompilerParams(dimension_semantics=("parallel",)),
    )(qp3, x,
      p3["layer_k"][0], _b(p3["layer_k"][1]),
      p3["layer_v"][0], _b(p3["layer_v"][1]),
      p3["fc_o"][0], _b(p3["fc_o"][1]),
      lin2[0], _b(lin2[1]),
      mlp0[0], _b(mlp0[1]),
      mlp1[0], _b(mlp1[1]))


# ----------------------------- JAX glue --------------------------------------

def build_gcn_adj(edge_index, num_nodes):
    """Dense GCN-normalized adjacency D^-1/2 (A+I) D^-1/2 (add_self_loops, unit weights)."""
    src, dst = edge_index[0], edge_index[1]
    a = jnp.zeros((num_nodes, num_nodes), F32).at[dst, src].add(1.0)
    a = a + jnp.eye(num_nodes, dtype=F32)
    deg = jnp.sum(a, axis=1)
    dinv = jnp.where(deg > 0, 1.0 / jnp.sqrt(deg), 0.0)
    return dinv[:, None] * a * dinv[None, :]


def gma_forward(params, x, ahat, batch, pos, lens, *, B, Nmax):
    # 1) GCN stack + gmt_lin1 + GMPool_G K/V GCNs + seed projections (one kernel).
    kn, vn, qp1, qp3 = fused_gcn_stack(ahat, x, params)

    # to_dense_batch (zero-padded: required by the GMT query-axis softmax quirk).
    # TODO(synk): scatter to dense batch stays in XLA; no clean Pallas gather here.
    D = HIDDEN
    kd = jnp.zeros((B, Nmax, D), F32).at[batch, pos].set(kn)
    vd = jnp.zeros((B, Nmax, D), F32).at[batch, pos].set(vn)

    # 2) GMPool_G (PMA, 75 seeds, masked).
    bx = pallas_pma_g(lens, qp1, kd, vd, params["pma1"]["fc_o"])    # (B, 75, 128)
    # 3) SelfAtt (SAB).
    bx = pallas_sab(bx, params["sab"])                              # (B, 75, 128)
    # 4) GMPool_I (1 seed) + gmt_lin2 + MLP tail.
    out = pallas_pma_i_tail(qp3, bx, params["pma3"], params["gmt_lin2"],
                            params["mlp0"], params["mlp1"])         # (B, 1, out)
    return out.reshape(B, -1)


# ----------------------------- parameters ------------------------------------

def init_params(key, in_features, out_features):
    keys = iter(jax.random.split(key, 64))

    def dense(shape, scale=0.1):
        return jax.random.normal(next(keys), shape, F32) * scale

    def lin(din, dout):
        return (dense((din, dout)), dense((dout,)))

    def mab_params(seeds=None):
        p = {"fc_q": lin(HIDDEN, HIDDEN), "layer_k": lin(HIDDEN, HIDDEN),
             "layer_v": lin(HIDDEN, HIDDEN), "fc_o": lin(HIDDEN, HIDDEN)}
        if seeds is not None:
            p["S"] = dense((seeds, HIDDEN))
        return p

    return {
        "conv1": lin(in_features, HIDDEN),
        "conv2": lin(HIDDEN, HIDDEN),
        "conv3": lin(HIDDEN, HIDDEN),
        "gmt_lin1": lin(HIDDEN, HIDDEN),
        "gmt_lin2": lin(HIDDEN, HIDDEN),
        "pma1": mab_params(NUM_SEEDS_1),
        "sab": mab_params(),
        "pma3": mab_params(NUM_SEEDS_3),
        "mlp0": lin(HIDDEN, HIDDEN),
        "mlp1": lin(HIDDEN, out_features),
    }


# ----------------------------- demo -------------------------------------------

if __name__ == "__main__":
    in_features, out_features = 16, 32
    nodes_per_graph = [10, 12]
    B = len(nodes_per_graph)
    N = int(sum(nodes_per_graph))
    Nmax = int(max(nodes_per_graph))

    key = jax.random.PRNGKey(0)
    k_x, k_e, k_p = jax.random.split(key, 3)

    # Node features.
    x = jax.random.normal(k_x, (N, in_features), F32)

    # batch vector & per-graph node position (contiguous graphs, as in PyG).
    batch_np = np.concatenate(
        [np.full(n, g, np.int32) for g, n in enumerate(nodes_per_graph)])
    pos_np = np.concatenate([np.arange(n, dtype=np.int32) for n in nodes_per_graph])
    offsets = np.concatenate([[0], np.cumsum(nodes_per_graph)[:-1]]).astype(np.int32)
    lens_np = np.asarray(nodes_per_graph, np.int32)

    # Random undirected intra-graph edges (no self loops, deduped, deterministic).
    ekeys = jax.random.split(k_e, B)
    src_list, dst_list = [], []
    for g, n in enumerate(nodes_per_graph):
        e = np.asarray(jax.random.randint(ekeys[g], (2, 3 * n), 0, n))
        e = e[:, e[0] != e[1]]
        pairs = set()
        for s, d in zip(e[0], e[1]):
            pairs.add((int(s), int(d)))
            pairs.add((int(d), int(s)))
        for s, d in sorted(pairs):
            src_list.append(s + int(offsets[g]))
            dst_list.append(d + int(offsets[g]))
    edge_index = np.stack([np.array(src_list, np.int32), np.array(dst_list, np.int32)])

    ahat = build_gcn_adj(jnp.asarray(edge_index), N)
    params = init_params(k_p, in_features, out_features)

    fwd = jax.jit(gma_forward, static_argnames=("B", "Nmax"))
    out = fwd(params, x, ahat, jnp.asarray(batch_np), jnp.asarray(pos_np),
              jnp.asarray(lens_np), B=B, Nmax=Nmax)
    out = jax.block_until_ready(out)
    assert out.shape == (B, out_features)
    assert bool(jnp.all(jnp.isfinite(out)))
    print("KERNEL_OK")
</pallas_src>

<mosaic_0001>
module attributes {stable_mosaic.version = 11 : i64} {
  func.func @_gcn_stack_kernel(%arg0: i32, %arg1: memref<22x22xf32, #tpu.memory_space<vmem>>, %arg2: memref<22x16xf32, #tpu.memory_space<vmem>>, %arg3: memref<16x128xf32, #tpu.memory_space<vmem>>, %arg4: memref<1x128xf32, #tpu.memory_space<vmem>>, %arg5: memref<128x128xf32, #tpu.memory_space<vmem>>, %arg6: memref<1x128xf32, #tpu.memory_space<vmem>>, %arg7: memref<128x128xf32, #tpu.memory_space<vmem>>, %arg8: memref<1x128xf32, #tpu.memory_space<vmem>>, %arg9: memref<128x128xf32, #tpu.memory_space<vmem>>, %arg10: memref<1x128xf32, #tpu.memory_space<vmem>>, %arg11: memref<128x128xf32, #tpu.memory_space<vmem>>, %arg12: memref<1x128xf32, #tpu.memory_space<vmem>>, %arg13: memref<128x128xf32, #tpu.memory_space<vmem>>, %arg14: memref<1x128xf32, #tpu.memory_space<vmem>>, %arg15: memref<75x128xf32, #tpu.memory_space<vmem>>, %arg16: memref<128x128xf32, #tpu.memory_space<vmem>>, %arg17: memref<1x128xf32, #tpu.memory_space<vmem>>, %arg18: memref<1x128xf32, #tpu.memory_space<vmem>>, %arg19: memref<128x128xf32, #tpu.memory_space<vmem>>, %arg20: memref<1x128xf32, #tpu.memory_space<vmem>>, %arg21: memref<22x128xf32, #tpu.memory_space<vmem>>, %arg22: memref<22x128xf32, #tpu.memory_space<vmem>>, %arg23: memref<75x128xf32, #tpu.memory_space<vmem>>, %arg24: memref<1x128xf32, #tpu.memory_space<vmem>>) attributes {dimension_semantics = [#tpu.dimension_semantics<arbitrary>], iteration_bounds = array<i64: 1>, scalar_prefetch = 0 : i64, scratch_operands = 0 : i64, tpu.core_type = #tpu.core_type<tc>, window_params = [{pipeline_mode = #tpu.pipeline_mode<synchronous>, transform_indices = @transform_0, window_bounds = array<i64: 22, 22>}, {pipeline_mode = #tpu.pipeline_mode<synchronous>, transform_indices = @transform_1, window_bounds = array<i64: 22, 16>}, {pipeline_mode = #tpu.pipeline_mode<synchronous>, transform_indices = @transform_2, window_bounds = array<i64: 16, 128>}, {pipeline_mode = #tpu.pipeline_mode<synchronous>, transform_indices = @transform_3, window_bounds = array<i64: 1, 128>}, {pipeline_mode = #tpu.pipeline_mode<synchronous>, transform_indices = @transform_4, window_bounds = array<i64: 128, 128>}, {pipeline_mode = #tpu.pipeline_mode<synchronous>, transform_indices = @transform_5, window_bounds = array<i64: 1, 128>}, {pipeline_mode = #tpu.pipeline_mode<synchronous>, transform_indices = @transform_6, window_bounds = array<i64: 128, 128>}, {pipeline_mode = #tpu.pipeline_mode<synchronous>, transform_indices = @transform_7, window_bounds = array<i64: 1, 128>}, {pipeline_mode = #tpu.pipeline_mode<synchronous>, transform_indices = @transform_8, window_bounds = array<i64: 128, 128>}, {pipeline_mode = #tpu.pipeline_mode<synchronous>, transform_indices = @transform_9, window_bounds = array<i64: 1, 128>}, {pipeline_mode = #tpu.pipeline_mode<synchronous>, transform_indices = @transform_10, window_bounds = array<i64: 128, 128>}, {pipeline_mode = #tpu.pipeline_mode<synchronous>, transform_indices = @transform_11, window_bounds = array<i64: 1, 128>}, {pipeline_mode = #tpu.pipeline_mode<synchronous>, transform_indices = @transform_12, window_bounds = array<i64: 128, 128>}, {pipeline_mode = #tpu.pipeline_mode<synchronous>, transform_indices = @transform_13, window_bounds = array<i64: 1, 128>}, {pipeline_mode = #tpu.pipeline_mode<synchronous>, transform_indices = @transform_14, window_bounds = array<i64: 75, 128>}, {pipeline_mode = #tpu.pipeline_mode<synchronous>, transform_indices = @transform_15, window_bounds = array<i64: 128, 128>}, {pipeline_mode = #tpu.pipeline_mode<synchronous>, transform_indices = @transform_16, window_bounds = array<i64: 1, 128>}, {pipeline_mode = #tpu.pipeline_mode<synchronous>, transform_indices = @transform_17, window_bounds = array<i64: 1, 128>}, {pipeline_mode = #tpu.pipeline_mode<synchronous>, transform_indices = @transform_18, window_bounds = array<i64: 128, 128>}, {pipeline_mode = #tpu.pipeline_mode<synchronous>, transform_indices = @transform_19, window_bounds = array<i64: 1, 128>}, {pipeline_mode = #tpu.pipeline_mode<synchronous>, transform_indices = @transform_20, window_bounds = array<i64: 22, 128>}, {pipeline_mode = #tpu.pipeline_mode<synchronous>, transform_indices = @transform_21, window_bounds = array<i64: 22, 128>}, {pipeline_mode = #tpu.pipeline_mode<synchronous>, transform_indices = @transform_22, window_bounds = array<i64: 75, 128>}, {pipeline_mode = #tpu.pipeline_mode<synchronous>, transform_indices = @transform_23, window_bounds = array<i64: 1, 128>}]} {
    %c0 = arith.constant 0 : index
    %c0_0 = arith.constant 0 : index
    %0 = vector.load %arg1[%c0, %c0_0] : memref<22x22xf32, #tpu.memory_space<vmem>>, vector<22x22xf32>
    %1 = arith.truncf %0 : vector<22x22xf32> to vector<22x22xbf16>
    %c0_1 = arith.constant 0 : index
    %c0_2 = arith.constant 0 : index
    %2 = vector.load %arg2[%c0_1, %c0_2] : memref<22x16xf32, #tpu.memory_space<vmem>>, vector<22x16xf32>
    %c0_3 = arith.constant 0 : index
    %c0_4 = arith.constant 0 : index
    %3 = vector.load %arg3[%c0_3, %c0_4] : memref<16x128xf32, #tpu.memory_space<vmem>>, vector<16x128xf32>
    %4 = arith.truncf %2 : vector<22x16xf32> to vector<22x16xbf16>
    %5 = arith.truncf %3 : vector<16x128xf32> to vector<16x128xbf16>
    %cst = arith.constant dense<0.000000e+00> : vector<22x128xf32>
    %6 = tpu.matmul %4, %5, %cst {dimension_numbers = #tpu.dot_dimension_numbers<[1], [0], [0], [1], [0, 0, 1, 1], [], []>} : vector<22x16xbf16>, vector<16x128xbf16>, vector<22x128xf32> -> vector<22x128xf32>
    %7 = arith.truncf %6 : vector<22x128xf32> to vector<22x128xbf16>
    %cst_5 = arith.constant dense<0.000000e+00> : vector<22x128xf32>
    %8 = tpu.matmul %1, %7, %cst_5 {dimension_numbers = #tpu.dot_dimension_numbers<[1], [0], [0], [1], [0, 0, 1, 1], [], []>} : vector<22x22xbf16>, vector<22x128xbf16>, vector<22x128xf32> -> vector<22x128xf32>
    %c0_6 = arith.constant 0 : index
    %c0_7 = arith.constant 0 : index
    %9 = vector.load %arg4[%c0_6, %c0_7] : memref<1x128xf32, #tpu.memory_space<vmem>>, vector<1x128xf32>
    %10 = vector.broadcast %9 : vector<1x128xf32> to vector<22x128xf32>
    %11 = arith.addf %8, %10 : vector<22x128xf32>
    %cst_8 = arith.constant 0.000000e+00 : f32
    %12 = vector.broadcast %cst_8 : f32 to vector<22x128xf32>
    %13 = arith.maximumf %11, %12 : vector<22x128xf32>
    %c0_9 = arith.constant 0 : index
    %c0_10 = arith.constant 0 : index
    %14 = vector.load %arg5[%c0_9, %c0_10] : memref<128x128xf32, #tpu.memory_space<vmem>>, vector<128x128xf32>
    %15 = arith.truncf %13 : vector<22x128xf32> to vector<22x128xbf16>
    %16 = arith.truncf %14 : vector<128x128xf32> to vector<128x128xbf16>
    %cst_11 = arith.constant dense<0.000000e+00> : vector<22x128xf32>
    %17 = tpu.matmul %15, %16, %cst_11 {dimension_numbers = #tpu.dot_dimension_numbers<[1], [0], [0], [1], [0, 0, 1, 1], [], []>} : vector<22x128xbf16>, vector<128x128xbf16>, vector<22x128xf32> -> vector<22x128xf32>
    %18 = arith.truncf %17 : vector<22x128xf32> to vector<22x128xbf16>
    %cst_12 = arith.constant dense<0.000000e+00> : vector<22x128xf32>
    %19 = tpu.matmul %1, %18, %cst_12 {dimension_numbers = #tpu.dot_dimension_numbers<[1], [0], [0], [1], [0, 0, 1, 1], [], []>} : vector<22x22xbf16>, vector<22x128xbf16>, vector<22x128xf32> -> vector<22x128xf32>
    %c0_13 = arith.constant 0 : index
    %c0_14 = arith.constant 0 : index
    %20 = vector.load %arg6[%c0_13, %c0_14] : memref<1x128xf32, #tpu.memory_space<vmem>>, vector<1x128xf32>
    %21 = vector.broadcast %20 : vector<1x128xf32> to vector<22x128xf32>
    %22 = arith.addf %19, %21 : vector<22x128xf32>
    %cst_15 = arith.constant 0.000000e+00 : f32
    %23 = vector.broadcast %cst_15 : f32 to vector<22x128xf32>
    %24 = arith.maximumf %22, %23 : vector<22x128xf32>
    %c0_16 = arith.constant 0 : index
    %c0_17 = arith.constant 0 : index
    %25 = vector.load %arg7[%c0_16, %c0_17] : memref<128x128xf32, #tpu.memory_space<vmem>>, vector<128x128xf32>
    %26 = arith.truncf %24 : vector<22x128xf32> to vector<22x128xbf16>
    %27 = arith.truncf %25 : vector<128x128xf32> to vector<128x128xbf16>
    %cst_18 = arith.constant dense<0.000000e+00> : vector<22x128xf32>
    %28 = tpu.matmul %26, %27, %cst_18 {dimension_numbers = #tpu.dot_dimension_numbers<[1], [0], [0], [1], [0, 0, 1, 1], [], []>} : vector<22x128xbf16>, vector<128x128xbf16>, vector<22x128xf32> -> vector<22x128xf32>
    %29 = arith.truncf %28 : vector<22x128xf32> to vector<22x128xbf16>
    %cst_19 = arith.constant dense<0.000000e+00> : vector<22x128xf32>
    %30 = tpu.matmul %1, %29, %cst_19 {dimension_numbers = #tpu.dot_dimension_numbers<[1], [0], [0], [1], [0, 0, 1, 1], [], []>} : vector<22x22xbf16>, vector<22x128xbf16>, vector<22x128xf32> -> vector<22x128xf32>
    %c0_20 = arith.constant 0 : index
    %c0_21 = arith.constant 0 : index
    %31 = vector.load %arg8[%c0_20, %c0_21] : memref<1x128xf32, #tpu.memory_space<vmem>>, vector<1x128xf32>
    %32 = vector.broadcast %31 : vector<1x128xf32> to vector<22x128xf32>
    %33 = arith.addf %30, %32 : vector<22x128xf32>
    %cst_22 = arith.constant 0.000000e+00 : f32
    %34 = vector.broadcast %cst_22 : f32 to vector<22x128xf32>
    %35 = arith.maximumf %33, %34 : vector<22x128xf32>
    %c0_23 = arith.constant 0 : index
    %c0_24 = arith.constant 0 : index
    %36 = vector.load %arg9[%c0_23, %c0_24] : memref<128x128xf32, #tpu.memory_space<vmem>>, vector<128x128xf32>
    %37 = arith.truncf %35 : vector<22x128xf32> to vector<22x128xbf16>
    %38 = arith.truncf %36 : vector<128x128xf32> to vector<128x128xbf16>
    %cst_25 = arith.constant dense<0.000000e+00> : vector<22x128xf32>
    %39 = tpu.matmul %37, %38, %cst_25 {dimension_numbers = #tpu.dot_dimension_numbers<[1], [0], [0], [1], [0, 0, 1, 1], [], []>} : vector<22x128xbf16>, vector<128x128xbf16>, vector<22x128xf32> -> vector<22x128xf32>
    %c0_26 = arith.constant 0 : index
    %c0_27 = arith.constant 0 : index
    %40 = vector.load %arg10[%c0_26, %c0_27] : memref<1x128xf32, #tpu.memory_space<vmem>>, vector<1x128xf32>
    %41 = vector.broadcast %40 : vector<1x128xf32> to vector<22x128xf32>
    %42 = arith.addf %39, %41 : vector<22x128xf32>
    %c0_28 = arith.constant 0 : index
    %c0_29 = arith.constant 0 : index
    %43 = vector.load %arg11[%c0_28, %c0_29] : memref<128x128xf32, #tpu.memory_space<vmem>>, vector<128x128xf32>
    %44 = arith.truncf %42 : vector<22x128xf32> to vector<22x128xbf16>
    %45 = arith.truncf %43 : vector<128x128xf32> to vector<128x128xbf16>
    %cst_30 = arith.constant dense<0.000000e+00> : vector<22x128xf32>
    %46 = tpu.matmul %44, %45, %cst_30 {dimension_numbers = #tpu.dot_dimension_numbers<[1], [0], [0], [1], [0, 0, 1, 1], [], []>} : vector<22x128xbf16>, vector<128x128xbf16>, vector<22x128xf32> -> vector<22x128xf32>
    %47 = arith.truncf %46 : vector<22x128xf32> to vector<22x128xbf16>
    %cst_31 = arith.constant dense<0.000000e+00> : vector<22x128xf32>
    %48 = tpu.matmul %1, %47, %cst_31 {dimension_numbers = #tpu.dot_dimension_numbers<[1], [0], [0], [1], [0, 0, 1, 1], [], []>} : vector<22x22xbf16>, vector<22x128xbf16>, vector<22x128xf32> -> vector<22x128xf32>
    %c0_32 = arith.constant 0 : index
    %c0_33 = arith.constant 0 : index
    %49 = vector.load %arg12[%c0_32, %c0_33] : memref<1x128xf32, #tpu.memory_space<vmem>>, vector<1x128xf32>
    %50 = vector.broadcast %49 : vector<1x128xf32> to vector<22x128xf32>
    %51 = arith.addf %48, %50 : vector<22x128xf32>
    %c0_34 = arith.constant 0 : index
    %c0_35 = arith.constant 0 : index
    %52 = vector.load %arg21[%c0_34, %c0_35] : memref<22x128xf32, #tpu.memory_space<vmem>>, vector<22x128xf32>
    tpu.vector_store %arg21[%c0_34, %c0_35], %51 {strides = array<i32>} : memref<22x128xf32, #tpu.memory_space<vmem>>, vector<22x128xf32>,
    %c0_36 = arith.constant 0 : index
    %c0_37 = arith.constant 0 : index
    %53 = vector.load %arg13[%c0_36, %c0_37] : memref<128x128xf32, #tpu.memory_space<vmem>>, vector<128x128xf32>
    %54 = arith.truncf %42 : vector<22x128xf32> to vector<22x128xbf16>
    %55 = arith.truncf %53 : vector<128x128xf32> to vector<128x128xbf16>
    %cst_38 = arith.constant dense<0.000000e+00> : vector<22x128xf32>
    %56 = tpu.matmul %54, %55, %cst_38 {dimension_numbers = #tpu.dot_dimension_numbers<[1], [0], [0], [1], [0, 0, 1, 1], [], []>} : vector<22x128xbf16>, vector<128x128xbf16>, vector<22x128xf32> -> vector<22x128xf32>
    %57 = arith.truncf %56 : vector<22x128xf32> to vector<22x128xbf16>
    %cst_39 = arith.constant dense<0.000000e+00> : vector<22x128xf32>
    %58 = tpu.matmul %1, %57, %cst_39 {dimension_numbers = #tpu.dot_dimension_numbers<[1], [0], [0], [1], [0, 0, 1, 1], [], []>} : vector<22x22xbf16>, vector<22x128xbf16>, vector<22x128xf32> -> vector<22x128xf32>
    %c0_40 = arith.constant 0 : index
    %c0_41 = arith.constant 0 : index
    %59 = vector.load %arg14[%c0_40, %c0_41] : memref<1x128xf32, #tpu.memory_space<vmem>>, vector<1x128xf32>
    %60 = vector.broadcast %59 : vector<1x128xf32> to vector<22x128xf32>
    %61 = arith.addf %58, %60 : vector<22x128xf32>
    %c0_42 = arith.constant 0 : index
    %c0_43 = arith.constant 0 : index
    %62 = vector.load %arg22[%c0_42, %c0_43] : memref<22x128xf32, #tpu.memory_space<vmem>>, vector<22x128xf32>
    tpu.vector_store %arg22[%c0_42, %c0_43], %61 {strides = array<i32>} : memref<22x128xf32, #tpu.memory_space<vmem>>, vector<22x128xf32>,
    %c0_44 = arith.constant 0 : index
    %c0_45 = arith.constant 0 : index
    %63 = vector.load %arg15[%c0_44, %c0_45] : memref<75x128xf32, #tpu.memory_space<vmem>>, vector<75x128xf32>
    %c0_46 = arith.constant 0 : index
    %c0_47 = arith.constant 0 : index
    %64 = vector.load %arg16[%c0_46, %c0_47] : memref<128x128xf32, #tpu.memory_space<vmem>>, vector<128x128xf32>
    %65 = arith.truncf %63 : vector<75x128xf32> to vector<75x128xbf16>
    %66 = arith.truncf %64 : vector<128x128xf32> to vector<128x128xbf16>
    %cst_48 = arith.constant dense<0.000000e+00> : vector<75x128xf32>
    %67 = tpu.matmul %65, %66, %cst_48 {dimension_numbers = #tpu.dot_dimension_numbers<[1], [0], [0], [1], [0, 0, 1, 1], [], []>} : vector<75x128xbf16>, vector<128x128xbf16>, vector<75x128xf32> -> vector<75x128xf32>
    %c0_49 = arith.constant 0 : index
    %c0_50 = arith.constant 0 : index
    %68 = vector.load %arg17[%c0_49, %c0_50] : memref<1x128xf32, #tpu.memory_space<vmem>>, vector<1x128xf32>
    %69 = vector.broadcast %68 : vector<1x128xf32> to vector<75x128xf32>
    %70 = arith.addf %67, %69 : vector<75x128xf32>
    %c0_51 = arith.constant 0 : index
    %c0_52 = arith.constant 0 : index
    %71 = vector.load %arg23[%c0_51, %c0_52] : memref<75x128xf32, #tpu.memory_space<vmem>>, vector<75x128xf32>
    tpu.vector_store %arg23[%c0_51, %c0_52], %70 {strides = array<i32>} : memref<75x128xf32, #tpu.memory_space<vmem>>, vector<75x128xf32>,
    %c0_53 = arith.constant 0 : index
    %c0_54 = arith.constant 0 : index
    %72 = vector.load %arg18[%c0_53, %c0_54] : memref<1x128xf32, #tpu.memory_space<vmem>>, vector<1x128xf32>
    %c0_55 = arith.constant 0 : index
    %c0_56 = arith.constant 0 : index
    %73 = vector.load %arg19[%c0_55, %c0_56] : memref<128x128xf32, #tpu.memory_space<vmem>>, vector<128x128xf32>
    %74 = arith.truncf %72 : vector<1x128xf32> to vector<1x128xbf16>
    %75 = arith.truncf %73 : vector<128x128xf32> to vector<128x128xbf16>
    %cst_57 = arith.constant dense<0.000000e+00> : vector<1x128xf32>
    %76 = tpu.matmul %74, %75, %cst_57 {dimension_numbers = #tpu.dot_dimension_numbers<[1], [0], [0], [1], [0, 0, 1, 1], [], []>} : vector<1x128xbf16>, vector<128x128xbf16>, vector<1x128xf32> -> vector<1x128xf32>
    %c0_58 = arith.constant 0 : index
    %c0_59 = arith.constant 0 : index
    %77 = vector.load %arg20[%c0_58, %c0_59] : memref<1x128xf32, #tpu.memory_space<vmem>>, vector<1x128xf32>
    %78 = arith.addf %76, %77 : vector<1x128xf32>
    %c0_60 = arith.constant 0 : index
    %c0_61 = arith.constant 0 : index
    %79 = vector.load %arg24[%c0_60, %c0_61] : memref<1x128xf32, #tpu.memory_space<vmem>>, vector<1x128xf32>
    tpu.vector_store %arg24[%c0_60, %c0_61], %78 {strides = array<i32>} : memref<1x128xf32, #tpu.memory_space<vmem>>, vector<1x128xf32>,
    return
  }
  func.func @transform_0(%arg0: i32) -> (i32, i32) {
    %c0_i32 = arith.constant 0 : i32
    %c0_i32_0 = arith.constant 0 : i32
    %c0_i32_1 = arith.constant 0 : i32
    return %c0_i32, %c0_i32_0 : i32, i32
  }
  func.func @transform_1(%arg0: i32) -> (i32, i32) {
    %c0_i32 = arith.constant 0 : i32
    %c0_i32_0 = arith.constant 0 : i32
    %c0_i32_1 = arith.constant 0 : i32
    return %c0_i32, %c0_i32_0 : i32, i32
  }
  func.func @transform_2(%arg0: i32) -> (i32, i32) {
    %c0_i32 = arith.constant 0 : i32
    %c0_i32_0 = arith.constant 0 : i32
    %c0_i32_1 = arith.constant 0 : i32
    return %c0_i32, %c0_i32_0 : i32, i32
  }
  func.func @transform_3(%arg0: i32) -> (i32, i32) {
    %c0_i32 = arith.constant 0 : i32
    %c0_i32_0 = arith.constant 0 : i32
    %c0_i32_1 = arith.constant 0 : i32
    return %c0_i32, %c0_i32_0 : i32, i32
  }
  func.func @transform_4(%arg0: i32) -> (i32, i32) {
    %c0_i32 = arith.constant 0 : i32
    %c0_i32_0 = arith.constant 0 : i32
    %c0_i32_1 = arith.constant 0 : i32
    return %c0_i32, %c0_i32_0 : i32, i32
  }
  func.func @transform_5(%arg0: i32) -> (i32, i32) {
    %c0_i32 = arith.constant 0 : i32
    %c0_i32_0 = arith.constant 0 : i32
    %c0_i32_1 = arith.constant 0 : i32
    return %c0_i32, %c0_i32_0 : i32, i32
  }
  func.func @transform_6(%arg0: i32) -> (i32, i32) {
    %c0_i32 = arith.constant 0 : i32
    %c0_i32_0 = arith.constant 0 : i32
    %c0_i32_1 = arith.constant 0 : i32
    return %c0_i32, %c0_i32_0 : i32, i32
  }
  func.func @transform_7(%arg0: i32) -> (i32, i32) {
    %c0_i32 = arith.constant 0 : i32
    %c0_i32_0 = arith.constant 0 : i32
    %c0_i32_1 = arith.constant 0 : i32
    return %c0_i32, %c0_i32_0 : i32, i32
  }
  func.func @transform_8(%arg0: i32) -> (i32, i32) {
    %c0_i32 = arith.constant 0 : i32
    %c0_i32_0 = arith.constant 0 : i32
    %c0_i32_1 = arith.constant 0 : i32
    return %c0_i32, %c0_i32_0 : i32, i32
  }
  func.func @transform_9(%arg0: i32) -> (i32, i32) {
    %c0_i32 = arith.constant 0 : i32
    %c0_i32_0 = arith.constant 0 : i32
    %c0_i32_1 = arith.constant 0 : i32
    return %c0_i32, %c0_i32_0 : i32, i32
  }
  func.func @transform_10(%arg0: i32) -> (i32, i32) {
    %c0_i32 = arith.constant 0 : i32
    %c0_i32_0 = arith.constant 0 : i32
    %c0_i32_1 = arith.constant 0 : i32
    return %c0_i32, %c0_i32_0 : i32, i32
  }
  func.func @transform_11(%arg0: i32) -> (i32, i32) {
    %c0_i32 = arith.constant 0 : i32
    %c0_i32_0 = arith.constant 0 : i32
    %c0_i32_1 = arith.constant 0 : i32
    return %c0_i32, %c0_i32_0 : i32, i32
  }
  func.func @transform_12(%arg0: i32) -> (i32, i32) {
    %c0_i32 = arith.constant 0 : i32
    %c0_i32_0 = arith.constant 0 : i32
    %c0_i32_1 = arith.constant 0 : i32
    return %c0_i32, %c0_i32_0 : i32, i32
  }
  func.func @transform_13(%arg0: i32) -> (i32, i32) {
    %c0_i32 = arith.constant 0 : i32
    %c0_i32_0 = arith.constant 0 : i32
    %c0_i32_1 = arith.constant 0 : i32
    return %c0_i32, %c0_i32_0 : i32, i32
  }
  func.func @transform_14(%arg0: i32) -> (i32, i32) {
    %c0_i32 = arith.constant 0 : i32
    %c0_i32_0 = arith.constant 0 : i32
    %c0_i32_1 = arith.constant 0 : i32
    return %c0_i32, %c0_i32_0 : i32, i32
  }
  func.func @transform_15(%arg0: i32) -> (i32, i32) {
    %c0_i32 = arith.constant 0 : i32
    %c0_i32_0 = arith.constant 0 : i32
    %c0_i32_1 = arith.constant 0 : i32
    return %c0_i32, %c0_i32_0 : i32, i32
  }
  func.func @transform_16(%arg0: i32) -> (i32, i32) {
    %c0_i32 = arith.constant 0 : i32
    %c0_i32_0 = arith.constant 0 : i32
    %c0_i32_1 = arith.constant 0 : i32
    return %c0_i32, %c0_i32_0 : i32, i32
  }
  func.func @transform_17(%arg0: i32) -> (i32, i32) {
    %c0_i32 = arith.constant 0 : i32
    %c0_i32_0 = arith.constant 0 : i32
    %c0_i32_1 = arith.constant 0 : i32
    return %c0_i32, %c0_i32_0 : i32, i32
  }
  func.func @transform_18(%arg0: i32) -> (i32, i32) {
    %c0_i32 = arith.constant 0 : i32
    %c0_i32_0 = arith.constant 0 : i32
    %c0_i32_1 = arith.constant 0 : i32
    return %c0_i32, %c0_i32_0 : i32, i32
  }
  func.func @transform_19(%arg0: i32) -> (i32, i32) {
    %c0_i32 = arith.constant 0 : i32
    %c0_i32_0 = arith.constant 0 : i32
    %c0_i32_1 = arith.constant 0 : i32
    return %c0_i32, %c0_i32_0 : i32, i32
  }
  func.func @transform_20(%arg0: i32) -> (i32, i32) {
    %c0_i32 = arith.constant 0 : i32
    %c0_i32_0 = arith.constant 0 : i32
    %c0_i32_1 = arith.constant 0 : i32
    return %c0_i32, %c0_i32_0 : i32, i32
  }
  func.func @transform_21(%arg0: i32) -> (i32, i32) {
    %c0_i32 = arith.constant 0 : i32
    %c0_i32_0 = arith.constant 0 : i32
    %c0_i32_1 = arith.constant 0 : i32
    return %c0_i32, %c0_i32_0 : i32, i32
  }
  func.func @transform_22(%arg0: i32) -> (i32, i32) {
    %c0_i32 = arith.constant 0 : i32
    %c0_i32_0 = arith.constant 0 : i32
    %c0_i32_1 = arith.constant 0 : i32
    return %c0_i32, %c0_i32_0 : i32, i32
  }
  func.func @transform_23(%arg0: i32) -> (i32, i32) {
    %c0_i32 = arith.constant 0 : i32
    %c0_i32_0 = arith.constant 0 : i32
    %c0_i32_1 = arith.constant 0 : i32
    return %c0_i32, %c0_i32_0 : i32, i32
  }
}

module attributes {stable_mosaic.version = 11 : i64} {
  func.func @_pma_g_kernel(%arg0: i32, %arg1: memref<2xi32, #tpu.memory_space<smem>>, %arg2: memref<75x128xf32, #tpu.memory_space<vmem>>, %arg3: memref<1x12x128xf32, #tpu.memory_space<vmem>>, %arg4: memref<1x12x128xf32, #tpu.memory_space<vmem>>, %arg5: memref<128x128xf32, #tpu.memory_space<vmem>>, %arg6: memref<1x128xf32, #tpu.memory_space<vmem>>, %arg7: memref<1x75x128xf32, #tpu.memory_space<vmem>>) attributes {dimension_semantics = [#tpu.dimension_semantics<parallel>], iteration_bounds = array<i64: 2>, scalar_prefetch = 1 : i64, scratch_operands = 0 : i64, tpu.core_type = #tpu.core_type<tc>, window_params = [{pipeline_mode = #tpu.pipeline_mode<synchronous>, transform_indices = @transform_0, window_bounds = array<i64: 75, 128>}, {transform_indices = @transform_1, window_bounds = array<i64: 1, 12, 128>}, {transform_indices = @transform_2, window_bounds = array<i64: 1, 12, 128>}, {pipeline_mode = #tpu.pipeline_mode<synchronous>, transform_indices = @transform_3, window_bounds = array<i64: 128, 128>}, {pipeline_mode = #tpu.pipeline_mode<synchronous>, transform_indices = @transform_4, window_bounds = array<i64: 1, 128>}, {transform_indices = @transform_5, window_bounds = array<i64: 1, 75, 128>}]} {
    %0 = arith.index_cast %arg0 : i32 to index
    %1 = memref.load %arg1[%0] : memref<2xi32, #tpu.memory_space<smem>>
    %2 = tpu.iota {dimensions = array<i32: 1>} : vector<1x12xi32>
    %3 = vector.broadcast %1 : i32 to vector<1x12xi32>
    %4 = arith.cmpi slt, %2, %3 : vector<1x12xi32>
    %cst = arith.constant 0.000000e+00 : f32
    %cst_0 = arith.constant -1.000000e+09 : f32
    %5 = vector.broadcast %cst : f32 to vector<1x12xf32>
    %6 = vector.broadcast %cst_0 : f32 to vector<1x12xf32>
    %7 = arith.select %4, %5, %6 : vector<1x12xi1>, vector<1x12xf32>
    %c0 = arith.constant 0 : index
    %c0_1 = arith.constant 0 : index
    %8 = vector.load %arg2[%c0, %c0_1] : memref<75x128xf32, #tpu.memory_space<vmem>>, vector<75x128xf32>
    %c0_2 = arith.constant 0 : index
    %c0_3 = arith.constant 0 : index
    %c0_4 = arith.constant 0 : index
    %9 = vector.load %arg3[%c0_2, %c0_3, %c0_4] : memref<1x12x128xf32, #tpu.memory_space<vmem>>, vector<1x12x128xf32>
    %10 = vector.shape_cast %9 : vector<1x12x128xf32> to vector<12x128xf32>
    %c0_5 = arith.constant 0 : index
    %c0_6 = arith.constant 0 : index
    %c0_7 = arith.constant 0 : index
    %11 = vector.load %arg4[%c0_5, %c0_6, %c0_7] : memref<1x12x128xf32, #tpu.memory_space<vmem>>, vector<1x12x128xf32>
    %12 = vector.shape_cast %11 : vector<1x12x128xf32> to vector<12x128xf32>
    %cst_8 = arith.constant 0.0883883461 : f32
    %13 = vector.broadcast %cst_8 : f32 to vector<75x128xf32>
    %14 = arith.mulf %8, %13 : vector<75x128xf32>
    %15 = arith.truncf %14 : vector<75x128xf32> to vector<75x128xbf16>
    %16 = arith.truncf %10 : vector<12x128xf32> to vector<12x128xbf16>
    %17 = arith.truncf %12 : vector<12x128xf32> to vector<12x128xbf16>
    %18 = vector.extract_strided_slice %15 {offsets = [0, 0], sizes = [75, 32], strides = [1, 1]} : vector<75x128xbf16> to vector<75x32xbf16>
    %19 = vector.extract_strided_slice %16 {offsets = [0, 0], sizes = [12, 32], strides = [1, 1]} : vector<12x128xbf16> to vector<12x32xbf16>
    %cst_9 = arith.constant dense<0.000000e+00> : vector<75x12xf32>
    %20 = tpu.matmul %18, %19, %cst_9 {dimension_numbers = #tpu.dot_dimension_numbers<[1], [1], [0], [0], [0, 0, 1, 0], [], []>} : vector<75x32xbf16>, vector<12x32xbf16>, vector<75x12xf32> -> vector<75x12xf32>
    %21 = vector.broadcast %7 : vector<1x12xf32> to vector<75x12xf32>
    %22 = arith.addf %20, %21 : vector<75x12xf32>
    %cst_10 = arith.constant dense<0xFF800000> : vector<12xf32>
    %23 = vector.multi_reduction <maximumf>, %22, %cst_10 [0] : vector<75x12xf32> to vector<12xf32>
    %24 = vector.shape_cast %23 : vector<12xf32> to vector<1x12xf32>
    %25 = vector.broadcast %24 : vector<1x12xf32> to vector<75x12xf32>
    %26 = arith.subf %22, %25 : vector<75x12xf32>
    %27 = math.exp %26 : vector<75x12xf32>
    %cst_11 = arith.constant dense<0.000000e+00> : vector<12xf32>
    %28 = vector.multi_reduction <add>, %27, %cst_11 [0] : vector<75x12xf32> to vector<12xf32>
    %29 = vector.shape_cast %28 : vector<12xf32> to vector<1x12xf32>
    %30 = tpu.reciprocal %29 {approx = true} : vector<1x12xf32> -> vector<1x12xf32>
    %31 = vector.broadcast %30 : vector<1x12xf32> to vector<75x12xf32>
    %32 = arith.mulf %27, %31 : vector<75x12xf32>
    %33 = arith.truncf %32 : vector<75x12xf32> to vector<75x12xbf16>
    %34 = vector.extract_strided_slice %17 {offsets = [0, 0], sizes = [12, 32], strides = [1, 1]} : vector<12x128xbf16> to vector<12x32xbf16>
    %cst_12 = arith.constant dense<0.000000e+00> : vector<75x32xf32>
    %35 = tpu.matmul %33, %34, %cst_12 {dimension_numbers = #tpu.dot_dimension_numbers<[1], [0], [0], [1], [0, 0, 1, 1], [], []>} : vector<75x12xbf16>, vector<12x32xbf16>, vector<75x32xf32> -> vector<75x32xf32>
    %36 = vector.extract_strided_slice %8 {offsets = [0, 0], sizes = [75, 32], strides = [1, 1]} : vector<75x128xf32> to vector<75x32xf32>
    %37 = arith.addf %36, %35 : vector<75x32xf32>
    %38 = vector.extract_strided_slice %15 {offsets = [0, 32], sizes = [75, 32], strides = [1, 1]} : vector<75x128xbf16> to vector<75x32xbf16>
    %39 = vector.extract_strided_slice %16 {offsets = [0, 32], sizes = [12, 32], strides = [1, 1]} : vector<12x128xbf16> to vector<12x32xbf16>
    %cst_13 = arith.constant dense<0.000000e+00> : vector<75x12xf32>
    %40 = tpu.matmul %38, %39, %cst_13 {dimension_numbers = #tpu.dot_dimension_numbers<[1], [1], [0], [0], [0, 0, 1, 0], [], []>} : vector<75x32xbf16>, vector<12x32xbf16>, vector<75x12xf32> -> vector<75x12xf32>
    %41 = vector.broadcast %7 : vector<1x12xf32> to vector<75x12xf32>
    %42 = arith.addf %40, %41 : vector<75x12xf32>
    %cst_14 = arith.constant dense<0xFF800000> : vector<12xf32>
    %43 = vector.multi_reduction <maximumf>, %42, %cst_14 [0] : vector<75x12xf32> to vector<12xf32>
    %44 = vector.shape_cast %43 : vector<12xf32> to vector<1x12xf32>
    %45 = vector.broadcast %44 : vector<1x12xf32> to vector<75x12xf32>
    %46 = arith.subf %42, %45 : vector<75x12xf32>
    %47 = math.exp %46 : vector<75x12xf32>
    %cst_15 = arith.constant dense<0.000000e+00> : vector<12xf32>
    %48 = vector.multi_reduction <add>, %47, %cst_15 [0] : vector<75x12xf32> to vector<12xf32>
    %49 = vector.shape_cast %48 : vector<12xf32> to vector<1x12xf32>
    %50 = tpu.reciprocal %49 {approx = true} : vector<1x12xf32> -> vector<1x12xf32>
    %51 = vector.broadcast %50 : vector<1x12xf32> to vector<75x12xf32>
    %52 = arith.mulf %47, %51 : vector<75x12xf32>
    %53 = arith.truncf %52 : vector<75x12xf32> to vector<75x12xbf16>
    %54 = vector.extract_strided_slice %17 {offsets = [0, 32], sizes = [12, 32], strides = [1, 1]} : vector<12x128xbf16> to vector<12x32xbf16>
    %cst_16 = arith.constant dense<0.000000e+00> : vector<75x32xf32>
    %55 = tpu.matmul %53, %54, %cst_16 {dimension_numbers = #tpu.dot_dimension_numbers<[1], [0], [0], [1], [0, 0, 1, 1], [], []>} : vector<75x12xbf16>, vector<12x32xbf16>, vector<75x32xf32> -> vector<75x32xf32>
    %56 = vector.extract_strided_slice %8 {offsets = [0, 32], sizes = [75, 32], strides = [1, 1]} : vector<75x128xf32> to vector<75x32xf32>
    %57 = arith.addf %56, %55 : vector<75x32xf32>
    %58 = vector.extract_strided_slice %15 {offsets = [0, 64], sizes = [75, 32], strides = [1, 1]} : vector<75x128xbf16> to vector<75x32xbf16>
    %59 = vector.extract_strided_slice %16 {offsets = [0, 64], sizes = [12, 32], strides = [1, 1]} : vector<12x128xbf16> to vector<12x32xbf16>
    %cst_17 = arith.constant dense<0.000000e+00> : vector<75x12xf32>
    %60 = tpu.matmul %58, %59, %cst_17 {dimension_numbers = #tpu.dot_dimension_numbers<[1], [1], [0], [0], [0, 0, 1, 0], [], []>} : vector<75x32xbf16>, vector<12x32xbf16>, vector<75x12xf32> -> vector<75x12xf32>
    %61 = vector.broadcast %7 : vector<1x12xf32> to vector<75x12xf32>
    %62 = arith.addf %60, %61 : vector<75x12xf32>
    %cst_18 = arith.constant dense<0xFF800000> : vector<12xf32>
    %63 = vector.multi_reduction <maximumf>, %62, %cst_18 [0] : vector<75x12xf32> to vector<12xf32>
    %64 = vector.shape_cast %63 : vector<12xf32> to vector<1x12xf32>
    %65 = vector.broadcast %64 : vector<1x12xf32> to vector<75x12xf32>
    %66 = arith.subf %62, %65 : vector<75x12xf32>
    %67 = math.exp %66 : vector<75x12xf32>
    %cst_19 = arith.constant dense<0.000000e+00> : vector<12xf32>
    %68 = vector.multi_reduction <add>, %67, %cst_19 [0] : vector<75x12xf32> to vector<12xf32>
    %69 = vector.shape_cast %68 : vector<12xf32> to vector<1x12xf32>
    %70 = tpu.reciprocal %69 {approx = true} : vector<1x12xf32> -> vector<1x12xf32>
    %71 = vector.broadcast %70 : vector<1x12xf32> to vector<75x12xf32>
    %72 = arith.mulf %67, %71 : vector<75x12xf32>
    %73 = arith.truncf %72 : vector<75x12xf32> to vector<75x12xbf16>
    %74 = vector.extract_strided_slice %17 {offsets = [0, 64], sizes = [12, 32], strides = [1, 1]} : vector<12x128xbf16> to vector<12x32xbf16>
    %cst_20 = arith.constant dense<0.000000e+00> : vector<75x32xf32>
    %75 = tpu.matmul %73, %74, %cst_20 {dimension_numbers = #tpu.dot_dimension_numbers<[1], [0], [0], [1], [0, 0, 1, 1], [], []>} : vector<75x12xbf16>, vector<12x32xbf16>, vector<75x32xf32> -> vector<75x32xf32>
    %76 = vector.extract_strided_slice %8 {offsets = [0, 64], sizes = [75, 32], strides = [1, 1]} : vector<75x128xf32> to vector<75x32xf32>
    %77 = arith.addf %76, %75 : vector<75x32xf32>
    %78 = vector.extract_strided_slice %15 {offsets = [0, 96], sizes = [75, 32], strides = [1, 1]} : vector<75x128xbf16> to vector<75x32xbf16>
    %79 = vector.extract_strided_slice %16 {offsets = [0, 96], sizes = [12, 32], strides = [1, 1]} : vector<12x128xbf16> to vector<12x32xbf16>
    %cst_21 = arith.constant dense<0.000000e+00> : vector<75x12xf32>
    %80 = tpu.matmul %78, %79, %cst_21 {dimension_numbers = #tpu.dot_dimension_numbers<[1], [1], [0], [0], [0, 0, 1, 0], [], []>} : vector<75x32xbf16>, vector<12x32xbf16>, vector<75x12xf32> -> vector<75x12xf32>
    %81 = vector.broadcast %7 : vector<1x12xf32> to vector<75x12xf32>
    %82 = arith.addf %80, %81 : vector<75x12xf32>
    %cst_22 = arith.constant dense<0xFF800000> : vector<12xf32>
    %83 = vector.multi_reduction <maximumf>, %82, %cst_22 [0] : vector<75x12xf32> to vector<12xf32>
    %84 = vector.shape_cast %83 : vector<12xf32> to vector<1x12xf32>
    %85 = vector.broadcast %84 : vector<1x12xf32> to vector<75x12xf32>
    %86 = arith.subf %82, %85 : vector<75x12xf32>
    %87 = math.exp %86 : vector<75x12xf32>
    %cst_23 = arith.constant dense<0.000000e+00> : vector<12xf32>
    %88 = vector.multi_reduction <add>, %87, %cst_23 [0] : vector<75x12xf32> to vector<12xf32>
    %89 = vector.shape_cast %88 : vector<12xf32> to vector<1x12xf32>
    %90 = tpu.reciprocal %89 {approx = true} : vector<1x12xf32> -> vector<1x12xf32>
    %91 = vector.broadcast %90 : vector<1x12xf32> to vector<75x12xf32>
    %92 = arith.mulf %87, %91 : vector<75x12xf32>
    %93 = arith.truncf %92 : vector<75x12xf32> to vector<75x12xbf16>
    %94 = vector.extract_strided_slice %17 {offsets = [0, 96], sizes = [12, 32], strides = [1, 1]} : vector<12x128xbf16> to vector<12x32xbf16>
    %cst_24 = arith.constant dense<0.000000e+00> : vector<75x32xf32>
    %95 = tpu.matmul %93, %94, %cst_24 {dimension_numbers = #tpu.dot_dimension_numbers<[1], [0], [0], [1], [0, 0, 1, 1], [], []>} : vector<75x12xbf16>, vector<12x32xbf16>, vector<75x32xf32> -> vector<75x32xf32>
    %96 = vector.extract_strided_slice %8 {offsets = [0, 96], sizes = [75, 32], strides = [1, 1]} : vector<75x128xf32> to vector<75x32xf32>
    %97 = arith.addf %96, %95 : vector<75x32xf32>
    %98 = tpu.concatenate %37, %57, %77, %97 in 1 : vector<75x32xf32>, vector<75x32xf32>, vector<75x32xf32>, vector<75x32xf32> -> vector<75x128xf32>
    %c0_25 = arith.constant 0 : index
    %c0_26 = arith.constant 0 : index
    %99 = vector.load %arg5[%c0_25, %c0_26] : memref<128x128xf32, #tpu.memory_space<vmem>>, vector<128x128xf32>
    %c0_27 = arith.constant 0 : index
    %c0_28 = arith.constant 0 : index
    %100 = vector.load %arg6[%c0_27, %c0_28] : memref<1x128xf32, #tpu.memory_space<vmem>>, vector<1x128xf32>
    %101 = arith.truncf %98 : vector<75x128xf32> to vector<75x128xbf16>
    %102 = arith.truncf %99 : vector<128x128xf32> to vector<128x128xbf16>
    %cst_29 = arith.constant dense<0.000000e+00> : vector<75x128xf32>
    %103 = tpu.matmul %101, %102, %cst_29 {dimension_numbers = #tpu.dot_dimension_numbers<[1], [0], [0], [1], [0, 0, 1, 1], [], []>} : vector<75x128xbf16>, vector<128x128xbf16>, vector<75x128xf32> -> vector<75x128xf32>
    %104 = vector.broadcast %100 : vector<1x128xf32> to vector<75x128xf32>
    %105 = arith.addf %103, %104 : vector<75x128xf32>
    %cst_30 = arith.constant 0.000000e+00 : f32
    %106 = vector.broadcast %cst_30 : f32 to vector<75x128xf32>
    %107 = arith.maximumf %105, %106 : vector<75x128xf32>
    %108 = arith.addf %98, %107 : vector<75x128xf32>
    %c0_31 = arith.constant 0 : index
    %c0_32 = arith.constant 0 : index
    %c0_33 = arith.constant 0 : index
    %109 = vector.load %arg7[%c0_31, %c0_32, %c0_33] : memref<1x75x128xf32, #tpu.memory_space<vmem>>, vector<1x75x128xf32>
    %110 = vector.shape_cast %109 : vector<1x75x128xf32> to vector<75x128xf32>
    %111 = vector.shape_cast %108 : vector<75x128xf32> to vector<1x75x128xf32>
    tpu.vector_store %arg7[%c0_31, %c0_32, %c0_33], %111 {strides = array<i32>} : memref<1x75x128xf32, #tpu.memory_space<vmem>>, vector<1x75x128xf32>,
    return
  }
  func.func @transform_0(%arg0: i32, %arg1: memref<2xi32, #tpu.memory_space<smem>>) -> (i32, i32) {
    %c0_i32 = arith.constant 0 : i32
    %c0_i32_0 = arith.constant 0 : i32
    %c0_i32_1 = arith.constant 0 : i32
    return %c0_i32, %c0_i32_0 : i32, i32
  }
  func.func @transform_1(%arg0: i32, %arg1: memref<2xi32, #tpu.memory_space<smem>>) -> (i32, i32, i32) {
    %c0_i32 = arith.constant 0 : i32
    %c0_i32_0 = arith.constant 0 : i32
    %c0_i32_1 = arith.constant 0 : i32
    return %arg0, %c0_i32, %c0_i32_0 : i32, i32, i32
  }
  func.func @transform_2(%arg0: i32, %arg1: memref<2xi32, #tpu.memory_space<smem>>) -> (i32, i32, i32) {
    %c0_i32 = arith.constant 0 : i32
    %c0_i32_0 = arith.constant 0 : i32
    %c0_i32_1 = arith.constant 0 : i32
    return %arg0, %c0_i32, %c0_i32_0 : i32, i32, i32
  }
  func.func @transform_3(%arg0: i32, %arg1: memref<2xi32, #tpu.memory_space<smem>>) -> (i32, i32) {
    %c0_i32 = arith.constant 0 : i32
    %c0_i32_0 = arith.constant 0 : i32
    %c0_i32_1 = arith.constant 0 : i32
    return %c0_i32, %c0_i32_0 : i32, i32
  }
  func.func @transform_4(%arg0: i32, %arg1: memref<2xi32, #tpu.memory_space<smem>>) -> (i32, i32) {
    %c0_i32 = arith.constant 0 : i32
    %c0_i32_0 = arith.constant 0 : i32
    %c0_i32_1 = arith.constant 0 : i32
    return %c0_i32, %c0_i32_0 : i32, i32
  }
  func.func @transform_5(%arg0: i32, %arg1: memref<2xi32, #tpu.memory_space<smem>>) -> (i32, i32, i32) {
    %c0_i32 = arith.constant 0 : i32
    %c0_i32_0 = arith.constant 0 : i32
    %c0_i32_1 = arith.constant 0 : i32
    return %arg0, %c0_i32, %c0_i32_0 : i32, i32, i32
  }
}

module attributes {stable_mosaic.version = 11 : i64} {
  func.func @_sab_kernel(%arg0: i32, %arg1: memref<1x75x128xf32, #tpu.memory_space<vmem>>, %arg2: memref<128x128xf32, #tpu.memory_space<vmem>>, %arg3: memref<1x128xf32, #tpu.memory_space<vmem>>, %arg4: memref<128x128xf32, #tpu.memory_space<vmem>>, %arg5: memref<1x128xf32, #tpu.memory_space<vmem>>, %arg6: memref<128x128xf32, #tpu.memory_space<vmem>>, %arg7: memref<1x128xf32, #tpu.memory_space<vmem>>, %arg8: memref<128x128xf32, #tpu.memory_space<vmem>>, %arg9: memref<1x128xf32, #tpu.memory_space<vmem>>, %arg10: memref<1x75x128xf32, #tpu.memory_space<vmem>>) attributes {dimension_semantics = [#tpu.dimension_semantics<parallel>], iteration_bounds = array<i64: 2>, scalar_prefetch = 0 : i64, scratch_operands = 0 : i64, tpu.core_type = #tpu.core_type<tc>, window_params = [{transform_indices = @transform_0, window_bounds = array<i64: 1, 75, 128>}, {pipeline_mode = #tpu.pipeline_mode<synchronous>, transform_indices = @transform_1, window_bounds = array<i64: 128, 128>}, {pipeline_mode = #tpu.pipeline_mode<synchronous>, transform_indices = @transform_2, window_bounds = array<i64: 1, 128>}, {pipeline_mode = #tpu.pipeline_mode<synchronous>, transform_indices = @transform_3, window_bounds = array<i64: 128, 128>}, {pipeline_mode = #tpu.pipeline_mode<synchronous>, transform_indices = @transform_4, window_bounds = array<i64: 1, 128>}, {pipeline_mode = #tpu.pipeline_mode<synchronous>, transform_indices = @transform_5, window_bounds = array<i64: 128, 128>}, {pipeline_mode = #tpu.pipeline_mode<synchronous>, transform_indices = @transform_6, window_bounds = array<i64: 1, 128>}, {pipeline_mode = #tpu.pipeline_mode<synchronous>, transform_indices = @transform_7, window_bounds = array<i64: 128, 128>}, {pipeline_mode = #tpu.pipeline_mode<synchronous>, transform_indices = @transform_8, window_bounds = array<i64: 1, 128>}, {transform_indices = @transform_9, window_bounds = array<i64: 1, 75, 128>}]} {
    %c0 = arith.constant 0 : index
    %c0_0 = arith.constant 0 : index
    %c0_1 = arith.constant 0 : index
    %0 = vector.load %arg1[%c0, %c0_0, %c0_1] : memref<1x75x128xf32, #tpu.memory_space<vmem>>, vector<1x75x128xf32>
    %1 = vector.shape_cast %0 : vector<1x75x128xf32> to vector<75x128xf32>
    %c0_2 = arith.constant 0 : index
    %c0_3 = arith.constant 0 : index
    %2 = vector.load %arg2[%c0_2, %c0_3] : memref<128x128xf32, #tpu.memory_space<vmem>>, vector<128x128xf32>
    %3 = arith.truncf %1 : vector<75x128xf32> to vector<75x128xbf16>
    %4 = arith.truncf %2 : vector<128x128xf32> to vector<128x128xbf16>
    %cst = arith.constant dense<0.000000e+00> : vector<75x128xf32>
    %5 = tpu.matmul %3, %4, %cst {dimension_numbers = #tpu.dot_dimension_numbers<[1], [0], [0], [1], [0, 0, 1, 1], [], []>} : vector<75x128xbf16>, vector<128x128xbf16>, vector<75x128xf32> -> vector<75x128xf32>
    %c0_4 = arith.constant 0 : index
    %c0_5 = arith.constant 0 : index
    %6 = vector.load %arg3[%c0_4, %c0_5] : memref<1x128xf32, #tpu.memory_space<vmem>>, vector<1x128xf32>
    %7 = vector.broadcast %6 : vector<1x128xf32> to vector<75x128xf32>
    %8 = arith.addf %5, %7 : vector<75x128xf32>
    %c0_6 = arith.constant 0 : index
    %c0_7 = arith.constant 0 : index
    %9 = vector.load %arg4[%c0_6, %c0_7] : memref<128x128xf32, #tpu.memory_space<vmem>>, vector<128x128xf32>
    %10 = arith.truncf %1 : vector<75x128xf32> to vector<75x128xbf16>
    %11 = arith.truncf %9 : vector<128x128xf32> to vector<128x128xbf16>
    %cst_8 = arith.constant dense<0.000000e+00> : vector<75x128xf32>
    %12 = tpu.matmul %10, %11, %cst_8 {dimension_numbers = #tpu.dot_dimension_numbers<[1], [0], [0], [1], [0, 0, 1, 1], [], []>} : vector<75x128xbf16>, vector<128x128xbf16>, vector<75x128xf32> -> vector<75x128xf32>
    %c0_9 = arith.constant 0 : index
    %c0_10 = arith.constant 0 : index
    %13 = vector.load %arg5[%c0_9, %c0_10] : memref<1x128xf32, #tpu.memory_space<vmem>>, vector<1x128xf32>
    %14 = vector.broadcast %13 : vector<1x128xf32> to vector<75x128xf32>
    %15 = arith.addf %12, %14 : vector<75x128xf32>
    %c0_11 = arith.constant 0 : index
    %c0_12 = arith.constant 0 : index
    %16 = vector.load %arg6[%c0_11, %c0_12] : memref<128x128xf32, #tpu.memory_space<vmem>>, vector<128x128xf32>
    %17 = arith.truncf %1 : vector<75x128xf32> to vector<75x128xbf16>
    %18 = arith.truncf %16 : vector<128x128xf32> to vector<128x128xbf16>
    %cst_13 = arith.constant dense<0.000000e+00> : vector<75x128xf32>
    %19 = tpu.matmul %17, %18, %cst_13 {dimension_numbers = #tpu.dot_dimension_numbers<[1], [0], [0], [1], [0, 0, 1, 1], [], []>} : vector<75x128xbf16>, vector<128x128xbf16>, vector<75x128xf32> -> vector<75x128xf32>
    %c0_14 = arith.constant 0 : index
    %c0_15 = arith.constant 0 : index
    %20 = vector.load %arg7[%c0_14, %c0_15] : memref<1x128xf32, #tpu.memory_space<vmem>>, vector<1x128xf32>
    %21 = vector.broadcast %20 : vector<1x128xf32> to vector<75x128xf32>
    %22 = arith.addf %19, %21 : vector<75x128xf32>
    %cst_16 = arith.constant 0.0883883461 : f32
    %23 = vector.broadcast %cst_16 : f32 to vector<75x128xf32>
    %24 = arith.mulf %8, %23 : vector<75x128xf32>
    %25 = arith.truncf %24 : vector<75x128xf32> to vector<75x128xbf16>
    %26 = arith.truncf %15 : vector<75x128xf32> to vector<75x128xbf16>
    %27 = arith.truncf %22 : vector<75x128xf32> to vector<75x128xbf16>
    %28 = vector.extract_strided_slice %25 {offsets = [0, 0], sizes = [75, 32], strides = [1, 1]} : vector<75x128xbf16> to vector<75x32xbf16>
    %29 = vector.extract_strided_slice %26 {offsets = [0, 0], sizes = [75, 32], strides = [1, 1]} : vector<75x128xbf16> to vector<75x32xbf16>
    %cst_17 = arith.constant dense<0.000000e+00> : vector<75x75xf32>
    %30 = tpu.matmul %28, %29, %cst_17 {dimension_numbers = #tpu.dot_dimension_numbers<[1], [1], [0], [0], [0, 0, 1, 0], [], []>} : vector<75x32xbf16>, vector<75x32xbf16>, vector<75x75xf32> -> vector<75x75xf32>
    %cst_18 = arith.constant dense<0xFF800000> : vector<75xf32>
    %31 = vector.multi_reduction <maximumf>, %30, %cst_18 [0] : vector<75x75xf32> to vector<75xf32>
    %32 = vector.shape_cast %31 : vector<75xf32> to vector<1x75xf32>
    %33 = vector.broadcast %32 : vector<1x75xf32> to vector<75x75xf32>
    %34 = arith.subf %30, %33 : vector<75x75xf32>
    %35 = math.exp %34 : vector<75x75xf32>
    %cst_19 = arith.constant dense<0.000000e+00> : vector<75xf32>
    %36 = vector.multi_reduction <add>, %35, %cst_19 [0] : vector<75x75xf32> to vector<75xf32>
    %37 = vector.shape_cast %36 : vector<75xf32> to vector<1x75xf32>
    %38 = tpu.reciprocal %37 {approx = true} : vector<1x75xf32> -> vector<1x75xf32>
    %39 = vector.broadcast %38 : vector<1x75xf32> to vector<75x75xf32>
    %40 = arith.mulf %35, %39 : vector<75x75xf32>
    %41 = arith.truncf %40 : vector<75x75xf32> to vector<75x75xbf16>
    %42 = vector.extract_strided_slice %27 {offsets = [0, 0], sizes = [75, 32], strides = [1, 1]} : vector<75x128xbf16> to vector<75x32xbf16>
    %cst_20 = arith.constant dense<0.000000e+00> : vector<75x32xf32>
    %43 = tpu.matmul %41, %42, %cst_20 {dimension_numbers = #tpu.dot_dimension_numbers<[1], [0], [0], [1], [0, 0, 1, 1], [], []>} : vector<75x75xbf16>, vector<75x32xbf16>, vector<75x32xf32> -> vector<75x32xf32>
    %44 = vector.extract_strided_slice %8 {offsets = [0, 0], sizes = [75, 32], strides = [1, 1]} : vector<75x128xf32> to vector<75x32xf32>
    %45 = arith.addf %44, %43 : vector<75x32xf32>
    %46 = vector.extract_strided_slice %25 {offsets = [0, 32], sizes = [75, 32], strides = [1, 1]} : vector<75x128xbf16> to vector<75x32xbf16>
    %47 = vector.extract_strided_slice %26 {offsets = [0, 32], sizes = [75, 32], strides = [1, 1]} : vector<75x128xbf16> to vector<75x32xbf16>
    %cst_21 = arith.constant dense<0.000000e+00> : vector<75x75xf32>
    %48 = tpu.matmul %46, %47, %cst_21 {dimension_numbers = #tpu.dot_dimension_numbers<[1], [1], [0], [0], [0, 0, 1, 0], [], []>} : vector<75x32xbf16>, vector<75x32xbf16>, vector<75x75xf32> -> vector<75x75xf32>
    %cst_22 = arith.constant dense<0xFF800000> : vector<75xf32>
    %49 = vector.multi_reduction <maximumf>, %48, %cst_22 [0] : vector<75x75xf32> to vector<75xf32>
    %50 = vector.shape_cast %49 : vector<75xf32> to vector<1x75xf32>
    %51 = vector.broadcast %50 : vector<1x75xf32> to vector<75x75xf32>
    %52 = arith.subf %48, %51 : vector<75x75xf32>
    %53 = math.exp %52 : vector<75x75xf32>
    %cst_23 = arith.constant dense<0.000000e+00> : vector<75xf32>
    %54 = vector.multi_reduction <add>, %53, %cst_23 [0] : vector<75x75xf32> to vector<75xf32>
    %55 = vector.shape_cast %54 : vector<75xf32> to vector<1x75xf32>
    %56 = tpu.reciprocal %55 {approx = true} : vector<1x75xf32> -> vector<1x75xf32>
    %57 = vector.broadcast %56 : vector<1x75xf32> to vector<75x75xf32>
    %58 = arith.mulf %53, %57 : vector<75x75xf32>
    %59 = arith.truncf %58 : vector<75x75xf32> to vector<75x75xbf16>
    %60 = vector.extract_strided_slice %27 {offsets = [0, 32], sizes = [75, 32], strides = [1, 1]} : vector<75x128xbf16> to vector<75x32xbf16>
    %cst_24 = arith.constant dense<0.000000e+00> : vector<75x32xf32>
    %61 = tpu.matmul %59, %60, %cst_24 {dimension_numbers = #tpu.dot_dimension_numbers<[1], [0], [0], [1], [0, 0, 1, 1], [], []>} : vector<75x75xbf16>, vector<75x32xbf16>, vector<75x32xf32> -> vector<75x32xf32>
    %62 = vector.extract_strided_slice %8 {offsets = [0, 32], sizes = [75, 32], strides = [1, 1]} : vector<75x128xf32> to vector<75x32xf32>
    %63 = arith.addf %62, %61 : vector<75x32xf32>
    %64 = vector.extract_strided_slice %25 {offsets = [0, 64], sizes = [75, 32], strides = [1, 1]} : vector<75x128xbf16> to vector<75x32xbf16>
    %65 = vector.extract_strided_slice %26 {offsets = [0, 64], sizes = [75, 32], strides = [1, 1]} : vector<75x128xbf16> to vector<75x32xbf16>
    %cst_25 = arith.constant dense<0.000000e+00> : vector<75x75xf32>
    %66 = tpu.matmul %64, %65, %cst_25 {dimension_numbers = #tpu.dot_dimension_numbers<[1], [1], [0], [0], [0, 0, 1, 0], [], []>} : vector<75x32xbf16>, vector<75x32xbf16>, vector<75x75xf32> -> vector<75x75xf32>
    %cst_26 = arith.constant dense<0xFF800000> : vector<75xf32>
    %67 = vector.multi_reduction <maximumf>, %66, %cst_26 [0] : vector<75x75xf32> to vector<75xf32>
    %68 = vector.shape_cast %67 : vector<75xf32> to vector<1x75xf32>
    %69 = vector.broadcast %68 : vector<1x75xf32> to vector<75x75xf32>
    %70 = arith.subf %66, %69 : vector<75x75xf32>
    %71 = math.exp %70 : vector<75x75xf32>
    %cst_27 = arith.constant dense<0.000000e+00> : vector<75xf32>
    %72 = vector.multi_reduction <add>, %71, %cst_27 [0] : vector<75x75xf32> to vector<75xf32>
    %73 = vector.shape_cast %72 : vector<75xf32> to vector<1x75xf32>
    %74 = tpu.reciprocal %73 {approx = true} : vector<1x75xf32> -> vector<1x75xf32>
    %75 = vector.broadcast %74 : vector<1x75xf32> to vector<75x75xf32>
    %76 = arith.mulf %71, %75 : vector<75x75xf32>
    %77 = arith.truncf %76 : vector<75x75xf32> to vector<75x75xbf16>
    %78 = vector.extract_strided_slice %27 {offsets = [0, 64], sizes = [75, 32], strides = [1, 1]} : vector<75x128xbf16> to vector<75x32xbf16>
    %cst_28 = arith.constant dense<0.000000e+00> : vector<75x32xf32>
    %79 = tpu.matmul %77, %78, %cst_28 {dimension_numbers = #tpu.dot_dimension_numbers<[1], [0], [0], [1], [0, 0, 1, 1], [], []>} : vector<75x75xbf16>, vector<75x32xbf16>, vector<75x32xf32> -> vector<75x32xf32>
    %80 = vector.extract_strided_slice %8 {offsets = [0, 64], sizes = [75, 32], strides = [1, 1]} : vector<75x128xf32> to vector<75x32xf32>
    %81 = arith.addf %80, %79 : vector<75x32xf32>
    %82 = vector.extract_strided_slice %25 {offsets = [0, 96], sizes = [75, 32], strides = [1, 1]} : vector<75x128xbf16> to vector<75x32xbf16>
    %83 = vector.extract_strided_slice %26 {offsets = [0, 96], sizes = [75, 32], strides = [1, 1]} : vector<75x128xbf16> to vector<75x32xbf16>
    %cst_29 = arith.constant dense<0.000000e+00> : vector<75x75xf32>
    %84 = tpu.matmul %82, %83, %cst_29 {dimension_numbers = #tpu.dot_dimension_numbers<[1], [1], [0], [0], [0, 0, 1, 0], [], []>} : vector<75x32xbf16>, vector<75x32xbf16>, vector<75x75xf32> -> vector<75x75xf32>
    %cst_30 = arith.constant dense<0xFF800000> : vector<75xf32>
    %85 = vector.multi_reduction <maximumf>, %84, %cst_30 [0] : vector<75x75xf32> to vector<75xf32>
    %86 = vector.shape_cast %85 : vector<75xf32> to vector<1x75xf32>
    %87 = vector.broadcast %86 : vector<1x75xf32> to vector<75x75xf32>
    %88 = arith.subf %84, %87 : vector<75x75xf32>
    %89 = math.exp %88 : vector<75x75xf32>
    %cst_31 = arith.constant dense<0.000000e+00> : vector<75xf32>
    %90 = vector.multi_reduction <add>, %89, %cst_31 [0] : vector<75x75xf32> to vector<75xf32>
    %91 = vector.shape_cast %90 : vector<75xf32> to vector<1x75xf32>
    %92 = tpu.reciprocal %91 {approx = true} : vector<1x75xf32> -> vector<1x75xf32>
    %93 = vector.broadcast %92 : vector<1x75xf32> to vector<75x75xf32>
    %94 = arith.mulf %89, %93 : vector<75x75xf32>
    %95 = arith.truncf %94 : vector<75x75xf32> to vector<75x75xbf16>
    %96 = vector.extract_strided_slice %27 {offsets = [0, 96], sizes = [75, 32], strides = [1, 1]} : vector<75x128xbf16> to vector<75x32xbf16>
    %cst_32 = arith.constant dense<0.000000e+00> : vector<75x32xf32>
    %97 = tpu.matmul %95, %96, %cst_32 {dimension_numbers = #tpu.dot_dimension_numbers<[1], [0], [0], [1], [0, 0, 1, 1], [], []>} : vector<75x75xbf16>, vector<75x32xbf16>, vector<75x32xf32> -> vector<75x32xf32>
    %98 = vector.extract_strided_slice %8 {offsets = [0, 96], sizes = [75, 32], strides = [1, 1]} : vector<75x128xf32> to vector<75x32xf32>
    %99 = arith.addf %98, %97 : vector<75x32xf32>
    %100 = tpu.concatenate %45, %63, %81, %99 in 1 : vector<75x32xf32>, vector<75x32xf32>, vector<75x32xf32>, vector<75x32xf32> -> vector<75x128xf32>
    %c0_33 = arith.constant 0 : index
    %c0_34 = arith.constant 0 : index
    %101 = vector.load %arg8[%c0_33, %c0_34] : memref<128x128xf32, #tpu.memory_space<vmem>>, vector<128x128xf32>
    %c0_35 = arith.constant 0 : index
    %c0_36 = arith.constant 0 : index
    %102 = vector.load %arg9[%c0_35, %c0_36] : memref<1x128xf32, #tpu.memory_space<vmem>>, vector<1x128xf32>
    %103 = arith.truncf %100 : vector<75x128xf32> to vector<75x128xbf16>
    %104 = arith.truncf %101 : vector<128x128xf32> to vector<128x128xbf16>
    %cst_37 = arith.constant dense<0.000000e+00> : vector<75x128xf32>
    %105 = tpu.matmul %103, %104, %cst_37 {dimension_numbers = #tpu.dot_dimension_numbers<[1], [0], [0], [1], [0, 0, 1, 1], [], []>} : vector<75x128xbf16>, vector<128x128xbf16>, vector<75x128xf32> -> vector<75x128xf32>
    %106 = vector.broadcast %102 : vector<1x128xf32> to vector<75x128xf32>
    %107 = arith.addf %105, %106 : vector<75x128xf32>
    %cst_38 = arith.constant 0.000000e+00 : f32
    %108 = vector.broadcast %cst_38 : f32 to vector<75x128xf32>
    %109 = arith.maximumf %107, %108 : vector<75x128xf32>
    %110 = arith.addf %100, %109 : vector<75x128xf32>
    %c0_39 = arith.constant 0 : index
    %c0_40 = arith.constant 0 : index
    %c0_41 = arith.constant 0 : index
    %111 = vector.load %arg10[%c0_39, %c0_40, %c0_41] : memref<1x75x128xf32, #tpu.memory_space<vmem>>, vector<1x75x128xf32>
    %112 = vector.shape_cast %111 : vector<1x75x128xf32> to vector<75x128xf32>
    %113 = vector.shape_cast %110 : vector<75x128xf32> to vector<1x75x128xf32>
    tpu.vector_store %arg10[%c0_39, %c0_40, %c0_41], %113 {strides = array<i32>} : memref<1x75x128xf32, #tpu.memory_space<vmem>>, vector<1x75x128xf32>,
    return
  }
  func.func @transform_0(%arg0: i32) -> (i32, i32, i32) {
    %c0_i32 = arith.constant 0 : i32
    %c0_i32_0 = arith.constant 0 : i32
    %c0_i32_1 = arith.constant 0 : i32
    return %arg0, %c0_i32, %c0_i32_0 : i32, i32, i32
  }
  func.func @transform_1(%arg0: i32) -> (i32, i32) {
    %c0_i32 = arith.constant 0 : i32
    %c0_i32_0 = arith.constant 0 : i32
    %c0_i32_1 = arith.constant 0 : i32
    return %c0_i32, %c0_i32_0 : i32, i32
  }
  func.func @transform_2(%arg0: i32) -> (i32, i32) {
    %c0_i32 = arith.constant 0 : i32
    %c0_i32_0 = arith.constant 0 : i32
    %c0_i32_1 = arith.constant 0 : i32
    return %c0_i32, %c0_i32_0 : i32, i32
  }
  func.func @transform_3(%arg0: i32) -> (i32, i32) {
    %c0_i32 = arith.constant 0 : i32
    %c0_i32_0 = arith.constant 0 : i32
    %c0_i32_1 = arith.constant 0 : i32
    return %c0_i32, %c0_i32_0 : i32, i32
  }
  func.func @transform_4(%arg0: i32) -> (i32, i32) {
    %c0_i32 = arith.constant 0 : i32
    %c0_i32_0 = arith.constant 0 : i32
    %c0_i32_1 = arith.constant 0 : i32
    return %c0_i32, %c0_i32_0 : i32, i32
  }
  func.func @transform_5(%arg0: i32) -> (i32, i32) {
    %c0_i32 = arith.constant 0 : i32
    %c0_i32_0 = arith.constant 0 : i32
    %c0_i32_1 = arith.constant 0 : i32
    return %c0_i32, %c0_i32_0 : i32, i32
  }
  func.func @transform_6(%arg0: i32) -> (i32, i32) {
    %c0_i32 = arith.constant 0 : i32
    %c0_i32_0 = arith.constant 0 : i32
    %c0_i32_1 = arith.constant 0 : i32
    return %c0_i32, %c0_i32_0 : i32, i32
  }
  func.func @transform_7(%arg0: i32) -> (i32, i32) {
    %c0_i32 = arith.constant 0 : i32
    %c0_i32_0 = arith.constant 0 : i32
    %c0_i32_1 = arith.constant 0 : i32
    return %c0_i32, %c0_i32_0 : i32, i32
  }
  func.func @transform_8(%arg0: i32) -> (i32, i32) {
    %c0_i32 = arith.constant 0 : i32
    %c0_i32_0 = arith.constant 0 : i32
    %c0_i32_1 = arith.constant 0 : i32
    return %c0_i32, %c0_i32_0 : i32, i32
  }
  func.func @transform_9(%arg0: i32) -> (i32, i32, i32) {
    %c0_i32 = arith.constant 0 : i32
    %c0_i32_0 = arith.constant 0 : i32
    %c0_i32_1 = arith.constant 0 : i32
    return %arg0, %c0_i32, %c0_i32_0 : i32, i32, i32
  }
}

module attributes {stable_mosaic.version = 11 : i64} {
  func.func @_pma_i_tail_kernel(%arg0: i32, %arg1: memref<1x128xf32, #tpu.memory_space<vmem>>, %arg2: memref<1x75x128xf32, #tpu.memory_space<vmem>>, %arg3: memref<128x128xf32, #tpu.memory_space<vmem>>, %arg4: memref<1x128xf32, #tpu.memory_space<vmem>>, %arg5: memref<128x128xf32, #tpu.memory_space<vmem>>, %arg6: memref<1x128xf32, #tpu.memory_space<vmem>>, %arg7: memref<128x128xf32, #tpu.memory_space<vmem>>, %arg8: memref<1x128xf32, #tpu.memory_space<vmem>>, %arg9: memref<128x128xf32, #tpu.memory_space<vmem>>, %arg10: memref<1x128xf32, #tpu.memory_space<vmem>>, %arg11: memref<128x128xf32, #tpu.memory_space<vmem>>, %arg12: memref<1x128xf32, #tpu.memory_space<vmem>>, %arg13: memref<128x32xf32, #tpu.memory_space<vmem>>, %arg14: memref<1x32xf32, #tpu.memory_space<vmem>>, %arg15: memref<1x1x32xf32, #tpu.memory_space<vmem>>) attributes {dimension_semantics = [#tpu.dimension_semantics<parallel>], iteration_bounds = array<i64: 2>, scalar_prefetch = 0 : i64, scratch_operands = 0 : i64, tpu.core_type = #tpu.core_type<tc>, window_params = [{pipeline_mode = #tpu.pipeline_mode<synchronous>, transform_indices = @transform_0, window_bounds = array<i64: 1, 128>}, {transform_indices = @transform_1, window_bounds = array<i64: 1, 75, 128>}, {pipeline_mode = #tpu.pipeline_mode<synchronous>, transform_indices = @transform_2, window_bounds = array<i64: 128, 128>}, {pipeline_mode = #tpu.pipeline_mode<synchronous>, transform_indices = @transform_3, window_bounds = array<i64: 1, 128>}, {pipeline_mode = #tpu.pipeline_mode<synchronous>, transform_indices = @transform_4, window_bounds = array<i64: 128, 128>}, {pipeline_mode = #tpu.pipeline_mode<synchronous>, transform_indices = @transform_5, window_bounds = array<i64: 1, 128>}, {pipeline_mode = #tpu.pipeline_mode<synchronous>, transform_indices = @transform_6, window_bounds = array<i64: 128, 128>}, {pipeline_mode = #tpu.pipeline_mode<synchronous>, transform_indices = @transform_7, window_bounds = array<i64: 1, 128>}, {pipeline_mode = #tpu.pipeline_mode<synchronous>, transform_indices = @transform_8, window_bounds = array<i64: 128, 128>}, {pipeline_mode = #tpu.pipeline_mode<synchronous>, transform_indices = @transform_9, window_bounds = array<i64: 1, 128>}, {pipeline_mode = #tpu.pipeline_mode<synchronous>, transform_indices = @transform_10, window_bounds = array<i64: 128, 128>}, {pipeline_mode = #tpu.pipeline_mode<synchronous>, transform_indices = @transform_11, window_bounds = array<i64: 1, 128>}, {pipeline_mode = #tpu.pipeline_mode<synchronous>, transform_indices = @transform_12, window_bounds = array<i64: 128, 32>}, {pipeline_mode = #tpu.pipeline_mode<synchronous>, transform_indices = @transform_13, window_bounds = array<i64: 1, 32>}, {transform_indices = @transform_14, window_bounds = array<i64: 1, 1, 32>}]} {
    %c0 = arith.constant 0 : index
    %c0_0 = arith.constant 0 : index
    %c0_1 = arith.constant 0 : index
    %0 = vector.load %arg2[%c0, %c0_0, %c0_1] : memref<1x75x128xf32, #tpu.memory_space<vmem>>, vector<1x75x128xf32>
    %1 = vector.shape_cast %0 : vector<1x75x128xf32> to vector<75x128xf32>
    %c0_2 = arith.constant 0 : index
    %c0_3 = arith.constant 0 : index
    %2 = vector.load %arg3[%c0_2, %c0_3] : memref<128x128xf32, #tpu.memory_space<vmem>>, vector<128x128xf32>
    %3 = arith.truncf %1 : vector<75x128xf32> to vector<75x128xbf16>
    %4 = arith.truncf %2 : vector<128x128xf32> to vector<128x128xbf16>
    %cst = arith.constant dense<0.000000e+00> : vector<75x128xf32>
    %5 = tpu.matmul %3, %4, %cst {dimension_numbers = #tpu.dot_dimension_numbers<[1], [0], [0], [1], [0, 0, 1, 1], [], []>} : vector<75x128xbf16>, vector<128x128xbf16>, vector<75x128xf32> -> vector<75x128xf32>
    %c0_4 = arith.constant 0 : index
    %c0_5 = arith.constant 0 : index
    %6 = vector.load %arg4[%c0_4, %c0_5] : memref<1x128xf32, #tpu.memory_space<vmem>>, vector<1x128xf32>
    %7 = vector.broadcast %6 : vector<1x128xf32> to vector<75x128xf32>
    %8 = arith.addf %5, %7 : vector<75x128xf32>
    %c0_6 = arith.constant 0 : index
    %c0_7 = arith.constant 0 : index
    %9 = vector.load %arg5[%c0_6, %c0_7] : memref<128x128xf32, #tpu.memory_space<vmem>>, vector<128x128xf32>
    %10 = arith.truncf %1 : vector<75x128xf32> to vector<75x128xbf16>
    %11 = arith.truncf %9 : vector<128x128xf32> to vector<128x128xbf16>
    %cst_8 = arith.constant dense<0.000000e+00> : vector<75x128xf32>
    %12 = tpu.matmul %10, %11, %cst_8 {dimension_numbers = #tpu.dot_dimension_numbers<[1], [0], [0], [1], [0, 0, 1, 1], [], []>} : vector<75x128xbf16>, vector<128x128xbf16>, vector<75x128xf32> -> vector<75x128xf32>
    %c0_9 = arith.constant 0 : index
    %c0_10 = arith.constant 0 : index
    %13 = vector.load %arg6[%c0_9, %c0_10] : memref<1x128xf32, #tpu.memory_space<vmem>>, vector<1x128xf32>
    %14 = vector.broadcast %13 : vector<1x128xf32> to vector<75x128xf32>
    %15 = arith.addf %12, %14 : vector<75x128xf32>
    %c0_11 = arith.constant 0 : index
    %c0_12 = arith.constant 0 : index
    %16 = vector.load %arg1[%c0_11, %c0_12] : memref<1x128xf32, #tpu.memory_space<vmem>>, vector<1x128xf32>
    %cst_13 = arith.constant 0.0883883461 : f32
    %17 = vector.broadcast %cst_13 : f32 to vector<1x128xf32>
    %18 = arith.mulf %16, %17 : vector<1x128xf32>
    %19 = arith.truncf %18 : vector<1x128xf32> to vector<1x128xbf16>
    %20 = arith.truncf %8 : vector<75x128xf32> to vector<75x128xbf16>
    %21 = arith.truncf %15 : vector<75x128xf32> to vector<75x128xbf16>
    %22 = vector.extract_strided_slice %19 {offsets = [0, 0], sizes = [1, 32], strides = [1, 1]} : vector<1x128xbf16> to vector<1x32xbf16>
    %23 = vector.extract_strided_slice %20 {offsets = [0, 0], sizes = [75, 32], strides = [1, 1]} : vector<75x128xbf16> to vector<75x32xbf16>
    %cst_14 = arith.constant dense<0.000000e+00> : vector<1x75xf32>
    %24 = tpu.matmul %22, %23, %cst_14 {dimension_numbers = #tpu.dot_dimension_numbers<[1], [1], [0], [0], [0, 0, 1, 0], [], []>} : vector<1x32xbf16>, vector<75x32xbf16>, vector<1x75xf32> -> vector<1x75xf32>
    %cst_15 = arith.constant dense<0xFF800000> : vector<75xf32>
    %25 = vector.multi_reduction <maximumf>, %24, %cst_15 [0] : vector<1x75xf32> to vector<75xf32>
    %26 = vector.shape_cast %25 : vector<75xf32> to vector<1x75xf32>
    %27 = arith.subf %24, %26 : vector<1x75xf32>
    %28 = math.exp %27 : vector<1x75xf32>
    %cst_16 = arith.constant dense<0.000000e+00> : vector<75xf32>
    %29 = vector.multi_reduction <add>, %28, %cst_16 [0] : vector<1x75xf32> to vector<75xf32>
    %30 = vector.shape_cast %29 : vector<75xf32> to vector<1x75xf32>
    %31 = tpu.reciprocal %30 {approx = true} : vector<1x75xf32> -> vector<1x75xf32>
    %32 = arith.mulf %28, %31 : vector<1x75xf32>
    %33 = arith.truncf %32 : vector<1x75xf32> to vector<1x75xbf16>
    %34 = vector.extract_strided_slice %21 {offsets = [0, 0], sizes = [75, 32], strides = [1, 1]} : vector<75x128xbf16> to vector<75x32xbf16>
    %cst_17 = arith.constant dense<0.000000e+00> : vector<1x32xf32>
    %35 = tpu.matmul %33, %34, %cst_17 {dimension_numbers = #tpu.dot_dimension_numbers<[1], [0], [0], [1], [0, 0, 1, 1], [], []>} : vector<1x75xbf16>, vector<75x32xbf16>, vector<1x32xf32> -> vector<1x32xf32>
    %36 = vector.extract_strided_slice %16 {offsets = [0, 0], sizes = [1, 32], strides = [1, 1]} : vector<1x128xf32> to vector<1x32xf32>
    %37 = arith.addf %36, %35 : vector<1x32xf32>
    %38 = vector.extract_strided_slice %19 {offsets = [0, 32], sizes = [1, 32], strides = [1, 1]} : vector<1x128xbf16> to vector<1x32xbf16>
    %39 = vector.extract_strided_slice %20 {offsets = [0, 32], sizes = [75, 32], strides = [1, 1]} : vector<75x128xbf16> to vector<75x32xbf16>
    %cst_18 = arith.constant dense<0.000000e+00> : vector<1x75xf32>
    %40 = tpu.matmul %38, %39, %cst_18 {dimension_numbers = #tpu.dot_dimension_numbers<[1], [1], [0], [0], [0, 0, 1, 0], [], []>} : vector<1x32xbf16>, vector<75x32xbf16>, vector<1x75xf32> -> vector<1x75xf32>
    %cst_19 = arith.constant dense<0xFF800000> : vector<75xf32>
    %41 = vector.multi_reduction <maximumf>, %40, %cst_19 [0] : vector<1x75xf32> to vector<75xf32>
    %42 = vector.shape_cast %41 : vector<75xf32> to vector<1x75xf32>
    %43 = arith.subf %40, %42 : vector<1x75xf32>
    %44 = math.exp %43 : vector<1x75xf32>
    %cst_20 = arith.constant dense<0.000000e+00> : vector<75xf32>
    %45 = vector.multi_reduction <add>, %44, %cst_20 [0] : vector<1x75xf32> to vector<75xf32>
    %46 = vector.shape_cast %45 : vector<75xf32> to vector<1x75xf32>
    %47 = tpu.reciprocal %46 {approx = true} : vector<1x75xf32> -> vector<1x75xf32>
    %48 = arith.mulf %44, %47 : vector<1x75xf32>
    %49 = arith.truncf %48 : vector<1x75xf32> to vector<1x75xbf16>
    %50 = vector.extract_strided_slice %21 {offsets = [0, 32], sizes = [75, 32], strides = [1, 1]} : vector<75x128xbf16> to vector<75x32xbf16>
    %cst_21 = arith.constant dense<0.000000e+00> : vector<1x32xf32>
    %51 = tpu.matmul %49, %50, %cst_21 {dimension_numbers = #tpu.dot_dimension_numbers<[1], [0], [0], [1], [0, 0, 1, 1], [], []>} : vector<1x75xbf16>, vector<75x32xbf16>, vector<1x32xf32> -> vector<1x32xf32>
    %52 = vector.extract_strided_slice %16 {offsets = [0, 32], sizes = [1, 32], strides = [1, 1]} : vector<1x128xf32> to vector<1x32xf32>
    %53 = arith.addf %52, %51 : vector<1x32xf32>
    %54 = vector.extract_strided_slice %19 {offsets = [0, 64], sizes = [1, 32], strides = [1, 1]} : vector<1x128xbf16> to vector<1x32xbf16>
    %55 = vector.extract_strided_slice %20 {offsets = [0, 64], sizes = [75, 32], strides = [1, 1]} : vector<75x128xbf16> to vector<75x32xbf16>
    %cst_22 = arith.constant dense<0.000000e+00> : vector<1x75xf32>
    %56 = tpu.matmul %54, %55, %cst_22 {dimension_numbers = #tpu.dot_dimension_numbers<[1], [1], [0], [0], [0, 0, 1, 0], [], []>} : vector<1x32xbf16>, vector<75x32xbf16>, vector<1x75xf32> -> vector<1x75xf32>
    %cst_23 = arith.constant dense<0xFF800000> : vector<75xf32>
    %57 = vector.multi_reduction <maximumf>, %56, %cst_23 [0] : vector<1x75xf32> to vector<75xf32>
    %58 = vector.shape_cast %57 : vector<75xf32> to vector<1x75xf32>
    %59 = arith.subf %56, %58 : vector<1x75xf32>
    %60 = math.exp %59 : vector<1x75xf32>
    %cst_24 = arith.constant dense<0.000000e+00> : vector<75xf32>
    %61 = vector.multi_reduction <add>, %60, %cst_24 [0] : vector<1x75xf32> to vector<75xf32>
    %62 = vector.shape_cast %61 : vector<75xf32> to vector<1x75xf32>
    %63 = tpu.reciprocal %62 {approx = true} : vector<1x75xf32> -> vector<1x75xf32>
    %64 = arith.mulf %60, %63 : vector<1x75xf32>
    %65 = arith.truncf %64 : vector<1x75xf32> to vector<1x75xbf16>
    %66 = vector.extract_strided_slice %21 {offsets = [0, 64], sizes = [75, 32], strides = [1, 1]} : vector<75x128xbf16> to vector<75x32xbf16>
    %cst_25 = arith.constant dense<0.000000e+00> : vector<1x32xf32>
    %67 = tpu.matmul %65, %66, %cst_25 {dimension_numbers = #tpu.dot_dimension_numbers<[1], [0], [0], [1], [0, 0, 1, 1], [], []>} : vector<1x75xbf16>, vector<75x32xbf16>, vector<1x32xf32> -> vector<1x32xf32>
    %68 = vector.extract_strided_slice %16 {offsets = [0, 64], sizes = [1, 32], strides = [1, 1]} : vector<1x128xf32> to vector<1x32xf32>
    %69 = arith.addf %68, %67 : vector<1x32xf32>
    %70 = vector.extract_strided_slice %19 {offsets = [0, 96], sizes = [1, 32], strides = [1, 1]} : vector<1x128xbf16> to vector<1x32xbf16>
    %71 = vector.extract_strided_slice %20 {offsets = [0, 96], sizes = [75, 32], strides = [1, 1]} : vector<75x128xbf16> to vector<75x32xbf16>
    %cst_26 = arith.constant dense<0.000000e+00> : vector<1x75xf32>
    %72 = tpu.matmul %70, %71, %cst_26 {dimension_numbers = #tpu.dot_dimension_numbers<[1], [1], [0], [0], [0, 0, 1, 0], [], []>} : vector<1x32xbf16>, vector<75x32xbf16>, vector<1x75xf32> -> vector<1x75xf32>
    %cst_27 = arith.constant dense<0xFF800000> : vector<75xf32>
    %73 = vector.multi_reduction <maximumf>, %72, %cst_27 [0] : vector<1x75xf32> to vector<75xf32>
    %74 = vector.shape_cast %73 : vector<75xf32> to vector<1x75xf32>
    %75 = arith.subf %72, %74 : vector<1x75xf32>
    %76 = math.exp %75 : vector<1x75xf32>
    %cst_28 = arith.constant dense<0.000000e+00> : vector<75xf32>
    %77 = vector.multi_reduction <add>, %76, %cst_28 [0] : vector<1x75xf32> to vector<75xf32>
    %78 = vector.shape_cast %77 : vector<75xf32> to vector<1x75xf32>
    %79 = tpu.reciprocal %78 {approx = true} : vector<1x75xf32> -> vector<1x75xf32>
    %80 = arith.mulf %76, %79 : vector<1x75xf32>
    %81 = arith.truncf %80 : vector<1x75xf32> to vector<1x75xbf16>
    %82 = vector.extract_strided_slice %21 {offsets = [0, 96], sizes = [75, 32], strides = [1, 1]} : vector<75x128xbf16> to vector<75x32xbf16>
    %cst_29 = arith.constant dense<0.000000e+00> : vector<1x32xf32>
    %83 = tpu.matmul %81, %82, %cst_29 {dimension_numbers = #tpu.dot_dimension_numbers<[1], [0], [0], [1], [0, 0, 1, 1], [], []>} : vector<1x75xbf16>, vector<75x32xbf16>, vector<1x32xf32> -> vector<1x32xf32>
    %84 = vector.extract_strided_slice %16 {offsets = [0, 96], sizes = [1, 32], strides = [1, 1]} : vector<1x128xf32> to vector<1x32xf32>
    %85 = arith.addf %84, %83 : vector<1x32xf32>
    %86 = tpu.concatenate %37, %53, %69, %85 in 1 : vector<1x32xf32>, vector<1x32xf32>, vector<1x32xf32>, vector<1x32xf32> -> vector<1x128xf32>
    %c0_30 = arith.constant 0 : index
    %c0_31 = arith.constant 0 : index
    %87 = vector.load %arg7[%c0_30, %c0_31] : memref<128x128xf32, #tpu.memory_space<vmem>>, vector<128x128xf32>
    %c0_32 = arith.constant 0 : index
    %c0_33 = arith.constant 0 : index
    %88 = vector.load %arg8[%c0_32, %c0_33] : memref<1x128xf32, #tpu.memory_space<vmem>>, vector<1x128xf32>
    %89 = arith.truncf %86 : vector<1x128xf32> to vector<1x128xbf16>
    %90 = arith.truncf %87 : vector<128x128xf32> to vector<128x128xbf16>
    %cst_34 = arith.constant dense<0.000000e+00> : vector<1x128xf32>
    %91 = tpu.matmul %89, %90, %cst_34 {dimension_numbers = #tpu.dot_dimension_numbers<[1], [0], [0], [1], [0, 0, 1, 1], [], []>} : vector<1x128xbf16>, vector<128x128xbf16>, vector<1x128xf32> -> vector<1x128xf32>
    %92 = arith.addf %91, %88 : vector<1x128xf32>
    %cst_35 = arith.constant 0.000000e+00 : f32
    %93 = vector.broadcast %cst_35 : f32 to vector<1x128xf32>
    %94 = arith.maximumf %92, %93 : vector<1x128xf32>
    %95 = arith.addf %86, %94 : vector<1x128xf32>
    %c0_36 = arith.constant 0 : index
    %c0_37 = arith.constant 0 : index
    %96 = vector.load %arg9[%c0_36, %c0_37] : memref<128x128xf32, #tpu.memory_space<vmem>>, vector<128x128xf32>
    %97 = arith.truncf %95 : vector<1x128xf32> to vector<1x128xbf16>
    %98 = arith.truncf %96 : vector<128x128xf32> to vector<128x128xbf16>
    %cst_38 = arith.constant dense<0.000000e+00> : vector<1x128xf32>
    %99 = tpu.matmul %97, %98, %cst_38 {dimension_numbers = #tpu.dot_dimension_numbers<[1], [0], [0], [1], [0, 0, 1, 1], [], []>} : vector<1x128xbf16>, vector<128x128xbf16>, vector<1x128xf32> -> vector<1x128xf32>
    %c0_39 = arith.constant 0 : index
    %c0_40 = arith.constant 0 : index
    %100 = vector.load %arg10[%c0_39, %c0_40] : memref<1x128xf32, #tpu.memory_space<vmem>>, vector<1x128xf32>
    %101 = arith.addf %99, %100 : vector<1x128xf32>
    %c0_41 = arith.constant 0 : index
    %c0_42 = arith.constant 0 : index
    %102 = vector.load %arg11[%c0_41, %c0_42] : memref<128x128xf32, #tpu.memory_space<vmem>>, vector<128x128xf32>
    %103 = arith.truncf %101 : vector<1x128xf32> to vector<1x128xbf16>
    %104 = arith.truncf %102 : vector<128x128xf32> to vector<128x128xbf16>
    %cst_43 = arith.constant dense<0.000000e+00> : vector<1x128xf32>
    %105 = tpu.matmul %103, %104, %cst_43 {dimension_numbers = #tpu.dot_dimension_numbers<[1], [0], [0], [1], [0, 0, 1, 1], [], []>} : vector<1x128xbf16>, vector<128x128xbf16>, vector<1x128xf32> -> vector<1x128xf32>
    %c0_44 = arith.constant 0 : index
    %c0_45 = arith.constant 0 : index
    %106 = vector.load %arg12[%c0_44, %c0_45] : memref<1x128xf32, #tpu.memory_space<vmem>>, vector<1x128xf32>
    %107 = arith.addf %105, %106 : vector<1x128xf32>
    %cst_46 = arith.constant 0.000000e+00 : f32
    %108 = vector.broadcast %cst_46 : f32 to vector<1x128xf32>
    %109 = arith.maximumf %107, %108 : vector<1x128xf32>
    %c0_47 = arith.constant 0 : index
    %c0_48 = arith.constant 0 : index
    %110 = vector.load %arg13[%c0_47, %c0_48] : memref<128x32xf32, #tpu.memory_space<vmem>>, vector<128x32xf32>
    %111 = arith.truncf %109 : vector<1x128xf32> to vector<1x128xbf16>
    %112 = arith.truncf %110 : vector<128x32xf32> to vector<128x32xbf16>
    %cst_49 = arith.constant dense<0.000000e+00> : vector<1x32xf32>
    %113 = tpu.matmul %111, %112, %cst_49 {dimension_numbers = #tpu.dot_dimension_numbers<[1], [0], [0], [1], [0, 0, 1, 1], [], []>} : vector<1x128xbf16>, vector<128x32xbf16>, vector<1x32xf32> -> vector<1x32xf32>
    %c0_50 = arith.constant 0 : index
    %c0_51 = arith.constant 0 : index
    %114 = vector.load %arg14[%c0_50, %c0_51] : memref<1x32xf32, #tpu.memory_space<vmem>>, vector<1x32xf32>
    %115 = arith.addf %113, %114 : vector<1x32xf32>
    %c0_52 = arith.constant 0 : index
    %c0_53 = arith.constant 0 : index
    %c0_54 = arith.constant 0 : index
    %116 = vector.load %arg15[%c0_52, %c0_53, %c0_54] : memref<1x1x32xf32, #tpu.memory_space<vmem>>, vector<1x1x32xf32>
    %117 = vector.shape_cast %116 : vector<1x1x32xf32> to vector<1x32xf32>
    %118 = vector.shape_cast %115 : vector<1x32xf32> to vector<1x1x32xf32>
    tpu.vector_store %arg15[%c0_52, %c0_53, %c0_54], %118 {strides = array<i32>} : memref<1x1x32xf32, #tpu.memory_space<vmem>>, vector<1x1x32xf32>,
    return
  }
  func.func @transform_0(%arg0: i32) -> (i32, i32) {
    %c0_i32 = arith.constant 0 : i32
    %c0_i32_0 = arith.constant 0 : i32
    %c0_i32_1 = arith.constant 0 : i32
    return %c0_i32, %c0_i32_0 : i32, i32
  }
  func.func @transform_1(%arg0: i32) -> (i32, i32, i32) {
    %c0_i32 = arith.constant 0 : i32
    %c0_i32_0 = arith.constant 0 : i32
    %c0_i32_1 = arith.constant 0 : i32
    return %arg0, %c0_i32, %c0_i32_0 : i32, i32, i32
  }
  func.func @transform_2(%arg0: i32) -> (i32, i32) {
    %c0_i32 = arith.constant 0 : i32
    %c0_i32_0 = arith.constant 0 : i32
    %c0_i32_1 = arith.constant 0 : i32
    return %c0_i32, %c0_i32_0 : i32, i32
  }
  func.func @transform_3(%arg0: i32) -> (i32, i32) {
    %c0_i32 = arith.constant 0 : i32
    %c0_i32_0 = arith.constant 0 : i32
    %c0_i32_1 = arith.constant 0 : i32
    return %c0_i32, %c0_i32_0 : i32, i32
  }
  func.func @transform_4(%arg0: i32) -> (i32, i32) {
    %c0_i32 = arith.constant 0 : i32
    %c0_i32_0 = arith.constant 0 : i32
    %c0_i32_1 = arith.constant 0 : i32
    return %c0_i32, %c0_i32_0 : i32, i32
  }
  func.func @transform_5(%arg0: i32) -> (i32, i32) {
    %c0_i32 = arith.constant 0 : i32
    %c0_i32_0 = arith.constant 0 : i32
    %c0_i32_1 = arith.constant 0 : i32
    return %c0_i32, %c0_i32_0 : i32, i32
  }
  func.func @transform_6(%arg0: i32) -> (i32, i32) {
    %c0_i32 = arith.constant 0 : i32
    %c0_i32_0 = arith.constant 0 : i32
    %c0_i32_1 = arith.constant 0 : i32
    return %c0_i32, %c0_i32_0 : i32, i32
  }
  func.func @transform_7(%arg0: i32) -> (i32, i32) {
    %c0_i32 = arith.constant 0 : i32
    %c0_i32_0 = arith.constant 0 : i32
    %c0_i32_1 = arith.constant 0 : i32
    return %c0_i32, %c0_i32_0 : i32, i32
  }
  func.func @transform_8(%arg0: i32) -> (i32, i32) {
    %c0_i32 = arith.constant 0 : i32
    %c0_i32_0 = arith.constant 0 : i32
    %c0_i32_1 = arith.constant 0 : i32
    return %c0_i32, %c0_i32_0 : i32, i32
  }
  func.func @transform_9(%arg0: i32) -> (i32, i32) {
    %c0_i32 = arith.constant 0 : i32
    %c0_i32_0 = arith.constant 0 : i32
    %c0_i32_1 = arith.constant 0 : i32
    return %c0_i32, %c0_i32_0 : i32, i32
  }
  func.func @transform_10(%arg0: i32) -> (i32, i32) {
    %c0_i32 = arith.constant 0 : i32
    %c0_i32_0 = arith.constant 0 : i32
    %c0_i32_1 = arith.constant 0 : i32
    return %c0_i32, %c0_i32_0 : i32, i32
  }
  func.func @transform_11(%arg0: i32) -> (i32, i32) {
    %c0_i32 = arith.constant 0 : i32
    %c0_i32_0 = arith.constant 0 : i32
    %c0_i32_1 = arith.constant 0 : i32
    return %c0_i32, %c0_i32_0 : i32, i32
  }
  func.func @transform_12(%arg0: i32) -> (i32, i32) {
    %c0_i32 = arith.constant 0 : i32
    %c0_i32_0 = arith.constant 0 : i32
    %c0_i32_1 = arith.constant 0 : i32
    return %c0_i32, %c0_i32_0 : i32, i32
  }
  func.func @transform_13(%arg0: i32) -> (i32, i32) {
    %c0_i32 = arith.constant 0 : i32
    %c0_i32_0 = arith.constant 0 : i32
    %c0_i32_1 = arith.constant 0 : i32
    return %c0_i32, %c0_i32_0 : i32, i32
  }
  func.func @transform_14(%arg0: i32) -> (i32, i32, i32) {
    %c0_i32 = arith.constant 0 : i32
    %c0_i32_0 = arith.constant 0 : i32
    %c0_i32_1 = arith.constant 0 : i32
    return %arg0, %c0_i32, %c0_i32_0 : i32, i32, i32
  }
}

</mosaic_0001>

<llo_original>
// kernel: gma_forward.4
$region0: #{gma_forward.4}
  #allocation0 [shape = 'u32[]', space=smem, size = 0x4, offset = 0x4, fixed_abs, tag = 'smem constant byte address 0x4 - core index']
  #allocation1 [shape = 'u32[144,128]{1,0:T(1,128)}', space=vmem, size = 0x12000, scoped, tag = 'internal scratch']
  %s0 = inlined_call_operand.vmem [shape: f32[22,22], index: 0, kind: input, shape index: {}]
  %s1 = inlined_call_operand.vmem [shape: f32[22,16], index: 1, kind: input, shape index: {}]
  %s2 = inlined_call_operand.hbm [shape: f32[16,128], index: 2, kind: input, shape index: {}]
  %s3 = inlined_call_operand.hbm [shape: f32[1,128], index: 3, kind: input, shape index: {}]
  %s4 = inlined_call_operand.hbm [shape: f32[128,128], index: 4, kind: input, shape index: {}]
  %s5 = inlined_call_operand.hbm [shape: f32[1,128], index: 5, kind: input, shape index: {}]
  %s6 = inlined_call_operand.vmem [shape: f32[128,128], index: 6, kind: input, shape index: {}]
  %s7 = inlined_call_operand.hbm [shape: f32[1,128], index: 7, kind: input, shape index: {}]
  %s8 = inlined_call_operand.hbm [shape: f32[128,128], index: 8, kind: input, shape index: {}]
  %s9 = inlined_call_operand.hbm [shape: f32[1,128], index: 9, kind: input, shape index: {}]
  %s10 = inlined_call_operand.hbm [shape: f32[128,128], index: 10, kind: input, shape index: {}]
  %s11 = inlined_call_operand.vmem [shape: f32[1,128], index: 11, kind: input, shape index: {}]
  %s12 = inlined_call_operand.hbm [shape: f32[128,128], index: 12, kind: input, shape index: {}]
  %s13 = inlined_call_operand.vmem [shape: f32[1,128], index: 13, kind: input, shape index: {}]
  %s14 = inlined_call_operand.hbm [shape: f32[75,128], index: 14, kind: input, shape index: {}]
  %s15 = inlined_call_operand.hbm [shape: f32[128,128], index: 15, kind: input, shape index: {}]
  %s16 = inlined_call_operand.vmem [shape: f32[1,128], index: 16, kind: input, shape index: {}]
  %s17 = inlined_call_operand.vmem [shape: f32[1,128], index: 17, kind: input, shape index: {}]
  %s18 = inlined_call_operand.hbm [shape: f32[128,128], index: 18, kind: input, shape index: {}]
  %s19 = inlined_call_operand.vmem [shape: f32[1,128], index: 19, kind: input, shape index: {}]
  %s20 = inlined_call_operand.vmem [shape: f32[22,128], index: 20, kind: output, shape index: {0}]
  %s21 = inlined_call_operand.vmem [shape: f32[22,128], index: 21, kind: output, shape index: {1}]
  %s22 = inlined_call_operand.vmem [shape: f32[75,128], index: 22, kind: output, shape index: {2}]
  %s23 = inlined_call_operand.vmem [shape: f32[1,128], index: 23, kind: output, shape index: {3}]
  %24 = xla_tuple %s20, %s21, %s22, %s23
  %s25 = sld [smem:[#allocation0]]
  $region162: #{gma_forward.4} parent=0
    _
  %s27 = ssub.s32 1, %s25
  %s28 = scalar_select 0, %s27, %s25
  $region1: #{gma_forward.4} parent=0
    #allocation2 [shape = 'u8[8192]{0}', space=vmem, size = 0x2000, scoped, tag = 'input window, operand 2, single buffered']
    #allocation3 [shape = 's32[1]{0}', space=sflag, size = 0x4, scoped, tag = 'scoped memory for gma_forward.4']
    #allocation4 [shape = 'u8[512]{0}', space=vmem, size = 0x400, scoped, tag = 'input window, operand 3, single buffered']
    #allocation5 [shape = 's32[1]{0}', space=sflag, size = 0x4, scoped, tag = 'scoped memory for gma_forward.4']
    #allocation6 [shape = 'u8[65536]{0}', space=vmem, size = 0x10000, scoped, tag = 'input window, operand 4, single buffered']
    #allocation7 [shape = 'u8[512]{0}', space=vmem, size = 0x400, scoped, tag = 'input window, operand 5, single buffered']
    #allocation8 [shape = 's32[1]{0}', space=sflag, size = 0x4, scoped, tag = 'scoped memory for gma_forward.4']
    #allocation9 [shape = 'u8[512]{0}', space=vmem, size = 0x400, scoped, tag = 'input window, operand 7, single buffered']
    #allocation10 [shape = 'u8[65536]{0}', space=vmem, size = 0x10000, scoped, tag = 'input window, operand 8, single buffered']
    #allocation11 [shape = 's32[1]{0}', space=sflag, size = 0x4, scoped, tag = 'scoped memory for gma_forward.4']
    #allocation12 [shape = 'u8[512]{0}', space=vmem, size = 0x400, scoped, tag = 'input window, operand 9, single buffered']
    #allocation13 [shape = 'u8[65536]{0}', space=vmem, size = 0x10000, scoped, tag = 'input window, operand 10, single buffered']
    #allocation14 [shape = 's32[1]{0}', space=sflag, size = 0x4, scoped, tag = 'scoped memory for gma_forward.4']
    #allocation15 [shape = 'u8[65536]{0}', space=vmem, size = 0x10000, scoped, tag = 'input window, operand 12, single buffered']
    #allocation16 [shape = 'u8[40960]{0}', space=vmem, size = 0xa000, scoped, tag = 'input window, operand 14, single buffered']
    #allocation17 [shape = 's32[1]{0}', space=sflag, size = 0x4, scoped, tag = 'scoped memory for gma_forward.4']
    #allocation18 [shape = 'u8[65536]{0}', space=vmem, size = 0x10000, scoped, tag = 'input window, operand 15, single buffered']
    #allocation19 [shape = 'u8[65536]{0}', space=vmem, size = 0x10000, scoped, tag = 'input window, operand 18, single buffered']
    #allocation20 [shape = 's32[1]{0}', space=sflag, size = 0x4, scoped, tag = 'scoped memory for gma_forward.4']
    %29 = vsyncpa [#allocation3], 0
    %30 = vsyncpa [#allocation5], 0
    %31 = vsyncpa [#allocation8], 0
    %32 = vsyncpa [#allocation11], 0
    %33 = vsyncpa [#allocation14], 0
    %34 = vsyncpa [#allocation17], 0
    %35 = vsyncpa [#allocation20], 0
    // Predicated region
    $region2: #{gma_forward.4} parent=1 // pred_check
      _
    $region3: #{gma_forward.4} parent=1 // pred_check_branch
      %37 = sbr.rel (0) target = $region5
    $region4: #{gma_forward.4} parent=1 // pred_region
      _
    $region5: #{gma_forward.4} parent=1 // pred_fallthru
      _
    // Predicated region
    $region6: #{gma_forward.4} parent=1 // pred_check
      _
    $region7: #{gma_forward.4} parent=1 // pred_check_branch
      %39 = sbr.rel (0) target = $region9
    $region8: #{gma_forward.4} parent=1 // pred_region
      _
    $region9: #{gma_forward.4} parent=1 // pred_fallthru
      _
    // Predicated region
    $region10: #{gma_forward.4} parent=1 // pred_check
      _
    $region11: #{gma_forward.4} parent=1 // pred_check_branch
      %41 = sbr.rel (0) target = $region13
    $region12: #{gma_forward.4} parent=1 // pred_region
      %s43 = ssub.s32 256, 256
      %44 = vsyncadd [#allocation3], %s43
      %s45 = sshll.u32 [#allocation2], 4
      %s46 = int_to_ptr.vmem [resolvable:$true] %s45
      %51 = dma.hbm_to_vmem [thread:$0]  %s2, 256, %s46, [#allocation3], 128, 128, 8
    $region13: #{gma_forward.4} parent=1 // pred_fallthru
      _
    // Predicated region
    $region14: #{gma_forward.4} parent=1 // pred_check
      _
    $region15: #{gma_forward.4} parent=1 // pred_check_branch
      %53 = sbr.rel (0) target = $region17
    $region16: #{gma_forward.4} parent=1 // pred_region
      %s55 = ssub.s32 16, 16
      %56 = vsyncadd [#allocation5], %s55
      %s58 = sshll.u32 [#allocation4], 4
      %s59 = int_to_ptr.vmem [resolvable:$true] %s58
      %61 = dma.hbm_to_vmem [thread:$0]  %s3, 16, %s59, [#allocation5]
    $region17: #{gma_forward.4} parent=1 // pred_fallthru
      _
    // Predicated region
    $region18: #{gma_forward.4} parent=1 // pred_check
      _
    $region19: #{gma_forward.4} parent=1 // pred_check_branch
      %63 = sbr.rel (0) target = $region21
    $region20: #{gma_forward.4} parent=1 // pred_region
      %s65 = ssub.s32 2048, 2048
      %66 = vsyncadd [#allocation5], %s65
      %s67 = sshll.u32 [#allocation6], 4
      %s68 = int_to_ptr.vmem [resolvable:$true] %s67
      %73 = dma.hbm_to_vmem [thread:$0]  %s4, 2048, %s68, [#allocation5], 128, 128, 8
    $region21: #{gma_forward.4} parent=1 // pred_fallthru
      _
    // Predicated region
    $region22: #{gma_forward.4} parent=1 // pred_check
      _
    $region23: #{gma_forward.4} parent=1 // pred_check_branch
      %75 = sbr.rel (0) target = $region25
    $region24: #{gma_forward.4} parent=1 // pred_region
      %s77 = ssub.s32 16, 16
      %78 = vsyncadd [#allocation8], %s77
      %s80 = sshll.u32 [#allocation7], 4
      %s81 = int_to_ptr.vmem [resolvable:$true] %s80
      %83 = dma.hbm_to_vmem [thread:$0]  %s5, 16, %s81, [#allocation8]
    $region25: #{gma_forward.4} parent=1 // pred_fallthru
      _
    // Predicated region
    $region26: #{gma_forward.4} parent=1 // pred_check
      _
    $region27: #{gma_forward.4} parent=1 // pred_check_branch
      %85 = sbr.rel (0) target = $region29
    $region28: #{gma_forward.4} parent=1 // pred_region
      _
    $region29: #{gma_forward.4} parent=1 // pred_fallthru
      _
    // Predicated region
    $region30: #{gma_forward.4} parent=1 // pred_check
      _
    $region31: #{gma_forward.4} parent=1 // pred_check_branch
      %87 = sbr.rel (0) target = $region33
    $region32: #{gma_forward.4} parent=1 // pred_region
      %s89 = ssub.s32 16, 16
      %90 = vsyncadd [#allocation8], %s89
      %s92 = sshll.u32 [#allocation9], 4
      %s93 = int_to_ptr.vmem [resolvable:$true] %s92
      %95 = dma.hbm_to_vmem [thread:$0]  %s7, 16, %s93, [#allocation8]
    $region33: #{gma_forward.4} parent=1 // pred_fallthru
      _
    // Predicated region
    $region34: #{gma_forward.4} parent=1 // pred_check
      _
    $region35: #{gma_forward.4} parent=1 // pred_check_branch
      %97 = sbr.rel (0) target = $region37
    $region36: #{gma_forward.4} parent=1 // pred_region
      %s99 = ssub.s32 2048, 2048
      %100 = vsyncadd [#allocation11], %s99
      %s101 = sshll.u32 [#allocation10], 4
      %s102 = int_to_ptr.vmem [resolvable:$true] %s101
      %107 = dma.hbm_to_vmem [thread:$0]  %s8, 2048, %s102, [#allocation11], 128, 128, 8
    $region37: #{gma_forward.4} parent=1 // pred_fallthru
      _
    // Predicated region
    $region38: #{gma_forward.4} parent=1 // pred_check
      _
    $region39: #{gma_forward.4} parent=1 // pred_check_branch
      %109 = sbr.rel (0) target = $region41
    $region40: #{gma_forward.4} parent=1 // pred_region
      %s111 = ssub.s32 16, 16
      %112 = vsyncadd [#allocation11], %s111
      %s114 = sshll.u32 [#allocation12], 4
      %s115 = int_to_ptr.vmem [resolvable:$true] %s114
      %117 = dma.hbm_to_vmem [thread:$0]  %s9, 16, %s115, [#allocation11]
    $region41: #{gma_forward.4} parent=1 // pred_fallthru
      _
    // Predicated region
    $region42: #{gma_forward.4} parent=1 // pred_check
      _
    $region43: #{gma_forward.4} parent=1 // pred_check_branch
      %119 = sbr.rel (0) target = $region45
    $region44: #{gma_forward.4} parent=1 // pred_region
      %s121 = ssub.s32 2048, 2048
      %122 = vsyncadd [#allocation14], %s121
      %s123 = sshll.u32 [#allocation13], 4
      %s124 = int_to_ptr.vmem [resolvable:$true] %s123
      %129 = dma.hbm_to_vmem [thread:$0]  %s10, 2048, %s124, [#allocation14], 128, 128, 8
    $region45: #{gma_forward.4} parent=1 // pred_fallthru
      _
    // Predicated region
    $region46: #{gma_forward.4} parent=1 // pred_check
      _
    $region47: #{gma_forward.4} parent=1 // pred_check_branch
      %131 = sbr.rel (0) target = $region49
    $region48: #{gma_forward.4} parent=1 // pred_region
      _
    $region49: #{gma_forward.4} parent=1 // pred_fallthru
      _
    // Predicated region
    $region50: #{gma_forward.4} parent=1 // pred_check
      _
    $region51: #{gma_forward.4} parent=1 // pred_check_branch
      %133 = sbr.rel (0) target = $region53
    $region52: #{gma_forward.4} parent=1 // pred_region
      %s135 = ssub.s32 2048, 2048
      %136 = vsyncadd [#allocation14], %s135
      %s137 = sshll.u32 [#allocation15], 4
      %s138 = int_to_ptr.vmem [resolvable:$true] %s137
      %143 = dma.hbm_to_vmem [thread:$0]  %s12, 2048, %s138, [#allocation14], 128, 128, 8
    $region53: #{gma_forward.4} parent=1 // pred_fallthru
      _
    // Predicated region
    $region54: #{gma_forward.4} parent=1 // pred_check
      _
    $region55: #{gma_forward.4} parent=1 // pred_check_branch
      %145 = sbr.rel (0) target = $region57
    $region56: #{gma_forward.4} parent=1 // pred_region
      _
    $region57: #{gma_forward.4} parent=1 // pred_fallthru
      _
    // Predicated region
    $region58: #{gma_forward.4} parent=1 // pred_check
      _
    $region59: #{gma_forward.4} parent=1 // pred_check_branch
      %147 = sbr.rel (0) target = $region61
    $region60: #{gma_forward.4} parent=1 // pred_region
      %s149 = ssub.s32 1280, 1280
      %150 = vsyncadd [#allocation17], %s149
      %s151 = sshll.u32 [#allocation16], 4
      %s152 = int_to_ptr.vmem [resolvable:$true] %s151
      %157 = dma.hbm_to_vmem [thread:$0]  %s14, 1280, %s152, [#allocation17], 128, 128, 8
    $region61: #{gma_forward.4} parent=1 // pred_fallthru
      _
    // Predicated region
    $region62: #{gma_forward.4} parent=1 // pred_check
      _
    $region63: #{gma_forward.4} parent=1 // pred_check_branch
      %159 = sbr.rel (0) target = $region65
    $region64: #{gma_forward.4} parent=1 // pred_region
      %s161 = ssub.s32 2048, 2048
      %162 = vsyncadd [#allocation17], %s161
      %s163 = sshll.u32 [#allocation18], 4
      %s164 = int_to_ptr.vmem [resolvable:$true] %s163
      %169 = dma.hbm_to_vmem [thread:$0]  %s15, 2048, %s164, [#allocation17], 128, 128, 8
    $region65: #{gma_forward.4} parent=1 // pred_fallthru
      _
    // Predicated region
    $region66: #{gma_forward.4} parent=1 // pred_check
      _
    $region67: #{gma_forward.4} parent=1 // pred_check_branch
      %171 = sbr.rel (0) target = $region69
    $region68: #{gma_forward.4} parent=1 // pred_region
      _
    $region69: #{gma_forward.4} parent=1 // pred_fallthru
      _
    // Predicated region
    $region70: #{gma_forward.4} parent=1 // pred_check
      _
    $region71: #{gma_forward.4} parent=1 // pred_check_branch
      %173 = sbr.rel (0) target = $region73
    $region72: #{gma_forward.4} parent=1 // pred_region
      _
    $region73: #{gma_forward.4} parent=1 // pred_fallthru
      _
    // Predicated region
    $region74: #{gma_forward.4} parent=1 // pred_check
      _
    $region75: #{gma_forward.4} parent=1 // pred_check_branch
      %175 = sbr.rel (0) target = $region77
    $region76: #{gma_forward.4} parent=1 // pred_region
      %s177 = ssub.s32 2048, 2048
      %178 = vsyncadd [#allocation20], %s177
      %s179 = sshll.u32 [#allocation19], 4
      %s180 = int_to_ptr.vmem [resolvable:$true] %s179
      %185 = dma.hbm_to_vmem [thread:$0]  %s18, 2048, %s180, [#allocation20], 128, 128, 8
    $region77: #{gma_forward.4} parent=1 // pred_fallthru
      _
    // Predicated region
    $region78: #{gma_forward.4} parent=1 // pred_check
      _
    $region79: #{gma_forward.4} parent=1 // pred_check_branch
      %187 = sbr.rel (0) target = $region81
    $region80: #{gma_forward.4} parent=1 // pred_region
      _
    $region81: #{gma_forward.4} parent=1 // pred_fallthru
      _
    // Predicated region
    $region82: #{gma_forward.4} parent=1 // pred_check
      _
    $region83: #{gma_forward.4} parent=1 // pred_check_branch
      %189 = sbr.rel (0) target = $region85
    $region84: #{gma_forward.4} parent=1 // pred_region
      %190 = dma.done [#allocation3], 256
    $region85: #{gma_forward.4} parent=1 // pred_fallthru
      _
    // Predicated region
    $region86: #{gma_forward.4} parent=1 // pred_check
      _
    $region87: #{gma_forward.4} parent=1 // pred_check_branch
      %192 = sbr.rel (0) target = $region89
    $region88: #{gma_forward.4} parent=1 // pred_region
      %193 = dma.done [#allocation5], 16
    $region89: #{gma_forward.4} parent=1 // pred_fallthru
      _
    // Predicated region
    $region90: #{gma_forward.4} parent=1 // pred_check
      _
    $region91: #{gma_forward.4} parent=1 // pred_check_branch
      %195 = sbr.rel (0) target = $region93
    $region92: #{gma_forward.4} parent=1 // pred_region
      %196 = dma.done [#allocation5], 2048
    $region93: #{gma_forward.4} parent=1 // pred_fallthru
      _
    // Predicated region
    $region94: #{gma_forward.4} parent=1 // pred_check
      _
    $region95: #{gma_forward.4} parent=1 // pred_check_branch
      %198 = sbr.rel (0) target = $region97
    $region96: #{gma_forward.4} parent=1 // pred_region
      %199 = dma.done [#allocation8], 16
    $region97: #{gma_forward.4} parent=1 // pred_fallthru
      _
    // Predicated region
    $region98: #{gma_forward.4} parent=1 // pred_check
      _
    $region99: #{gma_forward.4} parent=1 // pred_check_branch
      %201 = sbr.rel (0) target = $region101
    $region100: #{gma_forward.4} parent=1 // pred_region
      %202 = dma.done [#allocation8], 16
    $region101: #{gma_forward.4} parent=1 // pred_fallthru
      _
    // Predicated region
    $region102: #{gma_forward.4} parent=1 // pred_check
      _
    $region103: #{gma_forward.4} parent=1 // pred_check_branch
      %204 = sbr.rel (0) target = $region105
    $region104: #{gma_forward.4} parent=1 // pred_region
      %205 = dma.done [#allocation11], 2048
    $region105: #{gma_forward.4} parent=1 // pred_fallthru
      _
    // Predicated region
    $region106: #{gma_forward.4} parent=1 // pred_check
      _
    $region107: #{gma_forward.4} parent=1 // pred_check_branch
      %207 = sbr.rel (0) target = $region109
    $region108: #{gma_forward.4} parent=1 // pred_region
      %208 = dma.done [#allocation11], 16
    $region109: #{gma_forward.4} parent=1 // pred_fallthru
      _
    // Predicated region
    $region110: #{gma_forward.4} parent=1 // pred_check
      _
    $region111: #{gma_forward.4} parent=1 // pred_check_branch
      %210 = sbr.rel (0) target = $region113
    $region112: #{gma_forward.4} parent=1 // pred_region
      %211 = dma.done [#allocation14], 2048
    $region113: #{gma_forward.4} parent=1 // pred_fallthru
      _
    // Predicated region
    $region114: #{gma_forward.4} parent=1 // pred_check
      _
    $region115: #{gma_forward.4} parent=1 // pred_check_branch
      %213 = sbr.rel (0) target = $region117
    $region116: #{gma_forward.4} parent=1 // pred_region
      %214 = dma.done [#allocation14], 2048
    $region117: #{gma_forward.4} parent=1 // pred_fallthru
      _
    // Predicated region
    $region118: #{gma_forward.4} parent=1 // pred_check
      _
    $region119: #{gma_forward.4} parent=1 // pred_check_branch
      %216 = sbr.rel (0) target = $region121
    $region120: #{gma_forward.4} parent=1 // pred_region
      %217 = dma.done [#allocation17], 1280
    $region121: #{gma_forward.4} parent=1 // pred_fallthru
      _
    // Predicated region
    $region122: #{gma_forward.4} parent=1 // pred_check
      _
    $region123: #{gma_forward.4} parent=1 // pred_check_branch
      %219 = sbr.rel (0) target = $region125
    $region124: #{gma_forward.4} parent=1 // pred_region
      %220 = dma.done [#allocation17], 2048
    $region125: #{gma_forward.4} parent=1 // pred_fallthru
      _
    // Predicated region
    $region126: #{gma_forward.4} parent=1 // pred_check
      _
    $region127: #{gma_forward.4} parent=1 // pred_check_branch
      %222 = sbr.rel (0) target = $region129
    $region128: #{gma_forward.4} parent=1 // pred_region
      %223 = dma.done [#allocation20], 2048
    $region129: #{gma_forward.4} parent=1 // pred_fallthru
      _
    %v225 = vld [vmem:[%s0] sm:$0xff]
    %v226 = vld [vmem:[%s0 + $0x8] sm:$0xff]
    %v227 = vld [vmem:[%s0 + $0x10] sm:$0x3f]
    %v228 = vpack.c.bf16 %v226, %v225
    %v229 = vpack.c.bf16 %v227, %v227
    %v230 = vld [vmem:[%s1] sm:$0xff]
    %v231 = vld [vmem:[%s1 + $0x8] sm:$0xff]
    %v232 = vld [vmem:[%s1 + $0x10] sm:$0x3f]
    %v233 = vld [vmem:[#allocation2] sm:$0xff]
    %v234 = vld [vmem:[#allocation2 + $0x8] sm:$0xff]
    %v235 = vpack.c.bf16 %v231, %v230
    %v236 = vpack.c.bf16 %v232, %v232
    %v237 = vpack.c.bf16 %v234, %v233
    %vm238 = vcmask 130048
    %v240 = vsel %vm238, %v235, 0
    %v243 = vsel %vm238, %v236, 0
    %245 = vmatprep.subr.bf16.mxu0 0
    %246 = vmatpush1.bf16.msra.mxu0 %v237
    %247 = vmatprep.subr.bf16.mxu0 0
    %248 = vmatpush1.bf16.msra.mxu0 0
    %249 = vmatprep.subr.bf16.mxu0 0
    %250 = vmatpush1.bf16.msra.mxu0 0
    %251 = vmatprep.subr.bf16.mxu0 0
    %252 = vmatpush1.bf16.msra.mxu0 0
    %253 = vmatprep.subr.bf16.mxu0 0
    %254 = vmatpush1.bf16.msra.mxu0 0
    %255 = vmatprep.subr.bf16.mxu0 0
    %256 = vmatpush1.bf16.msra.mxu0 0
    %257 = vmatprep.subr.bf16.mxu0 0
    %258 = vmatpush1.bf16.msra.mxu0 0
    %259 = vmatprep.subr.bf16.mxu0 0
    %260 = vmatpush1.bf16.msra.mxu0 0
    %261 = vmatprep.subr.bf16.mxu0 0
    %262 = vmatpush1.bf16.msra.mxu0 0
    %263 = vmatprep.subr.bf16.mxu0 0
    %264 = vmatpush1.bf16.msra.mxu0 0
    %265 = vmatprep.subr.bf16.mxu0 0
    %266 = vmatpush1.bf16.msra.mxu0 0
    %267 = vmatprep.subr.bf16.mxu0 0
    %268 = vmatpush1.bf16.msra.mxu0 0
    %269 = vmatprep.subr.bf16.mxu0 0
    %270 = vmatpush1.bf16.msra.mxu0 0
    %271 = vmatprep.subr.bf16.mxu0 0
    %272 = vmatpush1.bf16.msra.mxu0 0
    %273 = vmatprep.subr.bf16.mxu0 0
    %274 = vmatpush1.bf16.msra.mxu0 0
    %275 = vmatprep.subr.bf16.mxu0 0
    %276 = vmatpush1.bf16.msra.mxu0 0
    %277 = vmatprep.mubr.bf16.mxu0 0
    %278 = vmatmul.mubr.bf16.gmra.mrb[0].mxu0 %v240
    %v279 = vpop.f32.mrb[0].mxu0
    %v280 = vadd.f32 0.0, %v279
    %v281 = vpop.f32.mrb[0].mxu0
    %v282 = vpop.f32.mrb[0].mxu0
    %v283 = vadd.f32 0.0, %v282
    %v284 = vpop.f32.mrb[0].mxu0
    %285 = vmatprep.mubr.bf16.mxu0 0
    %286 = vmatmul.mubr.bf16.gmra.mrb[0].mxu0 %v243
    %v287 = vpop.f32.mrb[0].mxu0
    %v288 = vadd.f32 0.0, %v287
    %v289 = vpop.f32.mrb[0].mxu0
    %v290 = vpop.f32.mrb[0].mxu0
    %v291 = vpop.f32.mrb[0].mxu0
    %292 = vdwg.mxu0
    %v293 = vpack.c.bf16 %v283, %v280
    %v294 = vpack.c.bf16 %v288, %v288
    %v295 = vld [vmem:[#allocation4] sm:$0x1]
    %v297 = vlaneseq
    %v298 = vshrl.u32 %v297, 7
    %v299 = vsub.s32 0, %v298
    %v300 = vrot.slane %v295, %v299
    %vm302 = vcmask 179200
    %v304 = vsel %vm302, %v228, 0
    %v307 = vsel %vm302, %v229, 0
    %vm309 = vcmask 1042432
    %v311 = vsel %vm309, %v294, 0
    %313 = vmatprep.subr.bf16.mxu0 0
    %314 = vmatpush1.bf16.msra.mxu0 %v293
    %315 = vmatprep.subr.bf16.mxu0 0
    %316 = vmatpush1.bf16.msra.mxu0 %v311
    %317 = vmatprep.subr.bf16.mxu0 0
    %318 = vmatpush1.bf16.msra.mxu0 0
    %319 = vmatprep.subr.bf16.mxu0 0
    %320 = vmatpush1.bf16.msra.mxu0 0
    %321 = vmatprep.subr.bf16.mxu0 0
    %322 = vmatpush1.bf16.msra.mxu0 0
    %323 = vmatprep.subr.bf16.mxu0 0
    %324 = vmatpush1.bf16.msra.mxu0 0
    %325 = vmatprep.subr.bf16.mxu0 0
    %326 = vmatpush1.bf16.msra.mxu0 0
    %327 = vmatprep.subr.bf16.mxu0 0
    %328 = vmatpush1.bf16.msra.mxu0 0
    %329 = vmatprep.subr.bf16.mxu0 0
    %330 = vmatpush1.bf16.msra.mxu0 0
    %331 = vmatprep.subr.bf16.mxu0 0
    %332 = vmatpush1.bf16.msra.mxu0 0
    %333 = vmatprep.subr.bf16.mxu0 0
    %334 = vmatpush1.bf16.msra.mxu0 0
    %335 = vmatprep.subr.bf16.mxu0 0
    %336 = vmatpush1.bf16.msra.mxu0 0
    %337 = vmatprep.subr.bf16.mxu0 0
    %338 = vmatpush1.bf16.msra.mxu0 0
    %339 = vmatprep.subr.bf16.mxu0 0
    %340 = vmatpush1.bf16.msra.mxu0 0
    %341 = vmatprep.subr.bf16.mxu0 0
    %342 = vmatpush1.bf16.msra.mxu0 0
    %343 = vmatprep.subr.bf16.mxu0 0
    %344 = vmatpush1.bf16.msra.mxu0 0
    %345 = vmatprep.mubr.bf16.mxu0 0
    %346 = vmatmul.mubr.bf16.gmra.mrb[0].mxu0 %v304
    %v347 = vpop.f32.mrb[0].mxu0
    %v348 = vadd.f32 %v300, %v347
    %v349 = vpop.f32.mrb[0].mxu0
    %v350 = vpop.f32.mrb[0].mxu0
    %v351 = vadd.f32 %v300, %v350
    %v352 = vpop.f32.mrb[0].mxu0
    %353 = vmatprep.mubr.bf16.mxu0 0
    %354 = vmatmul.mubr.bf16.gmra.mrb[0].mxu0 %v307
    %v355 = vpop.f32.mrb[0].mxu0
    %v356 = vadd.f32 %v300, %v355
    %v357 = vpop.f32.mrb[0].mxu0
    %v358 = vpop.f32.mrb[0].mxu0
    %v359 = vpop.f32.mrb[0].mxu0
    %360 = vdwg.mxu0
    %v361 = vmax.f32 %v348, 0.0
    %v362 = vmax.f32 %v351, 0.0
    %v363 = vmax.f32 %v356, 0.0
    %v364 = vld [vmem:[#allocation6] sm:$0xff]
    %v365 = vld [vmem:[#allocation6 + $0x8] sm:$0xff]
    %v366 = vld [vmem:[#allocation6 + $0x10] sm:$0xff]
    %v367 = vld [vmem:[#allocation6 + $0x18] sm:$0xff]
    %v368 = vld [vmem:[#allocation6 + $0x20] sm:$0xff]
    %v369 = vld [vmem:[#allocation6 + $0x28] sm:$0xff]
    %v370 = vld [vmem:[#allocation6 + $0x30] sm:$0xff]
    %v371 = vld [vmem:[#allocation6 + $0x38] sm:$0xff]
    %v372 = vld [vmem:[#allocation6 + $0x40] sm:$0xff]
    %v373 = vld [vmem:[#allocation6 + $0x48] sm:$0xff]
    %v374 = vld [vmem:[#allocation6 + $0x50] sm:$0xff]
    %v375 = vld [vmem:[#allocation6 + $0x58] sm:$0xff]
    %v376 = vld [vmem:[#allocation6 + $0x60] sm:$0xff]
    %v377 = vld [vmem:[#allocation6 + $0x68] sm:$0xff]
    %v378 = vld [vmem:[#allocation6 + $0x70] sm:$0xff]
    %v379 = vld [vmem:[#allocation6 + $0x78] sm:$0xff]
    %v380 = vpack.c.bf16 %v362, %v361
    %v381 = vpack.c.bf16 %v363, %v363
    %v382 = vpack.c.bf16 %v365, %v364
    %v383 = vpack.c.bf16 %v367, %v366
    %v384 = vpack.c.bf16 %v369, %v368
    %v385 = vpack.c.bf16 %v371, %v370
    %v386 = vpack.c.bf16 %v373, %v372
    %v387 = vpack.c.bf16 %v375, %v374
    %v388 = vpack.c.bf16 %v377, %v376
    %v389 = vpack.c.bf16 %v379, %v378
    %390 = vmatprep.subr.bf16.mxu0 0
    %391 = vmatpush1.bf16.msra.mxu0 %v382
    %392 = vmatprep.subr.bf16.mxu0 0
    %393 = vmatpush1.bf16.msra.mxu0 %v383
    %394 = vmatprep.subr.bf16.mxu0 0
    %395 = vmatpush1.bf16.msra.mxu0 %v384
    %396 = vmatprep.subr.bf16.mxu0 0
    %397 = vmatpush1.bf16.msra.mxu0 %v385
    %398 = vmatprep.subr.bf16.mxu0 0
    %399 = vmatpush1.bf16.msra.mxu0 %v386
    %400 = vmatprep.subr.bf16.mxu0 0
    %401 = vmatpush1.bf16.msra.mxu0 %v387
    %402 = vmatprep.subr.bf16.mxu0 0
    %403 = vmatpush1.bf16.msra.mxu0 %v388
    %404 = vmatprep.subr.bf16.mxu0 0
    %405 = vmatpush1.bf16.msra.mxu0 %v389
    %406 = vmatprep.subr.bf16.mxu0 0
    %407 = vmatpush1.bf16.msra.mxu0 0
    %408 = vmatprep.subr.bf16.mxu0 0
    %409 = vmatpush1.bf16.msra.mxu0 0
    %410 = vmatprep.subr.bf16.mxu0 0
    %411 = vmatpush1.bf16.msra.mxu0 0
    %412 = vmatprep.subr.bf16.mxu0 0
    %413 = vmatpush1.bf16.msra.mxu0 0
    %414 = vmatprep.subr.bf16.mxu0 0
    %415 = vmatpush1.bf16.msra.mxu0 0
    %416 = vmatprep.subr.bf16.mxu0 0
    %417 = vmatpush1.bf16.msra.mxu0 0
    %418 = vmatprep.subr.bf16.mxu0 0
    %419 = vmatpush1.bf16.msra.mxu0 0
    %420 = vmatprep.subr.bf16.mxu0 0
    %421 = vmatpush1.bf16.msra.mxu0 0
    %422 = vmatprep.mubr.bf16.mxu0 0
    %423 = vmatmul.mubr.bf16.gmra.mrb[0].mxu0 %v380
    %v424 = vpop.f32.mrb[0].mxu0
    %v425 = vadd.f32 0.0, %v424
    %v426 = vpop.f32.mrb[0].mxu0
    %v427 = vpop.f32.mrb[0].mxu0
    %v428 = vadd.f32 0.0, %v427
    %v429 = vpop.f32.mrb[0].mxu0
    %430 = vmatprep.mubr.bf16.mxu0 0
    %431 = vmatmul.mubr.bf16.gmra.mrb[0].mxu0 %v381
    %v432 = vpop.f32.mrb[0].mxu0
    %v433 = vadd.f32 0.0, %v432
    %v434 = vpop.f32.mrb[0].mxu0
    %v435 = vpop.f32.mrb[0].mxu0
    %v436 = vpop.f32.mrb[0].mxu0
    %437 = vdwg.mxu0
    %v438 = vpack.c.bf16 %v428, %v425
    %v439 = vpack.c.bf16 %v433, %v433
    %v440 = vld [vmem:[#allocation7] sm:$0x1]
    %v442 = vlaneseq
    %v443 = vshrl.u32 %v442, 7
    %v444 = vsub.s32 0, %v443
    %v445 = vrot.slane %v440, %v444
    %v448 = vsel %vm309, %v439, 0
    %450 = vmatprep.subr.bf16.mxu0 0
    %451 = vmatpush1.bf16.msra.mxu0 %v438
    %452 = vmatprep.subr.bf16.mxu0 0
    %453 = vmatpush1.bf16.msra.mxu0 %v448
    %454 = vmatprep.subr.bf16.mxu0 0
    %455 = vmatpush1.bf16.msra.mxu0 0
    %456 = vmatprep.subr.bf16.mxu0 0
    %457 = vmatpush1.bf16.msra.mxu0 0
    %458 = vmatprep.subr.bf16.mxu0 0
    %459 = vmatpush1.bf16.msra.mxu0 0
    %460 = vmatprep.subr.bf16.mxu0 0
    %461 = vmatpush1.bf16.msra.mxu0 0
    %462 = vmatprep.subr.bf16.mxu0 0
    %463 = vmatpush1.bf16.msra.mxu0 0
    %464 = vmatprep.subr.bf16.mxu0 0
    %465 = vmatpush1.bf16.msra.mxu0 0
    %466 = vmatprep.subr.bf16.mxu0 0
    %467 = vmatpush1.bf16.msra.mxu0 0
    %468 = vmatprep.subr.bf16.mxu0 0
    %469 = vmatpush1.bf16.msra.mxu0 0
    %470 = vmatprep.subr.bf16.mxu0 0
    %471 = vmatpush1.bf16.msra.mxu0 0
    %472 = vmatprep.subr.bf16.mxu0 0
    %473 = vmatpush1.bf16.msra.mxu0 0
    %474 = vmatprep.subr.bf16.mxu0 0
    %475 = vmatpush1.bf16.msra.mxu0 0
    %476 = vmatprep.subr.bf16.mxu0 0
    %477 = vmatpush1.bf16.msra.mxu0 0
    %478 = vmatprep.subr.bf16.mxu0 0
    %479 = vmatpush1.bf16.msra.mxu0 0
    %480 = vmatprep.subr.bf16.mxu0 0
    %481 = vmatpush1.bf16.msra.mxu0 0
    %482 = vmatprep.mubr.bf16.mxu0 0
    %483 = vmatmul.mubr.bf16.gmra.mrb[0].mxu0 %v304
    %v484 = vpop.f32.mrb[0].mxu0
    %v485 = vadd.f32 %v445, %v484
    %v486 = vpop.f32.mrb[0].mxu0
    %v487 = vpop.f32.mrb[0].mxu0
    %v488 = vadd.f32 %v445, %v487
    %v489 = vpop.f32.mrb[0].mxu0
    %490 = vmatprep.mubr.bf16.mxu0 0
    %491 = vmatmul.mubr.bf16.gmra.mrb[0].mxu0 %v307
    %v492 = vpop.f32.mrb[0].mxu0
    %v493 = vadd.f32 %v445, %v492
    %v494 = vpop.f32.mrb[0].mxu0
    %v495 = vpop.f32.mrb[0].mxu0
    %v496 = vpop.f32.mrb[0].mxu0
    %497 = vdwg.mxu0
    %v498 = vmax.f32 %v485, 0.0
    %v499 = vmax.f32 %v488, 0.0
    %v500 = vmax.f32 %v493, 0.0
    %v501 = vld [vmem:[%s6] sm:$0xff]
    %v502 = vld [vmem:[%s6 + $0x8] sm:$0xff]
    %v503 = vld [vmem:[%s6 + $0x10] sm:$0xff]
    %v504 = vld [vmem:[%s6 + $0x18] sm:$0xff]
    %v505 = vld [vmem:[%s6 + $0x20] sm:$0xff]
    %v506 = vld [vmem:[%s6 + $0x28] sm:$0xff]
    %v507 = vld [vmem:[%s6 + $0x30] sm:$0xff]
    %v508 = vld [vmem:[%s6 + $0x38] sm:$0xff]
    %v509 = vld [vmem:[%s6 + $0x40] sm:$0xff]
    %v510 = vld [vmem:[%s6 + $0x48] sm:$0xff]
    %v511 = vld [vmem:[%s6 + $0x50] sm:$0xff]
    %v512 = vld [vmem:[%s6 + $0x58] sm:$0xff]
    %v513 = vld [vmem:[%s6 + $0x60] sm:$0xff]
    %v514 = vld [vmem:[%s6 + $0x68] sm:$0xff]
    %v515 = vld [vmem:[%s6 + $0x70] sm:$0xff]
    %v516 = vld [vmem:[%s6 + $0x78] sm:$0xff]
    %v517 = vpack.c.bf16 %v499, %v498
    %v518 = vpack.c.bf16 %v500, %v500
    %v519 = vpack.c.bf16 %v502, %v501
    %v520 = vpack.c.bf16 %v504, %v503
    %v521 = vpack.c.bf16 %v506, %v505
    %v522 = vpack.c.bf16 %v508, %v507
    %v523 = vpack.c.bf16 %v510, %v509
    %v524 = vpack.c.bf16 %v512, %v511
    %v525 = vpack.c.bf16 %v514, %v513
    %v526 = vpack.c.bf16 %v516, %v515
    %527 = vmatprep.subr.bf16.mxu0 0
    %528 = vmatpush1.bf16.msra.mxu0 %v519
    %529 = vmatprep.subr.bf16.mxu0 0
    %530 = vmatpush1.bf16.msra.mxu0 %v520
    %531 = vmatprep.subr.bf16.mxu0 0
    %532 = vmatpush1.bf16.msra.mxu0 %v521
    %533 = vmatprep.subr.bf16.mxu0 0
    %534 = vmatpush1.bf16.msra.mxu0 %v522
    %535 = vmatprep.subr.bf16.mxu0 0
    %536 = vmatpush1.bf16.msra.mxu0 %v523
    %537 = vmatprep.subr.bf16.mxu0 0
    %538 = vmatpush1.bf16.msra.mxu0 %v524
    %539 = vmatprep.subr.bf16.mxu0 0
    %540 = vmatpush1.bf16.msra.mxu0 %v525
    %541 = vmatprep.subr.bf16.mxu0 0
    %542 = vmatpush1.bf16.msra.mxu0 %v526
    %543 = vmatprep.subr.bf16.mxu0 0
    %544 = vmatpush1.bf16.msra.mxu0 0
    %545 = vmatprep.subr.bf16.mxu0 0
    %546 = vmatpush1.bf16.msra.mxu0 0
    %547 = vmatprep.subr.bf16.mxu0 0
    %548 = vmatpush1.bf16.msra.mxu0 0
    %549 = vmatprep.subr.bf16.mxu0 0
    %550 = vmatpush1.bf16.msra.mxu0 0
    %551 = vmatprep.subr.bf16.mxu0 0
    %552 = vmatpush1.bf16.msra.mxu0 0
    %553 = vmatprep.subr.bf16.mxu0 0
    %554 = vmatpush1.bf16.msra.mxu0 0
    %555 = vmatprep.subr.bf16.mxu0 0
    %556 = vmatpush1.bf16.msra.mxu0 0
    %557 = vmatprep.subr.bf16.mxu0 0
    %558 = vmatpush1.bf16.msra.mxu0 0
    %559 = vmatprep.mubr.bf16.mxu0 0
    %560 = vmatmul.mubr.bf16.gmra.mrb[0].mxu0 %v517
    %v561 = vpop.f32.mrb[0].mxu0
    %v562 = vadd.f32 0.0, %v561
    %v563 = vpop.f32.mrb[0].mxu0
    %v564 = vpop.f32.mrb[0].mxu0
    %v565 = vadd.f32 0.0, %v564
    %v566 = vpop.f32.mrb[0].mxu0
    %567 = vmatprep.mubr.bf16.mxu0 0
    %568 = vmatmul.mubr.bf16.gmra.mrb[0].mxu0 %v518
    %v569 = vpop.f32.mrb[0].mxu0
    %v570 = vadd.f32 0.0, %v569
    %v571 = vpop.f32.mrb[0].mxu0
    %v572 = vpop.f32.mrb[0].mxu0
    %v573 = vpop.f32.mrb[0].mxu0
    %574 = vdwg.mxu0
    %v575 = vpack.c.bf16 %v565, %v562
    %v576 = vpack.c.bf16 %v570, %v570
    %v577 = vld [vmem:[#allocation9] sm:$0x1]
    %v579 = vlaneseq
    %v580 = vshrl.u32 %v579, 7
    %v581 = vsub.s32 0, %v580
    %v582 = vrot.slane %v577, %v581
    %v585 = vsel %vm309, %v576, 0
    %587 = vmatprep.subr.bf16.mxu0 0
    %588 = vmatpush1.bf16.msra.mxu0 %v575
    %589 = vmatprep.subr.bf16.mxu0 0
    %590 = vmatpush1.bf16.msra.mxu0 %v585
    %591 = vmatprep.subr.bf16.mxu0 0
    %592 = vmatpush1.bf16.msra.mxu0 0
    %593 = vmatprep.subr.bf16.mxu0 0
    %594 = vmatpush1.bf16.msra.mxu0 0
    %595 = vmatprep.subr.bf16.mxu0 0
    %596 = vmatpush1.bf16.msra.mxu0 0
    %597 = vmatprep.subr.bf16.mxu0 0
    %598 = vmatpush1.bf16.msra.mxu0 0
    %599 = vmatprep.subr.bf16.mxu0 0
    %600 = vmatpush1.bf16.msra.mxu0 0
    %601 = vmatprep.subr.bf16.mxu0 0
    %602 = vmatpush1.bf16.msra.mxu0 0
    %603 = vmatprep.subr.bf16.mxu0 0
    %604 = vmatpush1.bf16.msra.mxu0 0
    %605 = vmatprep.subr.bf16.mxu0 0
    %606 = vmatpush1.bf16.msra.mxu0 0
    %607 = vmatprep.subr.bf16.mxu0 0
    %608 = vmatpush1.bf16.msra.mxu0 0
    %609 = vmatprep.subr.bf16.mxu0 0
    %610 = vmatpush1.bf16.msra.mxu0 0
    %611 = vmatprep.subr.bf16.mxu0 0
    %612 = vmatpush1.bf16.msra.mxu0 0
    %613 = vmatprep.subr.bf16.mxu0 0
    %614 = vmatpush1.bf16.msra.mxu0 0
    %615 = vmatprep.subr.bf16.mxu0 0
    %616 = vmatpush1.bf16.msra.mxu0 0
    %617 = vmatprep.subr.bf16.mxu0 0
    %618 = vmatpush1.bf16.msra.mxu0 0
    %619 = vmatprep.mubr.bf16.mxu0 0
    %620 = vmatmul.mubr.bf16.gmra.mrb[0].mxu0 %v304
    %v621 = vpop.f32.mrb[0].mxu0
    %v622 = vadd.f32 %v582, %v621
    %v623 = vpop.f32.mrb[0].mxu0
    %v624 = vpop.f32.mrb[0].mxu0
    %v625 = vadd.f32 %v582, %v624
    %v626 = vpop.f32.mrb[0].mxu0
    %627 = vmatprep.mubr.bf16.mxu0 0
    %628 = vmatmul.mubr.bf16.gmra.mrb[0].mxu0 %v307
    %v629 = vpop.f32.mrb[0].mxu0
    %v630 = vadd.f32 %v582, %v629
    %v631 = vpop.f32.mrb[0].mxu0
    %v632 = vpop.f32.mrb[0].mxu0
    %v633 = vpop.f32.mrb[0].mxu0
    %634 = vdwg.mxu0
    %v635 = vmax.f32 %v622, 0.0
    %v636 = vmax.f32 %v625, 0.0
    %v637 = vmax.f32 %v630, 0.0
    %v638 = vld [vmem:[#allocation10] sm:$0xff]
    %v639 = vld [vmem:[#allocation10 + $0x8] sm:$0xff]
    %v640 = vld [vmem:[#allocation10 + $0x10] sm:$0xff]
    %v641 = vld [vmem:[#allocation10 + $0x18] sm:$0xff]
    %v642 = vld [vmem:[#allocation10 + $0x20] sm:$0xff]
    %v643 = vld [vmem:[#allocation10 + $0x28] sm:$0xff]
    %v644 = vld [vmem:[#allocation10 + $0x30] sm:$0xff]
    %v645 = vld [vmem:[#allocation10 + $0x38] sm:$0xff]
    %v646 = vld [vmem:[#allocation10 + $0x40] sm:$0xff]
    %v647 = vld [vmem:[#allocation10 + $0x48] sm:$0xff]
    %v648 = vld [vmem:[#allocation10 + $0x50] sm:$0xff]
    %v649 = vld [vmem:[#allocation10 + $0x58] sm:$0xff]
    %v650 = vld [vmem:[#allocation10 + $0x60] sm:$0xff]
    %v651 = vld [vmem:[#allocation10 + $0x68] sm:$0xff]
    %v652 = vld [vmem:[#allocation10 + $0x70] sm:$0xff]
    %v653 = vld [vmem:[#allocation10 + $0x78] sm:$0xff]
    %v654 = vpack.c.bf16 %v636, %v635
    %v655 = vpack.c.bf16 %v637, %v637
    %v656 = vpack.c.bf16 %v639, %v638
    %v657 = vpack.c.bf16 %v641, %v640
    %v658 = vpack.c.bf16 %v643, %v642
    %v659 = vpack.c.bf16 %v645, %v644
    %v660 = vpack.c.bf16 %v647, %v646
    %v661 = vpack.c.bf16 %v649, %v648
    %v662 = vpack.c.bf16 %v651, %v650
    %v663 = vpack.c.bf16 %v653, %v652
    %v664 = vld [vmem:[#allocation12] sm:$0x1]
    %v666 = vlaneseq
    %v667 = vshrl.u32 %v666, 7
    %v668 = vsub.s32 0, %v667
    %v669 = vrot.slane %v664, %v668
    %671 = vmatprep.subr.bf16.mxu0 0
    %672 = vmatpush1.bf16.msra.mxu0 %v656
    %673 = vmatprep.subr.bf16.mxu0 0
    %674 = vmatpush1.bf16.msra.mxu0 %v657
    %675 = vmatprep.subr.bf16.mxu0 0
    %676 = vmatpush1.bf16.msra.mxu0 %v658
    %677 = vmatprep.subr.bf16.mxu0 0
    %678 = vmatpush1.bf16.msra.mxu0 %v659
    %679 = vmatprep.subr.bf16.mxu0 0
    %680 = vmatpush1.bf16.msra.mxu0 %v660
    %681 = vmatprep.subr.bf16.mxu0 0
    %682 = vmatpush1.bf16.msra.mxu0 %v661
    %683 = vmatprep.subr.bf16.mxu0 0
    %684 = vmatpush1.bf16.msra.mxu0 %v662
    %685 = vmatprep.subr.bf16.mxu0 0
    %686 = vmatpush1.bf16.msra.mxu0 %v663
    %687 = vmatprep.subr.bf16.mxu0 0
    %688 = vmatpush1.bf16.msra.mxu0 0
    %689 = vmatprep.subr.bf16.mxu0 0
    %690 = vmatpush1.bf16.msra.mxu0 0
    %691 = vmatprep.subr.bf16.mxu0 0
    %692 = vmatpush1.bf16.msra.mxu0 0
    %693 = vmatprep.subr.bf16.mxu0 0
    %694 = vmatpush1.bf16.msra.mxu0 0
    %695 = vmatprep.subr.bf16.mxu0 0
    %696 = vmatpush1.bf16.msra.mxu0 0
    %697 = vmatprep.subr.bf16.mxu0 0
    %698 = vmatpush1.bf16.msra.mxu0 0
    %699 = vmatprep.subr.bf16.mxu0 0
    %700 = vmatpush1.bf16.msra.mxu0 0
    %701 = vmatprep.subr.bf16.mxu0 0
    %702 = vmatpush1.bf16.msra.mxu0 0
    %703 = vmatprep.mubr.bf16.mxu0 0
    %704 = vmatmul.mubr.bf16.gmra.mrb[0].mxu0 %v654
    %v705 = vpop.f32.mrb[0].mxu0
    %v706 = vadd.f32 %v669, %v705
    %v707 = vpop.f32.mrb[0].mxu0
    %v708 = vpop.f32.mrb[0].mxu0
    %v709 = vadd.f32 %v669, %v708
    %v710 = vpop.f32.mrb[0].mxu0
    %711 = vmatprep.mubr.bf16.mxu0 0
    %712 = vmatmul.mubr.bf16.gmra.mrb[0].mxu0 %v655
    %v713 = vpop.f32.mrb[0].mxu0
    %v714 = vadd.f32 %v669, %v713
    %v715 = vpop.f32.mrb[0].mxu0
    %v716 = vpop.f32.mrb[0].mxu0
    %v717 = vpop.f32.mrb[0].mxu0
    %718 = vdwg.mxu0
    %v719 = vld [vmem:[#allocation13] sm:$0xff]
    %v720 = vld [vmem:[#allocation13 + $0x8] sm:$0xff]
    %v721 = vld [vmem:[#allocation13 + $0x10] sm:$0xff]
    %v722 = vld [vmem:[#allocation13 + $0x18] sm:$0xff]
    %v723 = vld [vmem:[#allocation13 + $0x20] sm:$0xff]
    %v724 = vld [vmem:[#allocation13 + $0x28] sm:$0xff]
    %v725 = vld [vmem:[#allocation13 + $0x30] sm:$0xff]
    %v726 = vld [vmem:[#allocation13 + $0x38] sm:$0xff]
    %v727 = vld [vmem:[#allocation13 + $0x40] sm:$0xff]
    %v728 = vld [vmem:[#allocation13 + $0x48] sm:$0xff]
    %v729 = vld [vmem:[#allocation13 + $0x50] sm:$0xff]
    %v730 = vld [vmem:[#allocation13 + $0x58] sm:$0xff]
    %v731 = vld [vmem:[#allocation13 + $0x60] sm:$0xff]
    %v732 = vld [vmem:[#allocation13 + $0x68] sm:$0xff]
    %v733 = vld [vmem:[#allocation13 + $0x70] sm:$0xff]
    %v734 = vld [vmem:[#allocation13 + $0x78] sm:$0xff]
    %v735 = vpack.c.bf16 %v709, %v706
    %v736 = vpack.c.bf16 %v714, %v714
    %v737 = vpack.c.bf16 %v720, %v719
    %v738 = vpack.c.bf16 %v722, %v721
    %v739 = vpack.c.bf16 %v724, %v723
    %v740 = vpack.c.bf16 %v726, %v725
    %v741 = vpack.c.bf16 %v728, %v727
    %v742 = vpack.c.bf16 %v730, %v729
    %v743 = vpack.c.bf16 %v732, %v731
    %v744 = vpack.c.bf16 %v734, %v733
    %745 = vmatprep.subr.bf16.mxu0 0
    %746 = vmatpush1.bf16.msra.mxu0 %v737
    %747 = vmatprep.subr.bf16.mxu0 0
    %748 = vmatpush1.bf16.msra.mxu0 %v738
    %749 = vmatprep.subr.bf16.mxu0 0
    %750 = vmatpush1.bf16.msra.mxu0 %v739
    %751 = vmatprep.subr.bf16.mxu0 0
    %752 = vmatpush1.bf16.msra.mxu0 %v740
    %753 = vmatprep.subr.bf16.mxu0 0
    %754 = vmatpush1.bf16.msra.mxu0 %v741
    %755 = vmatprep.subr.bf16.mxu0 0
    %756 = vmatpush1.bf16.msra.mxu0 %v742
    %757 = vmatprep.subr.bf16.mxu0 0
    %758 = vmatpush1.bf16.msra.mxu0 %v743
    %759 = vmatprep.subr.bf16.mxu0 0
    %760 = vmatpush1.bf16.msra.mxu0 %v744
    %761 = vmatprep.subr.bf16.mxu0 0
    %762 = vmatpush1.bf16.msra.mxu0 0
    %763 = vmatprep.subr.bf16.mxu0 0
    %764 = vmatpush1.bf16.msra.mxu0 0
    %765 = vmatprep.subr.bf16.mxu0 0
    %766 = vmatpush1.bf16.msra.mxu0 0
    %767 = vmatprep.subr.bf16.mxu0 0
    %768 = vmatpush1.bf16.msra.mxu0 0
    %769 = vmatprep.subr.bf16.mxu0 0
    %770 = vmatpush1.bf16.msra.mxu0 0
    %771 = vmatprep.subr.bf16.mxu0 0
    %772 = vmatpush1.bf16.msra.mxu0 0
    %773 = vmatprep.subr.bf16.mxu0 0
    %774 = vmatpush1.bf16.msra.mxu0 0
    %775 = vmatprep.subr.bf16.mxu0 0
    %776 = vmatpush1.bf16.msra.mxu0 0
    %777 = vmatprep.mubr.bf16.mxu0 0
    %778 = vmatmul.mubr.bf16.gmra.mrb[0].mxu0 %v735
    %v779 = vpop.f32.mrb[0].mxu0
    %v780 = vadd.f32 0.0, %v779
    %v781 = vpop.f32.mrb[0].mxu0
    %v782 = vpop.f32.mrb[0].mxu0
    %v783 = vadd.f32 0.0, %v782
    %v784 = vpop.f32.mrb[0].mxu0
    %785 = vmatprep.mubr.bf16.mxu0 0
    %786 = vmatmul.mubr.bf16.gmra.mrb[0].mxu0 %v736
    %v787 = vpop.f32.mrb[0].mxu0
    %v788 = vadd.f32 0.0, %v787
    %v789 = vpop.f32.mrb[0].mxu0
    %v790 = vpop.f32.mrb[0].mxu0
    %v791 = vpop.f32.mrb[0].mxu0
    %792 = vdwg.mxu0
    %v793 = vpack.c.bf16 %v783, %v780
    %v794 = vpack.c.bf16 %v788, %v788
    %v795 = vld [vmem:[%s11] sm:$0x1]
    %v797 = vlaneseq
    %v798 = vshrl.u32 %v797, 7
    %v799 = vsub.s32 0, %v798
    %v800 = vrot.slane %v795, %v799
    %v803 = vsel %vm309, %v794, 0
    %805 = vmatprep.subr.bf16.mxu0 0
    %806 = vmatpush1.bf16.msra.mxu0 %v793
    %807 = vmatprep.subr.bf16.mxu0 0
    %808 = vmatpush1.bf16.msra.mxu0 %v803
    %809 = vmatprep.subr.bf16.mxu0 0
    %810 = vmatpush1.bf16.msra.mxu0 0
    %811 = vmatprep.subr.bf16.mxu0 0
    %812 = vmatpush1.bf16.msra.mxu0 0
    %813 = vmatprep.subr.bf16.mxu0 0
    %814 = vmatpush1.bf16.msra.mxu0 0
    %815 = vmatprep.subr.bf16.mxu0 0
    %816 = vmatpush1.bf16.msra.mxu0 0
    %817 = vmatprep.subr.bf16.mxu0 0
    %818 = vmatpush1.bf16.msra.mxu0 0
    %819 = vmatprep.subr.bf16.mxu0 0
    %820 = vmatpush1.bf16.msra.mxu0 0
    %821 = vmatprep.subr.bf16.mxu0 0
    %822 = vmatpush1.bf16.msra.mxu0 0
    %823 = vmatprep.subr.bf16.mxu0 0
    %824 = vmatpush1.bf16.msra.mxu0 0
    %825 = vmatprep.subr.bf16.mxu0 0
    %826 = vmatpush1.bf16.msra.mxu0 0
    %827 = vmatprep.subr.bf16.mxu0 0
    %828 = vmatpush1.bf16.msra.mxu0 0
    %829 = vmatprep.subr.bf16.mxu0 0
    %830 = vmatpush1.bf16.msra.mxu0 0
    %831 = vmatprep.subr.bf16.mxu0 0
    %832 = vmatpush1.bf16.msra.mxu0 0
    %833 = vmatprep.subr.bf16.mxu0 0
    %834 = vmatpush1.bf16.msra.mxu0 0
    %835 = vmatprep.subr.bf16.mxu0 0
    %836 = vmatpush1.bf16.msra.mxu0 0
    %837 = vmatprep.mubr.bf16.mxu0 0
    %838 = vmatmul.mubr.bf16.gmra.mrb[0].mxu0 %v304
    %v839 = vpop.f32.mrb[0].mxu0
    %v840 = vadd.f32 %v800, %v839
    %v841 = vpop.f32.mrb[0].mxu0
    %v842 = vpop.f32.mrb[0].mxu0
    %v843 = vadd.f32 %v800, %v842
    %v844 = vpop.f32.mrb[0].mxu0
    %845 = vmatprep.mubr.bf16.mxu0 0
    %846 = vmatmul.mubr.bf16.gmra.mrb[0].mxu0 %v307
    %v847 = vpop.f32.mrb[0].mxu0
    %v848 = vadd.f32 %v800, %v847
    %v849 = vpop.f32.mrb[0].mxu0
    %v850 = vpop.f32.mrb[0].mxu0
    %v851 = vpop.f32.mrb[0].mxu0
    %852 = vdwg.mxu0
    %853 = vst [vmem:[%s20] sm:$0xff] %v840
    %854 = vst [vmem:[%s20 + $0x8] sm:$0xff] %v843
    %855 = vst [vmem:[%s20 + $0x10] sm:$0x3f] %v848
    %v856 = vld [vmem:[#allocation15] sm:$0xff]
    %v857 = vld [vmem:[#allocation15 + $0x8] sm:$0xff]
    %v858 = vld [vmem:[#allocation15 + $0x10] sm:$0xff]
    %v859 = vld [vmem:[#allocation15 + $0x18] sm:$0xff]
    %v860 = vld [vmem:[#allocation15 + $0x20] sm:$0xff]
    %v861 = vld [vmem:[#allocation15 + $0x28] sm:$0xff]
    %v862 = vld [vmem:[#allocation15 + $0x30] sm:$0xff]
    %v863 = vld [vmem:[#allocation15 + $0x38] sm:$0xff]
    %v864 = vld [vmem:[#allocation15 + $0x40] sm:$0xff]
    %v865 = vld [vmem:[#allocation15 + $0x48] sm:$0xff]
    %v866 = vld [vmem:[#allocation15 + $0x50] sm:$0xff]
    %v867 = vld [vmem:[#allocation15 + $0x58] sm:$0xff]
    %v868 = vld [vmem:[#allocation15 + $0x60] sm:$0xff]
    %v869 = vld [vmem:[#allocation15 + $0x68] sm:$0xff]
    %v870 = vld [vmem:[#allocation15 + $0x70] sm:$0xff]
    %v871 = vld [vmem:[#allocation15 + $0x78] sm:$0xff]
    %v872 = vpack.c.bf16 %v857, %v856
    %v873 = vpack.c.bf16 %v859, %v858
    %v874 = vpack.c.bf16 %v861, %v860
    %v875 = vpack.c.bf16 %v863, %v862
    %v876 = vpack.c.bf16 %v865, %v864
    %v877 = vpack.c.bf16 %v867, %v866
    %v878 = vpack.c.bf16 %v869, %v868
    %v879 = vpack.c.bf16 %v871, %v870
    %880 = vmatprep.subr.bf16.mxu0 0
    %881 = vmatpush1.bf16.msra.mxu0 %v872
    %882 = vmatprep.subr.bf16.mxu0 0
    %883 = vmatpush1.bf16.msra.mxu0 %v873
    %884 = vmatprep.subr.bf16.mxu0 0
    %885 = vmatpush1.bf16.msra.mxu0 %v874
    %886 = vmatprep.subr.bf16.mxu0 0
    %887 = vmatpush1.bf16.msra.mxu0 %v875
    %888 = vmatprep.subr.bf16.mxu0 0
    %889 = vmatpush1.bf16.msra.mxu0 %v876
    %890 = vmatprep.subr.bf16.mxu0 0
    %891 = vmatpush1.bf16.msra.mxu0 %v877
    %892 = vmatprep.subr.bf16.mxu0 0
    %893 = vmatpush1.bf16.msra.mxu0 %v878
    %894 = vmatprep.subr.bf16.mxu0 0
    %895 = vmatpush1.bf16.msra.mxu0 %v879
    %896 = vmatprep.subr.bf16.mxu0 0
    %897 = vmatpush1.bf16.msra.mxu0 0
    %898 = vmatprep.subr.bf16.mxu0 0
    %899 = vmatpush1.bf16.msra.mxu0 0
    %900 = vmatprep.subr.bf16.mxu0 0
    %901 = vmatpush1.bf16.msra.mxu0 0
    %902 = vmatprep.subr.bf16.mxu0 0
    %903 = vmatpush1.bf16.msra.mxu0 0
    %904 = vmatprep.subr.bf16.mxu0 0
    %905 = vmatpush1.bf16.msra.mxu0 0
    %906 = vmatprep.subr.bf16.mxu0 0
    %907 = vmatpush1.bf16.msra.mxu0 0
    %908 = vmatprep.subr.bf16.mxu0 0
    %909 = vmatpush1.bf16.msra.mxu0 0
    %910 = vmatprep.subr.bf16.mxu0 0
    %911 = vmatpush1.bf16.msra.mxu0 0
    %912 = vmatprep.mubr.bf16.mxu0 0
    %913 = vmatmul.mubr.bf16.gmra.mrb[0].mxu0 %v735
    %v914 = vpop.f32.mrb[0].mxu0
    %v915 = vadd.f32 0.0, %v914
    %v916 = vpop.f32.mrb[0].mxu0
    %v917 = vpop.f32.mrb[0].mxu0
    %v918 = vadd.f32 0.0, %v917
    %v919 = vpop.f32.mrb[0].mxu0
    %920 = vmatprep.mubr.bf16.mxu0 0
    %921 = vmatmul.mubr.bf16.gmra.mrb[0].mxu0 %v736
    %v922 = vpop.f32.mrb[0].mxu0
    %v923 = vadd.f32 0.0, %v922
    %v924 = vpop.f32.mrb[0].mxu0
    %v925 = vpop.f32.mrb[0].mxu0
    %v926 = vpop.f32.mrb[0].mxu0
    %927 = vdwg.mxu0
    %v928 = vpack.c.bf16 %v918, %v915
    %v929 = vpack.c.bf16 %v923, %v923
    %v930 = vld [vmem:[%s13] sm:$0x1]
    %v932 = vlaneseq
    %v933 = vshrl.u32 %v932, 7
    %v934 = vsub.s32 0, %v933
    %v935 = vrot.slane %v930, %v934
    %v938 = vsel %vm309, %v929, 0
    %940 = vmatprep.subr.bf16.mxu0 0
    %941 = vmatpush1.bf16.msra.mxu0 %v928
    %942 = vmatprep.subr.bf16.mxu0 0
    %943 = vmatpush1.bf16.msra.mxu0 %v938
    %944 = vmatprep.subr.bf16.mxu0 0
    %945 = vmatpush1.bf16.msra.mxu0 0
    %946 = vmatprep.subr.bf16.mxu0 0
    %947 = vmatpush1.bf16.msra.mxu0 0
    %948 = vmatprep.subr.bf16.mxu0 0
    %949 = vmatpush1.bf16.msra.mxu0 0
    %950 = vmatprep.subr.bf16.mxu0 0
    %951 = vmatpush1.bf16.msra.mxu0 0
    %952 = vmatprep.subr.bf16.mxu0 0
    %953 = vmatpush1.bf16.msra.mxu0 0
    %954 = vmatprep.subr.bf16.mxu0 0
    %955 = vmatpush1.bf16.msra.mxu0 0
    %956 = vmatprep.subr.bf16.mxu0 0
    %957 = vmatpush1.bf16.msra.mxu0 0
    %958 = vmatprep.subr.bf16.mxu0 0
    %959 = vmatpush1.bf16.msra.mxu0 0
    %960 = vmatprep.subr.bf16.mxu0 0
    %961 = vmatpush1.bf16.msra.mxu0 0
    %962 = vmatprep.subr.bf16.mxu0 0
    %963 = vmatpush1.bf16.msra.mxu0 0
    %964 = vmatprep.subr.bf16.mxu0 0
    %965 = vmatpush1.bf16.msra.mxu0 0
    %966 = vmatprep.subr.bf16.mxu0 0
    %967 = vmatpush1.bf16.msra.mxu0 0
    %968 = vmatprep.subr.bf16.mxu0 0
    %969 = vmatpush1.bf16.msra.mxu0 0
    %970 = vmatprep.subr.bf16.mxu0 0
    %971 = vmatpush1.bf16.msra.mxu0 0
    %972 = vmatprep.mubr.bf16.mxu0 0
    %973 = vmatmul.mubr.bf16.gmra.mrb[0].mxu0 %v304
    %v974 = vpop.f32.mrb[0].mxu0
    %v975 = vadd.f32 %v935, %v974
    %v976 = vpop.f32.mrb[0].mxu0
    %v977 = vpop.f32.mrb[0].mxu0
    %v978 = vadd.f32 %v935, %v977
    %v979 = vpop.f32.mrb[0].mxu0
    %980 = vmatprep.mubr.bf16.mxu0 0
    %981 = vmatmul.mubr.bf16.gmra.mrb[0].mxu0 %v307
    %v982 = vpop.f32.mrb[0].mxu0
    %v983 = vadd.f32 %v935, %v982
    %v984 = vpop.f32.mrb[0].mxu0
    %v985 = vpop.f32.mrb[0].mxu0
    %v986 = vpop.f32.mrb[0].mxu0
    %987 = vdwg.mxu0
    %988 = vst [vmem:[%s21] sm:$0xff] %v975
    %989 = vst [vmem:[%s21 + $0x8] sm:$0xff] %v978
    %990 = vst [vmem:[%s21 + $0x10] sm:$0x3f] %v983
    %v991 = vld [vmem:[#allocation16] sm:$0xff]
    %v992 = vld [vmem:[#allocation16 + $0x8] sm:$0xff]
    %v993 = vld [vmem:[#allocation16 + $0x10] sm:$0xff]
    %v994 = vld [vmem:[#allocation16 + $0x18] sm:$0xff]
    %v995 = vld [vmem:[#allocation16 + $0x20] sm:$0xff]
    %v996 = vld [vmem:[#allocation16 + $0x28] sm:$0xff]
    %v997 = vld [vmem:[#allocation16 + $0x30] sm:$0xff]
    %v998 = vld [vmem:[#allocation16 + $0x38] sm:$0xff]
    %v999 = vld [vmem:[#allocation16 + $0x40] sm:$0xff]
    %v1000 = vld [vmem:[#allocation16 + $0x48] sm:$0x7]
    %v1001 = vld [vmem:[#allocation18] sm:$0xff]
    %v1002 = vld [vmem:[#allocation18 + $0x8] sm:$0xff]
    %v1003 = vld [vmem:[#allocation18 + $0x10] sm:$0xff]
    %v1004 = vld [vmem:[#allocation18 + $0x18] sm:$0xff]
    %v1005 = vld [vmem:[#allocation18 + $0x20] sm:$0xff]
    %v1006 = vld [vmem:[#allocation18 + $0x28] sm:$0xff]
    %v1007 = vld [vmem:[#allocation18 + $0x30] sm:$0xff]
    %v1008 = vld [vmem:[#allocation18 + $0x38] sm:$0xff]
    %v1009 = vld [vmem:[#allocation18 + $0x40] sm:$0xff]
    %v1010 = vld [vmem:[#allocation18 + $0x48] sm:$0xff]
    %v1011 = vld [vmem:[#allocation18 + $0x50] sm:$0xff]
    %v1012 = vld [vmem:[#allocation18 + $0x58] sm:$0xff]
    %v1013 = vld [vmem:[#allocation18 + $0x60] sm:$0xff]
    %v1014 = vld [vmem:[#allocation18 + $0x68] sm:$0xff]
    %v1015 = vld [vmem:[#allocation18 + $0x70] sm:$0xff]
    %v1016 = vld [vmem:[#allocation18 + $0x78] sm:$0xff]
    %v1017 = vpack.c.bf16 %v992, %v991
    %v1018 = vpack.c.bf16 %v994, %v993
    %v1019 = vpack.c.bf16 %v996, %v995
    %v1020 = vpack.c.bf16 %v998, %v997
    %v1021 = vpack.c.bf16 %v1000, %v999
    %v1022 = vpack.c.bf16 %v1002, %v1001
    %v1023 = vpack.c.bf16 %v1004, %v1003
    %v1024 = vpack.c.bf16 %v1006, %v1005
    %v1025 = vpack.c.bf16 %v1008, %v1007
    %v1026 = vpack.c.bf16 %v1010, %v1009
    %v1027 = vpack.c.bf16 %v1012, %v1011
    %v1028 = vpack.c.bf16 %v1014, %v1013
    %v1029 = vpack.c.bf16 %v1016, %v1015
    %v1030 = vld [vmem:[%s16] sm:$0x1]
    %v1032 = vlaneseq
    %v1033 = vshrl.u32 %v1032, 7
    %v1034 = vsub.s32 0, %v1033
    %v1035 = vrot.slane %v1030, %v1034
    %1037 = vmatprep.subr.bf16.mxu0 0
    %1038 = vmatpush1.bf16.msra.mxu0 %v1022
    %1039 = vmatprep.subr.bf16.mxu0 0
    %1040 = vmatpush1.bf16.msra.mxu0 %v1023
    %1041 = vmatprep.subr.bf16.mxu0 0
    %1042 = vmatpush1.bf16.msra.mxu0 %v1024
    %1043 = vmatprep.subr.bf16.mxu0 0
    %1044 = vmatpush1.bf16.msra.mxu0 %v1025
    %1045 = vmatprep.subr.bf16.mxu0 0
    %1046 = vmatpush1.bf16.msra.mxu0 %v1026
    %1047 = vmatprep.subr.bf16.mxu0 0
    %1048 = vmatpush1.bf16.msra.mxu0 %v1027
    %1049 = vmatprep.subr.bf16.mxu0 0
    %1050 = vmatpush1.bf16.msra.mxu0 %v1028
    %1051 = vmatprep.subr.bf16.mxu0 0
    %1052 = vmatpush1.bf16.msra.mxu0 %v1029
    %1053 = vmatprep.subr.bf16.mxu0 0
    %1054 = vmatpush1.bf16.msra.mxu0 0
    %1055 = vmatprep.subr.bf16.mxu0 0
    %1056 = vmatpush1.bf16.msra.mxu0 0
    %1057 = vmatprep.subr.bf16.mxu0 0
    %1058 = vmatpush1.bf16.msra.mxu0 0
    %1059 = vmatprep.subr.bf16.mxu0 0
    %1060 = vmatpush1.bf16.msra.mxu0 0
    %1061 = vmatprep.subr.bf16.mxu0 0
    %1062 = vmatpush1.bf16.msra.mxu0 0
    %1063 = vmatprep.subr.bf16.mxu0 0
    %1064 = vmatpush1.bf16.msra.mxu0 0
    %1065 = vmatprep.subr.bf16.mxu0 0
    %1066 = vmatpush1.bf16.msra.mxu0 0
    %1067 = vmatprep.subr.bf16.mxu0 0
    %1068 = vmatpush1.bf16.msra.mxu0 0
    %1069 = vmatprep.mubr.bf16.mxu0 0
    %1070 = vmatmul.mubr.bf16.gmra.mrb[0].mxu0 %v1017
    %v1071 = vpop.f32.mrb[0].mxu0
    %v1072 = vadd.f32 %v1035, %v1071
    %v1073 = vpop.f32.mrb[0].mxu0
    %v1074 = vpop.f32.mrb[0].mxu0
    %v1075 = vadd.f32 %v1035, %v1074
    %v1076 = vpop.f32.mrb[0].mxu0
    %1077 = vmatprep.mubr.bf16.mxu0 0
    %1078 = vmatmul.mubr.bf16.gmra.mrb[0].mxu0 %v1018
    %v1079 = vpop.f32.mrb[0].mxu0
    %v1080 = vadd.f32 %v1035, %v1079
    %v1081 = vpop.f32.mrb[0].mxu0
    %v1082 = vpop.f32.mrb[0].mxu0
    %v1083 = vadd.f32 %v1035, %v1082
    %v1084 = vpop.f32.mrb[0].mxu0
    %1085 = vmatprep.mubr.bf16.mxu0 0
    %1086 = vmatmul.mubr.bf16.gmra.mrb[0].mxu0 %v1019
    %v1087 = vpop.f32.mrb[0].mxu0
    %v1088 = vadd.f32 %v1035, %v1087
    %v1089 = vpop.f32.mrb[0].mxu0
    %v1090 = vpop.f32.mrb[0].mxu0
    %v1091 = vadd.f32 %v1035, %v1090
    %v1092 = vpop.f32.mrb[0].mxu0
    %1093 = vmatprep.mubr.bf16.mxu0 0
    %1094 = vmatmul.mubr.bf16.gmra.mrb[0].mxu0 %v1020
    %v1095 = vpop.f32.mrb[0].mxu0
    %v1096 = vadd.f32 %v1035, %v1095
    %v1097 = vpop.f32.mrb[0].mxu0
    %v1098 = vpop.f32.mrb[0].mxu0
    %v1099 = vadd.f32 %v1035, %v1098
    %v1100 = vpop.f32.mrb[0].mxu0
    %1101 = vmatprep.mubr.bf16.mxu0 0
    %1102 = vmatmul.mubr.bf16.gmra.mrb[0].mxu0 %v1021
    %v1103 = vpop.f32.mrb[0].mxu0
    %v1104 = vadd.f32 %v1035, %v1103
    %v1105 = vpop.f32.mrb[0].mxu0
    %v1106 = vpop.f32.mrb[0].mxu0
    %v1107 = vadd.f32 %v1035, %v1106
    %v1108 = vpop.f32.mrb[0].mxu0
    %1109 = vdwg.mxu0
    %1110 = vst [vmem:[%s22] sm:$0xff] %v1072
    %1111 = vst [vmem:[%s22 + $0x8] sm:$0xff] %v1075
    %1112 = vst [vmem:[%s22 + $0x10] sm:$0xff] %v1080
    %1113 = vst [vmem:[%s22 + $0x18] sm:$0xff] %v1083
    %1114 = vst [vmem:[%s22 + $0x20] sm:$0xff] %v1088
    %1115 = vst [vmem:[%s22 + $0x28] sm:$0xff] %v1091
    %1116 = vst [vmem:[%s22 + $0x30] sm:$0xff] %v1096
    %1117 = vst [vmem:[%s22 + $0x38] sm:$0xff] %v1099
    %1118 = vst [vmem:[%s22 + $0x40] sm:$0xff] %v1104
    %1119 = vst [vmem:[%s22 + $0x48] sm:$0x7] %v1107
    %v1120 = vld [vmem:[%s17] sm:$0x1]
    %v1121 = vld [vmem:[#allocation19] sm:$0xff]
    %v1122 = vld [vmem:[#allocation19 + $0x8] sm:$0xff]
    %v1123 = vld [vmem:[#allocation19 + $0x10] sm:$0xff]
    %v1124 = vld [vmem:[#allocation19 + $0x18] sm:$0xff]
    %v1125 = vld [vmem:[#allocation19 + $0x20] sm:$0xff]
    %v1126 = vld [vmem:[#allocation19 + $0x28] sm:$0xff]
    %v1127 = vld [vmem:[#allocation19 + $0x30] sm:$0xff]
    %v1128 = vld [vmem:[#allocation19 + $0x38] sm:$0xff]
    %v1129 = vld [vmem:[#allocation19 + $0x40] sm:$0xff]
    %v1130 = vld [vmem:[#allocation19 + $0x48] sm:$0xff]
    %v1131 = vld [vmem:[#allocation19 + $0x50] sm:$0xff]
    %v1132 = vld [vmem:[#allocation19 + $0x58] sm:$0xff]
    %v1133 = vld [vmem:[#allocation19 + $0x60] sm:$0xff]
    %v1134 = vld [vmem:[#allocation19 + $0x68] sm:$0xff]
    %v1135 = vld [vmem:[#allocation19 + $0x70] sm:$0xff]
    %v1136 = vld [vmem:[#allocation19 + $0x78] sm:$0xff]
    %v1137 = vpack.c.bf16 %v1120, %v1120
    %v1138 = vpack.c.bf16 %v1122, %v1121
    %v1139 = vpack.c.bf16 %v1124, %v1123
    %v1140 = vpack.c.bf16 %v1126, %v1125
    %v1141 = vpack.c.bf16 %v1128, %v1127
    %v1142 = vpack.c.bf16 %v1130, %v1129
    %v1143 = vpack.c.bf16 %v1132, %v1131
    %v1144 = vpack.c.bf16 %v1134, %v1133
    %v1145 = vpack.c.bf16 %v1136, %v1135
    %v1146 = vld [vmem:[%s19] sm:$0x1]
    %1147 = vmatprep.subr.bf16.mxu0 0
    %1148 = vmatpush1.bf16.msra.mxu0 %v1138
    %1149 = vmatprep.subr.bf16.mxu0 0
    %1150 = vmatpush1.bf16.msra.mxu0 %v1139
    %1151 = vmatprep.subr.bf16.mxu0 0
    %1152 = vmatpush1.bf16.msra.mxu0 %v1140
    %1153 = vmatprep.subr.bf16.mxu0 0
    %1154 = vmatpush1.bf16.msra.mxu0 %v1141
    %1155 = vmatprep.subr.bf16.mxu0 0
    %1156 = vmatpush1.bf16.msra.mxu0 %v1142
    %1157 = vmatprep.subr.bf16.mxu0 0
    %1158 = vmatpush1.bf16.msra.mxu0 %v1143
    %1159 = vmatprep.subr.bf16.mxu0 0
    %1160 = vmatpush1.bf16.msra.mxu0 %v1144
    %1161 = vmatprep.subr.bf16.mxu0 0
    %1162 = vmatpush1.bf16.msra.mxu0 %v1145
    %1163 = vmatprep.subr.bf16.mxu0 0
    %1164 = vmatpush1.bf16.msra.mxu0 0
    %1165 = vmatprep.subr.bf16.mxu0 0
    %1166 = vmatpush1.bf16.msra.mxu0 0
    %1167 = vmatprep.subr.bf16.mxu0 0
    %1168 = vmatpush1.bf16.msra.mxu0 0
    %1169 = vmatprep.subr.bf16.mxu0 0
    %1170 = vmatpush1.bf16.msra.mxu0 0
    %1171 = vmatprep.subr.bf16.mxu0 0
    %1172 = vmatpush1.bf16.msra.mxu0 0
    %1173 = vmatprep.subr.bf16.mxu0 0
    %1174 = vmatpush1.bf16.msra.mxu0 0
    %1175 = vmatprep.subr.bf16.mxu0 0
    %1176 = vmatpush1.bf16.msra.mxu0 0
    %1177 = vmatprep.subr.bf16.mxu0 0
    %1178 = vmatpush1.bf16.msra.mxu0 0
    %1179 = vmatprep.mubr.bf16.mxu0 0
    %1180 = vmatmul.mubr.bf16.gmra.mrb[0].mxu0 %v1137
    %v1181 = vpop.f32.mrb[0].mxu0
    %v1182 = vadd.f32 %v1146, %v1181
    %v1183 = vpop.f32.mrb[0].mxu0
    %v1184 = vpop.f32.mrb[0].mxu0
    %v1185 = vpop.f32.mrb[0].mxu0
    %1186 = vdwg.mxu0
    %1187 = vst [vmem:[%s23] sm:$0x1] %v1182
    // Predicated region
    $region130: #{gma_forward.4} parent=1 // pred_check
      _
    $region131: #{gma_forward.4} parent=1 // pred_check_branch
      %1189 = sbr.rel (0) target = $region133
    $region132: #{gma_forward.4} parent=1 // pred_region
      _
    $region133: #{gma_forward.4} parent=1 // pred_fallthru
      _
    // Predicated region
    $region134: #{gma_forward.4} parent=1 // pred_check
      _
    $region135: #{gma_forward.4} parent=1 // pred_check_branch
      %1191 = sbr.rel (0) target = $region137
    $region136: #{gma_forward.4} parent=1 // pred_region
      _
    $region137: #{gma_forward.4} parent=1 // pred_fallthru
      _
    // Predicated region
    $region138: #{gma_forward.4} parent=1 // pred_check
      _
    $region139: #{gma_forward.4} parent=1 // pred_check_branch
      %1193 = sbr.rel (0) target = $region141
    $region140: #{gma_forward.4} parent=1 // pred_region
      _
    $region141: #{gma_forward.4} parent=1 // pred_fallthru
      _
    // Predicated region
    $region142: #{gma_forward.4} parent=1 // pred_check
      _
    $region143: #{gma_forward.4} parent=1 // pred_check_branch
      %1195 = sbr.rel (0) target = $region145
    $region144: #{gma_forward.4} parent=1 // pred_region
      _
    $region145: #{gma_forward.4} parent=1 // pred_fallthru
      _
    // Predicated region
    $region146: #{gma_forward.4} parent=1 // pred_check
      _
    $region147: #{gma_forward.4} parent=1 // pred_check_branch
      %1197 = sbr.rel (0) target = $region149
    $region148: #{gma_forward.4} parent=1 // pred_region
      _
    $region149: #{gma_forward.4} parent=1 // pred_fallthru
      _
    // Predicated region
    $region150: #{gma_forward.4} parent=1 // pred_check
      _
    $region151: #{gma_forward.4} parent=1 // pred_check_branch
      %1199 = sbr.rel (0) target = $region153
    $region152: #{gma_forward.4} parent=1 // pred_region
      _
    $region153: #{gma_forward.4} parent=1 // pred_fallthru
      _
    // Predicated region
    $region154: #{gma_forward.4} parent=1 // pred_check
      _
    $region155: #{gma_forward.4} parent=1 // pred_check_branch
      %1201 = sbr.rel (0) target = $region157
    $region156: #{gma_forward.4} parent=1 // pred_region
      _
    $region157: #{gma_forward.4} parent=1 // pred_fallthru
      _
    // Predicated region
    $region158: #{gma_forward.4} parent=1 // pred_check
      _
    $region159: #{gma_forward.4} parent=1 // pred_check_branch
      %1203 = sbr.rel (0) target = $region161
    $region160: #{gma_forward.4} parent=1 // pred_region
      _
    $region161: #{gma_forward.4} parent=1 // pred_fallthru
      _
    %1204 = vsyncpa [#allocation3], 1
    %1205 = vsyncpa [#allocation5], 1
    %1206 = vsyncpa [#allocation8], 1
    %1207 = vsyncpa [#allocation11], 1
    %1208 = vsyncpa [#allocation14], 1
    %1209 = vsyncpa [#allocation17], 1
    %1210 = vsyncpa [#allocation20], 1

// kernel: gma_forward.5
$region0: #{gma_forward.5}
  #allocation0 [shape = 'u32[]', space=smem, size = 0x4, offset = 0x4, fixed_abs, tag = 'smem constant byte address 0x4 - core index']
  #allocation1 [shape = 'u32[144,128]{1,0:T(1,128)}', space=vmem, size = 0x12000, scoped, tag = 'internal scratch']
  #allocation2 [shape = 's32[1]{0}', space=sflag, size = 0x4, scoped, tag = 'scoped memory for gma_forward.5']
  #allocation3 [shape = 'u8[512]{0}', space=smem, size = 0x200, scoped, tag = 'prefetched SMEM operand 0']
  %s0 = inlined_call_operand.vmem [shape: s32[2], index: 0, kind: input, shape index: {}]
  %s1 = inlined_call_operand.vmem [shape: f32[75,128], index: 1, kind: input, shape index: {}]
  %s2 = inlined_call_operand.vmem [shape: f32[2,12,128], index: 2, kind: input, shape index: {}]
  %s3 = inlined_call_operand.vmem [shape: f32[2,12,128], index: 3, kind: input, shape index: {}]
  %s4 = inlined_call_operand.vmem [shape: f32[128,128], index: 4, kind: input, shape index: {}]
  %s5 = inlined_call_operand.vmem [shape: f32[1,128], index: 5, kind: input, shape index: {}]
  %s6 = inlined_call_operand.vmem [shape: f32[2,75,128], index: 6, kind: output, shape index: {}]
  %s7 = sld [smem:[#allocation0]]
  $region53: #{gma_forward.5} parent=0
    _
  %s9 = ssub.s32 1, %s7
  %s10 = scalar_select 0, %s9, %s7
  %s11 = sshll.u32 %s0, 4
  %s12 = int_to_ptr.vmem [resolvable:$true] %s11
  %14 = dma.vmem_to_smem %s12, 16, [#allocation3], [#allocation2]
  %15 = dma.done [#allocation2], 16
  %16 = sfence
  loop: start=0, step=1, limit=4
  $region2: #{gma_forward.5} parent=0 // loop_pre_header
    _
  $region3: #{gma_forward.5} parent=0 // loop_header
    %s18 = sphi 0, %s22
    %p19 = scmp.ge.s32.totalorder %s18, 4
    %s26 = sphi 0, %s26
    %s28 = sphi 0, %s26
    %s29 = sphi 0, %s28
    %s43 = sphi 0, %s29
    %s49 = sphi 0, %s51
    %s52 = sphi 0, %s49
    %s53 = sphi 0, %s52
    %s69 = sphi 0, %s53
    %s75 = sphi 0, %s77
    %s78 = sphi 0, %s75
    %s79 = sphi 0, %s78
    %s95 = sphi 0, %s79
    %s99 = sphi 0, %s99
    %s101 = sphi 0, %s99
    %s102 = sphi 0, %s101
    %s116 = sphi 0, %s102
    %s120 = sphi 0, %s120
    %s122 = sphi 0, %s120
    %s123 = sphi 0, %s122
    %s137 = sphi 0, %s123
    %s143 = sphi 0, %s145
    %s146 = sphi 0, %s143
    %s147 = sphi 0, %s146
    %s163 = sphi 0, %s147
  $region4: #{gma_forward.5} parent=0 // loop_header_branch
    %21 = sbr.rel (%p19) target = $region8
  $region5: #{gma_forward.5} parent=0 // loop_body
    %s23 = ssub.s32 %s18, 1
    %s24 = ssub.s32 %s18, 2
    %s25 = sadd.s32 %s18, 1
    %s27 = sadd.s32 %s26, 1
    %p30 = scmp.eq.s32.totalorder %s18, 1
    %p31 = scmp.ne.s32.totalorder %s26, %s28
    %p32 = scmp.eq.s32.totalorder %s18, 0
    %p33 = por %p31, %p32
    %p34 = scmp.ne.s32.totalorder %s26, %s28
    %p35 = scmp.eq.s32.totalorder %s23, 1
    %p36 = por %p34, %p35
    %p37 = scmp.ne.s32.totalorder %s28, %s29
    %p38 = scmp.eq.s32.totalorder %s23, 0
    %p39 = por %p37, %p38
    %p40 = scmp.ne.s32.totalorder %s28, %s29
    %p41 = scmp.eq.s32.totalorder %s24, 1
    %p42 = por %p40, %p41
    %p44 = scmp.ne.s32.totalorder %s29, %s43
    %p45 = scmp.eq.s32.totalorder %s24, 0
    %p46 = por %p44, %p45
    %s47 = ssub.s32 %s18, %s25
    %p48 = scmp.eq.s32.totalorder %s47, 0
    %s50 = sadd.s32 %s49, 1
    %s51 = scalar_select %p48, %s49, %s50
    %p54 = pneg %p48
    %p55 = scmp.eq.s32.totalorder %s18, 1
    %p56 = por %p54, %p55
    %p57 = scmp.ne.s32.totalorder %s49, %s52
    %p58 = scmp.eq.s32.totalorder %s18, 0
    %p59 = por %p57, %p58
    %p60 = scmp.ne.s32.totalorder %s49, %s52
    %p61 = scmp.eq.s32.totalorder %s23, 1
    %p62 = por %p60, %p61
    %p63 = scmp.ne.s32.totalorder %s52, %s53
    %p64 = scmp.eq.s32.totalorder %s23, 0
    %p65 = por %p63, %p64
    %p66 = scmp.ne.s32.totalorder %s52, %s53
    %p67 = scmp.eq.s32.totalorder %s24, 1
    %p68 = por %p66, %p67
    %p70 = scmp.ne.s32.totalorder %s53, %s69
    %p71 = scmp.eq.s32.totalorder %s24, 0
    %p72 = por %p70, %p71
    %s73 = ssub.s32 %s18, %s25
    %p74 = scmp.eq.s32.totalorder %s73, 0
    %s76 = sadd.s32 %s75, 1
    %s77 = scalar_select %p74, %s75, %s76
    %p80 = pneg %p74
    %p81 = scmp.eq.s32.totalorder %s18, 1
    %p82 = por %p80, %p81
    %p83 = scmp.ne.s32.totalorder %s75, %s78
    %p84 = scmp.eq.s32.totalorder %s18, 0
    %p85 = por %p83, %p84
    %p86 = scmp.ne.s32.totalorder %s75, %s78
    %p87 = scmp.eq.s32.totalorder %s23, 1
    %p88 = por %p86, %p87
    %p89 = scmp.ne.s32.totalorder %s78, %s79
    %p90 = scmp.eq.s32.totalorder %s23, 0
    %p91 = por %p89, %p90
    %p92 = scmp.ne.s32.totalorder %s78, %s79
    %p93 = scmp.eq.s32.totalorder %s24, 1
    %p94 = por %p92, %p93
    %p96 = scmp.ne.s32.totalorder %s79, %s95
    %p97 = scmp.eq.s32.totalorder %s24, 0
    %p98 = por %p96, %p97
    %s100 = sadd.s32 %s99, 1
    %p103 = scmp.eq.s32.totalorder %s18, 1
    %p104 = scmp.ne.s32.totalorder %s99, %s101
    %p105 = scmp.eq.s32.totalorder %s18, 0
    %p106 = por %p104, %p105
    %p107 = scmp.ne.s32.totalorder %s99, %s101
    %p108 = scmp.eq.s32.totalorder %s23, 1
    %p109 = por %p107, %p108
    %p110 = scmp.ne.s32.totalorder %s101, %s102
    %p111 = scmp.eq.s32.totalorder %s23, 0
    %p112 = por %p110, %p111
    %p113 = scmp.ne.s32.totalorder %s101, %s102
    %p114 = scmp.eq.s32.totalorder %s24, 1
    %p115 = por %p113, %p114
    %p117 = scmp.ne.s32.totalorder %s102, %s116
    %p118 = scmp.eq.s32.totalorder %s24, 0
    %p119 = por %p117, %p118
    %s121 = sadd.s32 %s120, 1
    %p124 = scmp.eq.s32.totalorder %s18, 1
    %p125 = scmp.ne.s32.totalorder %s120, %s122
    %p126 = scmp.eq.s32.totalorder %s18, 0
    %p127 = por %p125, %p126
    %p128 = scmp.ne.s32.totalorder %s120, %s122
    %p129 = scmp.eq.s32.totalorder %s23, 1
    %p130 = por %p128, %p129
    %p131 = scmp.ne.s32.totalorder %s122, %s123
    %p132 = scmp.eq.s32.totalorder %s23, 0
    %p133 = por %p131, %p132
    %p134 = scmp.ne.s32.totalorder %s122, %s123
    %p135 = scmp.eq.s32.totalorder %s24, 1
    %p136 = por %p134, %p135
    %p138 = scmp.ne.s32.totalorder %s123, %s137
    %p139 = scmp.eq.s32.totalorder %s24, 0
    %p140 = por %p138, %p139
    %s141 = ssub.s32 %s18, %s25
    %p142 = scmp.eq.s32.totalorder %s141, 0
    %s144 = sadd.s32 %s143, 1
    %s145 = scalar_select %p142, %s143, %s144
    %p148 = pneg %p142
    %p149 = scmp.eq.s32.totalorder %s18, 1
    %p150 = por %p148, %p149
    %p151 = scmp.ne.s32.totalorder %s143, %s146
    %p152 = scmp.eq.s32.totalorder %s18, 0
    %p153 = por %p151, %p152
    %p154 = scmp.ne.s32.totalorder %s143, %s146
    %p155 = scmp.eq.s32.totalorder %s23, 1
    %p156 = por %p154, %p155
    %p157 = scmp.ne.s32.totalorder %s146, %s147
    %p158 = scmp.eq.s32.totalorder %s23, 0
    %p159 = por %p157, %p158
    %p160 = scmp.ne.s32.totalorder %s146, %s147
    %p161 = scmp.eq.s32.totalorder %s24, 1
    %p162 = por %p160, %p161
    %p164 = scmp.ne.s32.totalorder %s147, %s163
    %p165 = scmp.eq.s32.totalorder %s24, 0
    %p166 = por %p164, %p165
    %p167 = scmp.le.s32.totalorder 1, %s18
    %p168 = scmp.lt.s32.totalorder %s18, 3
    %p169 = pnand %p167, %p168
    %p170 = pneg %p169
    // Predicated region
    $region9: #{gma_forward.5} parent=5 // pred_check
      _
    $region10: #{gma_forward.5} parent=5 // pred_check_branch
      %172 = sbr.rel (%p169) target = $region12
    $region11: #{gma_forward.5} parent=5 // pred_region
      %s173 = ssub.s32 %s18, 1
      // Predicated region
      $region13: #{gma_forward.5} parent=11 // pred_check
        %p174 = pneg %p39
      $region14: #{gma_forward.5} parent=11 // pred_check_branch
        %176 = sbr.rel (%p174) target = $region16
      $region15: #{gma_forward.5} parent=11 // pred_region
        _
      $region16: #{gma_forward.5} parent=11 // pred_fallthru
        _
      // Predicated region
      $region17: #{gma_forward.5} parent=11 // pred_check
        %p177 = pneg %p112
      $region18: #{gma_forward.5} parent=11 // pred_check_branch
        %179 = sbr.rel (%p177) target = $region20
      $region19: #{gma_forward.5} parent=11 // pred_region
        _
      $region20: #{gma_forward.5} parent=11 // pred_fallthru
        _
      // Predicated region
      $region21: #{gma_forward.5} parent=11 // pred_check
        %p180 = pneg %p133
      $region22: #{gma_forward.5} parent=11 // pred_check_branch
        %182 = sbr.rel (%p180) target = $region24
      $region23: #{gma_forward.5} parent=11 // pred_region
        _
      $region24: #{gma_forward.5} parent=11 // pred_fallthru
        _
    $region12: #{gma_forward.5} parent=5 // pred_fallthru
      _
    %p183 = scmp.lt.s32.totalorder %s18, 2
    // Predicated region
    $region25: #{gma_forward.5} parent=5 // pred_check
      %p184 = pneg %p183
    $region26: #{gma_forward.5} parent=5 // pred_check_branch
      %186 = sbr.rel (%p184) target = $region28
    $region27: #{gma_forward.5} parent=5 // pred_region
      // Predicated region
      $region29: #{gma_forward.5} parent=27 // pred_check
        %p187 = pneg %p59
      $region30: #{gma_forward.5} parent=27 // pred_check_branch
        %189 = sbr.rel (%p187) target = $region32
      $region31: #{gma_forward.5} parent=27 // pred_region
        %p190 = scmp.lt.s32.totalorder %s18, 1
        %s191 = scalar_select %p190, %s18, 1
        %s192 = smul.addr %s191, 2
        %s193 = smul.addr %s192, 8
        %s194 = scalar_lea.vmem %s2, %s193
      $region32: #{gma_forward.5} parent=27 // pred_fallthru
        _
      // Predicated region
      $region33: #{gma_forward.5} parent=27 // pred_check
        %p195 = pneg %p85
      $region34: #{gma_forward.5} parent=27 // pred_check_branch
        %197 = sbr.rel (%p195) target = $region36
      $region35: #{gma_forward.5} parent=27 // pred_region
        %p198 = scmp.lt.s32.totalorder %s18, 1
        %s199 = scalar_select %p198, %s18, 1
        %s200 = smul.addr %s199, 2
        %s201 = smul.addr %s200, 8
        %s202 = scalar_lea.vmem %s3, %s201
      $region36: #{gma_forward.5} parent=27 // pred_fallthru
        _
    $region28: #{gma_forward.5} parent=5 // pred_fallthru
      _
    %p203 = scmp.le.s32.totalorder 1, %s18
    %p204 = scmp.lt.s32.totalorder %s18, 3
    %p205 = pnand %p203, %p204
    %p206 = pneg %p205
    // Predicated region
    $region37: #{gma_forward.5} parent=5 // pred_check
      _
    $region38: #{gma_forward.5} parent=5 // pred_check_branch
      %208 = sbr.rel (%p205) target = $region40
    $region39: #{gma_forward.5} parent=5 // pred_region
      %s209 = ssub.s32 %s18, 1
      %p210 = pneg %p39
      %p211 = pneg %p36
      %p212 = scmp.lt.s32.totalorder %s23, 1
      %s213 = scalar_select %p212, %s23, 1
      %s214 = smul.addr %s213, 2
      %s215 = smul.addr %s214, 8
      %s216 = scalar_lea.vmem %s2, %s215
      %p217 = pneg %p65
      %p218 = pneg %p62
      %p219 = scmp.lt.s32.totalorder %s23, 1
      %s220 = scalar_select %p219, %s23, 1
      %s221 = smul.addr %s220, 2
      %s222 = smul.addr %s221, 8
      %s223 = scalar_lea.vmem %s3, %s222
      %p224 = pneg %p91
      %p225 = pneg %p88
      %p226 = pneg %p112
      %p227 = pneg %p109
      %p228 = pneg %p133
      %p229 = pneg %p130
      %p230 = pneg %p159
      %p231 = pneg %p156
      %p232 = scmp.lt.s32.totalorder %s23, 1
      %s233 = scalar_select %p232, %s23, 1
      %s234 = smul.addr %s233, 10
      %s235 = smul.addr %s234, 8
      %s236 = scalar_lea.vmem %s6, %s235
      %p237 = scmp.lt.s32.totalorder %s23, 1
      %s238 = scalar_select %p237, %s23, 1
      %s239 = smul.addr %s238, 2
      %s240 = smul.addr %s239, 8
      %s241 = scalar_lea.vmem %s2, %s240
      %p242 = scmp.lt.s32.totalorder %s23, 1
      %s243 = scalar_select %p242, %s23, 1
      %s244 = smul.addr %s243, 2
      %s245 = smul.addr %s244, 8
      %s246 = scalar_lea.vmem %s3, %s245
      %p247 = scmp.lt.s32.totalorder %s23, 1
      %s248 = scalar_select %p247, %s23, 1
      %s249 = smul.addr %s248, 10
      %s250 = smul.addr %s249, 8
      %s251 = scalar_lea.vmem %s6, %s250
      %s253 = sld [smem:[#allocation3 + %s23]]
      %v254 = vlaneseq
      %v255 = vand.u32 %v254, 127
      %v256 = vstv %s253
      %vm257 = vcmp.lt.s32.totalorder %v255, %v256
      %v258 = vsel %vm257, 0.0, -1e+09
      %v259 = vld [vmem:[%s1] sm:$0xff]
      %v260 = vld [vmem:[%s1 + $0x8] sm:$0xff]
      %v261 = vld [vmem:[%s1 + $0x10] sm:$0xff]
      %v262 = vld [vmem:[%s1 + $0x18] sm:$0xff]
      %v263 = vld [vmem:[%s1 + $0x20] sm:$0xff]
      %v264 = vld [vmem:[%s1 + $0x28] sm:$0xff]
      %v265 = vld [vmem:[%s1 + $0x30] sm:$0xff]
      %v266 = vld [vmem:[%s1 + $0x38] sm:$0xff]
      %v267 = vld [vmem:[%s1 + $0x40] sm:$0xff]
      %v268 = vld [vmem:[%s1 + $0x48] sm:$0x7]
      %v269 = vld [vmem:[%s241] sm:$0xff]
      %v270 = vld [vmem:[%s241 + $0x8] sm:$0xf]
      %v271 = vld [vmem:[%s246] sm:$0xff]
      %v272 = vld [vmem:[%s246 + $0x8] sm:$0xf]
      %v273 = vmul.f32 %v259, 0.088388346
      %v274 = vmul.f32 %v260, 0.088388346
      %v275 = vmul.f32 %v261, 0.088388346
      %v276 = vmul.f32 %v262, 0.088388346
      %v277 = vmul.f32 %v263, 0.088388346
      %v278 = vmul.f32 %v264, 0.088388346
      %v279 = vmul.f32 %v265, 0.088388346
      %v280 = vmul.f32 %v266, 0.088388346
      %v281 = vmul.f32 %v267, 0.088388346
      %v282 = vmul.f32 %v268, 0.088388346
      %v283 = vpack.c.bf16 %v274, %v273
      %v284 = vpack.c.bf16 %v276, %v275
      %v285 = vpack.c.bf16 %v278, %v277
      %v286 = vpack.c.bf16 %v280, %v279
      %v287 = vpack.c.bf16 %v282, %v281
      %v288 = vpack.c.bf16 %v270, %v269
      %v289 = vpack.c.bf16 %v272, %v271
      %vm290 = vcmask 261120
      %v292 = vsel %vm290, %v283, 0
      %v295 = vsel %vm290, %v284, 0
      %v298 = vsel %vm290, %v285, 0
      %v301 = vsel %vm290, %v286, 0
      %v304 = vsel %vm290, %v287, 0
      %v307 = vsel %vm290, %v288, 0
      %309 = vmatprep.subr.bf16.mxu0 0
      %310 = vmatpush1.bf16.xpose.msra.mxu0 %v307
      %311 = vmatprep.subr.bf16.mxu0 0
      %312 = vmatpush1.bf16.xpose.msra.mxu0 0
      %313 = vmatprep.subr.bf16.mxu0 0
      %314 = vmatpush1.bf16.xpose.msra.mxu0 0
      %315 = vmatprep.subr.bf16.mxu0 0
      %316 = vmatpush1.bf16.xpose.msra.mxu0 0
      %317 = vmatprep.subr.bf16.mxu0 0
      %318 = vmatpush1.bf16.xpose.msra.mxu0 0
      %319 = vmatprep.subr.bf16.mxu0 0
      %320 = vmatpush1.bf16.xpose.msra.mxu0 0
      %321 = vmatprep.subr.bf16.mxu0 0
      %322 = vmatpush1.bf16.xpose.msra.mxu0 0
      %323 = vmatprep.subr.bf16.mxu0 0
      %324 = vmatpush1.bf16.xpose.msra.mxu0 0
      %325 = vmatprep.subr.bf16.mxu0 0
      %326 = vmatpush1.bf16.xpose.msra.mxu0 0
      %327 = vmatprep.subr.bf16.mxu0 0
      %328 = vmatpush1.bf16.xpose.msra.mxu0 0
      %329 = vmatprep.subr.bf16.mxu0 0
      %330 = vmatpush1.bf16.xpose.msra.mxu0 0
      %331 = vmatprep.subr.bf16.mxu0 0
      %332 = vmatpush1.bf16.xpose.msra.mxu0 0
      %333 = vmatprep.subr.bf16.mxu0 0
      %334 = vmatpush1.bf16.xpose.msra.mxu0 0
      %335 = vmatprep.subr.bf16.mxu0 0
      %336 = vmatpush1.bf16.xpose.msra.mxu0 0
      %337 = vmatprep.subr.bf16.mxu0 0
      %338 = vmatpush1.bf16.xpose.msra.mxu0 0
      %339 = vmatprep.subr.bf16.mxu0 0
      %340 = vmatpush1.bf16.xpose.msra.mxu0 0
      %341 = vmatprep.mubr.bf16.mxu0 0
      %342 = vmatmul.mubr.bf16.gmra.mrb[0].mxu0 %v292
      %v343 = vpop.f32.mrb[0].mxu0
      %v344 = vadd.f32 %v258, %v343
      %v345 = vpop.f32.mrb[0].mxu0
      %v346 = vpop.f32.mrb[0].mxu0
      %v347 = vadd.f32 %v258, %v346
      %v348 = vpop.f32.mrb[0].mxu0
      %349 = vmatprep.mubr.bf16.mxu0 0
      %350 = vmatmul.mubr.bf16.gmra.mrb[0].mxu0 %v295
      %v351 = vpop.f32.mrb[0].mxu0
      %v352 = vadd.f32 %v258, %v351
      %v353 = vpop.f32.mrb[0].mxu0
      %v354 = vpop.f32.mrb[0].mxu0
      %v355 = vadd.f32 %v258, %v354
      %v356 = vpop.f32.mrb[0].mxu0
      %357 = vmatprep.mubr.bf16.mxu0 0
      %358 = vmatmul.mubr.bf16.gmra.mrb[0].mxu0 %v298
      %v359 = vpop.f32.mrb[0].mxu0
      %v360 = vadd.f32 %v258, %v359
      %v361 = vpop.f32.mrb[0].mxu0
      %v362 = vpop.f32.mrb[0].mxu0
      %v363 = vadd.f32 %v258, %v362
      %v364 = vpop.f32.mrb[0].mxu0
      %365 = vmatprep.mubr.bf16.mxu0 0
      %366 = vmatmul.mubr.bf16.gmra.mrb[0].mxu0 %v301
      %v367 = vpop.f32.mrb[0].mxu0
      %v368 = vadd.f32 %v258, %v367
      %v369 = vpop.f32.mrb[0].mxu0
      %v370 = vpop.f32.mrb[0].mxu0
      %v371 = vadd.f32 %v258, %v370
      %v372 = vpop.f32.mrb[0].mxu0
      %373 = vmatprep.mubr.bf16.mxu0 0
      %374 = vmatmul.mubr.bf16.gmra.mrb[0].mxu0 %v304
      %v375 = vpop.f32.mrb[0].mxu0
      %v376 = vadd.f32 %v258, %v375
      %v377 = vpop.f32.mrb[0].mxu0
      %v378 = vpop.f32.mrb[0].mxu0
      %v379 = vadd.f32 %v258, %v378
      %v380 = vpop.f32.mrb[0].mxu0
      %381 = vdwg.mxu0
      %vm382 = vcmask 97280
      %v383 = vsel %vm382, %v344, -inf
      %v384 = vsel %vm382, %v347, -inf
      %v385 = vsel %vm382, %v352, -inf
      %v386 = vsel %vm382, %v355, -inf
      %v387 = vsel %vm382, %v360, -inf
      %v388 = vmax.f32 %v383, %v387
      %v389 = vsel %vm382, %v363, -inf
      %v390 = vmax.f32 %v384, %v389
      %v391 = vsel %vm382, %v368, -inf
      %v392 = vmax.f32 %v385, %v391
      %v393 = vsel %vm382, %v371, -inf
      %v394 = vmax.f32 %v386, %v393
      %v395 = vsel %vm382, %v376, -inf
      %v396 = vmax.f32 %v388, %v395
      %vm397 = vcmask 92160
      %v398 = vsel %vm397, %v379, -inf
      %v399 = vmax.f32 %v390, %v398
      %v400 = vmax.f32 %v396, %v399
      %v401 = vmax.f32 %v392, %v394
      %v402 = vmax.f32 %v400, %v401
      %v403 = vrot.slane %v402, 4
      %v404 = vmax.f32 %v402, %v403
      %v405 = vrot.slane %v404, 2
      %v406 = vmax.f32 %v404, %v405
      %v407 = vrot.slane %v406, 1
      %v408 = vmax.f32 %v406, %v407
      %v409 = vsub.f32 %v344, %v408
      %v410 = vsub.f32 %v347, %v408
      %v411 = vsub.f32 %v352, %v408
      %v412 = vsub.f32 %v355, %v408
      %v413 = vsub.f32 %v360, %v408
      %v414 = vsub.f32 %v363, %v408
      %v415 = vsub.f32 %v368, %v408
      %v416 = vsub.f32 %v371, %v408
      %v417 = vsub.f32 %v376, %v408
      %v418 = vsub.f32 %v379, %v408
      %v419 = vmul.f32 %v409, 1.442695
      %v420 = vpow.pop %v419
      %v421 = vmul.f32 %v410, 1.442695
      %v422 = vpow.pop %v421
      %v423 = vmul.f32 %v411, 1.442695
      %v424 = vpow.pop %v423
      %v425 = vmul.f32 %v412, 1.442695
      %v426 = vpow.pop %v425
      %v427 = vmul.f32 %v413, 1.442695
      %v428 = vpow.pop %v427
      %v429 = vmul.f32 %v414, 1.442695
      %v430 = vpow.pop %v429
      %v431 = vmul.f32 %v415, 1.442695
      %v432 = vpow.pop %v431
      %v433 = vmul.f32 %v416, 1.442695
      %v434 = vpow.pop %v433
      %v435 = vmul.f32 %v417, 1.442695
      %v436 = vpow.pop %v435
      %v437 = vmul.f32 %v418, 1.442695
      %v438 = vpow.pop %v437
      %v439 = vsel %vm382, %v420, 0.0
      %v440 = vsel %vm382, %v422, 0.0
      %v441 = vadd.f32 %v439, %v440
      %v442 = vsel %vm382, %v424, 0.0
      %v443 = vadd.f32 %v441, %v442
      %v444 = vsel %vm382, %v426, 0.0
      %v445 = vadd.f32 %v443, %v444
      %v446 = vsel %vm382, %v428, 0.0
      %v447 = vadd.f32 %v445, %v446
      %v448 = vsel %vm382, %v430, 0.0
      %v449 = vadd.f32 %v447, %v448
      %v450 = vsel %vm382, %v432, 0.0
      %v451 = vadd.f32 %v449, %v450
      %v452 = vsel %vm382, %v434, 0.0
      %v453 = vadd.f32 %v451, %v452
      %v454 = vsel %vm382, %v436, 0.0
      %v455 = vadd.f32 %v453, %v454
      %v456 = vsel %vm397, %v438, 0.0
      %v457 = vadd.f32 %v455, %v456
      %v458 = vrot.slane %v457, 4
      %v459 = vadd.f32 %v457, %v458
      %v460 = vrot.slane %v459, 2
      %v461 = vadd.f32 %v459, %v460
      %v462 = vrot.slane %v461, 1
      %v463 = vadd.f32 %v461, %v462
      %v464 = vrcp.pop %v463
      %v465 = vmul.f32 %v420, %v464
      %v466 = vmul.f32 %v422, %v464
      %v467 = vmul.f32 %v424, %v464
      %v468 = vmul.f32 %v426, %v464
      %v469 = vmul.f32 %v428, %v464
      %v470 = vmul.f32 %v430, %v464
      %v471 = vmul.f32 %v432, %v464
      %v472 = vmul.f32 %v434, %v464
      %v473 = vmul.f32 %v436, %v464
      %v474 = vmul.f32 %v438, %v464
      %v475 = vpack.c.bf16 %v466, %v465
      %v476 = vpack.c.bf16 %v468, %v467
      %v477 = vpack.c.bf16 %v470, %v469
      %v478 = vpack.c.bf16 %v472, %v471
      %v479 = vpack.c.bf16 %v474, %v473
      %v481 = vsel %vm382, %v475, 0
      %v484 = vsel %vm382, %v476, 0
      %v487 = vsel %vm382, %v477, 0
      %v490 = vsel %vm382, %v478, 0
      %v493 = vsel %vm382, %v479, 0
      %vm495 = vcmask 1045504
      %v497 = vsel %vm495, %v289, 0
      %499 = vmatprep.subr.bf16.mxu0 0
      %500 = vmatpush1.bf16.msra.mxu0 %v497
      %501 = vmatprep.subr.bf16.mxu0 0
      %502 = vmatpush1.bf16.msra.mxu0 0
      %503 = vmatprep.subr.bf16.mxu0 0
      %504 = vmatpush1.bf16.msra.mxu0 0
      %505 = vmatprep.subr.bf16.mxu0 0
      %506 = vmatpush1.bf16.msra.mxu0 0
      %507 = vmatprep.subr.bf16.mxu0 0
      %508 = vmatpush1.bf16.msra.mxu0 0
      %509 = vmatprep.subr.bf16.mxu0 0
      %510 = vmatpush1.bf16.msra.mxu0 0
      %511 = vmatprep.subr.bf16.mxu0 0
      %512 = vmatpush1.bf16.msra.mxu0 0
      %513 = vmatprep.subr.bf16.mxu0 0
      %514 = vmatpush1.bf16.msra.mxu0 0
      %515 = vmatprep.subr.bf16.mxu0 0
      %516 = vmatpush1.bf16.msra.mxu0 0
      %517 = vmatprep.subr.bf16.mxu0 0
      %518 = vmatpush1.bf16.msra.mxu0 0
      %519 = vmatprep.subr.bf16.mxu0 0
      %520 = vmatpush1.bf16.msra.mxu0 0
      %521 = vmatprep.subr.bf16.mxu0 0
      %522 = vmatpush1.bf16.msra.mxu0 0
      %523 = vmatprep.subr.bf16.mxu0 0
      %524 = vmatpush1.bf16.msra.mxu0 0
      %525 = vmatprep.subr.bf16.mxu0 0
      %526 = vmatpush1.bf16.msra.mxu0 0
      %527 = vmatprep.subr.bf16.mxu0 0
      %528 = vmatpush1.bf16.msra.mxu0 0
      %529 = vmatprep.subr.bf16.mxu0 0
      %530 = vmatpush1.bf16.msra.mxu0 0
      %531 = vmatprep.mubr.bf16.mxu0 0
      %532 = vmatmul.mubr.bf16.gmra.mrb[0].mxu0 %v481
      %v533 = vpop.f32.mrb[0].mxu0
      %v534 = vadd.f32 0.0, %v533
      %v535 = vpop.f32.mrb[0].mxu0
      %v536 = vpop.f32.mrb[0].mxu0
      %v537 = vadd.f32 0.0, %v536
      %v538 = vpop.f32.mrb[0].mxu0
      %539 = vmatprep.mubr.bf16.mxu0 0
      %540 = vmatmul.mubr.bf16.gmra.mrb[0].mxu0 %v484
      %v541 = vpop.f32.mrb[0].mxu0
      %v542 = vadd.f32 0.0, %v541
      %v543 = vpop.f32.mrb[0].mxu0
      %v544 = vpop.f32.mrb[0].mxu0
      %v545 = vadd.f32 0.0, %v544
      %v546 = vpop.f32.mrb[0].mxu0
      %547 = vmatprep.mubr.bf16.mxu0 0
      %548 = vmatmul.mubr.bf16.gmra.mrb[0].mxu0 %v487
      %v549 = vpop.f32.mrb[0].mxu0
      %v550 = vadd.f32 0.0, %v549
      %v551 = vpop.f32.mrb[0].mxu0
      %v552 = vpop.f32.mrb[0].mxu0
      %v553 = vadd.f32 0.0, %v552
      %v554 = vpop.f32.mrb[0].mxu0
      %555 = vmatprep.mubr.bf16.mxu0 0
      %556 = vmatmul.mubr.bf16.gmra.mrb[0].mxu0 %v490
      %v557 = vpop.f32.mrb[0].mxu0
      %v558 = vadd.f32 0.0, %v557
      %v559 = vpop.f32.mrb[0].mxu0
      %v560 = vpop.f32.mrb[0].mxu0
      %v561 = vadd.f32 0.0, %v560
      %v562 = vpop.f32.mrb[0].mxu0
      %563 = vmatprep.mubr.bf16.mxu0 0
      %564 = vmatmul.mubr.bf16.gmra.mrb[0].mxu0 %v493
      %v565 = vpop.f32.mrb[0].mxu0
      %v566 = vadd.f32 0.0, %v565
      %v567 = vpop.f32.mrb[0].mxu0
      %v568 = vpop.f32.mrb[0].mxu0
      %v569 = vadd.f32 0.0, %v568
      %v570 = vpop.f32.mrb[0].mxu0
      %571 = vdwg.mxu0
      %v572 = vadd.f32 %v259, %v534
      %v573 = vadd.f32 %v260, %v537
      %v574 = vadd.f32 %v261, %v542
      %v575 = vadd.f32 %v262, %v545
      %v576 = vadd.f32 %v263, %v550
      %v577 = vadd.f32 %v264, %v553
      %v578 = vadd.f32 %v265, %v558
      %v579 = vadd.f32 %v266, %v561
      %v580 = vadd.f32 %v267, %v566
      %v581 = vadd.f32 %v268, %v569
      %587 = vrot.lane.b32.xlu0 %v283, 96
      %v588 = vpop.permute.xlu0 %587
      %589 = vrot.lane.b32.xlu0 %v284, 96
      %v590 = vpop.permute.xlu0 %589
      %591 = vrot.lane.b32.xlu0 %v285, 96
      %v592 = vpop.permute.xlu0 %591
      %593 = vrot.lane.b32.xlu0 %v286, 96
      %v594 = vpop.permute.xlu0 %593
      %595 = vrot.lane.b32.xlu0 %v287, 96
      %v596 = vpop.permute.xlu0 %595
      %598 = vrot.lane.b32.xlu0 %v288, 96
      %v599 = vpop.permute.xlu0 %598
      %v601 = vsel %vm290, %v588, 0
      %v604 = vsel %vm290, %v590, 0
      %v607 = vsel %vm290, %v592, 0
      %v610 = vsel %vm290, %v594, 0
      %v613 = vsel %vm290, %v596, 0
      %v616 = vsel %vm290, %v599, 0
      %618 = vmatprep.subr.bf16.mxu0 0
      %619 = vmatpush1.bf16.xpose.msra.mxu0 %v616
      %620 = vmatprep.subr.bf16.mxu0 0
      %621 = vmatpush1.bf16.xpose.msra.mxu0 0
      %622 = vmatprep.subr.bf16.mxu0 0
      %623 = vmatpush1.bf16.xpose.msra.mxu0 0
      %624 = vmatprep.subr.bf16.mxu0 0
      %625 = vmatpush1.bf16.xpose.msra.mxu0 0
      %626 = vmatprep.subr.bf16.mxu0 0
      %627 = vmatpush1.bf16.xpose.msra.mxu0 0
      %628 = vmatprep.subr.bf16.mxu0 0
      %629 = vmatpush1.bf16.xpose.msra.mxu0 0
      %630 = vmatprep.subr.bf16.mxu0 0
      %631 = vmatpush1.bf16.xpose.msra.mxu0 0
      %632 = vmatprep.subr.bf16.mxu0 0
      %633 = vmatpush1.bf16.xpose.msra.mxu0 0
      %634 = vmatprep.subr.bf16.mxu0 0
      %635 = vmatpush1.bf16.xpose.msra.mxu0 0
      %636 = vmatprep.subr.bf16.mxu0 0
      %637 = vmatpush1.bf16.xpose.msra.mxu0 0
      %638 = vmatprep.subr.bf16.mxu0 0
      %639 = vmatpush1.bf16.xpose.msra.mxu0 0
      %640 = vmatprep.subr.bf16.mxu0 0
      %641 = vmatpush1.bf16.xpose.msra.mxu0 0
      %642 = vmatprep.subr.bf16.mxu0 0
      %643 = vmatpush1.bf16.xpose.msra.mxu0 0
      %644 = vmatprep.subr.bf16.mxu0 0
      %645 = vmatpush1.bf16.xpose.msra.mxu0 0
      %646 = vmatprep.subr.bf16.mxu0 0
      %647 = vmatpush1.bf16.xpose.msra.mxu0 0
      %648 = vmatprep.subr.bf16.mxu0 0
      %649 = vmatpush1.bf16.xpose.msra.mxu0 0
      %650 = vmatprep.mubr.bf16.mxu0 0
      %651 = vmatmul.mubr.bf16.gmra.mrb[0].mxu0 %v601
      %v652 = vpop.f32.mrb[0].mxu0
      %v653 = vadd.f32 %v258, %v652
      %v654 = vpop.f32.mrb[0].mxu0
      %v655 = vpop.f32.mrb[0].mxu0
      %v656 = vadd.f32 %v258, %v655
      %v657 = vpop.f32.mrb[0].mxu0
      %658 = vmatprep.mubr.bf16.mxu0 0
      %659 = vmatmul.mubr.bf16.gmra.mrb[0].mxu0 %v604
      %v660 = vpop.f32.mrb[0].mxu0
      %v661 = vadd.f32 %v258, %v660
      %v662 = vpop.f32.mrb[0].mxu0
      %v663 = vpop.f32.mrb[0].mxu0
      %v664 = vadd.f32 %v258, %v663
      %v665 = vpop.f32.mrb[0].mxu0
      %666 = vmatprep.mubr.bf16.mxu0 0
      %667 = vmatmul.mubr.bf16.gmra.mrb[0].mxu0 %v607
      %v668 = vpop.f32.mrb[0].mxu0
      %v669 = vadd.f32 %v258, %v668
      %v670 = vpop.f32.mrb[0].mxu0
      %v671 = vpop.f32.mrb[0].mxu0
      %v672 = vadd.f32 %v258, %v671
      %v673 = vpop.f32.mrb[0].mxu0
      %674 = vmatprep.mubr.bf16.mxu0 0
      %675 = vmatmul.mubr.bf16.gmra.mrb[0].mxu0 %v610
      %v676 = vpop.f32.mrb[0].mxu0
      %v677 = vadd.f32 %v258, %v676
      %v678 = vpop.f32.mrb[0].mxu0
      %v679 = vpop.f32.mrb[0].mxu0
      %v680 = vadd.f32 %v258, %v679
      %v681 = vpop.f32.mrb[0].mxu0
      %682 = vmatprep.mubr.bf16.mxu0 0
      %683 = vmatmul.mubr.bf16.gmra.mrb[0].mxu0 %v613
      %v684 = vpop.f32.mrb[0].mxu0
      %v685 = vadd.f32 %v258, %v684
      %v686 = vpop.f32.mrb[0].mxu0
      %v687 = vpop.f32.mrb[0].mxu0
      %v688 = vadd.f32 %v258, %v687
      %v689 = vpop.f32.mrb[0].mxu0
      %690 = vdwg.mxu0
      %v691 = vsel %vm382, %v653, -inf
      %v692 = vsel %vm382, %v656, -inf
      %v693 = vsel %vm382, %v661, -inf
      %v694 = vsel %vm382, %v664, -inf
      %v695 = vsel %vm382, %v669, -inf
      %v696 = vmax.f32 %v691, %v695
      %v697 = vsel %vm382, %v672, -inf
      %v698 = vmax.f32 %v692, %v697
      %v699 = vsel %vm382, %v677, -inf
      %v700 = vmax.f32 %v693, %v699
      %v701 = vsel %vm382, %v680, -inf
      %v702 = vmax.f32 %v694, %v701
      %v703 = vsel %vm382, %v685, -inf
      %v704 = vmax.f32 %v696, %v703
      %v705 = vsel %vm397, %v688, -inf
      %v706 = vmax.f32 %v698, %v705
      %v707 = vmax.f32 %v704, %v706
      %v708 = vmax.f32 %v700, %v702
      %v709 = vmax.f32 %v707, %v708
      %v710 = vrot.slane %v709, 4
      %v711 = vmax.f32 %v709, %v710
      %v712 = vrot.slane %v711, 2
      %v713 = vmax.f32 %v711, %v712
      %v714 = vrot.slane %v713, 1
      %v715 = vmax.f32 %v713, %v714
      %v716 = vsub.f32 %v653, %v715
      %v717 = vsub.f32 %v656, %v715
      %v718 = vsub.f32 %v661, %v715
      %v719 = vsub.f32 %v664, %v715
      %v720 = vsub.f32 %v669, %v715
      %v721 = vsub.f32 %v672, %v715
      %v722 = vsub.f32 %v677, %v715
      %v723 = vsub.f32 %v680, %v715
      %v724 = vsub.f32 %v685, %v715
      %v725 = vsub.f32 %v688, %v715
      %v726 = vmul.f32 %v716, 1.442695
      %v727 = vpow.pop %v726
      %v728 = vmul.f32 %v717, 1.442695
      %v729 = vpow.pop %v728
      %v730 = vmul.f32 %v718, 1.442695
      %v731 = vpow.pop %v730
      %v732 = vmul.f32 %v719, 1.442695
      %v733 = vpow.pop %v732
      %v734 = vmul.f32 %v720, 1.442695
      %v735 = vpow.pop %v734
      %v736 = vmul.f32 %v721, 1.442695
      %v737 = vpow.pop %v736
      %v738 = vmul.f32 %v722, 1.442695
      %v739 = vpow.pop %v738
      %v740 = vmul.f32 %v723, 1.442695
      %v741 = vpow.pop %v740
      %v742 = vmul.f32 %v724, 1.442695
      %v743 = vpow.pop %v742
      %v744 = vmul.f32 %v725, 1.442695
      %v745 = vpow.pop %v744
      %v746 = vsel %vm382, %v727, 0.0
      %v747 = vsel %vm382, %v729, 0.0
      %v748 = vadd.f32 %v746, %v747
      %v749 = vsel %vm382, %v731, 0.0
      %v750 = vadd.f32 %v748, %v749
      %v751 = vsel %vm382, %v733, 0.0
      %v752 = vadd.f32 %v750, %v751
      %v753 = vsel %vm382, %v735, 0.0
      %v754 = vadd.f32 %v752, %v753
      %v755 = vsel %vm382, %v737, 0.0
      %v756 = vadd.f32 %v754, %v755
      %v757 = vsel %vm382, %v739, 0.0
      %v758 = vadd.f32 %v756, %v757
      %v759 = vsel %vm382, %v741, 0.0
      %v760 = vadd.f32 %v758, %v759
      %v761 = vsel %vm382, %v743, 0.0
      %v762 = vadd.f32 %v760, %v761
      %v763 = vsel %vm397, %v745, 0.0
      %v764 = vadd.f32 %v762, %v763
      %v765 = vrot.slane %v764, 4
      %v766 = vadd.f32 %v764, %v765
      %v767 = vrot.slane %v766, 2
      %v768 = vadd.f32 %v766, %v767
      %v769 = vrot.slane %v768, 1
      %v770 = vadd.f32 %v768, %v769
      %v771 = vrcp.pop %v770
      %v772 = vmul.f32 %v727, %v771
      %v773 = vmul.f32 %v729, %v771
      %v774 = vmul.f32 %v731, %v771
      %v775 = vmul.f32 %v733, %v771
      %v776 = vmul.f32 %v735, %v771
      %v777 = vmul.f32 %v737, %v771
      %v778 = vmul.f32 %v739, %v771
      %v779 = vmul.f32 %v741, %v771
      %v780 = vmul.f32 %v743, %v771
      %v781 = vmul.f32 %v745, %v771
      %v782 = vpack.c.bf16 %v773, %v772
      %v783 = vpack.c.bf16 %v775, %v774
      %v784 = vpack.c.bf16 %v777, %v776
      %v785 = vpack.c.bf16 %v779, %v778
      %v786 = vpack.c.bf16 %v781, %v780
      %788 = vrot.lane.b32.xlu0 %v289, 96
      %v789 = vpop.permute.xlu0 %788
      %v791 = vsel %vm382, %v782, 0
      %v794 = vsel %vm382, %v783, 0
      %v797 = vsel %vm382, %v784, 0
      %v800 = vsel %vm382, %v785, 0
      %v803 = vsel %vm382, %v786, 0
      %v806 = vsel %vm495, %v789, 0
      %808 = vmatprep.subr.bf16.mxu0 0
      %809 = vmatpush1.bf16.msra.mxu0 %v806
      %810 = vmatprep.subr.bf16.mxu0 0
      %811 = vmatpush1.bf16.msra.mxu0 0
      %812 = vmatprep.subr.bf16.mxu0 0
      %813 = vmatpush1.bf16.msra.mxu0 0
      %814 = vmatprep.subr.bf16.mxu0 0
      %815 = vmatpush1.bf16.msra.mxu0 0
      %816 = vmatprep.subr.bf16.mxu0 0
      %817 = vmatpush1.bf16.msra.mxu0 0
      %818 = vmatprep.subr.bf16.mxu0 0
      %819 = vmatpush1.bf16.msra.mxu0 0
      %820 = vmatprep.subr.bf16.mxu0 0
      %821 = vmatpush1.bf16.msra.mxu0 0
      %822 = vmatprep.subr.bf16.mxu0 0
      %823 = vmatpush1.bf16.msra.mxu0 0
      %824 = vmatprep.subr.bf16.mxu0 0
      %825 = vmatpush1.bf16.msra.mxu0 0
      %826 = vmatprep.subr.bf16.mxu0 0
      %827 = vmatpush1.bf16.msra.mxu0 0
      %828 = vmatprep.subr.bf16.mxu0 0
      %829 = vmatpush1.bf16.msra.mxu0 0
      %830 = vmatprep.subr.bf16.mxu0 0
      %831 = vmatpush1.bf16.msra.mxu0 0
      %832 = vmatprep.subr.bf16.mxu0 0
      %833 = vmatpush1.bf16.msra.mxu0 0
      %834 = vmatprep.subr.bf16.mxu0 0
      %835 = vmatpush1.bf16.msra.mxu0 0
      %836 = vmatprep.subr.bf16.mxu0 0
      %837 = vmatpush1.bf16.msra.mxu0 0
      %838 = vmatprep.subr.bf16.mxu0 0
      %839 = vmatpush1.bf16.msra.mxu0 0
      %840 = vmatprep.mubr.bf16.mxu0 0
      %841 = vmatmul.mubr.bf16.gmra.mrb[0].mxu0 %v791
      %v842 = vpop.f32.mrb[0].mxu0
      %v843 = vadd.f32 0.0, %v842
      %v844 = vpop.f32.mrb[0].mxu0
      %v845 = vpop.f32.mrb[0].mxu0
      %v846 = vadd.f32 0.0, %v845
      %v847 = vpop.f32.mrb[0].mxu0
      %848 = vmatprep.mubr.bf16.mxu0 0
      %849 = vmatmul.mubr.bf16.gmra.mrb[0].mxu0 %v794
      %v850 = vpop.f32.mrb[0].mxu0
      %v851 = vadd.f32 0.0, %v850
      %v852 = vpop.f32.mrb[0].mxu0
      %v853 = vpop.f32.mrb[0].mxu0
      %v854 = vadd.f32 0.0, %v853
      %v855 = vpop.f32.mrb[0].mxu0
      %856 = vmatprep.mubr.bf16.mxu0 0
      %857 = vmatmul.mubr.bf16.gmra.mrb[0].mxu0 %v797
      %v858 = vpop.f32.mrb[0].mxu0
      %v859 = vadd.f32 0.0, %v858
      %v860 = vpop.f32.mrb[0].mxu0
      %v861 = vpop.f32.mrb[0].mxu0
      %v862 = vadd.f32 0.0, %v861
      %v863 = vpop.f32.mrb[0].mxu0
      %864 = vmatprep.mubr.bf16.mxu0 0
      %865 = vmatmul.mubr.bf16.gmra.mrb[0].mxu0 %v800
      %v866 = vpop.f32.mrb[0].mxu0
      %v867 = vadd.f32 0.0, %v866
      %v868 = vpop.f32.mrb[0].mxu0
      %v869 = vpop.f32.mrb[0].mxu0
      %v870 = vadd.f32 0.0, %v869
      %v871 = vpop.f32.mrb[0].mxu0
      %872 = vmatprep.mubr.bf16.mxu0 0
      %873 = vmatmul.mubr.bf16.gmra.mrb[0].mxu0 %v803
      %v874 = vpop.f32.mrb[0].mxu0
      %v875 = vadd.f32 0.0, %v874
      %v876 = vpop.f32.mrb[0].mxu0
      %v877 = vpop.f32.mrb[0].mxu0
      %v878 = vadd.f32 0.0, %v877
      %v879 = vpop.f32.mrb[0].mxu0
      %880 = vdwg.mxu0
      %891 = vrot.lane.b32.xlu0 %v843, 32
      %v892 = vpop.permute.xlu0 %891
      %893 = vrot.lane.b32.xlu0 %v846, 32
      %v894 = vpop.permute.xlu0 %893
      %895 = vrot.lane.b32.xlu0 %v851, 32
      %v896 = vpop.permute.xlu0 %895
      %897 = vrot.lane.b32.xlu0 %v854, 32
      %v898 = vpop.permute.xlu0 %897
      %899 = vrot.lane.b32.xlu0 %v859, 32
      %v900 = vpop.permute.xlu0 %899
      %901 = vrot.lane.b32.xlu0 %v862, 32
      %v902 = vpop.permute.xlu0 %901
      %903 = vrot.lane.b32.xlu0 %v867, 32
      %v904 = vpop.permute.xlu0 %903
      %905 = vrot.lane.b32.xlu0 %v870, 32
      %v906 = vpop.permute.xlu0 %905
      %907 = vrot.lane.b32.xlu0 %v875, 32
      %v908 = vpop.permute.xlu0 %907
      %909 = vrot.lane.b32.xlu0 %v878, 32
      %v910 = vpop.permute.xlu0 %909
      %v921 = vadd.f32 %v259, %v892
      %v922 = vadd.f32 %v260, %v894
      %v923 = vadd.f32 %v261, %v896
      %v924 = vadd.f32 %v262, %v898
      %v925 = vadd.f32 %v263, %v900
      %v926 = vadd.f32 %v264, %v902
      %v927 = vadd.f32 %v265, %v904
      %v928 = vadd.f32 %v266, %v906
      %v929 = vadd.f32 %v267, %v908
      %v930 = vadd.f32 %v268, %v910
      %931 = vrot.lane.b32.xlu0 %v283, 64
      %v932 = vpop.permute.xlu0 %931
      %933 = vrot.lane.b32.xlu0 %v284, 64
      %v934 = vpop.permute.xlu0 %933
      %935 = vrot.lane.b32.xlu0 %v285, 64
      %v936 = vpop.permute.xlu0 %935
      %937 = vrot.lane.b32.xlu0 %v286, 64
      %v938 = vpop.permute.xlu0 %937
      %939 = vrot.lane.b32.xlu0 %v287, 64
      %v940 = vpop.permute.xlu0 %939
      %941 = vrot.lane.b32.xlu0 %v288, 64
      %v942 = vpop.permute.xlu0 %941
      %v944 = vsel %vm290, %v932, 0
      %v947 = vsel %vm290, %v934, 0
      %v950 = vsel %vm290, %v936, 0
      %v953 = vsel %vm290, %v938, 0
      %v956 = vsel %vm290, %v940, 0
      %v959 = vsel %vm290, %v942, 0
      %961 = vmatprep.subr.bf16.mxu0 0
      %962 = vmatpush1.bf16.xpose.msra.mxu0 %v959
      %963 = vmatprep.subr.bf16.mxu0 0
      %964 = vmatpush1.bf16.xpose.msra.mxu0 0
      %965 = vmatprep.subr.bf16.mxu0 0
      %966 = vmatpush1.bf16.xpose.msra.mxu0 0
      %967 = vmatprep.subr.bf16.mxu0 0
      %968 = vmatpush1.bf16.xpose.msra.mxu0 0
      %969 = vmatprep.subr.bf16.mxu0 0
      %970 = vmatpush1.bf16.xpose.msra.mxu0 0
      %971 = vmatprep.subr.bf16.mxu0 0
      %972 = vmatpush1.bf16.xpose.msra.mxu0 0
      %973 = vmatprep.subr.bf16.mxu0 0
      %974 = vmatpush1.bf16.xpose.msra.mxu0 0
      %975 = vmatprep.subr.bf16.mxu0 0
      %976 = vmatpush1.bf16.xpose.msra.mxu0 0
      %977 = vmatprep.subr.bf16.mxu0 0
      %978 = vmatpush1.bf16.xpose.msra.mxu0 0
      %979 = vmatprep.subr.bf16.mxu0 0
      %980 = vmatpush1.bf16.xpose.msra.mxu0 0
      %981 = vmatprep.subr.bf16.mxu0 0
      %982 = vmatpush1.bf16.xpose.msra.mxu0 0
      %983 = vmatprep.subr.bf16.mxu0 0
      %984 = vmatpush1.bf16.xpose.msra.mxu0 0
      %985 = vmatprep.subr.bf16.mxu0 0
      %986 = vmatpush1.bf16.xpose.msra.mxu0 0
      %987 = vmatprep.subr.bf16.mxu0 0
      %988 = vmatpush1.bf16.xpose.msra.mxu0 0
      %989 = vmatprep.subr.bf16.mxu0 0
      %990 = vmatpush1.bf16.xpose.msra.mxu0 0
      %991 = vmatprep.subr.bf16.mxu0 0
      %992 = vmatpush1.bf16.xpose.msra.mxu0 0
      %993 = vmatprep.mubr.bf16.mxu0 0
      %994 = vmatmul.mubr.bf16.gmra.mrb[0].mxu0 %v944
      %v995 = vpop.f32.mrb[0].mxu0
      %v996 = vadd.f32 %v258, %v995
      %v997 = vpop.f32.mrb[0].mxu0
      %v998 = vpop.f32.mrb[0].mxu0
      %v999 = vadd.f32 %v258, %v998
      %v1000 = vpop.f32.mrb[0].mxu0
      %1001 = vmatprep.mubr.bf16.mxu0 0
      %1002 = vmatmul.mubr.bf16.gmra.mrb[0].mxu0 %v947
      %v1003 = vpop.f32.mrb[0].mxu0
      %v1004 = vadd.f32 %v258, %v1003
      %v1005 = vpop.f32.mrb[0].mxu0
      %v1006 = vpop.f32.mrb[0].mxu0
      %v1007 = vadd.f32 %v258, %v1006
      %v1008 = vpop.f32.mrb[0].mxu0
      %1009 = vmatprep.mubr.bf16.mxu0 0
      %1010 = vmatmul.mubr.bf16.gmra.mrb[0].mxu0 %v950
      %v1011 = vpop.f32.mrb[0].mxu0
      %v1012 = vadd.f32 %v258, %v1011
      %v1013 = vpop.f32.mrb[0].mxu0
      %v1014 = vpop.f32.mrb[0].mxu0
      %v1015 = vadd.f32 %v258, %v1014
      %v1016 = vpop.f32.mrb[0].mxu0
      %1017 = vmatprep.mubr.bf16.mxu0 0
      %1018 = vmatmul.mubr.bf16.gmra.mrb[0].mxu0 %v953
      %v1019 = vpop.f32.mrb[0].mxu0
      %v1020 = vadd.f32 %v258, %v1019
      %v1021 = vpop.f32.mrb[0].mxu0
      %v1022 = vpop.f32.mrb[0].mxu0
      %v1023 = vadd.f32 %v258, %v1022
      %v1024 = vpop.f32.mrb[0].mxu0
      %1025 = vmatprep.mubr.bf16.mxu0 0
      %1026 = vmatmul.mubr.bf16.gmra.mrb[0].mxu0 %v956
      %v1027 = vpop.f32.mrb[0].mxu0
      %v1028 = vadd.f32 %v258, %v1027
      %v1029 = vpop.f32.mrb[0].mxu0
      %v1030 = vpop.f32.mrb[0].mxu0
      %v1031 = vadd.f32 %v258, %v1030
      %v1032 = vpop.f32.mrb[0].mxu0
      %1033 = vdwg.mxu0
      %v1034 = vsel %vm382, %v996, -inf
      %v1035 = vsel %vm382, %v999, -inf
      %v1036 = vsel %vm382, %v1004, -inf
      %v1037 = vsel %vm382, %v1007, -inf
      %v1038 = vsel %vm382, %v1012, -inf
      %v1039 = vmax.f32 %v1034, %v1038
      %v1040 = vsel %vm382, %v1015, -inf
      %v1041 = vmax.f32 %v1035, %v1040
      %v1042 = vsel %vm382, %v1020, -inf
      %v1043 = vmax.f32 %v1036, %v1042
      %v1044 = vsel %vm382, %v1023, -inf
      %v1045 = vmax.f32 %v1037, %v1044
      %v1046 = vsel %vm382, %v1028, -inf
      %v1047 = vmax.f32 %v1039, %v1046
      %v1048 = vsel %vm397, %v1031, -inf
      %v1049 = vmax.f32 %v1041, %v1048
      %v1050 = vmax.f32 %v1047, %v1049
      %v1051 = vmax.f32 %v1043, %v1045
      %v1052 = vmax.f32 %v1050, %v1051
      %v1053 = vrot.slane %v1052, 4
      %v1054 = vmax.f32 %v1052, %v1053
      %v1055 = vrot.slane %v1054, 2
      %v1056 = vmax.f32 %v1054, %v1055
      %v1057 = vrot.slane %v1056, 1
      %v1058 = vmax.f32 %v1056, %v1057
      %v1059 = vsub.f32 %v996, %v1058
      %v1060 = vsub.f32 %v999, %v1058
      %v1061 = vsub.f32 %v1004, %v1058
      %v1062 = vsub.f32 %v1007, %v1058
      %v1063 = vsub.f32 %v1012, %v1058
      %v1064 = vsub.f32 %v1015, %v1058
      %v1065 = vsub.f32 %v1020, %v1058
      %v1066 = vsub.f32 %v1023, %v1058
      %v1067 = vsub.f32 %v1028, %v1058
      %v1068 = vsub.f32 %v1031, %v1058
      %v1069 = vmul.f32 %v1059, 1.442695
      %v1070 = vpow.pop %v1069
      %v1071 = vmul.f32 %v1060, 1.442695
      %v1072 = vpow.pop %v1071
      %v1073 = vmul.f32 %v1061, 1.442695
      %v1074 = vpow.pop %v1073
      %v1075 = vmul.f32 %v1062, 1.442695
      %v1076 = vpow.pop %v1075
      %v1077 = vmul.f32 %v1063, 1.442695
      %v1078 = vpow.pop %v1077
      %v1079 = vmul.f32 %v1064, 1.442695
      %v1080 = vpow.pop %v1079
      %v1081 = vmul.f32 %v1065, 1.442695
      %v1082 = vpow.pop %v1081
      %v1083 = vmul.f32 %v1066, 1.442695
      %v1084 = vpow.pop %v1083
      %v1085 = vmul.f32 %v1067, 1.442695
      %v1086 = vpow.pop %v1085
      %v1087 = vmul.f32 %v1068, 1.442695
      %v1088 = vpow.pop %v1087
      %v1089 = vsel %vm382, %v1070, 0.0
      %v1090 = vsel %vm382, %v1072, 0.0
      %v1091 = vadd.f32 %v1089, %v1090
      %v1092 = vsel %vm382, %v1074, 0.0
      %v1093 = vadd.f32 %v1091, %v1092
      %v1094 = vsel %vm382, %v1076, 0.0
      %v1095 = vadd.f32 %v1093, %v1094
      %v1096 = vsel %vm382, %v1078, 0.0
      %v1097 = vadd.f32 %v1095, %v1096
      %v1098 = vsel %vm382, %v1080, 0.0
      %v1099 = vadd.f32 %v1097, %v1098
      %v1100 = vsel %vm382, %v1082, 0.0
      %v1101 = vadd.f32 %v1099, %v1100
      %v1102 = vsel %vm382, %v1084, 0.0
      %v1103 = vadd.f32 %v1101, %v1102
      %v1104 = vsel %vm382, %v1086, 0.0
      %v1105 = vadd.f32 %v1103, %v1104
      %v1106 = vsel %vm397, %v1088, 0.0
      %v1107 = vadd.f32 %v1105, %v1106
      %v1108 = vrot.slane %v1107, 4
      %v1109 = vadd.f32 %v1107, %v1108
      %v1110 = vrot.slane %v1109, 2
      %v1111 = vadd.f32 %v1109, %v1110
      %v1112 = vrot.slane %v1111, 1
      %v1113 = vadd.f32 %v1111, %v1112
      %v1114 = vrcp.pop %v1113
      %v1115 = vmul.f32 %v1070, %v1114
      %v1116 = vmul.f32 %v1072, %v1114
      %v1117 = vmul.f32 %v1074, %v1114
      %v1118 = vmul.f32 %v1076, %v1114
      %v1119 = vmul.f32 %v1078, %v1114
      %v1120 = vmul.f32 %v1080, %v1114
      %v1121 = vmul.f32 %v1082, %v1114
      %v1122 = vmul.f32 %v1084, %v1114
      %v1123 = vmul.f32 %v1086, %v1114
      %v1124 = vmul.f32 %v1088, %v1114
      %v1125 = vpack.c.bf16 %v1116, %v1115
      %v1126 = vpack.c.bf16 %v1118, %v1117
      %v1127 = vpack.c.bf16 %v1120, %v1119
      %v1128 = vpack.c.bf16 %v1122, %v1121
      %v1129 = vpack.c.bf16 %v1124, %v1123
      %1130 = vrot.lane.b32.xlu0 %v289, 64
      %v1131 = vpop.permute.xlu0 %1130
      %v1133 = vsel %vm382, %v1125, 0
      %v1136 = vsel %vm382, %v1126, 0
      %v1139 = vsel %vm382, %v1127, 0
      %v1142 = vsel %vm382, %v1128, 0
      %v1145 = vsel %vm382, %v1129, 0
      %v1148 = vsel %vm495, %v1131, 0
      %1150 = vmatprep.subr.bf16.mxu0 0
      %1151 = vmatpush1.bf16.msra.mxu0 %v1148
      %1152 = vmatprep.subr.bf16.mxu0 0
      %1153 = vmatpush1.bf16.msra.mxu0 0
      %1154 = vmatprep.subr.bf16.mxu0 0
      %1155 = vmatpush1.bf16.msra.mxu0 0
      %1156 = vmatprep.subr.bf16.mxu0 0
      %1157 = vmatpush1.bf16.msra.mxu0 0
      %1158 = vmatprep.subr.bf16.mxu0 0
      %1159 = vmatpush1.bf16.msra.mxu0 0
      %1160 = vmatprep.subr.bf16.mxu0 0
      %1161 = vmatpush1.bf16.msra.mxu0 0
      %1162 = vmatprep.subr.bf16.mxu0 0
      %1163 = vmatpush1.bf16.msra.mxu0 0
      %1164 = vmatprep.subr.bf16.mxu0 0
      %1165 = vmatpush1.bf16.msra.mxu0 0
      %1166 = vmatprep.subr.bf16.mxu0 0
      %1167 = vmatpush1.bf16.msra.mxu0 0
      %1168 = vmatprep.subr.bf16.mxu0 0
      %1169 = vmatpush1.bf16.msra.mxu0 0
      %1170 = vmatprep.subr.bf16.mxu0 0
      %1171 = vmatpush1.bf16.msra.mxu0 0
      %1172 = vmatprep.subr.bf16.mxu0 0
      %1173 = vmatpush1.bf16.msra.mxu0 0
      %1174 = vmatprep.subr.bf16.mxu0 0
      %1175 = vmatpush1.bf16.msra.mxu0 0
      %1176 = vmatprep.subr.bf16.mxu0 0
      %1177 = vmatpush1.bf16.msra.mxu0 0
      %1178 = vmatprep.subr.bf16.mxu0 0
      %1179 = vmatpush1.bf16.msra.mxu0 0
      %1180 = vmatprep.subr.bf16.mxu0 0
      %1181 = vmatpush1.bf16.msra.mxu0 0
      %1182 = vmatprep.mubr.bf16.mxu0 0
      %1183 = vmatmul.mubr.bf16.gmra.mrb[0].mxu0 %v1133
      %v1184 = vpop.f32.mrb[0].mxu0
      %v1185 = vadd.f32 0.0, %v1184
      %v1186 = vpop.f32.mrb[0].mxu0
      %v1187 = vpop.f32.mrb[0].mxu0
      %v1188 = vadd.f32 0.0, %v1187
      %v1189 = vpop.f32.mrb[0].mxu0
      %1190 = vmatprep.mubr.bf16.mxu0 0
      %1191 = vmatmul.mubr.bf16.gmra.mrb[0].mxu0 %v1136
      %v1192 = vpop.f32.mrb[0].mxu0
      %v1193 = vadd.f32 0.0, %v1192
      %v1194 = vpop.f32.mrb[0].mxu0
      %v1195 = vpop.f32.mrb[0].mxu0
      %v1196 = vadd.f32 0.0, %v1195
      %v1197 = vpop.f32.mrb[0].mxu0
      %1198 = vmatprep.mubr.bf16.mxu0 0
      %1199 = vmatmul.mubr.bf16.gmra.mrb[0].mxu0 %v1139
      %v1200 = vpop.f32.mrb[0].mxu0
      %v1201 = vadd.f32 0.0, %v1200
      %v1202 = vpop.f32.mrb[0].mxu0
      %v1203 = vpop.f32.mrb[0].mxu0
      %v1204 = vadd.f32 0.0, %v1203
      %v1205 = vpop.f32.mrb[0].mxu0
      %1206 = vmatprep.mubr.bf16.mxu0 0
      %1207 = vmatmul.mubr.bf16.gmra.mrb[0].mxu0 %v1142
      %v1208 = vpop.f32.mrb[0].mxu0
      %v1209 = vadd.f32 0.0, %v1208
      %v1210 = vpop.f32.mrb[0].mxu0
      %v1211 = vpop.f32.mrb[0].mxu0
      %v1212 = vadd.f32 0.0, %v1211
      %v1213 = vpop.f32.mrb[0].mxu0
      %1214 = vmatprep.mubr.bf16.mxu0 0
      %1215 = vmatmul.mubr.bf16.gmra.mrb[0].mxu0 %v1145
      %v1216 = vpop.f32.mrb[0].mxu0
      %v1217 = vadd.f32 0.0, %v1216
      %v1218 = vpop.f32.mrb[0].mxu0
      %v1219 = vpop.f32.mrb[0].mxu0
      %v1220 = vadd.f32 0.0, %v1219
      %v1221 = vpop.f32.mrb[0].mxu0
      %1222 = vdwg.mxu0
      %1233 = vrot.lane.b32.xlu0 %v1185, 64
      %v1234 = vpop.permute.xlu0 %1233
      %1235 = vrot.lane.b32.xlu0 %v1188, 64
      %v1236 = vpop.permute.xlu0 %1235
      %1237 = vrot.lane.b32.xlu0 %v1193, 64
      %v1238 = vpop.permute.xlu0 %1237
      %1239 = vrot.lane.b32.xlu0 %v1196, 64
      %v1240 = vpop.permute.xlu0 %1239
      %1241 = vrot.lane.b32.xlu0 %v1201, 64
      %v1242 = vpop.permute.xlu0 %1241
      %1243 = vrot.lane.b32.xlu0 %v1204, 64
      %v1244 = vpop.permute.xlu0 %1243
      %1245 = vrot.lane.b32.xlu0 %v1209, 64
      %v1246 = vpop.permute.xlu0 %1245
      %1247 = vrot.lane.b32.xlu0 %v1212, 64
      %v1248 = vpop.permute.xlu0 %1247
      %1249 = vrot.lane.b32.xlu0 %v1217, 64
      %v1250 = vpop.permute.xlu0 %1249
      %1251 = vrot.lane.b32.xlu0 %v1220, 64
      %v1252 = vpop.permute.xlu0 %1251
      %v1263 = vadd.f32 %v259, %v1234
      %v1264 = vadd.f32 %v260, %v1236
      %v1265 = vadd.f32 %v261, %v1238
      %v1266 = vadd.f32 %v262, %v1240
      %v1267 = vadd.f32 %v263, %v1242
      %v1268 = vadd.f32 %v264, %v1244
      %v1269 = vadd.f32 %v265, %v1246
      %v1270 = vadd.f32 %v266, %v1248
      %v1271 = vadd.f32 %v267, %v1250
      %v1272 = vadd.f32 %v268, %v1252
      %1273 = vrot.lane.b32.xlu0 %v283, 32
      %v1274 = vpop.permute.xlu0 %1273
      %1275 = vrot.lane.b32.xlu0 %v284, 32
      %v1276 = vpop.permute.xlu0 %1275
      %1277 = vrot.lane.b32.xlu0 %v285, 32
      %v1278 = vpop.permute.xlu0 %1277
      %1279 = vrot.lane.b32.xlu0 %v286, 32
      %v1280 = vpop.permute.xlu0 %1279
      %1281 = vrot.lane.b32.xlu0 %v287, 32
      %v1282 = vpop.permute.xlu0 %1281
      %1283 = vrot.lane.b32.xlu0 %v288, 32
      %v1284 = vpop.permute.xlu0 %1283
      %v1286 = vsel %vm290, %v1274, 0
      %v1289 = vsel %vm290, %v1276, 0
      %v1292 = vsel %vm290, %v1278, 0
      %v1295 = vsel %vm290, %v1280, 0
      %v1298 = vsel %vm290, %v1282, 0
      %v1301 = vsel %vm290, %v1284, 0
      %1303 = vmatprep.subr.bf16.mxu0 0
      %1304 = vmatpush1.bf16.xpose.msra.mxu0 %v1301
      %1305 = vmatprep.subr.bf16.mxu0 0
      %1306 = vmatpush1.bf16.xpose.msra.mxu0 0
      %1307 = vmatprep.subr.bf16.mxu0 0
      %1308 = vmatpush1.bf16.xpose.msra.mxu0 0
      %1309 = vmatprep.subr.bf16.mxu0 0
      %1310 = vmatpush1.bf16.xpose.msra.mxu0 0
      %1311 = vmatprep.subr.bf16.mxu0 0
      %1312 = vmatpush1.bf16.xpose.msra.mxu0 0
      %1313 = vmatprep.subr.bf16.mxu0 0
      %1314 = vmatpush1.bf16.xpose.msra.mxu0 0
      %1315 = vmatprep.subr.bf16.mxu0 0
      %1316 = vmatpush1.bf16.xpose.msra.mxu0 0
      %1317 = vmatprep.subr.bf16.mxu0 0
      %1318 = vmatpush1.bf16.xpose.msra.mxu0 0
      %1319 = vmatprep.subr.bf16.mxu0 0
      %1320 = vmatpush1.bf16.xpose.msra.mxu0 0
      %1321 = vmatprep.subr.bf16.mxu0 0
      %1322 = vmatpush1.bf16.xpose.msra.mxu0 0
      %1323 = vmatprep.subr.bf16.mxu0 0
      %1324 = vmatpush1.bf16.xpose.msra.mxu0 0
      %1325 = vmatprep.subr.bf16.mxu0 0
      %1326 = vmatpush1.bf16.xpose.msra.mxu0 0
      %1327 = vmatprep.subr.bf16.mxu0 0
      %1328 = vmatpush1.bf16.xpose.msra.mxu0 0
      %1329 = vmatprep.subr.bf16.mxu0 0
      %1330 = vmatpush1.bf16.xpose.msra.mxu0 0
      %1331 = vmatprep.subr.bf16.mxu0 0
      %1332 = vmatpush1.bf16.xpose.msra.mxu0 0
      %1333 = vmatprep.subr.bf16.mxu0 0
      %1334 = vmatpush1.bf16.xpose.msra.mxu0 0
      %1335 = vmatprep.mubr.bf16.mxu0 0
      %1336 = vmatmul.mubr.bf16.gmra.mrb[0].mxu0 %v1286
      %v1337 = vpop.f32.mrb[0].mxu0
      %v1338 = vadd.f32 %v258, %v1337
      %v1339 = vpop.f32.mrb[0].mxu0
      %v1340 = vpop.f32.mrb[0].mxu0
      %v1341 = vadd.f32 %v258, %v1340
      %v1342 = vpop.f32.mrb[0].mxu0
      %1343 = vmatprep.mubr.bf16.mxu0 0
      %1344 = vmatmul.mubr.bf16.gmra.mrb[0].mxu0 %v1289
      %v1345 = vpop.f32.mrb[0].mxu0
      %v1346 = vadd.f32 %v258, %v1345
      %v1347 = vpop.f32.mrb[0].mxu0
      %v1348 = vpop.f32.mrb[0].mxu0
      %v1349 = vadd.f32 %v258, %v1348
      %v1350 = vpop.f32.mrb[0].mxu0
      %1351 = vmatprep.mubr.bf16.mxu0 0
      %1352 = vmatmul.mubr.bf16.gmra.mrb[0].mxu0 %v1292
      %v1353 = vpop.f32.mrb[0].mxu0
      %v1354 = vadd.f32 %v258, %v1353
      %v1355 = vpop.f32.mrb[0].mxu0
      %v1356 = vpop.f32.mrb[0].mxu0
      %v1357 = vadd.f32 %v258, %v1356
      %v1358 = vpop.f32.mrb[0].mxu0
      %1359 = vmatprep.mubr.bf16.mxu0 0
      %1360 = vmatmul.mubr.bf16.gmra.mrb[0].mxu0 %v1295
      %v1361 = vpop.f32.mrb[0].mxu0
      %v1362 = vadd.f32 %v258, %v1361
      %v1363 = vpop.f32.mrb[0].mxu0
      %v1364 = vpop.f32.mrb[0].mxu0
      %v1365 = vadd.f32 %v258, %v1364
      %v1366 = vpop.f32.mrb[0].mxu0
      %1367 = vmatprep.mubr.bf16.mxu0 0
      %1368 = vmatmul.mubr.bf16.gmra.mrb[0].mxu0 %v1298
      %v1369 = vpop.f32.mrb[0].mxu0
      %v1370 = vadd.f32 %v258, %v1369
      %v1371 = vpop.f32.mrb[0].mxu0
      %v1372 = vpop.f32.mrb[0].mxu0
      %v1373 = vadd.f32 %v258, %v1372
      %v1374 = vpop.f32.mrb[0].mxu0
      %1375 = vdwg.mxu0
      %v1376 = vsel %vm382, %v1338, -inf
      %v1377 = vsel %vm382, %v1341, -inf
      %v1378 = vsel %vm382, %v1346, -inf
      %v1379 = vsel %vm382, %v1349, -inf
      %v1380 = vsel %vm382, %v1354, -inf
      %v1381 = vmax.f32 %v1376, %v1380
      %v1382 = vsel %vm382, %v1357, -inf
      %v1383 = vmax.f32 %v1377, %v1382
      %v1384 = vsel %vm382, %v1362, -inf
      %v1385 = vmax.f32 %v1378, %v1384
      %v1386 = vsel %vm382, %v1365, -inf
      %v1387 = vmax.f32 %v1379, %v1386
      %v1388 = vsel %vm382, %v1370, -inf
      %v1389 = vmax.f32 %v1381, %v1388
      %v1390 = vsel %vm397, %v1373, -inf
      %v1391 = vmax.f32 %v1383, %v1390
      %v1392 = vmax.f32 %v1389, %v1391
      %v1393 = vmax.f32 %v1385, %v1387
      %v1394 = vmax.f32 %v1392, %v1393
      %v1395 = vrot.slane %v1394, 4
      %v1396 = vmax.f32 %v1394, %v1395
      %v1397 = vrot.slane %v1396, 2
      %v1398 = vmax.f32 %v1396, %v1397
      %v1399 = vrot.slane %v1398, 1
      %v1400 = vmax.f32 %v1398, %v1399
      %v1401 = vsub.f32 %v1338, %v1400
      %v1402 = vsub.f32 %v1341, %v1400
      %v1403 = vsub.f32 %v1346, %v1400
      %v1404 = vsub.f32 %v1349, %v1400
      %v1405 = vsub.f32 %v1354, %v1400
      %v1406 = vsub.f32 %v1357, %v1400
      %v1407 = vsub.f32 %v1362, %v1400
      %v1408 = vsub.f32 %v1365, %v1400
      %v1409 = vsub.f32 %v1370, %v1400
      %v1410 = vsub.f32 %v1373, %v1400
      %v1411 = vmul.f32 %v1401, 1.442695
      %v1412 = vpow.pop %v1411
      %v1413 = vmul.f32 %v1402, 1.442695
      %v1414 = vpow.pop %v1413
      %v1415 = vmul.f32 %v1403, 1.442695
      %v1416 = vpow.pop %v1415
      %v1417 = vmul.f32 %v1404, 1.442695
      %v1418 = vpow.pop %v1417
      %v1419 = vmul.f32 %v1405, 1.442695
      %v1420 = vpow.pop %v1419
      %v1421 = vmul.f32 %v1406, 1.442695
      %v1422 = vpow.pop %v1421
      %v1423 = vmul.f32 %v1407, 1.442695
      %v1424 = vpow.pop %v1423
      %v1425 = vmul.f32 %v1408, 1.442695
      %v1426 = vpow.pop %v1425
      %v1427 = vmul.f32 %v1409, 1.442695
      %v1428 = vpow.pop %v1427
      %v1429 = vmul.f32 %v1410, 1.442695
      %v1430 = vpow.pop %v1429
      %v1431 = vsel %vm382, %v1412, 0.0
      %v1432 = vsel %vm382, %v1414, 0.0
      %v1433 = vadd.f32 %v1431, %v1432
      %v1434 = vsel %vm382, %v1416, 0.0
      %v1435 = vadd.f32 %v1433, %v1434
      %v1436 = vsel %vm382, %v1418, 0.0
      %v1437 = vadd.f32 %v1435, %v1436
      %v1438 = vsel %vm382, %v1420, 0.0
      %v1439 = vadd.f32 %v1437, %v1438
      %v1440 = vsel %vm382, %v1422, 0.0
      %v1441 = vadd.f32 %v1439, %v1440
      %v1442 = vsel %vm382, %v1424, 0.0
      %v1443 = vadd.f32 %v1441, %v1442
      %v1444 = vsel %vm382, %v1426, 0.0
      %v1445 = vadd.f32 %v1443, %v1444
      %v1446 = vsel %vm382, %v1428, 0.0
      %v1447 = vadd.f32 %v1445, %v1446
      %v1448 = vsel %vm397, %v1430, 0.0
      %v1449 = vadd.f32 %v1447, %v1448
      %v1450 = vrot.slane %v1449, 4
      %v1451 = vadd.f32 %v1449, %v1450
      %v1452 = vrot.slane %v1451, 2
      %v1453 = vadd.f32 %v1451, %v1452
      %v1454 = vrot.slane %v1453, 1
      %v1455 = vadd.f32 %v1453, %v1454
      %v1456 = vrcp.pop %v1455
      %v1457 = vmul.f32 %v1412, %v1456
      %v1458 = vmul.f32 %v1414, %v1456
      %v1459 = vmul.f32 %v1416, %v1456
      %v1460 = vmul.f32 %v1418, %v1456
      %v1461 = vmul.f32 %v1420, %v1456
      %v1462 = vmul.f32 %v1422, %v1456
      %v1463 = vmul.f32 %v1424, %v1456
      %v1464 = vmul.f32 %v1426, %v1456
      %v1465 = vmul.f32 %v1428, %v1456
      %v1466 = vmul.f32 %v1430, %v1456
      %v1467 = vpack.c.bf16 %v1458, %v1457
      %v1468 = vpack.c.bf16 %v1460, %v1459
      %v1469 = vpack.c.bf16 %v1462, %v1461
      %v1470 = vpack.c.bf16 %v1464, %v1463
      %v1471 = vpack.c.bf16 %v1466, %v1465
      %1472 = vrot.lane.b32.xlu0 %v289, 32
      %v1473 = vpop.permute.xlu0 %1472
      %v1475 = vsel %vm382, %v1467, 0
      %v1478 = vsel %vm382, %v1468, 0
      %v1481 = vsel %vm382, %v1469, 0
      %v1484 = vsel %vm382, %v1470, 0
      %v1487 = vsel %vm382, %v1471, 0
      %v1490 = vsel %vm495, %v1473, 0
      %1492 = vmatprep.subr.bf16.mxu0 0
      %1493 = vmatpush1.bf16.msra.mxu0 %v1490
      %1494 = vmatprep.subr.bf16.mxu0 0
      %1495 = vmatpush1.bf16.msra.mxu0 0
      %1496 = vmatprep.subr.bf16.mxu0 0
      %1497 = vmatpush1.bf16.msra.mxu0 0
      %1498 = vmatprep.subr.bf16.mxu0 0
      %1499 = vmatpush1.bf16.msra.mxu0 0
      %1500 = vmatprep.subr.bf16.mxu0 0
      %1501 = vmatpush1.bf16.msra.mxu0 0
      %1502 = vmatprep.subr.bf16.mxu0 0
      %1503 = vmatpush1.bf16.msra.mxu0 0
      %1504 = vmatprep.subr.bf16.mxu0 0
      %1505 = vmatpush1.bf16.msra.mxu0 0
      %1506 = vmatprep.subr.bf16.mxu0 0
      %1507 = vmatpush1.bf16.msra.mxu0 0
      %1508 = vmatprep.subr.bf16.mxu0 0
      %1509 = vmatpush1.bf16.msra.mxu0 0
      %1510 = vmatprep.subr.bf16.mxu0 0
      %1511 = vmatpush1.bf16.msra.mxu0 0
      %1512 = vmatprep.subr.bf16.mxu0 0
      %1513 = vmatpush1.bf16.msra.mxu0 0
      %1514 = vmatprep.subr.bf16.mxu0 0
      %1515 = vmatpush1.bf16.msra.mxu0 0
      %1516 = vmatprep.subr.bf16.mxu0 0
      %1517 = vmatpush1.bf16.msra.mxu0 0
      %1518 = vmatprep.subr.bf16.mxu0 0
      %1519 = vmatpush1.bf16.msra.mxu0 0
      %1520 = vmatprep.subr.bf16.mxu0 0
      %1521 = vmatpush1.bf16.msra.mxu0 0
      %1522 = vmatprep.subr.bf16.mxu0 0
      %1523 = vmatpush1.bf16.msra.mxu0 0
      %1524 = vmatprep.mubr.bf16.mxu0 0
      %1525 = vmatmul.mubr.bf16.gmra.mrb[0].mxu0 %v1475
      %v1526 = vpop.f32.mrb[0].mxu0
      %v1527 = vadd.f32 0.0, %v1526
      %v1528 = vpop.f32.mrb[0].mxu0
      %v1529 = vpop.f32.mrb[0].mxu0
      %v1530 = vadd.f32 0.0, %v1529
      %v1531 = vpop.f32.mrb[0].mxu0
      %1532 = vmatprep.mubr.bf16.mxu0 0
      %1533 = vmatmul.mubr.bf16.gmra.mrb[0].mxu0 %v1478
      %v1534 = vpop.f32.mrb[0].mxu0
      %v1535 = vadd.f32 0.0, %v1534
      %v1536 = vpop.f32.mrb[0].mxu0
      %v1537 = vpop.f32.mrb[0].mxu0
      %v1538 = vadd.f32 0.0, %v1537
      %v1539 = vpop.f32.mrb[0].mxu0
      %1540 = vmatprep.mubr.bf16.mxu0 0
      %1541 = vmatmul.mubr.bf16.gmra.mrb[0].mxu0 %v1481
      %v1542 = vpop.f32.mrb[0].mxu0
      %v1543 = vadd.f32 0.0, %v1542
      %v1544 = vpop.f32.mrb[0].mxu0
      %v1545 = vpop.f32.mrb[0].mxu0
      %v1546 = vadd.f32 0.0, %v1545
      %v1547 = vpop.f32.mrb[0].mxu0
      %1548 = vmatprep.mubr.bf16.mxu0 0
      %1549 = vmatmul.mubr.bf16.gmra.mrb[0].mxu0 %v1484
      %v1550 = vpop.f32.mrb[0].mxu0
      %v1551 = vadd.f32 0.0, %v1550
      %v1552 = vpop.f32.mrb[0].mxu0
      %v1553 = vpop.f32.mrb[0].mxu0
      %v1554 = vadd.f32 0.0, %v1553
      %v1555 = vpop.f32.mrb[0].mxu0
      %1556 = vmatprep.mubr.bf16.mxu0 0
      %1557 = vmatmul.mubr.bf16.gmra.mrb[0].mxu0 %v1487
      %v1558 = vpop.f32.mrb[0].mxu0
      %v1559 = vadd.f32 0.0, %v1558
      %v1560 = vpop.f32.mrb[0].mxu0
      %v1561 = vpop.f32.mrb[0].mxu0
      %v1562 = vadd.f32 0.0, %v1561
      %v1563 = vpop.f32.mrb[0].mxu0
      %1564 = vdwg.mxu0
      %1575 = vrot.lane.b32.xlu0 %v1527, 96
      %v1576 = vpop.permute.xlu0 %1575
      %1577 = vrot.lane.b32.xlu0 %v1530, 96
      %v1578 = vpop.permute.xlu0 %1577
      %1579 = vrot.lane.b32.xlu0 %v1535, 96
      %v1580 = vpop.permute.xlu0 %1579
      %1581 = vrot.lane.b32.xlu0 %v1538, 96
      %v1582 = vpop.permute.xlu0 %1581
      %1583 = vrot.lane.b32.xlu0 %v1543, 96
      %v1584 = vpop.permute.xlu0 %1583
      %1585 = vrot.lane.b32.xlu0 %v1546, 96
      %v1586 = vpop.permute.xlu0 %1585
      %1587 = vrot.lane.b32.xlu0 %v1551, 96
      %v1588 = vpop.permute.xlu0 %1587
      %1589 = vrot.lane.b32.xlu0 %v1554, 96
      %v1590 = vpop.permute.xlu0 %1589
      %1591 = vrot.lane.b32.xlu0 %v1559, 96
      %v1592 = vpop.permute.xlu0 %1591
      %1593 = vrot.lane.b32.xlu0 %v1562, 96
      %v1594 = vpop.permute.xlu0 %1593
      %v1605 = vadd.f32 %v259, %v1576
      %v1606 = vadd.f32 %v260, %v1578
      %v1607 = vadd.f32 %v261, %v1580
      %v1608 = vadd.f32 %v262, %v1582
      %v1609 = vadd.f32 %v263, %v1584
      %v1610 = vadd.f32 %v264, %v1586
      %v1611 = vadd.f32 %v265, %v1588
      %v1612 = vadd.f32 %v266, %v1590
      %v1613 = vadd.f32 %v267, %v1592
      %v1614 = vadd.f32 %v268, %v1594
      %v1615 = vsel %vm290, %v572, %v921
      %v1616 = vsel %vm290, %v573, %v922
      %v1617 = vsel %vm290, %v574, %v923
      %v1618 = vsel %vm290, %v575, %v924
      %v1619 = vsel %vm290, %v576, %v925
      %v1620 = vsel %vm290, %v577, %v926
      %v1621 = vsel %vm290, %v578, %v927
      %v1622 = vsel %vm290, %v579, %v928
      %v1623 = vsel %vm290, %v580, %v929
      %v1624 = vsel %vm290, %v581, %v930
      %vm1625 = vcmask 523264
      %v1626 = vsel %vm1625, %v1615, %v1263
      %v1627 = vsel %vm1625, %v1616, %v1264
      %v1628 = vsel %vm1625, %v1617, %v1265
      %v1629 = vsel %vm1625, %v1618, %v1266
      %v1630 = vsel %vm1625, %v1619, %v1267
      %v1631 = vsel %vm1625, %v1620, %v1268
      %v1632 = vsel %vm1625, %v1621, %v1269
      %v1633 = vsel %vm1625, %v1622, %v1270
      %v1634 = vsel %vm1625, %v1623, %v1271
      %v1635 = vsel %vm1625, %v1624, %v1272
      %vm1636 = vcmask 785408
      %v1637 = vsel %vm1636, %v1626, %v1605
      %v1638 = vsel %vm1636, %v1627, %v1606
      %v1639 = vsel %vm1636, %v1628, %v1607
      %v1640 = vsel %vm1636, %v1629, %v1608
      %v1641 = vsel %vm1636, %v1630, %v1609
      %v1642 = vsel %vm1636, %v1631, %v1610
      %v1643 = vsel %vm1636, %v1632, %v1611
      %v1644 = vsel %vm1636, %v1633, %v1612
      %v1645 = vsel %vm1636, %v1634, %v1613
      %v1646 = vsel %vm1636, %v1635, %v1614
      %v1647 = vld [vmem:[%s4] sm:$0xff]
      %v1648 = vld [vmem:[%s4 + $0x8] sm:$0xff]
      %v1649 = vld [vmem:[%s4 + $0x10] sm:$0xff]
      %v1650 = vld [vmem:[%s4 + $0x18] sm:$0xff]
      %v1651 = vld [vmem:[%s4 + $0x20] sm:$0xff]
      %v1652 = vld [vmem:[%s4 + $0x28] sm:$0xff]
      %v1653 = vld [vmem:[%s4 + $0x30] sm:$0xff]
      %v1654 = vld [vmem:[%s4 + $0x38] sm:$0xff]
      %v1655 = vld [vmem:[%s4 + $0x40] sm:$0xff]
      %v1656 = vld [vmem:[%s4 + $0x48] sm:$0xff]
      %v1657 = vld [vmem:[%s4 + $0x50] sm:$0xff]
      %v1658 = vld [vmem:[%s4 + $0x58] sm:$0xff]
      %v1659 = vld [vmem:[%s4 + $0x60] sm:$0xff]
      %v1660 = vld [vmem:[%s4 + $0x68] sm:$0xff]
      %v1661 = vld [vmem:[%s4 + $0x70] sm:$0xff]
      %v1662 = vld [vmem:[%s4 + $0x78] sm:$0xff]
      %v1663 = vld [vmem:[%s5] sm:$0x1]
      %v1664 = vpack.c.bf16 %v1638, %v1637
      %v1665 = vpack.c.bf16 %v1640, %v1639
      %v1666 = vpack.c.bf16 %v1642, %v1641
      %v1667 = vpack.c.bf16 %v1644, %v1643
      %v1668 = vpack.c.bf16 %v1646, %v1645
      %v1669 = vpack.c.bf16 %v1648, %v1647
      %v1670 = vpack.c.bf16 %v1650, %v1649
      %v1671 = vpack.c.bf16 %v1652, %v1651
      %v1672 = vpack.c.bf16 %v1654, %v1653
      %v1673 = vpack.c.bf16 %v1656, %v1655
      %v1674 = vpack.c.bf16 %v1658, %v1657
      %v1675 = vpack.c.bf16 %v1660, %v1659
      %v1676 = vpack.c.bf16 %v1662, %v1661
      %v1678 = vlaneseq
      %v1679 = vshrl.u32 %v1678, 7
      %v1680 = vsub.s32 0, %v1679
      %v1681 = vrot.slane %v1663, %v1680
      %1683 = vmatprep.subr.bf16.mxu0 0
      %1684 = vmatpush1.bf16.msra.mxu0 %v1669
      %1685 = vmatprep.subr.bf16.mxu0 0
      %1686 = vmatpush1.bf16.msra.mxu0 %v1670
      %1687 = vmatprep.subr.bf16.mxu0 0
      %1688 = vmatpush1.bf16.msra.mxu0 %v1671
      %1689 = vmatprep.subr.bf16.mxu0 0
      %1690 = vmatpush1.bf16.msra.mxu0 %v1672
      %1691 = vmatprep.subr.bf16.mxu0 0
      %1692 = vmatpush1.bf16.msra.mxu0 %v1673
      %1693 = vmatprep.subr.bf16.mxu0 0
      %1694 = vmatpush1.bf16.msra.mxu0 %v1674
      %1695 = vmatprep.subr.bf16.mxu0 0
      %1696 = vmatpush1.bf16.msra.mxu0 %v1675
      %1697 = vmatprep.subr.bf16.mxu0 0
      %1698 = vmatpush1.bf16.msra.mxu0 %v1676
      %1699 = vmatprep.subr.bf16.mxu0 0
      %1700 = vmatpush1.bf16.msra.mxu0 0
      %1701 = vmatprep.subr.bf16.mxu0 0
      %1702 = vmatpush1.bf16.msra.mxu0 0
      %1703 = vmatprep.subr.bf16.mxu0 0
      %1704 = vmatpush1.bf16.msra.mxu0 0
      %1705 = vmatprep.subr.bf16.mxu0 0
      %1706 = vmatpush1.bf16.msra.mxu0 0
      %1707 = vmatprep.subr.bf16.mxu0 0
      %1708 = vmatpush1.bf16.msra.mxu0 0
      %1709 = vmatprep.subr.bf16.mxu0 0
      %1710 = vmatpush1.bf16.msra.mxu0 0
      %1711 = vmatprep.subr.bf16.mxu0 0
      %1712 = vmatpush1.bf16.msra.mxu0 0
      %1713 = vmatprep.subr.bf16.mxu0 0
      %1714 = vmatpush1.bf16.msra.mxu0 0
      %1715 = vmatprep.mubr.bf16.mxu0 0
      %1716 = vmatmul.mubr.bf16.gmra.mrb[0].mxu0 %v1664
      %v1717 = vpop.f32.mrb[0].mxu0
      %v1718 = vadd.f32 %v1681, %v1717
      %v1719 = vpop.f32.mrb[0].mxu0
      %v1720 = vpop.f32.mrb[0].mxu0
      %v1721 = vadd.f32 %v1681, %v1720
      %v1722 = vpop.f32.mrb[0].mxu0
      %1723 = vmatprep.mubr.bf16.mxu0 0
      %1724 = vmatmul.mubr.bf16.gmra.mrb[0].mxu0 %v1665
      %v1725 = vpop.f32.mrb[0].mxu0
      %v1726 = vadd.f32 %v1681, %v1725
      %v1727 = vpop.f32.mrb[0].mxu0
      %v1728 = vpop.f32.mrb[0].mxu0
      %v1729 = vadd.f32 %v1681, %v1728
      %v1730 = vpop.f32.mrb[0].mxu0
      %1731 = vmatprep.mubr.bf16.mxu0 0
      %1732 = vmatmul.mubr.bf16.gmra.mrb[0].mxu0 %v1666
      %v1733 = vpop.f32.mrb[0].mxu0
      %v1734 = vadd.f32 %v1681, %v1733
      %v1735 = vpop.f32.mrb[0].mxu0
      %v1736 = vpop.f32.mrb[0].mxu0
      %v1737 = vadd.f32 %v1681, %v1736
      %v1738 = vpop.f32.mrb[0].mxu0
      %1739 = vmatprep.mubr.bf16.mxu0 0
      %1740 = vmatmul.mubr.bf16.gmra.mrb[0].mxu0 %v1667
      %v1741 = vpop.f32.mrb[0].mxu0
      %v1742 = vadd.f32 %v1681, %v1741
      %v1743 = vpop.f32.mrb[0].mxu0
      %v1744 = vpop.f32.mrb[0].mxu0
      %v1745 = vadd.f32 %v1681, %v1744
      %v1746 = vpop.f32.mrb[0].mxu0
      %1747 = vmatprep.mubr.bf16.mxu0 0
      %1748 = vmatmul.mubr.bf16.gmra.mrb[0].mxu0 %v1668
      %v1749 = vpop.f32.mrb[0].mxu0
      %v1750 = vadd.f32 %v1681, %v1749
      %v1751 = vpop.f32.mrb[0].mxu0
      %v1752 = vpop.f32.mrb[0].mxu0
      %v1753 = vadd.f32 %v1681, %v1752
      %v1754 = vpop.f32.mrb[0].mxu0
      %1755 = vdwg.mxu0
      %v1756 = vmax.f32 %v1718, 0.0
      %v1757 = vmax.f32 %v1721, 0.0
      %v1758 = vmax.f32 %v1726, 0.0
      %v1759 = vmax.f32 %v1729, 0.0
      %v1760 = vmax.f32 %v1734, 0.0
      %v1761 = vmax.f32 %v1737, 0.0
      %v1762 = vmax.f32 %v1742, 0.0
      %v1763 = vmax.f32 %v1745, 0.0
      %v1764 = vmax.f32 %v1750, 0.0
      %v1765 = vmax.f32 %v1753, 0.0
      %v1766 = vadd.f32 %v1637, %v1756
      %v1767 = vadd.f32 %v1638, %v1757
      %v1768 = vadd.f32 %v1639, %v1758
      %v1769 = vadd.f32 %v1640, %v1759
      %v1770 = vadd.f32 %v1641, %v1760
      %v1771 = vadd.f32 %v1642, %v1761
      %v1772 = vadd.f32 %v1643, %v1762
      %v1773 = vadd.f32 %v1644, %v1763
      %v1774 = vadd.f32 %v1645, %v1764
      %v1775 = vadd.f32 %v1646, %v1765
      %1776 = vst [vmem:[%s251] sm:$0xff] %v1766
      %1777 = vst [vmem:[%s251 + $0x8] sm:$0xff] %v1767
      %1778 = vst [vmem:[%s251 + $0x10] sm:$0xff] %v1768
      %1779 = vst [vmem:[%s251 + $0x18] sm:$0xff] %v1769
      %1780 = vst [vmem:[%s251 + $0x20] sm:$0xff] %v1770
      %1781 = vst [vmem:[%s251 + $0x28] sm:$0xff] %v1771
      %1782 = vst [vmem:[%s251 + $0x30] sm:$0xff] %v1772
      %1783 = vst [vmem:[%s251 + $0x38] sm:$0xff] %v1773
      %1784 = vst [vmem:[%s251 + $0x40] sm:$0xff] %v1774
      %1785 = vst [vmem:[%s251 + $0x48] sm:$0x7] %v1775
      %p1786 = scmp.lt.s32.totalorder %s23, 1
      %s1787 = scalar_select %p1786, %s23, 1
      %s1788 = smul.addr %s1787, 10
      %s1789 = smul.addr %s1788, 8
      %s1790 = scalar_lea.vmem %s6, %s1789
      // Predicated region
      $region41: #{gma_forward.5} parent=39 // pred_check
        %p1791 = pneg %p156
      $region42: #{gma_forward.5} parent=39 // pred_check_branch
        %1793 = sbr.rel (%p1791) target = $region44
      $region43: #{gma_forward.5} parent=39 // pred_region
        _
      $region44: #{gma_forward.5} parent=39 // pred_fallthru
        _
    $region40: #{gma_forward.5} parent=5 // pred_fallthru
      _
    %p1794 = scmp.le.s32.totalorder 2, %s18
    // Predicated region
    $region45: #{gma_forward.5} parent=5 // pred_check
      %p1795 = pneg %p1794
    $region46: #{gma_forward.5} parent=5 // pred_check_branch
      %1797 = sbr.rel (%p1795) target = $region48
    $region47: #{gma_forward.5} parent=5 // pred_region
      %s1798 = ssub.s32 %s18, 2
      // Predicated region
      $region49: #{gma_forward.5} parent=47 // pred_check
        %p1799 = pneg %p162
      $region50: #{gma_forward.5} parent=47 // pred_check_branch
        %1801 = sbr.rel (%p1799) target = $region52
      $region51: #{gma_forward.5} parent=47 // pred_region
        %p1802 = scmp.lt.s32.totalorder %s24, 1
        %s1803 = scalar_select %p1802, %s24, 1
        %s1804 = smul.addr %s1803, 10
        %s1805 = smul.addr %s1804, 8
        %s1806 = scalar_lea.vmem %s6, %s1805
      $region52: #{gma_forward.5} parent=47 // pred_fallthru
        _
    $region48: #{gma_forward.5} parent=5 // pred_fallthru
      _
  $region6: #{gma_forward.5} parent=0 // loop_footer
    %s22 = sadd.s32 1, %s18
  $region7: #{gma_forward.5} parent=0 // loop_footer_branch
    %17 = sbr.rel target = $region3
  $region8: #{gma_forward.5} parent=0 // loop_exit
    _

// kernel: gma_forward.6
$region0: #{gma_forward.6}
  #allocation0 [shape = 'u32[]', space=smem, size = 0x4, offset = 0x4, fixed_abs, tag = 'smem constant byte address 0x4 - core index']
  #allocation1 [shape = 'u32[144,128]{1,0:T(1,128)}', space=vmem, size = 0x12000, scoped, tag = 'internal scratch']
  %s0 = inlined_call_operand.vmem [shape: f32[2,75,128], index: 0, kind: input, shape index: {}]
  %s1 = inlined_call_operand.vmem [shape: f32[128,128], index: 1, kind: input, shape index: {}]
  %s2 = inlined_call_operand.vmem [shape: f32[1,128], index: 2, kind: input, shape index: {}]
  %s3 = inlined_call_operand.vmem [shape: f32[128,128], index: 3, kind: input, shape index: {}]
  %s4 = inlined_call_operand.vmem [shape: f32[1,128], index: 4, kind: input, shape index: {}]
  %s5 = inlined_call_operand.vmem [shape: f32[128,128], index: 5, kind: input, shape index: {}]
  %s6 = inlined_call_operand.vmem [shape: f32[1,128], index: 6, kind: input, shape index: {}]
  %s7 = inlined_call_operand.vmem [shape: f32[128,128], index: 7, kind: input, shape index: {}]
  %s8 = inlined_call_operand.vmem [shape: f32[1,128], index: 8, kind: input, shape index: {}]
  %s9 = inlined_call_operand.vmem [shape: f32[2,75,128], index: 9, kind: output, shape index: {}]
  %s10 = sld [smem:[#allocation0]]
  $region69: #{gma_forward.6} parent=0
    _
  %s12 = ssub.s32 1, %s10
  %s13 = scalar_select 0, %s12, %s10
  loop: start=0, step=1, limit=4
  $region2: #{gma_forward.6} parent=0 // loop_pre_header
    _
  $region3: #{gma_forward.6} parent=0 // loop_header
    %s15 = sphi 0, %s19
    %p16 = scmp.ge.s32.totalorder %s15, 4
    %s25 = sphi 0, %s27
    %s28 = sphi 0, %s25
    %s29 = sphi 0, %s28
    %s45 = sphi 0, %s29
    %s49 = sphi 0, %s49
    %s51 = sphi 0, %s49
    %s52 = sphi 0, %s51
    %s66 = sphi 0, %s52
    %s70 = sphi 0, %s70
    %s72 = sphi 0, %s70
    %s73 = sphi 0, %s72
    %s87 = sphi 0, %s73
    %s91 = sphi 0, %s91
    %s93 = sphi 0, %s91
    %s94 = sphi 0, %s93
    %s108 = sphi 0, %s94
    %s112 = sphi 0, %s112
    %s114 = sphi 0, %s112
    %s115 = sphi 0, %s114
    %s129 = sphi 0, %s115
    %s133 = sphi 0, %s133
    %s135 = sphi 0, %s133
    %s136 = sphi 0, %s135
    %s150 = sphi 0, %s136
    %s154 = sphi 0, %s154
    %s156 = sphi 0, %s154
    %s157 = sphi 0, %s156
    %s171 = sphi 0, %s157
    %s175 = sphi 0, %s175
    %s177 = sphi 0, %s175
    %s178 = sphi 0, %s177
    %s192 = sphi 0, %s178
    %s196 = sphi 0, %s196
    %s198 = sphi 0, %s196
    %s199 = sphi 0, %s198
    %s213 = sphi 0, %s199
    %s219 = sphi 0, %s221
    %s222 = sphi 0, %s219
    %s223 = sphi 0, %s222
    %s239 = sphi 0, %s223
  $region4: #{gma_forward.6} parent=0 // loop_header_branch
    %18 = sbr.rel (%p16) target = $region8
  $region5: #{gma_forward.6} parent=0 // loop_body
    %s20 = ssub.s32 %s15, 1
    %s21 = ssub.s32 %s15, 2
    %s22 = sadd.s32 %s15, 1
    %s23 = ssub.s32 %s15, %s22
    %p24 = scmp.eq.s32.totalorder %s23, 0
    %s26 = sadd.s32 %s25, 1
    %s27 = scalar_select %p24, %s25, %s26
    %p30 = pneg %p24
    %p31 = scmp.eq.s32.totalorder %s15, 1
    %p32 = por %p30, %p31
    %p33 = scmp.ne.s32.totalorder %s25, %s28
    %p34 = scmp.eq.s32.totalorder %s15, 0
    %p35 = por %p33, %p34
    %p36 = scmp.ne.s32.totalorder %s25, %s28
    %p37 = scmp.eq.s32.totalorder %s20, 1
    %p38 = por %p36, %p37
    %p39 = scmp.ne.s32.totalorder %s28, %s29
    %p40 = scmp.eq.s32.totalorder %s20, 0
    %p41 = por %p39, %p40
    %p42 = scmp.ne.s32.totalorder %s28, %s29
    %p43 = scmp.eq.s32.totalorder %s21, 1
    %p44 = por %p42, %p43
    %p46 = scmp.ne.s32.totalorder %s29, %s45
    %p47 = scmp.eq.s32.totalorder %s21, 0
    %p48 = por %p46, %p47
    %s50 = sadd.s32 %s49, 1
    %p53 = scmp.eq.s32.totalorder %s15, 1
    %p54 = scmp.ne.s32.totalorder %s49, %s51
    %p55 = scmp.eq.s32.totalorder %s15, 0
    %p56 = por %p54, %p55
    %p57 = scmp.ne.s32.totalorder %s49, %s51
    %p58 = scmp.eq.s32.totalorder %s20, 1
    %p59 = por %p57, %p58
    %p60 = scmp.ne.s32.totalorder %s51, %s52
    %p61 = scmp.eq.s32.totalorder %s20, 0
    %p62 = por %p60, %p61
    %p63 = scmp.ne.s32.totalorder %s51, %s52
    %p64 = scmp.eq.s32.totalorder %s21, 1
    %p65 = por %p63, %p64
    %p67 = scmp.ne.s32.totalorder %s52, %s66
    %p68 = scmp.eq.s32.totalorder %s21, 0
    %p69 = por %p67, %p68
    %s71 = sadd.s32 %s70, 1
    %p74 = scmp.eq.s32.totalorder %s15, 1
    %p75 = scmp.ne.s32.totalorder %s70, %s72
    %p76 = scmp.eq.s32.totalorder %s15, 0
    %p77 = por %p75, %p76
    %p78 = scmp.ne.s32.totalorder %s70, %s72
    %p79 = scmp.eq.s32.totalorder %s20, 1
    %p80 = por %p78, %p79
    %p81 = scmp.ne.s32.totalorder %s72, %s73
    %p82 = scmp.eq.s32.totalorder %s20, 0
    %p83 = por %p81, %p82
    %p84 = scmp.ne.s32.totalorder %s72, %s73
    %p85 = scmp.eq.s32.totalorder %s21, 1
    %p86 = por %p84, %p85
    %p88 = scmp.ne.s32.totalorder %s73, %s87
    %p89 = scmp.eq.s32.totalorder %s21, 0
    %p90 = por %p88, %p89
    %s92 = sadd.s32 %s91, 1
    %p95 = scmp.eq.s32.totalorder %s15, 1
    %p96 = scmp.ne.s32.totalorder %s91, %s93
    %p97 = scmp.eq.s32.totalorder %s15, 0
    %p98 = por %p96, %p97
    %p99 = scmp.ne.s32.totalorder %s91, %s93
    %p100 = scmp.eq.s32.totalorder %s20, 1
    %p101 = por %p99, %p100
    %p102 = scmp.ne.s32.totalorder %s93, %s94
    %p103 = scmp.eq.s32.totalorder %s20, 0
    %p104 = por %p102, %p103
    %p105 = scmp.ne.s32.totalorder %s93, %s94
    %p106 = scmp.eq.s32.totalorder %s21, 1
    %p107 = por %p105, %p106
    %p109 = scmp.ne.s32.totalorder %s94, %s108
    %p110 = scmp.eq.s32.totalorder %s21, 0
    %p111 = por %p109, %p110
    %s113 = sadd.s32 %s112, 1
    %p116 = scmp.eq.s32.totalorder %s15, 1
    %p117 = scmp.ne.s32.totalorder %s112, %s114
    %p118 = scmp.eq.s32.totalorder %s15, 0
    %p119 = por %p117, %p118
    %p120 = scmp.ne.s32.totalorder %s112, %s114
    %p121 = scmp.eq.s32.totalorder %s20, 1
    %p122 = por %p120, %p121
    %p123 = scmp.ne.s32.totalorder %s114, %s115
    %p124 = scmp.eq.s32.totalorder %s20, 0
    %p125 = por %p123, %p124
    %p126 = scmp.ne.s32.totalorder %s114, %s115
    %p127 = scmp.eq.s32.totalorder %s21, 1
    %p128 = por %p126, %p127
    %p130 = scmp.ne.s32.totalorder %s115, %s129
    %p131 = scmp.eq.s32.totalorder %s21, 0
    %p132 = por %p130, %p131
    %s134 = sadd.s32 %s133, 1
    %p137 = scmp.eq.s32.totalorder %s15, 1
    %p138 = scmp.ne.s32.totalorder %s133, %s135
    %p139 = scmp.eq.s32.totalorder %s15, 0
    %p140 = por %p138, %p139
    %p141 = scmp.ne.s32.totalorder %s133, %s135
    %p142 = scmp.eq.s32.totalorder %s20, 1
    %p143 = por %p141, %p142
    %p144 = scmp.ne.s32.totalorder %s135, %s136
    %p145 = scmp.eq.s32.totalorder %s20, 0
    %p146 = por %p144, %p145
    %p147 = scmp.ne.s32.totalorder %s135, %s136
    %p148 = scmp.eq.s32.totalorder %s21, 1
    %p149 = por %p147, %p148
    %p151 = scmp.ne.s32.totalorder %s136, %s150
    %p152 = scmp.eq.s32.totalorder %s21, 0
    %p153 = por %p151, %p152
    %s155 = sadd.s32 %s154, 1
    %p158 = scmp.eq.s32.totalorder %s15, 1
    %p159 = scmp.ne.s32.totalorder %s154, %s156
    %p160 = scmp.eq.s32.totalorder %s15, 0
    %p161 = por %p159, %p160
    %p162 = scmp.ne.s32.totalorder %s154, %s156
    %p163 = scmp.eq.s32.totalorder %s20, 1
    %p164 = por %p162, %p163
    %p165 = scmp.ne.s32.totalorder %s156, %s157
    %p166 = scmp.eq.s32.totalorder %s20, 0
    %p167 = por %p165, %p166
    %p168 = scmp.ne.s32.totalorder %s156, %s157
    %p169 = scmp.eq.s32.totalorder %s21, 1
    %p170 = por %p168, %p169
    %p172 = scmp.ne.s32.totalorder %s157, %s171
    %p173 = scmp.eq.s32.totalorder %s21, 0
    %p174 = por %p172, %p173
    %s176 = sadd.s32 %s175, 1
    %p179 = scmp.eq.s32.totalorder %s15, 1
    %p180 = scmp.ne.s32.totalorder %s175, %s177
    %p181 = scmp.eq.s32.totalorder %s15, 0
    %p182 = por %p180, %p181
    %p183 = scmp.ne.s32.totalorder %s175, %s177
    %p184 = scmp.eq.s32.totalorder %s20, 1
    %p185 = por %p183, %p184
    %p186 = scmp.ne.s32.totalorder %s177, %s178
    %p187 = scmp.eq.s32.totalorder %s20, 0
    %p188 = por %p186, %p187
    %p189 = scmp.ne.s32.totalorder %s177, %s178
    %p190 = scmp.eq.s32.totalorder %s21, 1
    %p191 = por %p189, %p190
    %p193 = scmp.ne.s32.totalorder %s178, %s192
    %p194 = scmp.eq.s32.totalorder %s21, 0
    %p195 = por %p193, %p194
    %s197 = sadd.s32 %s196, 1
    %p200 = scmp.eq.s32.totalorder %s15, 1
    %p201 = scmp.ne.s32.totalorder %s196, %s198
    %p202 = scmp.eq.s32.totalorder %s15, 0
    %p203 = por %p201, %p202
    %p204 = scmp.ne.s32.totalorder %s196, %s198
    %p205 = scmp.eq.s32.totalorder %s20, 1
    %p206 = por %p204, %p205
    %p207 = scmp.ne.s32.totalorder %s198, %s199
    %p208 = scmp.eq.s32.totalorder %s20, 0
    %p209 = por %p207, %p208
    %p210 = scmp.ne.s32.totalorder %s198, %s199
    %p211 = scmp.eq.s32.totalorder %s21, 1
    %p212 = por %p210, %p211
    %p214 = scmp.ne.s32.totalorder %s199, %s213
    %p215 = scmp.eq.s32.totalorder %s21, 0
    %p216 = por %p214, %p215
    %s217 = ssub.s32 %s15, %s22
    %p218 = scmp.eq.s32.totalorder %s217, 0
    %s220 = sadd.s32 %s219, 1
    %s221 = scalar_select %p218, %s219, %s220
    %p224 = pneg %p218
    %p225 = scmp.eq.s32.totalorder %s15, 1
    %p226 = por %p224, %p225
    %p227 = scmp.ne.s32.totalorder %s219, %s222
    %p228 = scmp.eq.s32.totalorder %s15, 0
    %p229 = por %p227, %p228
    %p230 = scmp.ne.s32.totalorder %s219, %s222
    %p231 = scmp.eq.s32.totalorder %s20, 1
    %p232 = por %p230, %p231
    %p233 = scmp.ne.s32.totalorder %s222, %s223
    %p234 = scmp.eq.s32.totalorder %s20, 0
    %p235 = por %p233, %p234
    %p236 = scmp.ne.s32.totalorder %s222, %s223
    %p237 = scmp.eq.s32.totalorder %s21, 1
    %p238 = por %p236, %p237
    %p240 = scmp.ne.s32.totalorder %s223, %s239
    %p241 = scmp.eq.s32.totalorder %s21, 0
    %p242 = por %p240, %p241
    %p243 = scmp.le.s32.totalorder 1, %s15
    %p244 = scmp.lt.s32.totalorder %s15, 3
    %p245 = pnand %p243, %p244
    %p246 = pneg %p245
    // Predicated region
    $region9: #{gma_forward.6} parent=5 // pred_check
      _
    $region10: #{gma_forward.6} parent=5 // pred_check_branch
      %248 = sbr.rel (%p245) target = $region12
    $region11: #{gma_forward.6} parent=5 // pred_region
      %s249 = ssub.s32 %s15, 1
      // Predicated region
      $region13: #{gma_forward.6} parent=11 // pred_check
        %p250 = pneg %p62
      $region14: #{gma_forward.6} parent=11 // pred_check_branch
        %252 = sbr.rel (%p250) target = $region16
      $region15: #{gma_forward.6} parent=11 // pred_region
        _
      $region16: #{gma_forward.6} parent=11 // pred_fallthru
        _
      // Predicated region
      $region17: #{gma_forward.6} parent=11 // pred_check
        %p253 = pneg %p83
      $region18: #{gma_forward.6} parent=11 // pred_check_branch
        %255 = sbr.rel (%p253) target = $region20
      $region19: #{gma_forward.6} parent=11 // pred_region
        _
      $region20: #{gma_forward.6} parent=11 // pred_fallthru
        _
      // Predicated region
      $region21: #{gma_forward.6} parent=11 // pred_check
        %p256 = pneg %p104
      $region22: #{gma_forward.6} parent=11 // pred_check_branch
        %258 = sbr.rel (%p256) target = $region24
      $region23: #{gma_forward.6} parent=11 // pred_region
        _
      $region24: #{gma_forward.6} parent=11 // pred_fallthru
        _
      // Predicated region
      $region25: #{gma_forward.6} parent=11 // pred_check
        %p259 = pneg %p125
      $region26: #{gma_forward.6} parent=11 // pred_check_branch
        %261 = sbr.rel (%p259) target = $region28
      $region27: #{gma_forward.6} parent=11 // pred_region
        _
      $region28: #{gma_forward.6} parent=11 // pred_fallthru
        _
      // Predicated region
      $region29: #{gma_forward.6} parent=11 // pred_check
        %p262 = pneg %p146
      $region30: #{gma_forward.6} parent=11 // pred_check_branch
        %264 = sbr.rel (%p262) target = $region32
      $region31: #{gma_forward.6} parent=11 // pred_region
        _
      $region32: #{gma_forward.6} parent=11 // pred_fallthru
        _
      // Predicated region
      $region33: #{gma_forward.6} parent=11 // pred_check
        %p265 = pneg %p167
      $region34: #{gma_forward.6} parent=11 // pred_check_branch
        %267 = sbr.rel (%p265) target = $region36
      $region35: #{gma_forward.6} parent=11 // pred_region
        _
      $region36: #{gma_forward.6} parent=11 // pred_fallthru
        _
      // Predicated region
      $region37: #{gma_forward.6} parent=11 // pred_check
        %p268 = pneg %p188
      $region38: #{gma_forward.6} parent=11 // pred_check_branch
        %270 = sbr.rel (%p268) target = $region40
      $region39: #{gma_forward.6} parent=11 // pred_region
        _
      $region40: #{gma_forward.6} parent=11 // pred_fallthru
        _
      // Predicated region
      $region41: #{gma_forward.6} parent=11 // pred_check
        %p271 = pneg %p209
      $region42: #{gma_forward.6} parent=11 // pred_check_branch
        %273 = sbr.rel (%p271) target = $region44
      $region43: #{gma_forward.6} parent=11 // pred_region
        _
      $region44: #{gma_forward.6} parent=11 // pred_fallthru
        _
    $region12: #{gma_forward.6} parent=5 // pred_fallthru
      _
    %p274 = scmp.lt.s32.totalorder %s15, 2
    // Predicated region
    $region45: #{gma_forward.6} parent=5 // pred_check
      %p275 = pneg %p274
    $region46: #{gma_forward.6} parent=5 // pred_check_branch
      %277 = sbr.rel (%p275) target = $region48
    $region47: #{gma_forward.6} parent=5 // pred_region
      // Predicated region
      $region49: #{gma_forward.6} parent=47 // pred_check
        %p278 = pneg %p35
      $region50: #{gma_forward.6} parent=47 // pred_check_branch
        %280 = sbr.rel (%p278) target = $region52
      $region51: #{gma_forward.6} parent=47 // pred_region
        %p281 = scmp.lt.s32.totalorder %s15, 1
        %s282 = scalar_select %p281, %s15, 1
        %s283 = smul.addr %s282, 10
        %s284 = smul.addr %s283, 8
        %s285 = scalar_lea.vmem %s0, %s284
      $region52: #{gma_forward.6} parent=47 // pred_fallthru
        _
    $region48: #{gma_forward.6} parent=5 // pred_fallthru
      _
    %p286 = scmp.le.s32.totalorder 1, %s15
    %p287 = scmp.lt.s32.totalorder %s15, 3
    %p288 = pnand %p286, %p287
    %p289 = pneg %p288
    // Predicated region
    $region53: #{gma_forward.6} parent=5 // pred_check
      _
    $region54: #{gma_forward.6} parent=5 // pred_check_branch
      %291 = sbr.rel (%p288) target = $region56
    $region55: #{gma_forward.6} parent=5 // pred_region
      %s292 = ssub.s32 %s15, 1
      %p293 = scmp.lt.s32.totalorder %s20, 1
      %s294 = scalar_select %p293, %s20, 1
      %s295 = smul.addr %s294, 10
      %s296 = smul.addr %s295, 8
      %s297 = scalar_lea.vmem %s0, %s296
      %p298 = pneg %p41
      %p299 = pneg %p38
      %p300 = pneg %p62
      %p301 = pneg %p59
      %p302 = pneg %p83
      %p303 = pneg %p80
      %p304 = pneg %p104
      %p305 = pneg %p101
      %p306 = pneg %p125
      %p307 = pneg %p122
      %p308 = pneg %p146
      %p309 = pneg %p143
      %p310 = pneg %p167
      %p311 = pneg %p164
      %p312 = pneg %p188
      %p313 = pneg %p185
      %p314 = pneg %p209
      %p315 = pneg %p206
      %p316 = pneg %p235
      %p317 = pneg %p232
      %p318 = scmp.lt.s32.totalorder %s20, 1
      %s319 = scalar_select %p318, %s20, 1
      %s320 = smul.addr %s319, 10
      %s321 = smul.addr %s320, 8
      %s322 = scalar_lea.vmem %s9, %s321
      %p323 = scmp.lt.s32.totalorder %s20, 1
      %s324 = scalar_select %p323, %s20, 1
      %s325 = smul.addr %s324, 10
      %s326 = smul.addr %s325, 8
      %s327 = scalar_lea.vmem %s0, %s326
      %p328 = scmp.lt.s32.totalorder %s20, 1
      %s329 = scalar_select %p328, %s20, 1
      %s330 = smul.addr %s329, 10
      %s331 = smul.addr %s330, 8
      %s332 = scalar_lea.vmem %s9, %s331
      %v334 = vld [vmem:[%s327] sm:$0xff]
      %v335 = vld [vmem:[%s327 + $0x8] sm:$0xff]
      %v336 = vld [vmem:[%s327 + $0x10] sm:$0xff]
      %v337 = vld [vmem:[%s327 + $0x18] sm:$0xff]
      %v338 = vld [vmem:[%s327 + $0x20] sm:$0xff]
      %v339 = vld [vmem:[%s327 + $0x28] sm:$0xff]
      %v340 = vld [vmem:[%s327 + $0x30] sm:$0xff]
      %v341 = vld [vmem:[%s327 + $0x38] sm:$0xff]
      %v342 = vld [vmem:[%s327 + $0x40] sm:$0xff]
      %v343 = vld [vmem:[%s327 + $0x48] sm:$0x7]
      %v344 = vld [vmem:[%s1] sm:$0xff]
      %v345 = vld [vmem:[%s1 + $0x8] sm:$0xff]
      %v346 = vld [vmem:[%s1 + $0x10] sm:$0xff]
      %v347 = vld [vmem:[%s1 + $0x18] sm:$0xff]
      %v348 = vld [vmem:[%s1 + $0x20] sm:$0xff]
      %v349 = vld [vmem:[%s1 + $0x28] sm:$0xff]
      %v350 = vld [vmem:[%s1 + $0x30] sm:$0xff]
      %v351 = vld [vmem:[%s1 + $0x38] sm:$0xff]
      %v352 = vld [vmem:[%s1 + $0x40] sm:$0xff]
      %v353 = vld [vmem:[%s1 + $0x48] sm:$0xff]
      %v354 = vld [vmem:[%s1 + $0x50] sm:$0xff]
      %v355 = vld [vmem:[%s1 + $0x58] sm:$0xff]
      %v356 = vld [vmem:[%s1 + $0x60] sm:$0xff]
      %v357 = vld [vmem:[%s1 + $0x68] sm:$0xff]
      %v358 = vld [vmem:[%s1 + $0x70] sm:$0xff]
      %v359 = vld [vmem:[%s1 + $0x78] sm:$0xff]
      %v360 = vpack.c.bf16 %v335, %v334
      %v361 = vpack.c.bf16 %v337, %v336
      %v362 = vpack.c.bf16 %v339, %v338
      %v363 = vpack.c.bf16 %v341, %v340
      %v364 = vpack.c.bf16 %v343, %v342
      %v365 = vpack.c.bf16 %v345, %v344
      %v366 = vpack.c.bf16 %v347, %v346
      %v367 = vpack.c.bf16 %v349, %v348
      %v368 = vpack.c.bf16 %v351, %v350
      %v369 = vpack.c.bf16 %v353, %v352
      %v370 = vpack.c.bf16 %v355, %v354
      %v371 = vpack.c.bf16 %v357, %v356
      %v372 = vpack.c.bf16 %v359, %v358
      %v373 = vld [vmem:[%s2] sm:$0x1]
      %v375 = vlaneseq
      %v376 = vshrl.u32 %v375, 7
      %v377 = vsub.s32 0, %v376
      %v378 = vrot.slane %v373, %v377
      %380 = vmatprep.subr.bf16.mxu0 0
      %381 = vmatpush1.bf16.msra.mxu0 %v365
      %382 = vmatprep.subr.bf16.mxu0 0
      %383 = vmatpush1.bf16.msra.mxu0 %v366
      %384 = vmatprep.subr.bf16.mxu0 0
      %385 = vmatpush1.bf16.msra.mxu0 %v367
      %386 = vmatprep.subr.bf16.mxu0 0
      %387 = vmatpush1.bf16.msra.mxu0 %v368
      %388 = vmatprep.subr.bf16.mxu0 0
      %389 = vmatpush1.bf16.msra.mxu0 %v369
      %390 = vmatprep.subr.bf16.mxu0 0
      %391 = vmatpush1.bf16.msra.mxu0 %v370
      %392 = vmatprep.subr.bf16.mxu0 0
      %393 = vmatpush1.bf16.msra.mxu0 %v371
      %394 = vmatprep.subr.bf16.mxu0 0
      %395 = vmatpush1.bf16.msra.mxu0 %v372
      %396 = vmatprep.subr.bf16.mxu0 0
      %397 = vmatpush1.bf16.msra.mxu0 0
      %398 = vmatprep.subr.bf16.mxu0 0
      %399 = vmatpush1.bf16.msra.mxu0 0
      %400 = vmatprep.subr.bf16.mxu0 0
      %401 = vmatpush1.bf16.msra.mxu0 0
      %402 = vmatprep.subr.bf16.mxu0 0
      %403 = vmatpush1.bf16.msra.mxu0 0
      %404 = vmatprep.subr.bf16.mxu0 0
      %405 = vmatpush1.bf16.msra.mxu0 0
      %406 = vmatprep.subr.bf16.mxu0 0
      %407 = vmatpush1.bf16.msra.mxu0 0
      %408 = vmatprep.subr.bf16.mxu0 0
      %409 = vmatpush1.bf16.msra.mxu0 0
      %410 = vmatprep.subr.bf16.mxu0 0
      %411 = vmatpush1.bf16.msra.mxu0 0
      %412 = vmatprep.mubr.bf16.mxu0 0
      %413 = vmatmul.mubr.bf16.gmra.mrb[0].mxu0 %v360
      %v414 = vpop.f32.mrb[0].mxu0
      %v415 = vadd.f32 %v378, %v414
      %v416 = vpop.f32.mrb[0].mxu0
      %v417 = vpop.f32.mrb[0].mxu0
      %v418 = vadd.f32 %v378, %v417
      %v419 = vpop.f32.mrb[0].mxu0
      %420 = vmatprep.mubr.bf16.mxu0 0
      %421 = vmatmul.mubr.bf16.gmra.mrb[0].mxu0 %v361
      %v422 = vpop.f32.mrb[0].mxu0
      %v423 = vadd.f32 %v378, %v422
      %v424 = vpop.f32.mrb[0].mxu0
      %v425 = vpop.f32.mrb[0].mxu0
      %v426 = vadd.f32 %v378, %v425
      %v427 = vpop.f32.mrb[0].mxu0
      %428 = vmatprep.mubr.bf16.mxu0 0
      %429 = vmatmul.mubr.bf16.gmra.mrb[0].mxu0 %v362
      %v430 = vpop.f32.mrb[0].mxu0
      %v431 = vadd.f32 %v378, %v430
      %v432 = vpop.f32.mrb[0].mxu0
      %v433 = vpop.f32.mrb[0].mxu0
      %v434 = vadd.f32 %v378, %v433
      %v435 = vpop.f32.mrb[0].mxu0
      %436 = vmatprep.mubr.bf16.mxu0 0
      %437 = vmatmul.mubr.bf16.gmra.mrb[0].mxu0 %v363
      %v438 = vpop.f32.mrb[0].mxu0
      %v439 = vadd.f32 %v378, %v438
      %v440 = vpop.f32.mrb[0].mxu0
      %v441 = vpop.f32.mrb[0].mxu0
      %v442 = vadd.f32 %v378, %v441
      %v443 = vpop.f32.mrb[0].mxu0
      %444 = vmatprep.mubr.bf16.mxu0 0
      %445 = vmatmul.mubr.bf16.gmra.mrb[0].mxu0 %v364
      %v446 = vpop.f32.mrb[0].mxu0
      %v447 = vadd.f32 %v378, %v446
      %v448 = vpop.f32.mrb[0].mxu0
      %v449 = vpop.f32.mrb[0].mxu0
      %v450 = vadd.f32 %v378, %v449
      %v451 = vpop.f32.mrb[0].mxu0
      %452 = vdwg.mxu0
      %v453 = vld [vmem:[%s3] sm:$0xff]
      %v454 = vld [vmem:[%s3 + $0x8] sm:$0xff]
      %v455 = vld [vmem:[%s3 + $0x10] sm:$0xff]
      %v456 = vld [vmem:[%s3 + $0x18] sm:$0xff]
      %v457 = vld [vmem:[%s3 + $0x20] sm:$0xff]
      %v458 = vld [vmem:[%s3 + $0x28] sm:$0xff]
      %v459 = vld [vmem:[%s3 + $0x30] sm:$0xff]
      %v460 = vld [vmem:[%s3 + $0x38] sm:$0xff]
      %v461 = vld [vmem:[%s3 + $0x40] sm:$0xff]
      %v462 = vld [vmem:[%s3 + $0x48] sm:$0xff]
      %v463 = vld [vmem:[%s3 + $0x50] sm:$0xff]
      %v464 = vld [vmem:[%s3 + $0x58] sm:$0xff]
      %v465 = vld [vmem:[%s3 + $0x60] sm:$0xff]
      %v466 = vld [vmem:[%s3 + $0x68] sm:$0xff]
      %v467 = vld [vmem:[%s3 + $0x70] sm:$0xff]
      %v468 = vld [vmem:[%s3 + $0x78] sm:$0xff]
      %v469 = vpack.c.bf16 %v454, %v453
      %v470 = vpack.c.bf16 %v456, %v455
      %v471 = vpack.c.bf16 %v458, %v457
      %v472 = vpack.c.bf16 %v460, %v459
      %v473 = vpack.c.bf16 %v462, %v461
      %v474 = vpack.c.bf16 %v464, %v463
      %v475 = vpack.c.bf16 %v466, %v465
      %v476 = vpack.c.bf16 %v468, %v467
      %v477 = vld [vmem:[%s4] sm:$0x1]
      %v479 = vlaneseq
      %v480 = vshrl.u32 %v479, 7
      %v481 = vsub.s32 0, %v480
      %v482 = vrot.slane %v477, %v481
      %484 = vmatprep.subr.bf16.mxu0 0
      %485 = vmatpush1.bf16.msra.mxu0 %v469
      %486 = vmatprep.subr.bf16.mxu0 0
      %487 = vmatpush1.bf16.msra.mxu0 %v470
      %488 = vmatprep.subr.bf16.mxu0 0
      %489 = vmatpush1.bf16.msra.mxu0 %v471
      %490 = vmatprep.subr.bf16.mxu0 0
      %491 = vmatpush1.bf16.msra.mxu0 %v472
      %492 = vmatprep.subr.bf16.mxu0 0
      %493 = vmatpush1.bf16.msra.mxu0 %v473
      %494 = vmatprep.subr.bf16.mxu0 0
      %495 = vmatpush1.bf16.msra.mxu0 %v474
      %496 = vmatprep.subr.bf16.mxu0 0
      %497 = vmatpush1.bf16.msra.mxu0 %v475
      %498 = vmatprep.subr.bf16.mxu0 0
      %499 = vmatpush1.bf16.msra.mxu0 %v476
      %500 = vmatprep.subr.bf16.mxu0 0
      %501 = vmatpush1.bf16.msra.mxu0 0
      %502 = vmatprep.subr.bf16.mxu0 0
      %503 = vmatpush1.bf16.msra.mxu0 0
      %504 = vmatprep.subr.bf16.mxu0 0
      %505 = vmatpush1.bf16.msra.mxu0 0
      %506 = vmatprep.subr.bf16.mxu0 0
      %507 = vmatpush1.bf16.msra.mxu0 0
      %508 = vmatprep.subr.bf16.mxu0 0
      %509 = vmatpush1.bf16.msra.mxu0 0
      %510 = vmatprep.subr.bf16.mxu0 0
      %511 = vmatpush1.bf16.msra.mxu0 0
      %512 = vmatprep.subr.bf16.mxu0 0
      %513 = vmatpush1.bf16.msra.mxu0 0
      %514 = vmatprep.subr.bf16.mxu0 0
      %515 = vmatpush1.bf16.msra.mxu0 0
      %516 = vmatprep.mubr.bf16.mxu0 0
      %517 = vmatmul.mubr.bf16.gmra.mrb[0].mxu0 %v360
      %v518 = vpop.f32.mrb[0].mxu0
      %v519 = vadd.f32 %v482, %v518
      %v520 = vpop.f32.mrb[0].mxu0
      %v521 = vpop.f32.mrb[0].mxu0
      %v522 = vadd.f32 %v482, %v521
      %v523 = vpop.f32.mrb[0].mxu0
      %524 = vmatprep.mubr.bf16.mxu0 0
      %525 = vmatmul.mubr.bf16.gmra.mrb[0].mxu0 %v361
      %v526 = vpop.f32.mrb[0].mxu0
      %v527 = vadd.f32 %v482, %v526
      %v528 = vpop.f32.mrb[0].mxu0
      %v529 = vpop.f32.mrb[0].mxu0
      %v530 = vadd.f32 %v482, %v529
      %v531 = vpop.f32.mrb[0].mxu0
      %532 = vmatprep.mubr.bf16.mxu0 0
      %533 = vmatmul.mubr.bf16.gmra.mrb[0].mxu0 %v362
      %v534 = vpop.f32.mrb[0].mxu0
      %v535 = vadd.f32 %v482, %v534
      %v536 = vpop.f32.mrb[0].mxu0
      %v537 = vpop.f32.mrb[0].mxu0
      %v538 = vadd.f32 %v482, %v537
      %v539 = vpop.f32.mrb[0].mxu0
      %540 = vmatprep.mubr.bf16.mxu0 0
      %541 = vmatmul.mubr.bf16.gmra.mrb[0].mxu0 %v363
      %v542 = vpop.f32.mrb[0].mxu0
      %v543 = vadd.f32 %v482, %v542
      %v544 = vpop.f32.mrb[0].mxu0
      %v545 = vpop.f32.mrb[0].mxu0
      %v546 = vadd.f32 %v482, %v545
      %v547 = vpop.f32.mrb[0].mxu0
      %548 = vmatprep.mubr.bf16.mxu0 0
      %549 = vmatmul.mubr.bf16.gmra.mrb[0].mxu0 %v364
      %v550 = vpop.f32.mrb[0].mxu0
      %v551 = vadd.f32 %v482, %v550
      %v552 = vpop.f32.mrb[0].mxu0
      %v553 = vpop.f32.mrb[0].mxu0
      %v554 = vadd.f32 %v482, %v553
      %v555 = vpop.f32.mrb[0].mxu0
      %556 = vdwg.mxu0
      %v557 = vld [vmem:[%s5] sm:$0xff]
      %v558 = vld [vmem:[%s5 + $0x8] sm:$0xff]
      %v559 = vld [vmem:[%s5 + $0x10] sm:$0xff]
      %v560 = vld [vmem:[%s5 + $0x18] sm:$0xff]
      %v561 = vld [vmem:[%s5 + $0x20] sm:$0xff]
      %v562 = vld [vmem:[%s5 + $0x28] sm:$0xff]
      %v563 = vld [vmem:[%s5 + $0x30] sm:$0xff]
      %v564 = vld [vmem:[%s5 + $0x38] sm:$0xff]
      %v565 = vld [vmem:[%s5 + $0x40] sm:$0xff]
      %v566 = vld [vmem:[%s5 + $0x48] sm:$0xff]
      %v567 = vld [vmem:[%s5 + $0x50] sm:$0xff]
      %v568 = vld [vmem:[%s5 + $0x58] sm:$0xff]
      %v569 = vld [vmem:[%s5 + $0x60] sm:$0xff]
      %v570 = vld [vmem:[%s5 + $0x68] sm:$0xff]
      %v571 = vld [vmem:[%s5 + $0x70] sm:$0xff]
      %v572 = vld [vmem:[%s5 + $0x78] sm:$0xff]
      %v573 = vpack.c.bf16 %v558, %v557
      %v574 = vpack.c.bf16 %v560, %v559
      %v575 = vpack.c.bf16 %v562, %v561
      %v576 = vpack.c.bf16 %v564, %v563
      %v577 = vpack.c.bf16 %v566, %v565
      %v578 = vpack.c.bf16 %v568, %v567
      %v579 = vpack.c.bf16 %v570, %v569
      %v580 = vpack.c.bf16 %v572, %v571
      %v581 = vld [vmem:[%s6] sm:$0x1]
      %v583 = vlaneseq
      %v584 = vshrl.u32 %v583, 7
      %v585 = vsub.s32 0, %v584
      %v586 = vrot.slane %v581, %v585
      %588 = vmatprep.subr.bf16.mxu0 0
      %589 = vmatpush1.bf16.msra.mxu0 %v573
      %590 = vmatprep.subr.bf16.mxu0 0
      %591 = vmatpush1.bf16.msra.mxu0 %v574
      %592 = vmatprep.subr.bf16.mxu0 0
      %593 = vmatpush1.bf16.msra.mxu0 %v575
      %594 = vmatprep.subr.bf16.mxu0 0
      %595 = vmatpush1.bf16.msra.mxu0 %v576
      %596 = vmatprep.subr.bf16.mxu0 0
      %597 = vmatpush1.bf16.msra.mxu0 %v577
      %598 = vmatprep.subr.bf16.mxu0 0
      %599 = vmatpush1.bf16.msra.mxu0 %v578
      %600 = vmatprep.subr.bf16.mxu0 0
      %601 = vmatpush1.bf16.msra.mxu0 %v579
      %602 = vmatprep.subr.bf16.mxu0 0
      %603 = vmatpush1.bf16.msra.mxu0 %v580
      %604 = vmatprep.subr.bf16.mxu0 0
      %605 = vmatpush1.bf16.msra.mxu0 0
      %606 = vmatprep.subr.bf16.mxu0 0
      %607 = vmatpush1.bf16.msra.mxu0 0
      %608 = vmatprep.subr.bf16.mxu0 0
      %609 = vmatpush1.bf16.msra.mxu0 0
      %610 = vmatprep.subr.bf16.mxu0 0
      %611 = vmatpush1.bf16.msra.mxu0 0
      %612 = vmatprep.subr.bf16.mxu0 0
      %613 = vmatpush1.bf16.msra.mxu0 0
      %614 = vmatprep.subr.bf16.mxu0 0
      %615 = vmatpush1.bf16.msra.mxu0 0
      %616 = vmatprep.subr.bf16.mxu0 0
      %617 = vmatpush1.bf16.msra.mxu0 0
      %618 = vmatprep.subr.bf16.mxu0 0
      %619 = vmatpush1.bf16.msra.mxu0 0
      %620 = vmatprep.mubr.bf16.mxu0 0
      %621 = vmatmul.mubr.bf16.gmra.mrb[0].mxu0 %v360
      %v622 = vpop.f32.mrb[0].mxu0
      %v623 = vadd.f32 %v586, %v622
      %v624 = vpop.f32.mrb[0].mxu0
      %v625 = vpop.f32.mrb[0].mxu0
      %v626 = vadd.f32 %v586, %v625
      %v627 = vpop.f32.mrb[0].mxu0
      %628 = vmatprep.mubr.bf16.mxu0 0
      %629 = vmatmul.mubr.bf16.gmra.mrb[0].mxu0 %v361
      %v630 = vpop.f32.mrb[0].mxu0
      %v631 = vadd.f32 %v586, %v630
      %v632 = vpop.f32.mrb[0].mxu0
      %v633 = vpop.f32.mrb[0].mxu0
      %v634 = vadd.f32 %v586, %v633
      %v635 = vpop.f32.mrb[0].mxu0
      %636 = vmatprep.mubr.bf16.mxu0 0
      %637 = vmatmul.mubr.bf16.gmra.mrb[0].mxu0 %v362
      %v638 = vpop.f32.mrb[0].mxu0
      %v639 = vadd.f32 %v586, %v638
      %v640 = vpop.f32.mrb[0].mxu0
      %v641 = vpop.f32.mrb[0].mxu0
      %v642 = vadd.f32 %v586, %v641
      %v643 = vpop.f32.mrb[0].mxu0
      %644 = vmatprep.mubr.bf16.mxu0 0
      %645 = vmatmul.mubr.bf16.gmra.mrb[0].mxu0 %v363
      %v646 = vpop.f32.mrb[0].mxu0
      %v647 = vadd.f32 %v586, %v646
      %v648 = vpop.f32.mrb[0].mxu0
      %v649 = vpop.f32.mrb[0].mxu0
      %v650 = vadd.f32 %v586, %v649
      %v651 = vpop.f32.mrb[0].mxu0
      %652 = vmatprep.mubr.bf16.mxu0 0
      %653 = vmatmul.mubr.bf16.gmra.mrb[0].mxu0 %v364
      %v654 = vpop.f32.mrb[0].mxu0
      %v655 = vadd.f32 %v586, %v654
      %v656 = vpop.f32.mrb[0].mxu0
      %v657 = vpop.f32.mrb[0].mxu0
      %v658 = vadd.f32 %v586, %v657
      %v659 = vpop.f32.mrb[0].mxu0
      %660 = vdwg.mxu0
      %v661 = vmul.f32 %v415, 0.088388346
      %v662 = vmul.f32 %v418, 0.088388346
      %v663 = vmul.f32 %v423, 0.088388346
      %v664 = vmul.f32 %v426, 0.088388346
      %v665 = vmul.f32 %v431, 0.088388346
      %v666 = vmul.f32 %v434, 0.088388346
      %v667 = vmul.f32 %v439, 0.088388346
      %v668 = vmul.f32 %v442, 0.088388346
      %v669 = vmul.f32 %v447, 0.088388346
      %v670 = vmul.f32 %v450, 0.088388346
      %v671 = vpack.c.bf16 %v662, %v661
      %v672 = vpack.c.bf16 %v664, %v663
      %v673 = vpack.c.bf16 %v666, %v665
      %v674 = vpack.c.bf16 %v668, %v667
      %v675 = vpack.c.bf16 %v670, %v669
      %v676 = vpack.c.bf16 %v522, %v519
      %v677 = vpack.c.bf16 %v530, %v527
      %v678 = vpack.c.bf16 %v538, %v535
      %v679 = vpack.c.bf16 %v546, %v543
      %v680 = vpack.c.bf16 %v554, %v551
      %v681 = vpack.c.bf16 %v626, %v623
      %v682 = vpack.c.bf16 %v634, %v631
      %v683 = vpack.c.bf16 %v642, %v639
      %v684 = vpack.c.bf16 %v650, %v647
      %v685 = vpack.c.bf16 %v658, %v655
      %vm686 = vcmask 261120
      %v688 = vsel %vm686, %v671, 0
      %v691 = vsel %vm686, %v672, 0
      %v694 = vsel %vm686, %v673, 0
      %v697 = vsel %vm686, %v674, 0
      %v700 = vsel %vm686, %v675, 0
      %v703 = vsel %vm686, %v676, 0
      %v706 = vsel %vm686, %v677, 0
      %v709 = vsel %vm686, %v678, 0
      %v712 = vsel %vm686, %v679, 0
      %v715 = vsel %vm686, %v680, 0
      %717 = vmatprep.subr.bf16.mxu0 0
      %718 = vmatpush1.bf16.xpose.msra.mxu0 %v703
      %719 = vmatprep.subr.bf16.mxu0 0
      %720 = vmatpush1.bf16.xpose.msra.mxu0 %v706
      %721 = vmatprep.subr.bf16.mxu0 0
      %722 = vmatpush1.bf16.xpose.msra.mxu0 %v709
      %723 = vmatprep.subr.bf16.mxu0 0
      %724 = vmatpush1.bf16.xpose.msra.mxu0 %v712
      %725 = vmatprep.subr.bf16.mxu0 0
      %726 = vmatpush1.bf16.xpose.msra.mxu0 %v715
      %727 = vmatprep.subr.bf16.mxu0 0
      %728 = vmatpush1.bf16.xpose.msra.mxu0 0
      %729 = vmatprep.subr.bf16.mxu0 0
      %730 = vmatpush1.bf16.xpose.msra.mxu0 0
      %731 = vmatprep.subr.bf16.mxu0 0
      %732 = vmatpush1.bf16.xpose.msra.mxu0 0
      %733 = vmatprep.subr.bf16.mxu0 0
      %734 = vmatpush1.bf16.xpose.msra.mxu0 0
      %735 = vmatprep.subr.bf16.mxu0 0
      %736 = vmatpush1.bf16.xpose.msra.mxu0 0
      %737 = vmatprep.subr.bf16.mxu0 0
      %738 = vmatpush1.bf16.xpose.msra.mxu0 0
      %739 = vmatprep.subr.bf16.mxu0 0
      %740 = vmatpush1.bf16.xpose.msra.mxu0 0
      %741 = vmatprep.subr.bf16.mxu0 0
      %742 = vmatpush1.bf16.xpose.msra.mxu0 0
      %743 = vmatprep.subr.bf16.mxu0 0
      %744 = vmatpush1.bf16.xpose.msra.mxu0 0
      %745 = vmatprep.subr.bf16.mxu0 0
      %746 = vmatpush1.bf16.xpose.msra.mxu0 0
      %747 = vmatprep.subr.bf16.mxu0 0
      %748 = vmatpush1.bf16.xpose.msra.mxu0 0
      %749 = vmatprep.mubr.bf16.mxu0 0
      %750 = vmatmul.mubr.bf16.gmra.mrb[0].mxu0 %v688
      %v751 = vpop.f32.mrb[0].mxu0
      %v752 = vadd.f32 0.0, %v751
      %v753 = vpop.f32.mrb[0].mxu0
      %v754 = vpop.f32.mrb[0].mxu0
      %v755 = vadd.f32 0.0, %v754
      %v756 = vpop.f32.mrb[0].mxu0
      %757 = vmatprep.mubr.bf16.mxu0 0
      %758 = vmatmul.mubr.bf16.gmra.mrb[0].mxu0 %v691
      %v759 = vpop.f32.mrb[0].mxu0
      %v760 = vadd.f32 0.0, %v759
      %v761 = vpop.f32.mrb[0].mxu0
      %v762 = vpop.f32.mrb[0].mxu0
      %v763 = vadd.f32 0.0, %v762
      %v764 = vpop.f32.mrb[0].mxu0
      %765 = vmatprep.mubr.bf16.mxu0 0
      %766 = vmatmul.mubr.bf16.gmra.mrb[0].mxu0 %v694
      %v767 = vpop.f32.mrb[0].mxu0
      %v768 = vadd.f32 0.0, %v767
      %v769 = vpop.f32.mrb[0].mxu0
      %v770 = vpop.f32.mrb[0].mxu0
      %v771 = vadd.f32 0.0, %v770
      %v772 = vpop.f32.mrb[0].mxu0
      %773 = vmatprep.mubr.bf16.mxu0 0
      %774 = vmatmul.mubr.bf16.gmra.mrb[0].mxu0 %v697
      %v775 = vpop.f32.mrb[0].mxu0
      %v776 = vadd.f32 0.0, %v775
      %v777 = vpop.f32.mrb[0].mxu0
      %v778 = vpop.f32.mrb[0].mxu0
      %v779 = vadd.f32 0.0, %v778
      %v780 = vpop.f32.mrb[0].mxu0
      %781 = vmatprep.mubr.bf16.mxu0 0
      %782 = vmatmul.mubr.bf16.gmra.mrb[0].mxu0 %v700
      %v783 = vpop.f32.mrb[0].mxu0
      %v784 = vadd.f32 0.0, %v783
      %v785 = vpop.f32.mrb[0].mxu0
      %v786 = vpop.f32.mrb[0].mxu0
      %v787 = vadd.f32 0.0, %v786
      %v788 = vpop.f32.mrb[0].mxu0
      %789 = vdwg.mxu0
      %vm790 = vcmask 613376
      %v791 = vsel %vm790, %v752, -inf
      %v792 = vsel %vm790, %v755, -inf
      %v793 = vsel %vm790, %v760, -inf
      %v794 = vsel %vm790, %v763, -inf
      %v795 = vsel %vm790, %v768, -inf
      %v796 = vmax.f32 %v791, %v795
      %v797 = vsel %vm790, %v771, -inf
      %v798 = vmax.f32 %v792, %v797
      %v799 = vsel %vm790, %v776, -inf
      %v800 = vmax.f32 %v793, %v799
      %v801 = vsel %vm790, %v779, -inf
      %v802 = vmax.f32 %v794, %v801
      %v803 = vsel %vm790, %v784, -inf
      %v804 = vmax.f32 %v796, %v803
      %vm805 = vcmask 608256
      %v806 = vsel %vm805, %v787, -inf
      %v807 = vmax.f32 %v798, %v806
      %v808 = vmax.f32 %v804, %v807
      %v809 = vmax.f32 %v800, %v802
      %v810 = vmax.f32 %v808, %v809
      %v811 = vrot.slane %v810, 4
      %v812 = vmax.f32 %v810, %v811
      %v813 = vrot.slane %v812, 2
      %v814 = vmax.f32 %v812, %v813
      %v815 = vrot.slane %v814, 1
      %v816 = vmax.f32 %v814, %v815
      %v817 = vsub.f32 %v752, %v816
      %v818 = vsub.f32 %v755, %v816
      %v819 = vsub.f32 %v760, %v816
      %v820 = vsub.f32 %v763, %v816
      %v821 = vsub.f32 %v768, %v816
      %v822 = vsub.f32 %v771, %v816
      %v823 = vsub.f32 %v776, %v816
      %v824 = vsub.f32 %v779, %v816
      %v825 = vsub.f32 %v784, %v816
      %v826 = vsub.f32 %v787, %v816
      %v827 = vmul.f32 %v817, 1.442695
      %v828 = vpow.pop %v827
      %v829 = vmul.f32 %v818, 1.442695
      %v830 = vpow.pop %v829
      %v831 = vmul.f32 %v819, 1.442695
      %v832 = vpow.pop %v831
      %v833 = vmul.f32 %v820, 1.442695
      %v834 = vpow.pop %v833
      %v835 = vmul.f32 %v821, 1.442695
      %v836 = vpow.pop %v835
      %v837 = vmul.f32 %v822, 1.442695
      %v838 = vpow.pop %v837
      %v839 = vmul.f32 %v823, 1.442695
      %v840 = vpow.pop %v839
      %v841 = vmul.f32 %v824, 1.442695
      %v842 = vpow.pop %v841
      %v843 = vmul.f32 %v825, 1.442695
      %v844 = vpow.pop %v843
      %v845 = vmul.f32 %v826, 1.442695
      %v846 = vpow.pop %v845
      %v847 = vsel %vm790, %v828, 0.0
      %v848 = vsel %vm790, %v830, 0.0
      %v849 = vadd.f32 %v847, %v848
      %v850 = vsel %vm790, %v832, 0.0
      %v851 = vadd.f32 %v849, %v850
      %v852 = vsel %vm790, %v834, 0.0
      %v853 = vadd.f32 %v851, %v852
      %v854 = vsel %vm790, %v836, 0.0
      %v855 = vadd.f32 %v853, %v854
      %v856 = vsel %vm790, %v838, 0.0
      %v857 = vadd.f32 %v855, %v856
      %v858 = vsel %vm790, %v840, 0.0
      %v859 = vadd.f32 %v857, %v858
      %v860 = vsel %vm790, %v842, 0.0
      %v861 = vadd.f32 %v859, %v860
      %v862 = vsel %vm790, %v844, 0.0
      %v863 = vadd.f32 %v861, %v862
      %v864 = vsel %vm805, %v846, 0.0
      %v865 = vadd.f32 %v863, %v864
      %v866 = vrot.slane %v865, 4
      %v867 = vadd.f32 %v865, %v866
      %v868 = vrot.slane %v867, 2
      %v869 = vadd.f32 %v867, %v868
      %v870 = vrot.slane %v869, 1
      %v871 = vadd.f32 %v869, %v870
      %v872 = vrcp.pop %v871
      %v873 = vmul.f32 %v828, %v872
      %v874 = vmul.f32 %v830, %v872
      %v875 = vmul.f32 %v832, %v872
      %v876 = vmul.f32 %v834, %v872
      %v877 = vmul.f32 %v836, %v872
      %v878 = vmul.f32 %v838, %v872
      %v879 = vmul.f32 %v840, %v872
      %v880 = vmul.f32 %v842, %v872
      %v881 = vmul.f32 %v844, %v872
      %v882 = vmul.f32 %v846, %v872
      %v883 = vpack.c.bf16 %v874, %v873
      %v884 = vpack.c.bf16 %v876, %v875
      %v885 = vpack.c.bf16 %v878, %v877
      %v886 = vpack.c.bf16 %v880, %v879
      %v887 = vpack.c.bf16 %v882, %v881
      %v889 = vsel %vm790, %v883, 0
      %v892 = vsel %vm790, %v884, 0
      %v895 = vsel %vm790, %v885, 0
      %v898 = vsel %vm790, %v886, 0
      %v901 = vsel %vm790, %v887, 0
      %vm903 = vcmask 1044480
      %vm904 = vcmask 1045504
      %v905 = vsel %vm903, 4294967295, 65535
      %v906 = vsel %vm904, %v905, 0
      %v908 = vand.u32 %v685, %v906
      %910 = vmatprep.subr.bf16.mxu0 0
      %911 = vmatpush1.bf16.msra.mxu0 %v681
      %912 = vmatprep.subr.bf16.mxu0 0
      %913 = vmatpush1.bf16.msra.mxu0 %v682
      %914 = vmatprep.subr.bf16.mxu0 0
      %915 = vmatpush1.bf16.msra.mxu0 %v683
      %916 = vmatprep.subr.bf16.mxu0 0
      %917 = vmatpush1.bf16.msra.mxu0 %v684
      %918 = vmatprep.subr.bf16.mxu0 0
      %919 = vmatpush1.bf16.msra.mxu0 %v908
      %920 = vmatprep.subr.bf16.mxu0 0
      %921 = vmatpush1.bf16.msra.mxu0 0
      %922 = vmatprep.subr.bf16.mxu0 0
      %923 = vmatpush1.bf16.msra.mxu0 0
      %924 = vmatprep.subr.bf16.mxu0 0
      %925 = vmatpush1.bf16.msra.mxu0 0
      %926 = vmatprep.subr.bf16.mxu0 0
      %927 = vmatpush1.bf16.msra.mxu0 0
      %928 = vmatprep.subr.bf16.mxu0 0
      %929 = vmatpush1.bf16.msra.mxu0 0
      %930 = vmatprep.subr.bf16.mxu0 0
      %931 = vmatpush1.bf16.msra.mxu0 0
      %932 = vmatprep.subr.bf16.mxu0 0
      %933 = vmatpush1.bf16.msra.mxu0 0
      %934 = vmatprep.subr.bf16.mxu0 0
      %935 = vmatpush1.bf16.msra.mxu0 0
      %936 = vmatprep.subr.bf16.mxu0 0
      %937 = vmatpush1.bf16.msra.mxu0 0
      %938 = vmatprep.subr.bf16.mxu0 0
      %939 = vmatpush1.bf16.msra.mxu0 0
      %940 = vmatprep.subr.bf16.mxu0 0
      %941 = vmatpush1.bf16.msra.mxu0 0
      %942 = vmatprep.mubr.bf16.mxu0 0
      %943 = vmatmul.mubr.bf16.gmra.mrb[0].mxu0 %v889
      %v944 = vpop.f32.mrb[0].mxu0
      %v945 = vadd.f32 0.0, %v944
      %v946 = vpop.f32.mrb[0].mxu0
      %v947 = vpop.f32.mrb[0].mxu0
      %v948 = vadd.f32 0.0, %v947
      %v949 = vpop.f32.mrb[0].mxu0
      %950 = vmatprep.mubr.bf16.mxu0 0
      %951 = vmatmul.mubr.bf16.gmra.mrb[0].mxu0 %v892
      %v952 = vpop.f32.mrb[0].mxu0
      %v953 = vadd.f32 0.0, %v952
      %v954 = vpop.f32.mrb[0].mxu0
      %v955 = vpop.f32.mrb[0].mxu0
      %v956 = vadd.f32 0.0, %v955
      %v957 = vpop.f32.mrb[0].mxu0
      %958 = vmatprep.mubr.bf16.mxu0 0
      %959 = vmatmul.mubr.bf16.gmra.mrb[0].mxu0 %v895
      %v960 = vpop.f32.mrb[0].mxu0
      %v961 = vadd.f32 0.0, %v960
      %v962 = vpop.f32.mrb[0].mxu0
      %v963 = vpop.f32.mrb[0].mxu0
      %v964 = vadd.f32 0.0, %v963
      %v965 = vpop.f32.mrb[0].mxu0
      %966 = vmatprep.mubr.bf16.mxu0 0
      %967 = vmatmul.mubr.bf16.gmra.mrb[0].mxu0 %v898
      %v968 = vpop.f32.mrb[0].mxu0
      %v969 = vadd.f32 0.0, %v968
      %v970 = vpop.f32.mrb[0].mxu0
      %v971 = vpop.f32.mrb[0].mxu0
      %v972 = vadd.f32 0.0, %v971
      %v973 = vpop.f32.mrb[0].mxu0
      %974 = vmatprep.mubr.bf16.mxu0 0
      %975 = vmatmul.mubr.bf16.gmra.mrb[0].mxu0 %v901
      %v976 = vpop.f32.mrb[0].mxu0
      %v977 = vadd.f32 0.0, %v976
      %v978 = vpop.f32.mrb[0].mxu0
      %v979 = vpop.f32.mrb[0].mxu0
      %v980 = vadd.f32 0.0, %v979
      %v981 = vpop.f32.mrb[0].mxu0
      %982 = vdwg.mxu0
      %v983 = vadd.f32 %v415, %v945
      %v984 = vadd.f32 %v418, %v948
      %v985 = vadd.f32 %v423, %v953
      %v986 = vadd.f32 %v426, %v956
      %v987 = vadd.f32 %v431, %v961
      %v988 = vadd.f32 %v434, %v964
      %v989 = vadd.f32 %v439, %v969
      %v990 = vadd.f32 %v442, %v972
      %v991 = vadd.f32 %v447, %v977
      %v992 = vadd.f32 %v450, %v980
      %998 = vrot.lane.b32.xlu0 %v671, 96
      %v999 = vpop.permute.xlu0 %998
      %1000 = vrot.lane.b32.xlu0 %v672, 96
      %v1001 = vpop.permute.xlu0 %1000
      %1002 = vrot.lane.b32.xlu0 %v673, 96
      %v1003 = vpop.permute.xlu0 %1002
      %1004 = vrot.lane.b32.xlu0 %v674, 96
      %v1005 = vpop.permute.xlu0 %1004
      %1006 = vrot.lane.b32.xlu0 %v675, 96
      %v1007 = vpop.permute.xlu0 %1006
      %1013 = vrot.lane.b32.xlu0 %v676, 96
      %v1014 = vpop.permute.xlu0 %1013
      %1015 = vrot.lane.b32.xlu0 %v677, 96
      %v1016 = vpop.permute.xlu0 %1015
      %1017 = vrot.lane.b32.xlu0 %v678, 96
      %v1018 = vpop.permute.xlu0 %1017
      %1019 = vrot.lane.b32.xlu0 %v679, 96
      %v1020 = vpop.permute.xlu0 %1019
      %1021 = vrot.lane.b32.xlu0 %v680, 96
      %v1022 = vpop.permute.xlu0 %1021
      %v1024 = vsel %vm686, %v999, 0
      %v1027 = vsel %vm686, %v1001, 0
      %v1030 = vsel %vm686, %v1003, 0
      %v1033 = vsel %vm686, %v1005, 0
      %v1036 = vsel %vm686, %v1007, 0
      %v1039 = vsel %vm686, %v1014, 0
      %v1042 = vsel %vm686, %v1016, 0
      %v1045 = vsel %vm686, %v1018, 0
      %v1048 = vsel %vm686, %v1020, 0
      %v1051 = vsel %vm686, %v1022, 0
      %1053 = vmatprep.subr.bf16.mxu0 0
      %1054 = vmatpush1.bf16.xpose.msra.mxu0 %v1039
      %1055 = vmatprep.subr.bf16.mxu0 0
      %1056 = vmatpush1.bf16.xpose.msra.mxu0 %v1042
      %1057 = vmatprep.subr.bf16.mxu0 0
      %1058 = vmatpush1.bf16.xpose.msra.mxu0 %v1045
      %1059 = vmatprep.subr.bf16.mxu0 0
      %1060 = vmatpush1.bf16.xpose.msra.mxu0 %v1048
      %1061 = vmatprep.subr.bf16.mxu0 0
      %1062 = vmatpush1.bf16.xpose.msra.mxu0 %v1051
      %1063 = vmatprep.subr.bf16.mxu0 0
      %1064 = vmatpush1.bf16.xpose.msra.mxu0 0
      %1065 = vmatprep.subr.bf16.mxu0 0
      %1066 = vmatpush1.bf16.xpose.msra.mxu0 0
      %1067 = vmatprep.subr.bf16.mxu0 0
      %1068 = vmatpush1.bf16.xpose.msra.mxu0 0
      %1069 = vmatprep.subr.bf16.mxu0 0
      %1070 = vmatpush1.bf16.xpose.msra.mxu0 0
      %1071 = vmatprep.subr.bf16.mxu0 0
      %1072 = vmatpush1.bf16.xpose.msra.mxu0 0
      %1073 = vmatprep.subr.bf16.mxu0 0
      %1074 = vmatpush1.bf16.xpose.msra.mxu0 0
      %1075 = vmatprep.subr.bf16.mxu0 0
      %1076 = vmatpush1.bf16.xpose.msra.mxu0 0
      %1077 = vmatprep.subr.bf16.mxu0 0
      %1078 = vmatpush1.bf16.xpose.msra.mxu0 0
      %1079 = vmatprep.subr.bf16.mxu0 0
      %1080 = vmatpush1.bf16.xpose.msra.mxu0 0
      %1081 = vmatprep.subr.bf16.mxu0 0
      %1082 = vmatpush1.bf16.xpose.msra.mxu0 0
      %1083 = vmatprep.subr.bf16.mxu0 0
      %1084 = vmatpush1.bf16.xpose.msra.mxu0 0
      %1085 = vmatprep.mubr.bf16.mxu0 0
      %1086 = vmatmul.mubr.bf16.gmra.mrb[0].mxu0 %v1024
      %v1087 = vpop.f32.mrb[0].mxu0
      %v1088 = vadd.f32 0.0, %v1087
      %v1089 = vpop.f32.mrb[0].mxu0
      %v1090 = vpop.f32.mrb[0].mxu0
      %v1091 = vadd.f32 0.0, %v1090
      %v1092 = vpop.f32.mrb[0].mxu0
      %1093 = vmatprep.mubr.bf16.mxu0 0
      %1094 = vmatmul.mubr.bf16.gmra.mrb[0].mxu0 %v1027
      %v1095 = vpop.f32.mrb[0].mxu0
      %v1096 = vadd.f32 0.0, %v1095
      %v1097 = vpop.f32.mrb[0].mxu0
      %v1098 = vpop.f32.mrb[0].mxu0
      %v1099 = vadd.f32 0.0, %v1098
      %v1100 = vpop.f32.mrb[0].mxu0
      %1101 = vmatprep.mubr.bf16.mxu0 0
      %1102 = vmatmul.mubr.bf16.gmra.mrb[0].mxu0 %v1030
      %v1103 = vpop.f32.mrb[0].mxu0
      %v1104 = vadd.f32 0.0, %v1103
      %v1105 = vpop.f32.mrb[0].mxu0
      %v1106 = vpop.f32.mrb[0].mxu0
      %v1107 = vadd.f32 0.0, %v1106
      %v1108 = vpop.f32.mrb[0].mxu0
      %1109 = vmatprep.mubr.bf16.mxu0 0
      %1110 = vmatmul.mubr.bf16.gmra.mrb[0].mxu0 %v1033
      %v1111 = vpop.f32.mrb[0].mxu0
      %v1112 = vadd.f32 0.0, %v1111
      %v1113 = vpop.f32.mrb[0].mxu0
      %v1114 = vpop.f32.mrb[0].mxu0
      %v1115 = vadd.f32 0.0, %v1114
      %v1116 = vpop.f32.mrb[0].mxu0
      %1117 = vmatprep.mubr.bf16.mxu0 0
      %1118 = vmatmul.mubr.bf16.gmra.mrb[0].mxu0 %v1036
      %v1119 = vpop.f32.mrb[0].mxu0
      %v1120 = vadd.f32 0.0, %v1119
      %v1121 = vpop.f32.mrb[0].mxu0
      %v1122 = vpop.f32.mrb[0].mxu0
      %v1123 = vadd.f32 0.0, %v1122
      %v1124 = vpop.f32.mrb[0].mxu0
      %1125 = vdwg.mxu0
      %v1126 = vsel %vm790, %v1088, -inf
      %v1127 = vsel %vm790, %v1091, -inf
      %v1128 = vsel %vm790, %v1096, -inf
      %v1129 = vsel %vm790, %v1099, -inf
      %v1130 = vsel %vm790, %v1104, -inf
      %v1131 = vmax.f32 %v1126, %v1130
      %v1132 = vsel %vm790, %v1107, -inf
      %v1133 = vmax.f32 %v1127, %v1132
      %v1134 = vsel %vm790, %v1112, -inf
      %v1135 = vmax.f32 %v1128, %v1134
      %v1136 = vsel %vm790, %v1115, -inf
      %v1137 = vmax.f32 %v1129, %v1136
      %v1138 = vsel %vm790, %v1120, -inf
      %v1139 = vmax.f32 %v1131, %v1138
      %v1140 = vsel %vm805, %v1123, -inf
      %v1141 = vmax.f32 %v1133, %v1140
      %v1142 = vmax.f32 %v1139, %v1141
      %v1143 = vmax.f32 %v1135, %v1137
      %v1144 = vmax.f32 %v1142, %v1143
      %v1145 = vrot.slane %v1144, 4
      %v1146 = vmax.f32 %v1144, %v1145
      %v1147 = vrot.slane %v1146, 2
      %v1148 = vmax.f32 %v1146, %v1147
      %v1149 = vrot.slane %v1148, 1
      %v1150 = vmax.f32 %v1148, %v1149
      %v1151 = vsub.f32 %v1088, %v1150
      %v1152 = vsub.f32 %v1091, %v1150
      %v1153 = vsub.f32 %v1096, %v1150
      %v1154 = vsub.f32 %v1099, %v1150
      %v1155 = vsub.f32 %v1104, %v1150
      %v1156 = vsub.f32 %v1107, %v1150
      %v1157 = vsub.f32 %v1112, %v1150
      %v1158 = vsub.f32 %v1115, %v1150
      %v1159 = vsub.f32 %v1120, %v1150
      %v1160 = vsub.f32 %v1123, %v1150
      %v1161 = vmul.f32 %v1151, 1.442695
      %v1162 = vpow.pop %v1161
      %v1163 = vmul.f32 %v1152, 1.442695
      %v1164 = vpow.pop %v1163
      %v1165 = vmul.f32 %v1153, 1.442695
      %v1166 = vpow.pop %v1165
      %v1167 = vmul.f32 %v1154, 1.442695
      %v1168 = vpow.pop %v1167
      %v1169 = vmul.f32 %v1155, 1.442695
      %v1170 = vpow.pop %v1169
      %v1171 = vmul.f32 %v1156, 1.442695
      %v1172 = vpow.pop %v1171
      %v1173 = vmul.f32 %v1157, 1.442695
      %v1174 = vpow.pop %v1173
      %v1175 = vmul.f32 %v1158, 1.442695
      %v1176 = vpow.pop %v1175
      %v1177 = vmul.f32 %v1159, 1.442695
      %v1178 = vpow.pop %v1177
      %v1179 = vmul.f32 %v1160, 1.442695
      %v1180 = vpow.pop %v1179
      %v1181 = vsel %vm790, %v1162, 0.0
      %v1182 = vsel %vm790, %v1164, 0.0
      %v1183 = vadd.f32 %v1181, %v1182
      %v1184 = vsel %vm790, %v1166, 0.0
      %v1185 = vadd.f32 %v1183, %v1184
      %v1186 = vsel %vm790, %v1168, 0.0
      %v1187 = vadd.f32 %v1185, %v1186
      %v1188 = vsel %vm790, %v1170, 0.0
      %v1189 = vadd.f32 %v1187, %v1188
      %v1190 = vsel %vm790, %v1172, 0.0
      %v1191 = vadd.f32 %v1189, %v1190
      %v1192 = vsel %vm790, %v1174, 0.0
      %v1193 = vadd.f32 %v1191, %v1192
      %v1194 = vsel %vm790, %v1176, 0.0
      %v1195 = vadd.f32 %v1193, %v1194
      %v1196 = vsel %vm790, %v1178, 0.0
      %v1197 = vadd.f32 %v1195, %v1196
      %v1198 = vsel %vm805, %v1180, 0.0
      %v1199 = vadd.f32 %v1197, %v1198
      %v1200 = vrot.slane %v1199, 4
      %v1201 = vadd.f32 %v1199, %v1200
      %v1202 = vrot.slane %v1201, 2
      %v1203 = vadd.f32 %v1201, %v1202
      %v1204 = vrot.slane %v1203, 1
      %v1205 = vadd.f32 %v1203, %v1204
      %v1206 = vrcp.pop %v1205
      %v1207 = vmul.f32 %v1162, %v1206
      %v1208 = vmul.f32 %v1164, %v1206
      %v1209 = vmul.f32 %v1166, %v1206
      %v1210 = vmul.f32 %v1168, %v1206
      %v1211 = vmul.f32 %v1170, %v1206
      %v1212 = vmul.f32 %v1172, %v1206
      %v1213 = vmul.f32 %v1174, %v1206
      %v1214 = vmul.f32 %v1176, %v1206
      %v1215 = vmul.f32 %v1178, %v1206
      %v1216 = vmul.f32 %v1180, %v1206
      %v1217 = vpack.c.bf16 %v1208, %v1207
      %v1218 = vpack.c.bf16 %v1210, %v1209
      %v1219 = vpack.c.bf16 %v1212, %v1211
      %v1220 = vpack.c.bf16 %v1214, %v1213
      %v1221 = vpack.c.bf16 %v1216, %v1215
      %1227 = vrot.lane.b32.xlu0 %v681, 96
      %v1228 = vpop.permute.xlu0 %1227
      %1229 = vrot.lane.b32.xlu0 %v682, 96
      %v1230 = vpop.permute.xlu0 %1229
      %1231 = vrot.lane.b32.xlu0 %v683, 96
      %v1232 = vpop.permute.xlu0 %1231
      %1233 = vrot.lane.b32.xlu0 %v684, 96
      %v1234 = vpop.permute.xlu0 %1233
      %1235 = vrot.lane.b32.xlu0 %v685, 96
      %v1236 = vpop.permute.xlu0 %1235
      %v1242 = vsel %vm790, %v1217, 0
      %v1245 = vsel %vm790, %v1218, 0
      %v1248 = vsel %vm790, %v1219, 0
      %v1251 = vsel %vm790, %v1220, 0
      %v1254 = vsel %vm790, %v1221, 0
      %v1257 = vand.u32 %v1236, %v906
      %1259 = vmatprep.subr.bf16.mxu0 0
      %1260 = vmatpush1.bf16.msra.mxu0 %v1228
      %1261 = vmatprep.subr.bf16.mxu0 0
      %1262 = vmatpush1.bf16.msra.mxu0 %v1230
      %1263 = vmatprep.subr.bf16.mxu0 0
      %1264 = vmatpush1.bf16.msra.mxu0 %v1232
      %1265 = vmatprep.subr.bf16.mxu0 0
      %1266 = vmatpush1.bf16.msra.mxu0 %v1234
      %1267 = vmatprep.subr.bf16.mxu0 0
      %1268 = vmatpush1.bf16.msra.mxu0 %v1257
      %1269 = vmatprep.subr.bf16.mxu0 0
      %1270 = vmatpush1.bf16.msra.mxu0 0
      %1271 = vmatprep.subr.bf16.mxu0 0
      %1272 = vmatpush1.bf16.msra.mxu0 0
      %1273 = vmatprep.subr.bf16.mxu0 0
      %1274 = vmatpush1.bf16.msra.mxu0 0
      %1275 = vmatprep.subr.bf16.mxu0 0
      %1276 = vmatpush1.bf16.msra.mxu0 0
      %1277 = vmatprep.subr.bf16.mxu0 0
      %1278 = vmatpush1.bf16.msra.mxu0 0
      %1279 = vmatprep.subr.bf16.mxu0 0
      %1280 = vmatpush1.bf16.msra.mxu0 0
      %1281 = vmatprep.subr.bf16.mxu0 0
      %1282 = vmatpush1.bf16.msra.mxu0 0
      %1283 = vmatprep.subr.bf16.mxu0 0
      %1284 = vmatpush1.bf16.msra.mxu0 0
      %1285 = vmatprep.subr.bf16.mxu0 0
      %1286 = vmatpush1.bf16.msra.mxu0 0
      %1287 = vmatprep.subr.bf16.mxu0 0
      %1288 = vmatpush1.bf16.msra.mxu0 0
      %1289 = vmatprep.subr.bf16.mxu0 0
      %1290 = vmatpush1.bf16.msra.mxu0 0
      %1291 = vmatprep.mubr.bf16.mxu0 0
      %1292 = vmatmul.mubr.bf16.gmra.mrb[0].mxu0 %v1242
      %v1293 = vpop.f32.mrb[0].mxu0
      %v1294 = vadd.f32 0.0, %v1293
      %v1295 = vpop.f32.mrb[0].mxu0
      %v1296 = vpop.f32.mrb[0].mxu0
      %v1297 = vadd.f32 0.0, %v1296
      %v1298 = vpop.f32.mrb[0].mxu0
      %1299 = vmatprep.mubr.bf16.mxu0 0
      %1300 = vmatmul.mubr.bf16.gmra.mrb[0].mxu0 %v1245
      %v1301 = vpop.f32.mrb[0].mxu0
      %v1302 = vadd.f32 0.0, %v1301
      %v1303 = vpop.f32.mrb[0].mxu0
      %v1304 = vpop.f32.mrb[0].mxu0
      %v1305 = vadd.f32 0.0, %v1304
      %v1306 = vpop.f32.mrb[0].mxu0
      %1307 = vmatprep.mubr.bf16.mxu0 0
      %1308 = vmatmul.mubr.bf16.gmra.mrb[0].mxu0 %v1248
      %v1309 = vpop.f32.mrb[0].mxu0
      %v1310 = vadd.f32 0.0, %v1309
      %v1311 = vpop.f32.mrb[0].mxu0
      %v1312 = vpop.f32.mrb[0].mxu0
      %v1313 = vadd.f32 0.0, %v1312
      %v1314 = vpop.f32.mrb[0].mxu0
      %1315 = vmatprep.mubr.bf16.mxu0 0
      %1316 = vmatmul.mubr.bf16.gmra.mrb[0].mxu0 %v1251
      %v1317 = vpop.f32.mrb[0].mxu0
      %v1318 = vadd.f32 0.0, %v1317
      %v1319 = vpop.f32.mrb[0].mxu0
      %v1320 = vpop.f32.mrb[0].mxu0
      %v1321 = vadd.f32 0.0, %v1320
      %v1322 = vpop.f32.mrb[0].mxu0
      %1323 = vmatprep.mubr.bf16.mxu0 0
      %1324 = vmatmul.mubr.bf16.gmra.mrb[0].mxu0 %v1254
      %v1325 = vpop.f32.mrb[0].mxu0
      %v1326 = vadd.f32 0.0, %v1325
      %v1327 = vpop.f32.mrb[0].mxu0
      %v1328 = vpop.f32.mrb[0].mxu0
      %v1329 = vadd.f32 0.0, %v1328
      %v1330 = vpop.f32.mrb[0].mxu0
      %1331 = vdwg.mxu0
      %1342 = vrot.lane.b32.xlu0 %v1294, 32
      %v1343 = vpop.permute.xlu0 %1342
      %1344 = vrot.lane.b32.xlu0 %v1297, 32
      %v1345 = vpop.permute.xlu0 %1344
      %1346 = vrot.lane.b32.xlu0 %v1302, 32
      %v1347 = vpop.permute.xlu0 %1346
      %1348 = vrot.lane.b32.xlu0 %v1305, 32
      %v1349 = vpop.permute.xlu0 %1348
      %1350 = vrot.lane.b32.xlu0 %v1310, 32
      %v1351 = vpop.permute.xlu0 %1350
      %1352 = vrot.lane.b32.xlu0 %v1313, 32
      %v1353 = vpop.permute.xlu0 %1352
      %1354 = vrot.lane.b32.xlu0 %v1318, 32
      %v1355 = vpop.permute.xlu0 %1354
      %1356 = vrot.lane.b32.xlu0 %v1321, 32
      %v1357 = vpop.permute.xlu0 %1356
      %1358 = vrot.lane.b32.xlu0 %v1326, 32
      %v1359 = vpop.permute.xlu0 %1358
      %1360 = vrot.lane.b32.xlu0 %v1329, 32
      %v1361 = vpop.permute.xlu0 %1360
      %v1372 = vadd.f32 %v415, %v1343
      %v1373 = vadd.f32 %v418, %v1345
      %v1374 = vadd.f32 %v423, %v1347
      %v1375 = vadd.f32 %v426, %v1349
      %v1376 = vadd.f32 %v431, %v1351
      %v1377 = vadd.f32 %v434, %v1353
      %v1378 = vadd.f32 %v439, %v1355
      %v1379 = vadd.f32 %v442, %v1357
      %v1380 = vadd.f32 %v447, %v1359
      %v1381 = vadd.f32 %v450, %v1361
      %1382 = vrot.lane.b32.xlu0 %v671, 64
      %v1383 = vpop.permute.xlu0 %1382
      %1384 = vrot.lane.b32.xlu0 %v672, 64
      %v1385 = vpop.permute.xlu0 %1384
      %1386 = vrot.lane.b32.xlu0 %v673, 64
      %v1387 = vpop.permute.xlu0 %1386
      %1388 = vrot.lane.b32.xlu0 %v674, 64
      %v1389 = vpop.permute.xlu0 %1388
      %1390 = vrot.lane.b32.xlu0 %v675, 64
      %v1391 = vpop.permute.xlu0 %1390
      %1392 = vrot.lane.b32.xlu0 %v676, 64
      %v1393 = vpop.permute.xlu0 %1392
      %1394 = vrot.lane.b32.xlu0 %v677, 64
      %v1395 = vpop.permute.xlu0 %1394
      %1396 = vrot.lane.b32.xlu0 %v678, 64
      %v1397 = vpop.permute.xlu0 %1396
      %1398 = vrot.lane.b32.xlu0 %v679, 64
      %v1399 = vpop.permute.xlu0 %1398
      %1400 = vrot.lane.b32.xlu0 %v680, 64
      %v1401 = vpop.permute.xlu0 %1400
      %v1403 = vsel %vm686, %v1383, 0
      %v1406 = vsel %vm686, %v1385, 0
      %v1409 = vsel %vm686, %v1387, 0
      %v1412 = vsel %vm686, %v1389, 0
      %v1415 = vsel %vm686, %v1391, 0
      %v1418 = vsel %vm686, %v1393, 0
      %v1421 = vsel %vm686, %v1395, 0
      %v1424 = vsel %vm686, %v1397, 0
      %v1427 = vsel %vm686, %v1399, 0
      %v1430 = vsel %vm686, %v1401, 0
      %1432 = vmatprep.subr.bf16.mxu0 0
      %1433 = vmatpush1.bf16.xpose.msra.mxu0 %v1418
      %1434 = vmatprep.subr.bf16.mxu0 0
      %1435 = vmatpush1.bf16.xpose.msra.mxu0 %v1421
      %1436 = vmatprep.subr.bf16.mxu0 0
      %1437 = vmatpush1.bf16.xpose.msra.mxu0 %v1424
      %1438 = vmatprep.subr.bf16.mxu0 0
      %1439 = vmatpush1.bf16.xpose.msra.mxu0 %v1427
      %1440 = vmatprep.subr.bf16.mxu0 0
      %1441 = vmatpush1.bf16.xpose.msra.mxu0 %v1430
      %1442 = vmatprep.subr.bf16.mxu0 0
      %1443 = vmatpush1.bf16.xpose.msra.mxu0 0
      %1444 = vmatprep.subr.bf16.mxu0 0
      %1445 = vmatpush1.bf16.xpose.msra.mxu0 0
      %1446 = vmatprep.subr.bf16.mxu0 0
      %1447 = vmatpush1.bf16.xpose.msra.mxu0 0
      %1448 = vmatprep.subr.bf16.mxu0 0
      %1449 = vmatpush1.bf16.xpose.msra.mxu0 0
      %1450 = vmatprep.subr.bf16.mxu0 0
      %1451 = vmatpush1.bf16.xpose.msra.mxu0 0
      %1452 = vmatprep.subr.bf16.mxu0 0
      %1453 = vmatpush1.bf16.xpose.msra.mxu0 0
      %1454 = vmatprep.subr.bf16.mxu0 0
      %1455 = vmatpush1.bf16.xpose.msra.mxu0 0
      %1456 = vmatprep.subr.bf16.mxu0 0
      %1457 = vmatpush1.bf16.xpose.msra.mxu0 0
      %1458 = vmatprep.subr.bf16.mxu0 0
      %1459 = vmatpush1.bf16.xpose.msra.mxu0 0
      %1460 = vmatprep.subr.bf16.mxu0 0
      %1461 = vmatpush1.bf16.xpose.msra.mxu0 0
      %1462 = vmatprep.subr.bf16.mxu0 0
      %1463 = vmatpush1.bf16.xpose.msra.mxu0 0
      %1464 = vmatprep.mubr.bf16.mxu0 0
      %1465 = vmatmul.mubr.bf16.gmra.mrb[0].mxu0 %v1403
      %v1466 = vpop.f32.mrb[0].mxu0
      %v1467 = vadd.f32 0.0, %v1466
      %v1468 = vpop.f32.mrb[0].mxu0
      %v1469 = vpop.f32.mrb[0].mxu0
      %v1470 = vadd.f32 0.0, %v1469
      %v1471 = vpop.f32.mrb[0].mxu0
      %1472 = vmatprep.mubr.bf16.mxu0 0
      %1473 = vmatmul.mubr.bf16.gmra.mrb[0].mxu0 %v1406
      %v1474 = vpop.f32.mrb[0].mxu0
      %v1475 = vadd.f32 0.0, %v1474
      %v1476 = vpop.f32.mrb[0].mxu0
      %v1477 = vpop.f32.mrb[0].mxu0
      %v1478 = vadd.f32 0.0, %v1477
      %v1479 = vpop.f32.mrb[0].mxu0
      %1480 = vmatprep.mubr.bf16.mxu0 0
      %1481 = vmatmul.mubr.bf16.gmra.mrb[0].mxu0 %v1409
      %v1482 = vpop.f32.mrb[0].mxu0
      %v1483 = vadd.f32 0.0, %v1482
      %v1484 = vpop.f32.mrb[0].mxu0
      %v1485 = vpop.f32.mrb[0].mxu0
      %v1486 = vadd.f32 0.0, %v1485
      %v1487 = vpop.f32.mrb[0].mxu0
      %1488 = vmatprep.mubr.bf16.mxu0 0
      %1489 = vmatmul.mubr.bf16.gmra.mrb[0].mxu0 %v1412
      %v1490 = vpop.f32.mrb[0].mxu0
      %v1491 = vadd.f32 0.0, %v1490
      %v1492 = vpop.f32.mrb[0].mxu0
      %v1493 = vpop.f32.mrb[0].mxu0
      %v1494 = vadd.f32 0.0, %v1493
      %v1495 = vpop.f32.mrb[0].mxu0
      %1496 = vmatprep.mubr.bf16.mxu0 0
      %1497 = vmatmul.mubr.bf16.gmra.mrb[0].mxu0 %v1415
      %v1498 = vpop.f32.mrb[0].mxu0
      %v1499 = vadd.f32 0.0, %v1498
      %v1500 = vpop.f32.mrb[0].mxu0
      %v1501 = vpop.f32.mrb[0].mxu0
      %v1502 = vadd.f32 0.0, %v1501
      %v1503 = vpop.f32.mrb[0].mxu0
      %1504 = vdwg.mxu0
      %v1505 = vsel %vm790, %v1467, -inf
      %v1506 = vsel %vm790, %v1470, -inf
      %v1507 = vsel %vm790, %v1475, -inf
      %v1508 = vsel %vm790, %v1478, -inf
      %v1509 = vsel %vm790, %v1483, -inf
      %v1510 = vmax.f32 %v1505, %v1509
      %v1511 = vsel %vm790, %v1486, -inf
      %v1512 = vmax.f32 %v1506, %v1511
      %v1513 = vsel %vm790, %v1491, -inf
      %v1514 = vmax.f32 %v1507, %v1513
      %v1515 = vsel %vm790, %v1494, -inf
      %v1516 = vmax.f32 %v1508, %v1515
      %v1517 = vsel %vm790, %v1499, -inf
      %v1518 = vmax.f32 %v1510, %v1517
      %v1519 = vsel %vm805, %v1502, -inf
      %v1520 = vmax.f32 %v1512, %v1519
      %v1521 = vmax.f32 %v1518, %v1520
      %v1522 = vmax.f32 %v1514, %v1516
      %v1523 = vmax.f32 %v1521, %v1522
      %v1524 = vrot.slane %v1523, 4
      %v1525 = vmax.f32 %v1523, %v1524
      %v1526 = vrot.slane %v1525, 2
      %v1527 = vmax.f32 %v1525, %v1526
      %v1528 = vrot.slane %v1527, 1
      %v1529 = vmax.f32 %v1527, %v1528
      %v1530 = vsub.f32 %v1467, %v1529
      %v1531 = vsub.f32 %v1470, %v1529
      %v1532 = vsub.f32 %v1475, %v1529
      %v1533 = vsub.f32 %v1478, %v1529
      %v1534 = vsub.f32 %v1483, %v1529
      %v1535 = vsub.f32 %v1486, %v1529
      %v1536 = vsub.f32 %v1491, %v1529
      %v1537 = vsub.f32 %v1494, %v1529
      %v1538 = vsub.f32 %v1499, %v1529
      %v1539 = vsub.f32 %v1502, %v1529
      %v1540 = vmul.f32 %v1530, 1.442695
      %v1541 = vpow.pop %v1540
      %v1542 = vmul.f32 %v1531, 1.442695
      %v1543 = vpow.pop %v1542
      %v1544 = vmul.f32 %v1532, 1.442695
      %v1545 = vpow.pop %v1544
      %v1546 = vmul.f32 %v1533, 1.442695
      %v1547 = vpow.pop %v1546
      %v1548 = vmul.f32 %v1534, 1.442695
      %v1549 = vpow.pop %v1548
      %v1550 = vmul.f32 %v1535, 1.442695
      %v1551 = vpow.pop %v1550
      %v1552 = vmul.f32 %v1536, 1.442695
      %v1553 = vpow.pop %v1552
      %v1554 = vmul.f32 %v1537, 1.442695
      %v1555 = vpow.pop %v1554
      %v1556 = vmul.f32 %v1538, 1.442695
      %v1557 = vpow.pop %v1556
      %v1558 = vmul.f32 %v1539, 1.442695
      %v1559 = vpow.pop %v1558
      %v1560 = vsel %vm790, %v1541, 0.0
      %v1561 = vsel %vm790, %v1543, 0.0
      %v1562 = vadd.f32 %v1560, %v1561
      %v1563 = vsel %vm790, %v1545, 0.0
      %v1564 = vadd.f32 %v1562, %v1563
      %v1565 = vsel %vm790, %v1547, 0.0
      %v1566 = vadd.f32 %v1564, %v1565
      %v1567 = vsel %vm790, %v1549, 0.0
      %v1568 = vadd.f32 %v1566, %v1567
      %v1569 = vsel %vm790, %v1551, 0.0
      %v1570 = vadd.f32 %v1568, %v1569
      %v1571 = vsel %vm790, %v1553, 0.0
      %v1572 = vadd.f32 %v1570, %v1571
      %v1573 = vsel %vm790, %v1555, 0.0
      %v1574 = vadd.f32 %v1572, %v1573
      %v1575 = vsel %vm790, %v1557, 0.0
      %v1576 = vadd.f32 %v1574, %v1575
      %v1577 = vsel %vm805, %v1559, 0.0
      %v1578 = vadd.f32 %v1576, %v1577
      %v1579 = vrot.slane %v1578, 4
      %v1580 = vadd.f32 %v1578, %v1579
      %v1581 = vrot.slane %v1580, 2
      %v1582 = vadd.f32 %v1580, %v1581
      %v1583 = vrot.slane %v1582, 1
      %v1584 = vadd.f32 %v1582, %v1583
      %v1585 = vrcp.pop %v1584
      %v1586 = vmul.f32 %v1541, %v1585
      %v1587 = vmul.f32 %v1543, %v1585
      %v1588 = vmul.f32 %v1545, %v1585
      %v1589 = vmul.f32 %v1547, %v1585
      %v1590 = vmul.f32 %v1549, %v1585
      %v1591 = vmul.f32 %v1551, %v1585
      %v1592 = vmul.f32 %v1553, %v1585
      %v1593 = vmul.f32 %v1555, %v1585
      %v1594 = vmul.f32 %v1557, %v1585
      %v1595 = vmul.f32 %v1559, %v1585
      %v1596 = vpack.c.bf16 %v1587, %v1586
      %v1597 = vpack.c.bf16 %v1589, %v1588
      %v1598 = vpack.c.bf16 %v1591, %v1590
      %v1599 = vpack.c.bf16 %v1593, %v1592
      %v1600 = vpack.c.bf16 %v1595, %v1594
      %1601 = vrot.lane.b32.xlu0 %v681, 64
      %v1602 = vpop.permute.xlu0 %1601
      %1603 = vrot.lane.b32.xlu0 %v682, 64
      %v1604 = vpop.permute.xlu0 %1603
      %1605 = vrot.lane.b32.xlu0 %v683, 64
      %v1606 = vpop.permute.xlu0 %1605
      %1607 = vrot.lane.b32.xlu0 %v684, 64
      %v1608 = vpop.permute.xlu0 %1607
      %1609 = vrot.lane.b32.xlu0 %v685, 64
      %v1610 = vpop.permute.xlu0 %1609
      %v1616 = vsel %vm790, %v1596, 0
      %v1619 = vsel %vm790, %v1597, 0
      %v1622 = vsel %vm790, %v1598, 0
      %v1625 = vsel %vm790, %v1599, 0
      %v1628 = vsel %vm790, %v1600, 0
      %v1631 = vand.u32 %v1610, %v906
      %1633 = vmatprep.subr.bf16.mxu0 0
      %1634 = vmatpush1.bf16.msra.mxu0 %v1602
      %1635 = vmatprep.subr.bf16.mxu0 0
      %1636 = vmatpush1.bf16.msra.mxu0 %v1604
      %1637 = vmatprep.subr.bf16.mxu0 0
      %1638 = vmatpush1.bf16.msra.mxu0 %v1606
      %1639 = vmatprep.subr.bf16.mxu0 0
      %1640 = vmatpush1.bf16.msra.mxu0 %v1608
      %1641 = vmatprep.subr.bf16.mxu0 0
      %1642 = vmatpush1.bf16.msra.mxu0 %v1631
      %1643 = vmatprep.subr.bf16.mxu0 0
      %1644 = vmatpush1.bf16.msra.mxu0 0
      %1645 = vmatprep.subr.bf16.mxu0 0
      %1646 = vmatpush1.bf16.msra.mxu0 0
      %1647 = vmatprep.subr.bf16.mxu0 0
      %1648 = vmatpush1.bf16.msra.mxu0 0
      %1649 = vmatprep.subr.bf16.mxu0 0
      %1650 = vmatpush1.bf16.msra.mxu0 0
      %1651 = vmatprep.subr.bf16.mxu0 0
      %1652 = vmatpush1.bf16.msra.mxu0 0
      %1653 = vmatprep.subr.bf16.mxu0 0
      %1654 = vmatpush1.bf16.msra.mxu0 0
      %1655 = vmatprep.subr.bf16.mxu0 0
      %1656 = vmatpush1.bf16.msra.mxu0 0
      %1657 = vmatprep.subr.bf16.mxu0 0
      %1658 = vmatpush1.bf16.msra.mxu0 0
      %1659 = vmatprep.subr.bf16.mxu0 0
      %1660 = vmatpush1.bf16.msra.mxu0 0
      %1661 = vmatprep.subr.bf16.mxu0 0
      %1662 = vmatpush1.bf16.msra.mxu0 0
      %1663 = vmatprep.subr.bf16.mxu0 0
      %1664 = vmatpush1.bf16.msra.mxu0 0
      %1665 = vmatprep.mubr.bf16.mxu0 0
      %1666 = vmatmul.mubr.bf16.gmra.mrb[0].mxu0 %v1616
      %v1667 = vpop.f32.mrb[0].mxu0
      %v1668 = vadd.f32 0.0, %v1667
      %v1669 = vpop.f32.mrb[0].mxu0
      %v1670 = vpop.f32.mrb[0].mxu0
      %v1671 = vadd.f32 0.0, %v1670
      %v1672 = vpop.f32.mrb[0].mxu0
      %1673 = vmatprep.mubr.bf16.mxu0 0
      %1674 = vmatmul.mubr.bf16.gmra.mrb[0].mxu0 %v1619
      %v1675 = vpop.f32.mrb[0].mxu0
      %v1676 = vadd.f32 0.0, %v1675
      %v1677 = vpop.f32.mrb[0].mxu0
      %v1678 = vpop.f32.mrb[0].mxu0
      %v1679 = vadd.f32 0.0, %v1678
      %v1680 = vpop.f32.mrb[0].mxu0
      %1681 = vmatprep.mubr.bf16.mxu0 0
      %1682 = vmatmul.mubr.bf16.gmra.mrb[0].mxu0 %v1622
      %v1683 = vpop.f32.mrb[0].mxu0
      %v1684 = vadd.f32 0.0, %v1683
      %v1685 = vpop.f32.mrb[0].mxu0
      %v1686 = vpop.f32.mrb[0].mxu0
      %v1687 = vadd.f32 0.0, %v1686
      %v1688 = vpop.f32.mrb[0].mxu0
      %1689 = vmatprep.mubr.bf16.mxu0 0
      %1690 = vmatmul.mubr.bf16.gmra.mrb[0].mxu0 %v1625
      %v1691 = vpop.f32.mrb[0].mxu0
      %v1692 = vadd.f32 0.0, %v1691
      %v1693 = vpop.f32.mrb[0].mxu0
      %v1694 = vpop.f32.mrb[0].mxu0
      %v1695 = vadd.f32 0.0, %v1694
      %v1696 = vpop.f32.mrb[0].mxu0
      %1697 = vmatprep.mubr.bf16.mxu0 0
      %1698 = vmatmul.mubr.bf16.gmra.mrb[0].mxu0 %v1628
      %v1699 = vpop.f32.mrb[0].mxu0
      %v1700 = vadd.f32 0.0, %v1699
      %v1701 = vpop.f32.mrb[0].mxu0
      %v1702 = vpop.f32.mrb[0].mxu0
      %v1703 = vadd.f32 0.0, %v1702
      %v1704 = vpop.f32.mrb[0].mxu0
      %1705 = vdwg.mxu0
      %1716 = vrot.lane.b32.xlu0 %v1668, 64
      %v1717 = vpop.permute.xlu0 %1716
      %1718 = vrot.lane.b32.xlu0 %v1671, 64
      %v1719 = vpop.permute.xlu0 %1718
      %1720 = vrot.lane.b32.xlu0 %v1676, 64
      %v1721 = vpop.permute.xlu0 %1720
      %1722 = vrot.lane.b32.xlu0 %v1679, 64
      %v1723 = vpop.permute.xlu0 %1722
      %1724 = vrot.lane.b32.xlu0 %v1684, 64
      %v1725 = vpop.permute.xlu0 %1724
      %1726 = vrot.lane.b32.xlu0 %v1687, 64
      %v1727 = vpop.permute.xlu0 %1726
      %1728 = vrot.lane.b32.xlu0 %v1692, 64
      %v1729 = vpop.permute.xlu0 %1728
      %1730 = vrot.lane.b32.xlu0 %v1695, 64
      %v1731 = vpop.permute.xlu0 %1730
      %1732 = vrot.lane.b32.xlu0 %v1700, 64
      %v1733 = vpop.permute.xlu0 %1732
      %1734 = vrot.lane.b32.xlu0 %v1703, 64
      %v1735 = vpop.permute.xlu0 %1734
      %v1746 = vadd.f32 %v415, %v1717
      %v1747 = vadd.f32 %v418, %v1719
      %v1748 = vadd.f32 %v423, %v1721
      %v1749 = vadd.f32 %v426, %v1723
      %v1750 = vadd.f32 %v431, %v1725
      %v1751 = vadd.f32 %v434, %v1727
      %v1752 = vadd.f32 %v439, %v1729
      %v1753 = vadd.f32 %v442, %v1731
      %v1754 = vadd.f32 %v447, %v1733
      %v1755 = vadd.f32 %v450, %v1735
      %1756 = vrot.lane.b32.xlu0 %v671, 32
      %v1757 = vpop.permute.xlu0 %1756
      %1758 = vrot.lane.b32.xlu0 %v672, 32
      %v1759 = vpop.permute.xlu0 %1758
      %1760 = vrot.lane.b32.xlu0 %v673, 32
      %v1761 = vpop.permute.xlu0 %1760
      %1762 = vrot.lane.b32.xlu0 %v674, 32
      %v1763 = vpop.permute.xlu0 %1762
      %1764 = vrot.lane.b32.xlu0 %v675, 32
      %v1765 = vpop.permute.xlu0 %1764
      %1766 = vrot.lane.b32.xlu0 %v676, 32
      %v1767 = vpop.permute.xlu0 %1766
      %1768 = vrot.lane.b32.xlu0 %v677, 32
      %v1769 = vpop.permute.xlu0 %1768
      %1770 = vrot.lane.b32.xlu0 %v678, 32
      %v1771 = vpop.permute.xlu0 %1770
      %1772 = vrot.lane.b32.xlu0 %v679, 32
      %v1773 = vpop.permute.xlu0 %1772
      %1774 = vrot.lane.b32.xlu0 %v680, 32
      %v1775 = vpop.permute.xlu0 %1774
      %v1777 = vsel %vm686, %v1757, 0
      %v1780 = vsel %vm686, %v1759, 0
      %v1783 = vsel %vm686, %v1761, 0
      %v1786 = vsel %vm686, %v1763, 0
      %v1789 = vsel %vm686, %v1765, 0
      %v1792 = vsel %vm686, %v1767, 0
      %v1795 = vsel %vm686, %v1769, 0
      %v1798 = vsel %vm686, %v1771, 0
      %v1801 = vsel %vm686, %v1773, 0
      %v1804 = vsel %vm686, %v1775, 0
      %1806 = vmatprep.subr.bf16.mxu0 0
      %1807 = vmatpush1.bf16.xpose.msra.mxu0 %v1792
      %1808 = vmatprep.subr.bf16.mxu0 0
      %1809 = vmatpush1.bf16.xpose.msra.mxu0 %v1795
      %1810 = vmatprep.subr.bf16.mxu0 0
      %1811 = vmatpush1.bf16.xpose.msra.mxu0 %v1798
      %1812 = vmatprep.subr.bf16.mxu0 0
      %1813 = vmatpush1.bf16.xpose.msra.mxu0 %v1801
      %1814 = vmatprep.subr.bf16.mxu0 0
      %1815 = vmatpush1.bf16.xpose.msra.mxu0 %v1804
      %1816 = vmatprep.subr.bf16.mxu0 0
      %1817 = vmatpush1.bf16.xpose.msra.mxu0 0
      %1818 = vmatprep.subr.bf16.mxu0 0
      %1819 = vmatpush1.bf16.xpose.msra.mxu0 0
      %1820 = vmatprep.subr.bf16.mxu0 0
      %1821 = vmatpush1.bf16.xpose.msra.mxu0 0
      %1822 = vmatprep.subr.bf16.mxu0 0
      %1823 = vmatpush1.bf16.xpose.msra.mxu0 0
      %1824 = vmatprep.subr.bf16.mxu0 0
      %1825 = vmatpush1.bf16.xpose.msra.mxu0 0
      %1826 = vmatprep.subr.bf16.mxu0 0
      %1827 = vmatpush1.bf16.xpose.msra.mxu0 0
      %1828 = vmatprep.subr.bf16.mxu0 0
      %1829 = vmatpush1.bf16.xpose.msra.mxu0 0
      %1830 = vmatprep.subr.bf16.mxu0 0
      %1831 = vmatpush1.bf16.xpose.msra.mxu0 0
      %1832 = vmatprep.subr.bf16.mxu0 0
      %1833 = vmatpush1.bf16.xpose.msra.mxu0 0
      %1834 = vmatprep.subr.bf16.mxu0 0
      %1835 = vmatpush1.bf16.xpose.msra.mxu0 0
      %1836 = vmatprep.subr.bf16.mxu0 0
      %1837 = vmatpush1.bf16.xpose.msra.mxu0 0
      %1838 = vmatprep.mubr.bf16.mxu0 0
      %1839 = vmatmul.mubr.bf16.gmra.mrb[0].mxu0 %v1777
      %v1840 = vpop.f32.mrb[0].mxu0
      %v1841 = vadd.f32 0.0, %v1840
      %v1842 = vpop.f32.mrb[0].mxu0
      %v1843 = vpop.f32.mrb[0].mxu0
      %v1844 = vadd.f32 0.0, %v1843
      %v1845 = vpop.f32.mrb[0].mxu0
      %1846 = vmatprep.mubr.bf16.mxu0 0
      %1847 = vmatmul.mubr.bf16.gmra.mrb[0].mxu0 %v1780
      %v1848 = vpop.f32.mrb[0].mxu0
      %v1849 = vadd.f32 0.0, %v1848
      %v1850 = vpop.f32.mrb[0].mxu0
      %v1851 = vpop.f32.mrb[0].mxu0
      %v1852 = vadd.f32 0.0, %v1851
      %v1853 = vpop.f32.mrb[0].mxu0
      %1854 = vmatprep.mubr.bf16.mxu0 0
      %1855 = vmatmul.mubr.bf16.gmra.mrb[0].mxu0 %v1783
      %v1856 = vpop.f32.mrb[0].mxu0
      %v1857 = vadd.f32 0.0, %v1856
      %v1858 = vpop.f32.mrb[0].mxu0
      %v1859 = vpop.f32.mrb[0].mxu0
      %v1860 = vadd.f32 0.0, %v1859
      %v1861 = vpop.f32.mrb[0].mxu0
      %1862 = vmatprep.mubr.bf16.mxu0 0
      %1863 = vmatmul.mubr.bf16.gmra.mrb[0].mxu0 %v1786
      %v1864 = vpop.f32.mrb[0].mxu0
      %v1865 = vadd.f32 0.0, %v1864
      %v1866 = vpop.f32.mrb[0].mxu0
      %v1867 = vpop.f32.mrb[0].mxu0
      %v1868 = vadd.f32 0.0, %v1867
      %v1869 = vpop.f32.mrb[0].mxu0
      %1870 = vmatprep.mubr.bf16.mxu0 0
      %1871 = vmatmul.mubr.bf16.gmra.mrb[0].mxu0 %v1789
      %v1872 = vpop.f32.mrb[0].mxu0
      %v1873 = vadd.f32 0.0, %v1872
      %v1874 = vpop.f32.mrb[0].mxu0
      %v1875 = vpop.f32.mrb[0].mxu0
      %v1876 = vadd.f32 0.0, %v1875
      %v1877 = vpop.f32.mrb[0].mxu0
      %1878 = vdwg.mxu0
      %v1879 = vsel %vm790, %v1841, -inf
      %v1880 = vsel %vm790, %v1844, -inf
      %v1881 = vsel %vm790, %v1849, -inf
      %v1882 = vsel %vm790, %v1852, -inf
      %v1883 = vsel %vm790, %v1857, -inf
      %v1884 = vmax.f32 %v1879, %v1883
      %v1885 = vsel %vm790, %v1860, -inf
      %v1886 = vmax.f32 %v1880, %v1885
      %v1887 = vsel %vm790, %v1865, -inf
      %v1888 = vmax.f32 %v1881, %v1887
      %v1889 = vsel %vm790, %v1868, -inf
      %v1890 = vmax.f32 %v1882, %v1889
      %v1891 = vsel %vm790, %v1873, -inf
      %v1892 = vmax.f32 %v1884, %v1891
      %v1893 = vsel %vm805, %v1876, -inf
      %v1894 = vmax.f32 %v1886, %v1893
      %v1895 = vmax.f32 %v1892, %v1894
      %v1896 = vmax.f32 %v1888, %v1890
      %v1897 = vmax.f32 %v1895, %v1896
      %v1898 = vrot.slane %v1897, 4
      %v1899 = vmax.f32 %v1897, %v1898
      %v1900 = vrot.slane %v1899, 2
      %v1901 = vmax.f32 %v1899, %v1900
      %v1902 = vrot.slane %v1901, 1
      %v1903 = vmax.f32 %v1901, %v1902
      %v1904 = vsub.f32 %v1841, %v1903
      %v1905 = vsub.f32 %v1844, %v1903
      %v1906 = vsub.f32 %v1849, %v1903
      %v1907 = vsub.f32 %v1852, %v1903
      %v1908 = vsub.f32 %v1857, %v1903
      %v1909 = vsub.f32 %v1860, %v1903
      %v1910 = vsub.f32 %v1865, %v1903
      %v1911 = vsub.f32 %v1868, %v1903
      %v1912 = vsub.f32 %v1873, %v1903
      %v1913 = vsub.f32 %v1876, %v1903
      %v1914 = vmul.f32 %v1904, 1.442695
      %v1915 = vpow.pop %v1914
      %v1916 = vmul.f32 %v1905, 1.442695
      %v1917 = vpow.pop %v1916
      %v1918 = vmul.f32 %v1906, 1.442695
      %v1919 = vpow.pop %v1918
      %v1920 = vmul.f32 %v1907, 1.442695
      %v1921 = vpow.pop %v1920
      %v1922 = vmul.f32 %v1908, 1.442695
      %v1923 = vpow.pop %v1922
      %v1924 = vmul.f32 %v1909, 1.442695
      %v1925 = vpow.pop %v1924
      %v1926 = vmul.f32 %v1910, 1.442695
      %v1927 = vpow.pop %v1926
      %v1928 = vmul.f32 %v1911, 1.442695
      %v1929 = vpow.pop %v1928
      %v1930 = vmul.f32 %v1912, 1.442695
      %v1931 = vpow.pop %v1930
      %v1932 = vmul.f32 %v1913, 1.442695
      %v1933 = vpow.pop %v1932
      %v1934 = vsel %vm790, %v1915, 0.0
      %v1935 = vsel %vm790, %v1917, 0.0
      %v1936 = vadd.f32 %v1934, %v1935
      %v1937 = vsel %vm790, %v1919, 0.0
      %v1938 = vadd.f32 %v1936, %v1937
      %v1939 = vsel %vm790, %v1921, 0.0
      %v1940 = vadd.f32 %v1938, %v1939
      %v1941 = vsel %vm790, %v1923, 0.0
      %v1942 = vadd.f32 %v1940, %v1941
      %v1943 = vsel %vm790, %v1925, 0.0
      %v1944 = vadd.f32 %v1942, %v1943
      %v1945 = vsel %vm790, %v1927, 0.0
      %v1946 = vadd.f32 %v1944, %v1945
      %v1947 = vsel %vm790, %v1929, 0.0
      %v1948 = vadd.f32 %v1946, %v1947
      %v1949 = vsel %vm790, %v1931, 0.0
      %v1950 = vadd.f32 %v1948, %v1949
      %v1951 = vsel %vm805, %v1933, 0.0
      %v1952 = vadd.f32 %v1950, %v1951
      %v1953 = vrot.slane %v1952, 4
      %v1954 = vadd.f32 %v1952, %v1953
      %v1955 = vrot.slane %v1954, 2
      %v1956 = vadd.f32 %v1954, %v1955
      %v1957 = vrot.slane %v1956, 1
      %v1958 = vadd.f32 %v1956, %v1957
      %v1959 = vrcp.pop %v1958
      %v1960 = vmul.f32 %v1915, %v1959
      %v1961 = vmul.f32 %v1917, %v1959
      %v1962 = vmul.f32 %v1919, %v1959
      %v1963 = vmul.f32 %v1921, %v1959
      %v1964 = vmul.f32 %v1923, %v1959
      %v1965 = vmul.f32 %v1925, %v1959
      %v1966 = vmul.f32 %v1927, %v1959
      %v1967 = vmul.f32 %v1929, %v1959
      %v1968 = vmul.f32 %v1931, %v1959
      %v1969 = vmul.f32 %v1933, %v1959
      %v1970 = vpack.c.bf16 %v1961, %v1960
      %v1971 = vpack.c.bf16 %v1963, %v1962
      %v1972 = vpack.c.bf16 %v1965, %v1964
      %v1973 = vpack.c.bf16 %v1967, %v1966
      %v1974 = vpack.c.bf16 %v1969, %v1968
      %1975 = vrot.lane.b32.xlu0 %v681, 32
      %v1976 = vpop.permute.xlu0 %1975
      %1977 = vrot.lane.b32.xlu0 %v682, 32
      %v1978 = vpop.permute.xlu0 %1977
      %1979 = vrot.lane.b32.xlu0 %v683, 32
      %v1980 = vpop.permute.xlu0 %1979
      %1981 = vrot.lane.b32.xlu0 %v684, 32
      %v1982 = vpop.permute.xlu0 %1981
      %1983 = vrot.lane.b32.xlu0 %v685, 32
      %v1984 = vpop.permute.xlu0 %1983
      %v1990 = vsel %vm790, %v1970, 0
      %v1993 = vsel %vm790, %v1971, 0
      %v1996 = vsel %vm790, %v1972, 0
      %v1999 = vsel %vm790, %v1973, 0
      %v2002 = vsel %vm790, %v1974, 0
      %v2005 = vand.u32 %v1984, %v906
      %2007 = vmatprep.subr.bf16.mxu0 0
      %2008 = vmatpush1.bf16.msra.mxu0 %v1976
      %2009 = vmatprep.subr.bf16.mxu0 0
      %2010 = vmatpush1.bf16.msra.mxu0 %v1978
      %2011 = vmatprep.subr.bf16.mxu0 0
      %2012 = vmatpush1.bf16.msra.mxu0 %v1980
      %2013 = vmatprep.subr.bf16.mxu0 0
      %2014 = vmatpush1.bf16.msra.mxu0 %v1982
      %2015 = vmatprep.subr.bf16.mxu0 0
      %2016 = vmatpush1.bf16.msra.mxu0 %v2005
      %2017 = vmatprep.subr.bf16.mxu0 0
      %2018 = vmatpush1.bf16.msra.mxu0 0
      %2019 = vmatprep.subr.bf16.mxu0 0
      %2020 = vmatpush1.bf16.msra.mxu0 0
      %2021 = vmatprep.subr.bf16.mxu0 0
      %2022 = vmatpush1.bf16.msra.mxu0 0
      %2023 = vmatprep.subr.bf16.mxu0 0
      %2024 = vmatpush1.bf16.msra.mxu0 0
      %2025 = vmatprep.subr.bf16.mxu0 0
      %2026 = vmatpush1.bf16.msra.mxu0 0
      %2027 = vmatprep.subr.bf16.mxu0 0
      %2028 = vmatpush1.bf16.msra.mxu0 0
      %2029 = vmatprep.subr.bf16.mxu0 0
      %2030 = vmatpush1.bf16.msra.mxu0 0
      %2031 = vmatprep.subr.bf16.mxu0 0
      %2032 = vmatpush1.bf16.msra.mxu0 0
      %2033 = vmatprep.subr.bf16.mxu0 0
      %2034 = vmatpush1.bf16.msra.mxu0 0
      %2035 = vmatprep.subr.bf16.mxu0 0
      %2036 = vmatpush1.bf16.msra.mxu0 0
      %2037 = vmatprep.subr.bf16.mxu0 0
      %2038 = vmatpush1.bf16.msra.mxu0 0
      %2039 = vmatprep.mubr.bf16.mxu0 0
      %2040 = vmatmul.mubr.bf16.gmra.mrb[0].mxu0 %v1990
      %v2041 = vpop.f32.mrb[0].mxu0
      %v2042 = vadd.f32 0.0, %v2041
      %v2043 = vpop.f32.mrb[0].mxu0
      %v2044 = vpop.f32.mrb[0].mxu0
      %v2045 = vadd.f32 0.0, %v2044
      %v2046 = vpop.f32.mrb[0].mxu0
      %2047 = vmatprep.mubr.bf16.mxu0 0
      %2048 = vmatmul.mubr.bf16.gmra.mrb[0].mxu0 %v1993
      %v2049 = vpop.f32.mrb[0].mxu0
      %v2050 = vadd.f32 0.0, %v2049
      %v2051 = vpop.f32.mrb[0].mxu0
      %v2052 = vpop.f32.mrb[0].mxu0
      %v2053 = vadd.f32 0.0, %v2052
      %v2054 = vpop.f32.mrb[0].mxu0
      %2055 = vmatprep.mubr.bf16.mxu0 0
      %2056 = vmatmul.mubr.bf16.gmra.mrb[0].mxu0 %v1996
      %v2057 = vpop.f32.mrb[0].mxu0
      %v2058 = vadd.f32 0.0, %v2057
      %v2059 = vpop.f32.mrb[0].mxu0
      %v2060 = vpop.f32.mrb[0].mxu0
      %v2061 = vadd.f32 0.0, %v2060
      %v2062 = vpop.f32.mrb[0].mxu0
      %2063 = vmatprep.mubr.bf16.mxu0 0
      %2064 = vmatmul.mubr.bf16.gmra.mrb[0].mxu0 %v1999
      %v2065 = vpop.f32.mrb[0].mxu0
      %v2066 = vadd.f32 0.0, %v2065
      %v2067 = vpop.f32.mrb[0].mxu0
      %v2068 = vpop.f32.mrb[0].mxu0
      %v2069 = vadd.f32 0.0, %v2068
      %v2070 = vpop.f32.mrb[0].mxu0
      %2071 = vmatprep.mubr.bf16.mxu0 0
      %2072 = vmatmul.mubr.bf16.gmra.mrb[0].mxu0 %v2002
      %v2073 = vpop.f32.mrb[0].mxu0
      %v2074 = vadd.f32 0.0, %v2073
      %v2075 = vpop.f32.mrb[0].mxu0
      %v2076 = vpop.f32.mrb[0].mxu0
      %v2077 = vadd.f32 0.0, %v2076
      %v2078 = vpop.f32.mrb[0].mxu0
      %2079 = vdwg.mxu0
      %2090 = vrot.lane.b32.xlu0 %v2042, 96
      %v2091 = vpop.permute.xlu0 %2090
      %2092 = vrot.lane.b32.xlu0 %v2045, 96
      %v2093 = vpop.permute.xlu0 %2092
      %2094 = vrot.lane.b32.xlu0 %v2050, 96
      %v2095 = vpop.permute.xlu0 %2094
      %2096 = vrot.lane.b32.xlu0 %v2053, 96
      %v2097 = vpop.permute.xlu0 %2096
      %2098 = vrot.lane.b32.xlu0 %v2058, 96
      %v2099 = vpop.permute.xlu0 %2098
      %2100 = vrot.lane.b32.xlu0 %v2061, 96
      %v2101 = vpop.permute.xlu0 %2100
      %2102 = vrot.lane.b32.xlu0 %v2066, 96
      %v2103 = vpop.permute.xlu0 %2102
      %2104 = vrot.lane.b32.xlu0 %v2069, 96
      %v2105 = vpop.permute.xlu0 %2104
      %2106 = vrot.lane.b32.xlu0 %v2074, 96
      %v2107 = vpop.permute.xlu0 %2106
      %2108 = vrot.lane.b32.xlu0 %v2077, 96
      %v2109 = vpop.permute.xlu0 %2108
      %v2120 = vadd.f32 %v415, %v2091
      %v2121 = vadd.f32 %v418, %v2093
      %v2122 = vadd.f32 %v423, %v2095
      %v2123 = vadd.f32 %v426, %v2097
      %v2124 = vadd.f32 %v431, %v2099
      %v2125 = vadd.f32 %v434, %v2101
      %v2126 = vadd.f32 %v439, %v2103
      %v2127 = vadd.f32 %v442, %v2105
      %v2128 = vadd.f32 %v447, %v2107
      %v2129 = vadd.f32 %v450, %v2109
      %v2130 = vsel %vm686, %v983, %v1372
      %v2131 = vsel %vm686, %v984, %v1373
      %v2132 = vsel %vm686, %v985, %v1374
      %v2133 = vsel %vm686, %v986, %v1375
      %v2134 = vsel %vm686, %v987, %v1376
      %v2135 = vsel %vm686, %v988, %v1377
      %v2136 = vsel %vm686, %v989, %v1378
      %v2137 = vsel %vm686, %v990, %v1379
      %v2138 = vsel %vm686, %v991, %v1380
      %v2139 = vsel %vm686, %v992, %v1381
      %vm2140 = vcmask 523264
      %v2141 = vsel %vm2140, %v2130, %v1746
      %v2142 = vsel %vm2140, %v2131, %v1747
      %v2143 = vsel %vm2140, %v2132, %v1748
      %v2144 = vsel %vm2140, %v2133, %v1749
      %v2145 = vsel %vm2140, %v2134, %v1750
      %v2146 = vsel %vm2140, %v2135, %v1751
      %v2147 = vsel %vm2140, %v2136, %v1752
      %v2148 = vsel %vm2140, %v2137, %v1753
      %v2149 = vsel %vm2140, %v2138, %v1754
      %v2150 = vsel %vm2140, %v2139, %v1755
      %vm2151 = vcmask 785408
      %v2152 = vsel %vm2151, %v2141, %v2120
      %v2153 = vsel %vm2151, %v2142, %v2121
      %v2154 = vsel %vm2151, %v2143, %v2122
      %v2155 = vsel %vm2151, %v2144, %v2123
      %v2156 = vsel %vm2151, %v2145, %v2124
      %v2157 = vsel %vm2151, %v2146, %v2125
      %v2158 = vsel %vm2151, %v2147, %v2126
      %v2159 = vsel %vm2151, %v2148, %v2127
      %v2160 = vsel %vm2151, %v2149, %v2128
      %v2161 = vsel %vm2151, %v2150, %v2129
      %v2162 = vld [vmem:[%s7] sm:$0xff]
      %v2163 = vld [vmem:[%s7 + $0x8] sm:$0xff]
      %v2164 = vld [vmem:[%s7 + $0x10] sm:$0xff]
      %v2165 = vld [vmem:[%s7 + $0x18] sm:$0xff]
      %v2166 = vld [vmem:[%s7 + $0x20] sm:$0xff]
      %v2167 = vld [vmem:[%s7 + $0x28] sm:$0xff]
      %v2168 = vld [vmem:[%s7 + $0x30] sm:$0xff]
      %v2169 = vld [vmem:[%s7 + $0x38] sm:$0xff]
      %v2170 = vld [vmem:[%s7 + $0x40] sm:$0xff]
      %v2171 = vld [vmem:[%s7 + $0x48] sm:$0xff]
      %v2172 = vld [vmem:[%s7 + $0x50] sm:$0xff]
      %v2173 = vld [vmem:[%s7 + $0x58] sm:$0xff]
      %v2174 = vld [vmem:[%s7 + $0x60] sm:$0xff]
      %v2175 = vld [vmem:[%s7 + $0x68] sm:$0xff]
      %v2176 = vld [vmem:[%s7 + $0x70] sm:$0xff]
      %v2177 = vld [vmem:[%s7 + $0x78] sm:$0xff]
      %v2178 = vld [vmem:[%s8] sm:$0x1]
      %v2179 = vpack.c.bf16 %v2153, %v2152
      %v2180 = vpack.c.bf16 %v2155, %v2154
      %v2181 = vpack.c.bf16 %v2157, %v2156
      %v2182 = vpack.c.bf16 %v2159, %v2158
      %v2183 = vpack.c.bf16 %v2161, %v2160
      %v2184 = vpack.c.bf16 %v2163, %v2162
      %v2185 = vpack.c.bf16 %v2165, %v2164
      %v2186 = vpack.c.bf16 %v2167, %v2166
      %v2187 = vpack.c.bf16 %v2169, %v2168
      %v2188 = vpack.c.bf16 %v2171, %v2170
      %v2189 = vpack.c.bf16 %v2173, %v2172
      %v2190 = vpack.c.bf16 %v2175, %v2174
      %v2191 = vpack.c.bf16 %v2177, %v2176
      %v2193 = vlaneseq
      %v2194 = vshrl.u32 %v2193, 7
      %v2195 = vsub.s32 0, %v2194
      %v2196 = vrot.slane %v2178, %v2195
      %2198 = vmatprep.subr.bf16.mxu0 0
      %2199 = vmatpush1.bf16.msra.mxu0 %v2184
      %2200 = vmatprep.subr.bf16.mxu0 0
      %2201 = vmatpush1.bf16.msra.mxu0 %v2185
      %2202 = vmatprep.subr.bf16.mxu0 0
      %2203 = vmatpush1.bf16.msra.mxu0 %v2186
      %2204 = vmatprep.subr.bf16.mxu0 0
      %2205 = vmatpush1.bf16.msra.mxu0 %v2187
      %2206 = vmatprep.subr.bf16.mxu0 0
      %2207 = vmatpush1.bf16.msra.mxu0 %v2188
      %2208 = vmatprep.subr.bf16.mxu0 0
      %2209 = vmatpush1.bf16.msra.mxu0 %v2189
      %2210 = vmatprep.subr.bf16.mxu0 0
      %2211 = vmatpush1.bf16.msra.mxu0 %v2190
      %2212 = vmatprep.subr.bf16.mxu0 0
      %2213 = vmatpush1.bf16.msra.mxu0 %v2191
      %2214 = vmatprep.subr.bf16.mxu0 0
      %2215 = vmatpush1.bf16.msra.mxu0 0
      %2216 = vmatprep.subr.bf16.mxu0 0
      %2217 = vmatpush1.bf16.msra.mxu0 0
      %2218 = vmatprep.subr.bf16.mxu0 0
      %2219 = vmatpush1.bf16.msra.mxu0 0
      %2220 = vmatprep.subr.bf16.mxu0 0
      %2221 = vmatpush1.bf16.msra.mxu0 0
      %2222 = vmatprep.subr.bf16.mxu0 0
      %2223 = vmatpush1.bf16.msra.mxu0 0
      %2224 = vmatprep.subr.bf16.mxu0 0
      %2225 = vmatpush1.bf16.msra.mxu0 0
      %2226 = vmatprep.subr.bf16.mxu0 0
      %2227 = vmatpush1.bf16.msra.mxu0 0
      %2228 = vmatprep.subr.bf16.mxu0 0
      %2229 = vmatpush1.bf16.msra.mxu0 0
      %2230 = vmatprep.mubr.bf16.mxu0 0
      %2231 = vmatmul.mubr.bf16.gmra.mrb[0].mxu0 %v2179
      %v2232 = vpop.f32.mrb[0].mxu0
      %v2233 = vadd.f32 %v2196, %v2232
      %v2234 = vpop.f32.mrb[0].mxu0
      %v2235 = vpop.f32.mrb[0].mxu0
      %v2236 = vadd.f32 %v2196, %v2235
      %v2237 = vpop.f32.mrb[0].mxu0
      %2238 = vmatprep.mubr.bf16.mxu0 0
      %2239 = vmatmul.mubr.bf16.gmra.mrb[0].mxu0 %v2180
      %v2240 = vpop.f32.mrb[0].mxu0
      %v2241 = vadd.f32 %v2196, %v2240
      %v2242 = vpop.f32.mrb[0].mxu0
      %v2243 = vpop.f32.mrb[0].mxu0
      %v2244 = vadd.f32 %v2196, %v2243
      %v2245 = vpop.f32.mrb[0].mxu0
      %2246 = vmatprep.mubr.bf16.mxu0 0
      %2247 = vmatmul.mubr.bf16.gmra.mrb[0].mxu0 %v2181
      %v2248 = vpop.f32.mrb[0].mxu0
      %v2249 = vadd.f32 %v2196, %v2248
      %v2250 = vpop.f32.mrb[0].mxu0
      %v2251 = vpop.f32.mrb[0].mxu0
      %v2252 = vadd.f32 %v2196, %v2251
      %v2253 = vpop.f32.mrb[0].mxu0
      %2254 = vmatprep.mubr.bf16.mxu0 0
      %2255 = vmatmul.mubr.bf16.gmra.mrb[0].mxu0 %v2182
      %v2256 = vpop.f32.mrb[0].mxu0
      %v2257 = vadd.f32 %v2196, %v2256
      %v2258 = vpop.f32.mrb[0].mxu0
      %v2259 = vpop.f32.mrb[0].mxu0
      %v2260 = vadd.f32 %v2196, %v2259
      %v2261 = vpop.f32.mrb[0].mxu0
      %2262 = vmatprep.mubr.bf16.mxu0 0
      %2263 = vmatmul.mubr.bf16.gmra.mrb[0].mxu0 %v2183
      %v2264 = vpop.f32.mrb[0].mxu0
      %v2265 = vadd.f32 %v2196, %v2264
      %v2266 = vpop.f32.mrb[0].mxu0
      %v2267 = vpop.f32.mrb[0].mxu0
      %v2268 = vadd.f32 %v2196, %v2267
      %v2269 = vpop.f32.mrb[0].mxu0
      %2270 = vdwg.mxu0
      %v2271 = vmax.f32 %v2233, 0.0
      %v2272 = vmax.f32 %v2236, 0.0
      %v2273 = vmax.f32 %v2241, 0.0
      %v2274 = vmax.f32 %v2244, 0.0
      %v2275 = vmax.f32 %v2249, 0.0
      %v2276 = vmax.f32 %v2252, 0.0
      %v2277 = vmax.f32 %v2257, 0.0
      %v2278 = vmax.f32 %v2260, 0.0
      %v2279 = vmax.f32 %v2265, 0.0
      %v2280 = vmax.f32 %v2268, 0.0
      %v2281 = vadd.f32 %v2152, %v2271
      %v2282 = vadd.f32 %v2153, %v2272
      %v2283 = vadd.f32 %v2154, %v2273
      %v2284 = vadd.f32 %v2155, %v2274
      %v2285 = vadd.f32 %v2156, %v2275
      %v2286 = vadd.f32 %v2157, %v2276
      %v2287 = vadd.f32 %v2158, %v2277
      %v2288 = vadd.f32 %v2159, %v2278
      %v2289 = vadd.f32 %v2160, %v2279
      %v2290 = vadd.f32 %v2161, %v2280
      %2291 = vst [vmem:[%s332] sm:$0xff] %v2281
      %2292 = vst [vmem:[%s332 + $0x8] sm:$0xff] %v2282
      %2293 = vst [vmem:[%s332 + $0x10] sm:$0xff] %v2283
      %2294 = vst [vmem:[%s332 + $0x18] sm:$0xff] %v2284
      %2295 = vst [vmem:[%s332 + $0x20] sm:$0xff] %v2285
      %2296 = vst [vmem:[%s332 + $0x28] sm:$0xff] %v2286
      %2297 = vst [vmem:[%s332 + $0x30] sm:$0xff] %v2287
      %2298 = vst [vmem:[%s332 + $0x38] sm:$0xff] %v2288
      %2299 = vst [vmem:[%s332 + $0x40] sm:$0xff] %v2289
      %2300 = vst [vmem:[%s332 + $0x48] sm:$0x7] %v2290
      %p2301 = scmp.lt.s32.totalorder %s20, 1
      %s2302 = scalar_select %p2301, %s20, 1
      %s2303 = smul.addr %s2302, 10
      %s2304 = smul.addr %s2303, 8
      %s2305 = scalar_lea.vmem %s9, %s2304
      // Predicated region
      $region57: #{gma_forward.6} parent=55 // pred_check
        %p2306 = pneg %p232
      $region58: #{gma_forward.6} parent=55 // pred_check_branch
        %2308 = sbr.rel (%p2306) target = $region60
      $region59: #{gma_forward.6} parent=55 // pred_region
        _
      $region60: #{gma_forward.6} parent=55 // pred_fallthru
        _
    $region56: #{gma_forward.6} parent=5 // pred_fallthru
      _
    %p2309 = scmp.le.s32.totalorder 2, %s15
    // Predicated region
    $region61: #{gma_forward.6} parent=5 // pred_check
      %p2310 = pneg %p2309
    $region62: #{gma_forward.6} parent=5 // pred_check_branch
      %2312 = sbr.rel (%p2310) target = $region64
    $region63: #{gma_forward.6} parent=5 // pred_region
      %s2313 = ssub.s32 %s15, 2
      // Predicated region
      $region65: #{gma_forward.6} parent=63 // pred_check
        %p2314 = pneg %p238
      $region66: #{gma_forward.6} parent=63 // pred_check_branch
        %2316 = sbr.rel (%p2314) target = $region68
      $region67: #{gma_forward.6} parent=63 // pred_region
        %p2317 = scmp.lt.s32.totalorder %s21, 1
        %s2318 = scalar_select %p2317, %s21, 1
        %s2319 = smul.addr %s2318, 10
        %s2320 = smul.addr %s2319, 8
        %s2321 = scalar_lea.vmem %s9, %s2320
      $region68: #{gma_forward.6} parent=63 // pred_fallthru
        _
    $region64: #{gma_forward.6} parent=5 // pred_fallthru
      _
  $region6: #{gma_forward.6} parent=0 // loop_footer
    %s19 = sadd.s32 1, %s15
  $region7: #{gma_forward.6} parent=0 // loop_footer_branch
    %14 = sbr.rel target = $region3
  $region8: #{gma_forward.6} parent=0 // loop_exit
    _

// kernel: gma_forward.7
$region0: #{gma_forward.7}
  #allocation0 [shape = 'u32[]', space=smem, size = 0x4, offset = 0x4, fixed_abs, tag = 'smem constant byte address 0x4 - core index']
  #allocation1 [shape = 'u32[144,128]{1,0:T(1,128)}', space=vmem, size = 0x12000, scoped, tag = 'internal scratch']
  %s0 = inlined_call_operand.vmem [shape: f32[1,128], index: 0, kind: input, shape index: {}]
  %s1 = inlined_call_operand.vmem [shape: f32[2,75,128], index: 1, kind: input, shape index: {}]
  %s2 = inlined_call_operand.vmem [shape: f32[128,128], index: 2, kind: input, shape index: {}]
  %s3 = inlined_call_operand.vmem [shape: f32[1,128], index: 3, kind: input, shape index: {}]
  %s4 = inlined_call_operand.vmem [shape: f32[128,128], index: 4, kind: input, shape index: {}]
  %s5 = inlined_call_operand.vmem [shape: f32[1,128], index: 5, kind: input, shape index: {}]
  %s6 = inlined_call_operand.vmem [shape: f32[128,128], index: 6, kind: input, shape index: {}]
  %s7 = inlined_call_operand.vmem [shape: f32[1,128], index: 7, kind: input, shape index: {}]
  %s8 = inlined_call_operand.vmem [shape: f32[128,128], index: 8, kind: input, shape index: {}]
  %s9 = inlined_call_operand.vmem [shape: f32[1,128], index: 9, kind: input, shape index: {}]
  %s10 = inlined_call_operand.vmem [shape: f32[128,128], index: 10, kind: input, shape index: {}]
  %s11 = inlined_call_operand.vmem [shape: f32[1,128], index: 11, kind: input, shape index: {}]
  %s12 = inlined_call_operand.vmem [shape: f32[128,32], index: 12, kind: input, shape index: {}]
  %s13 = inlined_call_operand.vmem [shape: f32[1,32], index: 13, kind: input, shape index: {}]
  %s14 = inlined_call_operand.hbm [shape: f32[2,1,32], index: 14, kind: output, shape index: {}]
  %s15 = sld [smem:[#allocation0]]
  $region89: #{gma_forward.7} parent=0
    _
  %s17 = ssub.s32 1, %s15
  %s18 = scalar_select 0, %s17, %s15
  $region1: #{gma_forward.7} parent=0
    #allocation2 [shape = 'u8[1024]{0}', space=vmem, size = 0x400, scoped, tag = 'output window, operand 0']
    #allocation3 [shape = 's32[2]{0}', space=sflag, size = 0x8, scoped, tag = 'scoped memory for gma_forward.7']
    %19 = vsyncpa [#allocation3], 0
    %s20 = scalar_lea.sflag [#allocation3], 1
    %21 = vsyncpa %s20, 0
    loop: start=0, step=1, limit=4
    $region2: #{gma_forward.7} parent=1 // loop_pre_header
      _
    $region3: #{gma_forward.7} parent=1 // loop_header
      %s23 = sphi 0, %s27
      %p24 = scmp.ge.s32.totalorder %s23, 4
      %s31 = sphi 0, %s31
      %s33 = sphi 0, %s31
      %s34 = sphi 0, %s33
      %s48 = sphi 0, %s34
      %s54 = sphi 0, %s56
      %s57 = sphi 0, %s54
      %s58 = sphi 0, %s57
      %s74 = sphi 0, %s58
      %s78 = sphi 0, %s78
      %s80 = sphi 0, %s78
      %s81 = sphi 0, %s80
      %s95 = sphi 0, %s81
      %s99 = sphi 0, %s99
      %s101 = sphi 0, %s99
      %s102 = sphi 0, %s101
      %s116 = sphi 0, %s102
      %s120 = sphi 0, %s120
      %s122 = sphi 0, %s120
      %s123 = sphi 0, %s122
      %s137 = sphi 0, %s123
      %s141 = sphi 0, %s141
      %s143 = sphi 0, %s141
      %s144 = sphi 0, %s143
      %s158 = sphi 0, %s144
      %s162 = sphi 0, %s162
      %s164 = sphi 0, %s162
      %s165 = sphi 0, %s164
      %s179 = sphi 0, %s165
      %s183 = sphi 0, %s183
      %s185 = sphi 0, %s183
      %s186 = sphi 0, %s185
      %s200 = sphi 0, %s186
      %s204 = sphi 0, %s204
      %s206 = sphi 0, %s204
      %s207 = sphi 0, %s206
      %s221 = sphi 0, %s207
      %s225 = sphi 0, %s225
      %s227 = sphi 0, %s225
      %s228 = sphi 0, %s227
      %s242 = sphi 0, %s228
      %s246 = sphi 0, %s246
      %s248 = sphi 0, %s246
      %s249 = sphi 0, %s248
      %s263 = sphi 0, %s249
      %s267 = sphi 0, %s267
      %s269 = sphi 0, %s267
      %s270 = sphi 0, %s269
      %s284 = sphi 0, %s270
      %s288 = sphi 0, %s288
      %s290 = sphi 0, %s288
      %s291 = sphi 0, %s290
      %s305 = sphi 0, %s291
      %s309 = sphi 0, %s309
      %s311 = sphi 0, %s309
      %s312 = sphi 0, %s311
      %s326 = sphi 0, %s312
      %s332 = sphi 0, %s334
      %s335 = sphi 0, %s332
      %s336 = sphi 0, %s335
      %s352 = sphi 0, %s336
    $region4: #{gma_forward.7} parent=1 // loop_header_branch
      %26 = sbr.rel (%p24) target = $region8
    $region5: #{gma_forward.7} parent=1 // loop_body
      %s28 = ssub.s32 %s23, 1
      %s29 = ssub.s32 %s23, 2
      %s30 = sadd.s32 %s23, 1
      %s32 = sadd.s32 %s31, 1
      %p35 = scmp.eq.s32.totalorder %s23, 1
      %p36 = scmp.ne.s32.totalorder %s31, %s33
      %p37 = scmp.eq.s32.totalorder %s23, 0
      %p38 = por %p36, %p37
      %p39 = scmp.ne.s32.totalorder %s31, %s33
      %p40 = scmp.eq.s32.totalorder %s28, 1
      %p41 = por %p39, %p40
      %p42 = scmp.ne.s32.totalorder %s33, %s34
      %p43 = scmp.eq.s32.totalorder %s28, 0
      %p44 = por %p42, %p43
      %p45 = scmp.ne.s32.totalorder %s33, %s34
      %p46 = scmp.eq.s32.totalorder %s29, 1
      %p47 = por %p45, %p46
      %p49 = scmp.ne.s32.totalorder %s34, %s48
      %p50 = scmp.eq.s32.totalorder %s29, 0
      %p51 = por %p49, %p50
      %s52 = ssub.s32 %s23, %s30
      %p53 = scmp.eq.s32.totalorder %s52, 0
      %s55 = sadd.s32 %s54, 1
      %s56 = scalar_select %p53, %s54, %s55
      %p59 = pneg %p53
      %p60 = scmp.eq.s32.totalorder %s23, 1
      %p61 = por %p59, %p60
      %p62 = scmp.ne.s32.totalorder %s54, %s57
      %p63 = scmp.eq.s32.totalorder %s23, 0
      %p64 = por %p62, %p63
      %p65 = scmp.ne.s32.totalorder %s54, %s57
      %p66 = scmp.eq.s32.totalorder %s28, 1
      %p67 = por %p65, %p66
      %p68 = scmp.ne.s32.totalorder %s57, %s58
      %p69 = scmp.eq.s32.totalorder %s28, 0
      %p70 = por %p68, %p69
      %p71 = scmp.ne.s32.totalorder %s57, %s58
      %p72 = scmp.eq.s32.totalorder %s29, 1
      %p73 = por %p71, %p72
      %p75 = scmp.ne.s32.totalorder %s58, %s74
      %p76 = scmp.eq.s32.totalorder %s29, 0
      %p77 = por %p75, %p76
      %s79 = sadd.s32 %s78, 1
      %p82 = scmp.eq.s32.totalorder %s23, 1
      %p83 = scmp.ne.s32.totalorder %s78, %s80
      %p84 = scmp.eq.s32.totalorder %s23, 0
      %p85 = por %p83, %p84
      %p86 = scmp.ne.s32.totalorder %s78, %s80
      %p87 = scmp.eq.s32.totalorder %s28, 1
      %p88 = por %p86, %p87
      %p89 = scmp.ne.s32.totalorder %s80, %s81
      %p90 = scmp.eq.s32.totalorder %s28, 0
      %p91 = por %p89, %p90
      %p92 = scmp.ne.s32.totalorder %s80, %s81
      %p93 = scmp.eq.s32.totalorder %s29, 1
      %p94 = por %p92, %p93
      %p96 = scmp.ne.s32.totalorder %s81, %s95
      %p97 = scmp.eq.s32.totalorder %s29, 0
      %p98 = por %p96, %p97
      %s100 = sadd.s32 %s99, 1
      %p103 = scmp.eq.s32.totalorder %s23, 1
      %p104 = scmp.ne.s32.totalorder %s99, %s101
      %p105 = scmp.eq.s32.totalorder %s23, 0
      %p106 = por %p104, %p105
      %p107 = scmp.ne.s32.totalorder %s99, %s101
      %p108 = scmp.eq.s32.totalorder %s28, 1
      %p109 = por %p107, %p108
      %p110 = scmp.ne.s32.totalorder %s101, %s102
      %p111 = scmp.eq.s32.totalorder %s28, 0
      %p112 = por %p110, %p111
      %p113 = scmp.ne.s32.totalorder %s101, %s102
      %p114 = scmp.eq.s32.totalorder %s29, 1
      %p115 = por %p113, %p114
      %p117 = scmp.ne.s32.totalorder %s102, %s116
      %p118 = scmp.eq.s32.totalorder %s29, 0
      %p119 = por %p117, %p118
      %s121 = sadd.s32 %s120, 1
      %p124 = scmp.eq.s32.totalorder %s23, 1
      %p125 = scmp.ne.s32.totalorder %s120, %s122
      %p126 = scmp.eq.s32.totalorder %s23, 0
      %p127 = por %p125, %p126
      %p128 = scmp.ne.s32.totalorder %s120, %s122
      %p129 = scmp.eq.s32.totalorder %s28, 1
      %p130 = por %p128, %p129
      %p131 = scmp.ne.s32.totalorder %s122, %s123
      %p132 = scmp.eq.s32.totalorder %s28, 0
      %p133 = por %p131, %p132
      %p134 = scmp.ne.s32.totalorder %s122, %s123
      %p135 = scmp.eq.s32.totalorder %s29, 1
      %p136 = por %p134, %p135
      %p138 = scmp.ne.s32.totalorder %s123, %s137
      %p139 = scmp.eq.s32.totalorder %s29, 0
      %p140 = por %p138, %p139
      %s142 = sadd.s32 %s141, 1
      %p145 = scmp.eq.s32.totalorder %s23, 1
      %p146 = scmp.ne.s32.totalorder %s141, %s143
      %p147 = scmp.eq.s32.totalorder %s23, 0
      %p148 = por %p146, %p147
      %p149 = scmp.ne.s32.totalorder %s141, %s143
      %p150 = scmp.eq.s32.totalorder %s28, 1
      %p151 = por %p149, %p150
      %p152 = scmp.ne.s32.totalorder %s143, %s144
      %p153 = scmp.eq.s32.totalorder %s28, 0
      %p154 = por %p152, %p153
      %p155 = scmp.ne.s32.totalorder %s143, %s144
      %p156 = scmp.eq.s32.totalorder %s29, 1
      %p157 = por %p155, %p156
      %p159 = scmp.ne.s32.totalorder %s144, %s158
      %p160 = scmp.eq.s32.totalorder %s29, 0
      %p161 = por %p159, %p160
      %s163 = sadd.s32 %s162, 1
      %p166 = scmp.eq.s32.totalorder %s23, 1
      %p167 = scmp.ne.s32.totalorder %s162, %s164
      %p168 = scmp.eq.s32.totalorder %s23, 0
      %p169 = por %p167, %p168
      %p170 = scmp.ne.s32.totalorder %s162, %s164
      %p171 = scmp.eq.s32.totalorder %s28, 1
      %p172 = por %p170, %p171
      %p173 = scmp.ne.s32.totalorder %s164, %s165
      %p174 = scmp.eq.s32.totalorder %s28, 0
      %p175 = por %p173, %p174
      %p176 = scmp.ne.s32.totalorder %s164, %s165
      %p177 = scmp.eq.s32.totalorder %s29, 1
      %p178 = por %p176, %p177
      %p180 = scmp.ne.s32.totalorder %s165, %s179
      %p181 = scmp.eq.s32.totalorder %s29, 0
      %p182 = por %p180, %p181
      %s184 = sadd.s32 %s183, 1
      %p187 = scmp.eq.s32.totalorder %s23, 1
      %p188 = scmp.ne.s32.totalorder %s183, %s185
      %p189 = scmp.eq.s32.totalorder %s23, 0
      %p190 = por %p188, %p189
      %p191 = scmp.ne.s32.totalorder %s183, %s185
      %p192 = scmp.eq.s32.totalorder %s28, 1
      %p193 = por %p191, %p192
      %p194 = scmp.ne.s32.totalorder %s185, %s186
      %p195 = scmp.eq.s32.totalorder %s28, 0
      %p196 = por %p194, %p195
      %p197 = scmp.ne.s32.totalorder %s185, %s186
      %p198 = scmp.eq.s32.totalorder %s29, 1
      %p199 = por %p197, %p198
      %p201 = scmp.ne.s32.totalorder %s186, %s200
      %p202 = scmp.eq.s32.totalorder %s29, 0
      %p203 = por %p201, %p202
      %s205 = sadd.s32 %s204, 1
      %p208 = scmp.eq.s32.totalorder %s23, 1
      %p209 = scmp.ne.s32.totalorder %s204, %s206
      %p210 = scmp.eq.s32.totalorder %s23, 0
      %p211 = por %p209, %p210
      %p212 = scmp.ne.s32.totalorder %s204, %s206
      %p213 = scmp.eq.s32.totalorder %s28, 1
      %p214 = por %p212, %p213
      %p215 = scmp.ne.s32.totalorder %s206, %s207
      %p216 = scmp.eq.s32.totalorder %s28, 0
      %p217 = por %p215, %p216
      %p218 = scmp.ne.s32.totalorder %s206, %s207
      %p219 = scmp.eq.s32.totalorder %s29, 1
      %p220 = por %p218, %p219
      %p222 = scmp.ne.s32.totalorder %s207, %s221
      %p223 = scmp.eq.s32.totalorder %s29, 0
      %p224 = por %p222, %p223
      %s226 = sadd.s32 %s225, 1
      %p229 = scmp.eq.s32.totalorder %s23, 1
      %p230 = scmp.ne.s32.totalorder %s225, %s227
      %p231 = scmp.eq.s32.totalorder %s23, 0
      %p232 = por %p230, %p231
      %p233 = scmp.ne.s32.totalorder %s225, %s227
      %p234 = scmp.eq.s32.totalorder %s28, 1
      %p235 = por %p233, %p234
      %p236 = scmp.ne.s32.totalorder %s227, %s228
      %p237 = scmp.eq.s32.totalorder %s28, 0
      %p238 = por %p236, %p237
      %p239 = scmp.ne.s32.totalorder %s227, %s228
      %p240 = scmp.eq.s32.totalorder %s29, 1
      %p241 = por %p239, %p240
      %p243 = scmp.ne.s32.totalorder %s228, %s242
      %p244 = scmp.eq.s32.totalorder %s29, 0
      %p245 = por %p243, %p244
      %s247 = sadd.s32 %s246, 1
      %p250 = scmp.eq.s32.totalorder %s23, 1
      %p251 = scmp.ne.s32.totalorder %s246, %s248
      %p252 = scmp.eq.s32.totalorder %s23, 0
      %p253 = por %p251, %p252
      %p254 = scmp.ne.s32.totalorder %s246, %s248
      %p255 = scmp.eq.s32.totalorder %s28, 1
      %p256 = por %p254, %p255
      %p257 = scmp.ne.s32.totalorder %s248, %s249
      %p258 = scmp.eq.s32.totalorder %s28, 0
      %p259 = por %p257, %p258
      %p260 = scmp.ne.s32.totalorder %s248, %s249
      %p261 = scmp.eq.s32.totalorder %s29, 1
      %p262 = por %p260, %p261
      %p264 = scmp.ne.s32.totalorder %s249, %s263
      %p265 = scmp.eq.s32.totalorder %s29, 0
      %p266 = por %p264, %p265
      %s268 = sadd.s32 %s267, 1
      %p271 = scmp.eq.s32.totalorder %s23, 1
      %p272 = scmp.ne.s32.totalorder %s267, %s269
      %p273 = scmp.eq.s32.totalorder %s23, 0
      %p274 = por %p272, %p273
      %p275 = scmp.ne.s32.totalorder %s267, %s269
      %p276 = scmp.eq.s32.totalorder %s28, 1
      %p277 = por %p275, %p276
      %p278 = scmp.ne.s32.totalorder %s269, %s270
      %p279 = scmp.eq.s32.totalorder %s28, 0
      %p280 = por %p278, %p279
      %p281 = scmp.ne.s32.totalorder %s269, %s270
      %p282 = scmp.eq.s32.totalorder %s29, 1
      %p283 = por %p281, %p282
      %p285 = scmp.ne.s32.totalorder %s270, %s284
      %p286 = scmp.eq.s32.totalorder %s29, 0
      %p287 = por %p285, %p286
      %s289 = sadd.s32 %s288, 1
      %p292 = scmp.eq.s32.totalorder %s23, 1
      %p293 = scmp.ne.s32.totalorder %s288, %s290
      %p294 = scmp.eq.s32.totalorder %s23, 0
      %p295 = por %p293, %p294
      %p296 = scmp.ne.s32.totalorder %s288, %s290
      %p297 = scmp.eq.s32.totalorder %s28, 1
      %p298 = por %p296, %p297
      %p299 = scmp.ne.s32.totalorder %s290, %s291
      %p300 = scmp.eq.s32.totalorder %s28, 0
      %p301 = por %p299, %p300
      %p302 = scmp.ne.s32.totalorder %s290, %s291
      %p303 = scmp.eq.s32.totalorder %s29, 1
      %p304 = por %p302, %p303
      %p306 = scmp.ne.s32.totalorder %s291, %s305
      %p307 = scmp.eq.s32.totalorder %s29, 0
      %p308 = por %p306, %p307
      %s310 = sadd.s32 %s309, 1
      %p313 = scmp.eq.s32.totalorder %s23, 1
      %p314 = scmp.ne.s32.totalorder %s309, %s311
      %p315 = scmp.eq.s32.totalorder %s23, 0
      %p316 = por %p314, %p315
      %p317 = scmp.ne.s32.totalorder %s309, %s311
      %p318 = scmp.eq.s32.totalorder %s28, 1
      %p319 = por %p317, %p318
      %p320 = scmp.ne.s32.totalorder %s311, %s312
      %p321 = scmp.eq.s32.totalorder %s28, 0
      %p322 = por %p320, %p321
      %p323 = scmp.ne.s32.totalorder %s311, %s312
      %p324 = scmp.eq.s32.totalorder %s29, 1
      %p325 = por %p323, %p324
      %p327 = scmp.ne.s32.totalorder %s312, %s326
      %p328 = scmp.eq.s32.totalorder %s29, 0
      %p329 = por %p327, %p328
      %s330 = ssub.s32 %s23, %s30
      %p331 = scmp.eq.s32.totalorder %s330, 0
      %s333 = sadd.s32 %s332, 1
      %s334 = scalar_select %p331, %s332, %s333
      %p337 = pneg %p331
      %p338 = scmp.eq.s32.totalorder %s23, 1
      %p339 = por %p337, %p338
      %p340 = scmp.ne.s32.totalorder %s332, %s335
      %p341 = scmp.eq.s32.totalorder %s23, 0
      %p342 = por %p340, %p341
      %p343 = scmp.ne.s32.totalorder %s332, %s335
      %p344 = scmp.eq.s32.totalorder %s28, 1
      %p345 = por %p343, %p344
      %p346 = scmp.ne.s32.totalorder %s335, %s336
      %p347 = scmp.eq.s32.totalorder %s28, 0
      %p348 = por %p346, %p347
      %p349 = scmp.ne.s32.totalorder %s335, %s336
      %p350 = scmp.eq.s32.totalorder %s29, 1
      %p351 = por %p349, %p350
      %p353 = scmp.ne.s32.totalorder %s336, %s352
      %p354 = scmp.eq.s32.totalorder %s29, 0
      %p355 = por %p353, %p354
      %p356 = scmp.le.s32.totalorder 1, %s23
      %p357 = scmp.lt.s32.totalorder %s23, 3
      %p358 = pnand %p356, %p357
      %p359 = pneg %p358
      // Predicated region
      $region9: #{gma_forward.7} parent=5 // pred_check
        _
      $region10: #{gma_forward.7} parent=5 // pred_check_branch
        %361 = sbr.rel (%p358) target = $region12
      $region11: #{gma_forward.7} parent=5 // pred_region
        %s362 = ssub.s32 %s23, 1
        // Predicated region
        $region13: #{gma_forward.7} parent=11 // pred_check
          %p363 = pneg %p44
        $region14: #{gma_forward.7} parent=11 // pred_check_branch
          %365 = sbr.rel (%p363) target = $region16
        $region15: #{gma_forward.7} parent=11 // pred_region
          _
        $region16: #{gma_forward.7} parent=11 // pred_fallthru
          _
        // Predicated region
        $region17: #{gma_forward.7} parent=11 // pred_check
          %p366 = pneg %p91
        $region18: #{gma_forward.7} parent=11 // pred_check_branch
          %368 = sbr.rel (%p366) target = $region20
        $region19: #{gma_forward.7} parent=11 // pred_region
          _
        $region20: #{gma_forward.7} parent=11 // pred_fallthru
          _
        // Predicated region
        $region21: #{gma_forward.7} parent=11 // pred_check
          %p369 = pneg %p112
        $region22: #{gma_forward.7} parent=11 // pred_check_branch
          %371 = sbr.rel (%p369) target = $region24
        $region23: #{gma_forward.7} parent=11 // pred_region
          _
        $region24: #{gma_forward.7} parent=11 // pred_fallthru
          _
        // Predicated region
        $region25: #{gma_forward.7} parent=11 // pred_check
          %p372 = pneg %p133
        $region26: #{gma_forward.7} parent=11 // pred_check_branch
          %374 = sbr.rel (%p372) target = $region28
        $region27: #{gma_forward.7} parent=11 // pred_region
          _
        $region28: #{gma_forward.7} parent=11 // pred_fallthru
          _
        // Predicated region
        $region29: #{gma_forward.7} parent=11 // pred_check
          %p375 = pneg %p154
        $region30: #{gma_forward.7} parent=11 // pred_check_branch
          %377 = sbr.rel (%p375) target = $region32
        $region31: #{gma_forward.7} parent=11 // pred_region
          _
        $region32: #{gma_forward.7} parent=11 // pred_fallthru
          _
        // Predicated region
        $region33: #{gma_forward.7} parent=11 // pred_check
          %p378 = pneg %p175
        $region34: #{gma_forward.7} parent=11 // pred_check_branch
          %380 = sbr.rel (%p378) target = $region36
        $region35: #{gma_forward.7} parent=11 // pred_region
          _
        $region36: #{gma_forward.7} parent=11 // pred_fallthru
          _
        // Predicated region
        $region37: #{gma_forward.7} parent=11 // pred_check
          %p381 = pneg %p196
        $region38: #{gma_forward.7} parent=11 // pred_check_branch
          %383 = sbr.rel (%p381) target = $region40
        $region39: #{gma_forward.7} parent=11 // pred_region
          _
        $region40: #{gma_forward.7} parent=11 // pred_fallthru
          _
        // Predicated region
        $region41: #{gma_forward.7} parent=11 // pred_check
          %p384 = pneg %p217
        $region42: #{gma_forward.7} parent=11 // pred_check_branch
          %386 = sbr.rel (%p384) target = $region44
        $region43: #{gma_forward.7} parent=11 // pred_region
          _
        $region44: #{gma_forward.7} parent=11 // pred_fallthru
          _
        // Predicated region
        $region45: #{gma_forward.7} parent=11 // pred_check
          %p387 = pneg %p238
        $region46: #{gma_forward.7} parent=11 // pred_check_branch
          %389 = sbr.rel (%p387) target = $region48
        $region47: #{gma_forward.7} parent=11 // pred_region
          _
        $region48: #{gma_forward.7} parent=11 // pred_fallthru
          _
        // Predicated region
        $region49: #{gma_forward.7} parent=11 // pred_check
          %p390 = pneg %p259
        $region50: #{gma_forward.7} parent=11 // pred_check_branch
          %392 = sbr.rel (%p390) target = $region52
        $region51: #{gma_forward.7} parent=11 // pred_region
          _
        $region52: #{gma_forward.7} parent=11 // pred_fallthru
          _
        // Predicated region
        $region53: #{gma_forward.7} parent=11 // pred_check
          %p393 = pneg %p280
        $region54: #{gma_forward.7} parent=11 // pred_check_branch
          %395 = sbr.rel (%p393) target = $region56
        $region55: #{gma_forward.7} parent=11 // pred_region
          _
        $region56: #{gma_forward.7} parent=11 // pred_fallthru
          _
        // Predicated region
        $region57: #{gma_forward.7} parent=11 // pred_check
          %p396 = pneg %p301
        $region58: #{gma_forward.7} parent=11 // pred_check_branch
          %398 = sbr.rel (%p396) target = $region60
        $region59: #{gma_forward.7} parent=11 // pred_region
          _
        $region60: #{gma_forward.7} parent=11 // pred_fallthru
          _
        // Predicated region
        $region61: #{gma_forward.7} parent=11 // pred_check
          %p399 = pneg %p322
        $region62: #{gma_forward.7} parent=11 // pred_check_branch
          %401 = sbr.rel (%p399) target = $region64
        $region63: #{gma_forward.7} parent=11 // pred_region
          _
        $region64: #{gma_forward.7} parent=11 // pred_fallthru
          _
      $region12: #{gma_forward.7} parent=5 // pred_fallthru
        _
      %p402 = scmp.lt.s32.totalorder %s23, 2
      // Predicated region
      $region65: #{gma_forward.7} parent=5 // pred_check
        %p403 = pneg %p402
      $region66: #{gma_forward.7} parent=5 // pred_check_branch
        %405 = sbr.rel (%p403) target = $region68
      $region67: #{gma_forward.7} parent=5 // pred_region
        // Predicated region
        $region69: #{gma_forward.7} parent=67 // pred_check
          %p406 = pneg %p64
        $region70: #{gma_forward.7} parent=67 // pred_check_branch
          %408 = sbr.rel (%p406) target = $region72
        $region71: #{gma_forward.7} parent=67 // pred_region
          %p409 = scmp.lt.s32.totalorder %s23, 1
          %s410 = scalar_select %p409, %s23, 1
          %s411 = smul.addr %s410, 10
          %s412 = smul.addr %s411, 8
          %s413 = scalar_lea.vmem %s1, %s412
        $region72: #{gma_forward.7} parent=67 // pred_fallthru
          _
      $region68: #{gma_forward.7} parent=5 // pred_fallthru
        _
      %p414 = scmp.le.s32.totalorder 1, %s23
      %p415 = scmp.lt.s32.totalorder %s23, 3
      %p416 = pnand %p414, %p415
      %p417 = pneg %p416
      // Predicated region
      $region73: #{gma_forward.7} parent=5 // pred_check
        _
      $region74: #{gma_forward.7} parent=5 // pred_check_branch
        %419 = sbr.rel (%p416) target = $region76
      $region75: #{gma_forward.7} parent=5 // pred_region
        %s420 = ssub.s32 %s23, 1
        %p421 = pneg %p44
        %p422 = pneg %p41
        %p423 = scmp.lt.s32.totalorder %s28, 1
        %s424 = scalar_select %p423, %s28, 1
        %s425 = smul.addr %s424, 10
        %s426 = smul.addr %s425, 8
        %s427 = scalar_lea.vmem %s1, %s426
        %p428 = pneg %p70
        %p429 = pneg %p67
        %p430 = pneg %p91
        %p431 = pneg %p88
        %p432 = pneg %p112
        %p433 = pneg %p109
        %p434 = pneg %p133
        %p435 = pneg %p130
        %p436 = pneg %p154
        %p437 = pneg %p151
        %p438 = pneg %p175
        %p439 = pneg %p172
        %p440 = pneg %p196
        %p441 = pneg %p193
        %p442 = pneg %p217
        %p443 = pneg %p214
        %p444 = pneg %p238
        %p445 = pneg %p235
        %p446 = pneg %p259
        %p447 = pneg %p256
        %p448 = pneg %p280
        %p449 = pneg %p277
        %p450 = pneg %p301
        %p451 = pneg %p298
        %p452 = pneg %p322
        %p453 = pneg %p319
        %p454 = pneg %p348
        %p455 = pneg %p345
        %s456 = sand.u32 %s335, 1
        %s457 = scalar_lea.sflag [#allocation3], %s456
        %s458 = sand.u32 %s335, 1
        %s459 = scalar_lea.vmem [#allocation2], %s458
        %p460 = scmp.lt.s32.totalorder %s28, 1
        %s461 = scalar_select %p460, %s28, 1
        %s462 = smul.addr %s461, 10
        %s463 = smul.addr %s462, 8
        %s464 = scalar_lea.vmem %s1, %s463
        %v466 = vld [vmem:[%s464] sm:$0xff]
        %v467 = vld [vmem:[%s464 + $0x8] sm:$0xff]
        %v468 = vld [vmem:[%s464 + $0x10] sm:$0xff]
        %v469 = vld [vmem:[%s464 + $0x18] sm:$0xff]
        %v470 = vld [vmem:[%s464 + $0x20] sm:$0xff]
        %v471 = vld [vmem:[%s464 + $0x28] sm:$0xff]
        %v472 = vld [vmem:[%s464 + $0x30] sm:$0xff]
        %v473 = vld [vmem:[%s464 + $0x38] sm:$0xff]
        %v474 = vld [vmem:[%s464 + $0x40] sm:$0xff]
        %v475 = vld [vmem:[%s464 + $0x48] sm:$0x7]
        %v476 = vld [vmem:[%s2] sm:$0xff]
        %v477 = vld [vmem:[%s2 + $0x8] sm:$0xff]
        %v478 = vld [vmem:[%s2 + $0x10] sm:$0xff]
        %v479 = vld [vmem:[%s2 + $0x18] sm:$0xff]
        %v480 = vld [vmem:[%s2 + $0x20] sm:$0xff]
        %v481 = vld [vmem:[%s2 + $0x28] sm:$0xff]
        %v482 = vld [vmem:[%s2 + $0x30] sm:$0xff]
        %v483 = vld [vmem:[%s2 + $0x38] sm:$0xff]
        %v484 = vld [vmem:[%s2 + $0x40] sm:$0xff]
        %v485 = vld [vmem:[%s2 + $0x48] sm:$0xff]
        %v486 = vld [vmem:[%s2 + $0x50] sm:$0xff]
        %v487 = vld [vmem:[%s2 + $0x58] sm:$0xff]
        %v488 = vld [vmem:[%s2 + $0x60] sm:$0xff]
        %v489 = vld [vmem:[%s2 + $0x68] sm:$0xff]
        %v490 = vld [vmem:[%s2 + $0x70] sm:$0xff]
        %v491 = vld [vmem:[%s2 + $0x78] sm:$0xff]
        %v492 = vpack.c.bf16 %v467, %v466
        %v493 = vpack.c.bf16 %v469, %v468
        %v494 = vpack.c.bf16 %v471, %v470
        %v495 = vpack.c.bf16 %v473, %v472
        %v496 = vpack.c.bf16 %v475, %v474
        %v497 = vpack.c.bf16 %v477, %v476
        %v498 = vpack.c.bf16 %v479, %v478
        %v499 = vpack.c.bf16 %v481, %v480
        %v500 = vpack.c.bf16 %v483, %v482
        %v501 = vpack.c.bf16 %v485, %v484
        %v502 = vpack.c.bf16 %v487, %v486
        %v503 = vpack.c.bf16 %v489, %v488
        %v504 = vpack.c.bf16 %v491, %v490
        %v505 = vld [vmem:[%s3] sm:$0x1]
        %v507 = vlaneseq
        %v508 = vshrl.u32 %v507, 7
        %v509 = vsub.s32 0, %v508
        %v510 = vrot.slane %v505, %v509
        %512 = vmatprep.subr.bf16.mxu0 0
        %513 = vmatpush1.bf16.msra.mxu0 %v497
        %514 = vmatprep.subr.bf16.mxu0 0
        %515 = vmatpush1.bf16.msra.mxu0 %v498
        %516 = vmatprep.subr.bf16.mxu0 0
        %517 = vmatpush1.bf16.msra.mxu0 %v499
        %518 = vmatprep.subr.bf16.mxu0 0
        %519 = vmatpush1.bf16.msra.mxu0 %v500
        %520 = vmatprep.subr.bf16.mxu0 0
        %521 = vmatpush1.bf16.msra.mxu0 %v501
        %522 = vmatprep.subr.bf16.mxu0 0
        %523 = vmatpush1.bf16.msra.mxu0 %v502
        %524 = vmatprep.subr.bf16.mxu0 0
        %525 = vmatpush1.bf16.msra.mxu0 %v503
        %526 = vmatprep.subr.bf16.mxu0 0
        %527 = vmatpush1.bf16.msra.mxu0 %v504
        %528 = vmatprep.subr.bf16.mxu0 0
        %529 = vmatpush1.bf16.msra.mxu0 0
        %530 = vmatprep.subr.bf16.mxu0 0
        %531 = vmatpush1.bf16.msra.mxu0 0
        %532 = vmatprep.subr.bf16.mxu0 0
        %533 = vmatpush1.bf16.msra.mxu0 0
        %534 = vmatprep.subr.bf16.mxu0 0
        %535 = vmatpush1.bf16.msra.mxu0 0
        %536 = vmatprep.subr.bf16.mxu0 0
        %537 = vmatpush1.bf16.msra.mxu0 0
        %538 = vmatprep.subr.bf16.mxu0 0
        %539 = vmatpush1.bf16.msra.mxu0 0
        %540 = vmatprep.subr.bf16.mxu0 0
        %541 = vmatpush1.bf16.msra.mxu0 0
        %542 = vmatprep.subr.bf16.mxu0 0
        %543 = vmatpush1.bf16.msra.mxu0 0
        %544 = vmatprep.mubr.bf16.mxu0 0
        %545 = vmatmul.mubr.bf16.gmra.mrb[0].mxu0 %v492
        %v546 = vpop.f32.mrb[0].mxu0
        %v547 = vadd.f32 %v510, %v546
        %v548 = vpop.f32.mrb[0].mxu0
        %v549 = vpop.f32.mrb[0].mxu0
        %v550 = vadd.f32 %v510, %v549
        %v551 = vpop.f32.mrb[0].mxu0
        %552 = vmatprep.mubr.bf16.mxu0 0
        %553 = vmatmul.mubr.bf16.gmra.mrb[0].mxu0 %v493
        %v554 = vpop.f32.mrb[0].mxu0
        %v555 = vadd.f32 %v510, %v554
        %v556 = vpop.f32.mrb[0].mxu0
        %v557 = vpop.f32.mrb[0].mxu0
        %v558 = vadd.f32 %v510, %v557
        %v559 = vpop.f32.mrb[0].mxu0
        %560 = vmatprep.mubr.bf16.mxu0 0
        %561 = vmatmul.mubr.bf16.gmra.mrb[0].mxu0 %v494
        %v562 = vpop.f32.mrb[0].mxu0
        %v563 = vadd.f32 %v510, %v562
        %v564 = vpop.f32.mrb[0].mxu0
        %v565 = vpop.f32.mrb[0].mxu0
        %v566 = vadd.f32 %v510, %v565
        %v567 = vpop.f32.mrb[0].mxu0
        %568 = vmatprep.mubr.bf16.mxu0 0
        %569 = vmatmul.mubr.bf16.gmra.mrb[0].mxu0 %v495
        %v570 = vpop.f32.mrb[0].mxu0
        %v571 = vadd.f32 %v510, %v570
        %v572 = vpop.f32.mrb[0].mxu0
        %v573 = vpop.f32.mrb[0].mxu0
        %v574 = vadd.f32 %v510, %v573
        %v575 = vpop.f32.mrb[0].mxu0
        %576 = vmatprep.mubr.bf16.mxu0 0
        %577 = vmatmul.mubr.bf16.gmra.mrb[0].mxu0 %v496
        %v578 = vpop.f32.mrb[0].mxu0
        %v579 = vadd.f32 %v510, %v578
        %v580 = vpop.f32.mrb[0].mxu0
        %v581 = vpop.f32.mrb[0].mxu0
        %v582 = vadd.f32 %v510, %v581
        %v583 = vpop.f32.mrb[0].mxu0
        %584 = vdwg.mxu0
        %v585 = vld [vmem:[%s4] sm:$0xff]
        %v586 = vld [vmem:[%s4 + $0x8] sm:$0xff]
        %v587 = vld [vmem:[%s4 + $0x10] sm:$0xff]
        %v588 = vld [vmem:[%s4 + $0x18] sm:$0xff]
        %v589 = vld [vmem:[%s4 + $0x20] sm:$0xff]
        %v590 = vld [vmem:[%s4 + $0x28] sm:$0xff]
        %v591 = vld [vmem:[%s4 + $0x30] sm:$0xff]
        %v592 = vld [vmem:[%s4 + $0x38] sm:$0xff]
        %v593 = vld [vmem:[%s4 + $0x40] sm:$0xff]
        %v594 = vld [vmem:[%s4 + $0x48] sm:$0xff]
        %v595 = vld [vmem:[%s4 + $0x50] sm:$0xff]
        %v596 = vld [vmem:[%s4 + $0x58] sm:$0xff]
        %v597 = vld [vmem:[%s4 + $0x60] sm:$0xff]
        %v598 = vld [vmem:[%s4 + $0x68] sm:$0xff]
        %v599 = vld [vmem:[%s4 + $0x70] sm:$0xff]
        %v600 = vld [vmem:[%s4 + $0x78] sm:$0xff]
        %v601 = vpack.c.bf16 %v586, %v585
        %v602 = vpack.c.bf16 %v588, %v587
        %v603 = vpack.c.bf16 %v590, %v589
        %v604 = vpack.c.bf16 %v592, %v591
        %v605 = vpack.c.bf16 %v594, %v593
        %v606 = vpack.c.bf16 %v596, %v595
        %v607 = vpack.c.bf16 %v598, %v597
        %v608 = vpack.c.bf16 %v600, %v599
        %v609 = vld [vmem:[%s5] sm:$0x1]
        %v611 = vlaneseq
        %v612 = vshrl.u32 %v611, 7
        %v613 = vsub.s32 0, %v612
        %v614 = vrot.slane %v609, %v613
        %616 = vmatprep.subr.bf16.mxu0 0
        %617 = vmatpush1.bf16.msra.mxu0 %v601
        %618 = vmatprep.subr.bf16.mxu0 0
        %619 = vmatpush1.bf16.msra.mxu0 %v602
        %620 = vmatprep.subr.bf16.mxu0 0
        %621 = vmatpush1.bf16.msra.mxu0 %v603
        %622 = vmatprep.subr.bf16.mxu0 0
        %623 = vmatpush1.bf16.msra.mxu0 %v604
        %624 = vmatprep.subr.bf16.mxu0 0
        %625 = vmatpush1.bf16.msra.mxu0 %v605
        %626 = vmatprep.subr.bf16.mxu0 0
        %627 = vmatpush1.bf16.msra.mxu0 %v606
        %628 = vmatprep.subr.bf16.mxu0 0
        %629 = vmatpush1.bf16.msra.mxu0 %v607
        %630 = vmatprep.subr.bf16.mxu0 0
        %631 = vmatpush1.bf16.msra.mxu0 %v608
        %632 = vmatprep.subr.bf16.mxu0 0
        %633 = vmatpush1.bf16.msra.mxu0 0
        %634 = vmatprep.subr.bf16.mxu0 0
        %635 = vmatpush1.bf16.msra.mxu0 0
        %636 = vmatprep.subr.bf16.mxu0 0
        %637 = vmatpush1.bf16.msra.mxu0 0
        %638 = vmatprep.subr.bf16.mxu0 0
        %639 = vmatpush1.bf16.msra.mxu0 0
        %640 = vmatprep.subr.bf16.mxu0 0
        %641 = vmatpush1.bf16.msra.mxu0 0
        %642 = vmatprep.subr.bf16.mxu0 0
        %643 = vmatpush1.bf16.msra.mxu0 0
        %644 = vmatprep.subr.bf16.mxu0 0
        %645 = vmatpush1.bf16.msra.mxu0 0
        %646 = vmatprep.subr.bf16.mxu0 0
        %647 = vmatpush1.bf16.msra.mxu0 0
        %648 = vmatprep.mubr.bf16.mxu0 0
        %649 = vmatmul.mubr.bf16.gmra.mrb[0].mxu0 %v492
        %v650 = vpop.f32.mrb[0].mxu0
        %v651 = vadd.f32 %v614, %v650
        %v652 = vpop.f32.mrb[0].mxu0
        %v653 = vpop.f32.mrb[0].mxu0
        %v654 = vadd.f32 %v614, %v653
        %v655 = vpop.f32.mrb[0].mxu0
        %656 = vmatprep.mubr.bf16.mxu0 0
        %657 = vmatmul.mubr.bf16.gmra.mrb[0].mxu0 %v493
        %v658 = vpop.f32.mrb[0].mxu0
        %v659 = vadd.f32 %v614, %v658
        %v660 = vpop.f32.mrb[0].mxu0
        %v661 = vpop.f32.mrb[0].mxu0
        %v662 = vadd.f32 %v614, %v661
        %v663 = vpop.f32.mrb[0].mxu0
        %664 = vmatprep.mubr.bf16.mxu0 0
        %665 = vmatmul.mubr.bf16.gmra.mrb[0].mxu0 %v494
        %v666 = vpop.f32.mrb[0].mxu0
        %v667 = vadd.f32 %v614, %v666
        %v668 = vpop.f32.mrb[0].mxu0
        %v669 = vpop.f32.mrb[0].mxu0
        %v670 = vadd.f32 %v614, %v669
        %v671 = vpop.f32.mrb[0].mxu0
        %672 = vmatprep.mubr.bf16.mxu0 0
        %673 = vmatmul.mubr.bf16.gmra.mrb[0].mxu0 %v495
        %v674 = vpop.f32.mrb[0].mxu0
        %v675 = vadd.f32 %v614, %v674
        %v676 = vpop.f32.mrb[0].mxu0
        %v677 = vpop.f32.mrb[0].mxu0
        %v678 = vadd.f32 %v614, %v677
        %v679 = vpop.f32.mrb[0].mxu0
        %680 = vmatprep.mubr.bf16.mxu0 0
        %681 = vmatmul.mubr.bf16.gmra.mrb[0].mxu0 %v496
        %v682 = vpop.f32.mrb[0].mxu0
        %v683 = vadd.f32 %v614, %v682
        %v684 = vpop.f32.mrb[0].mxu0
        %v685 = vpop.f32.mrb[0].mxu0
        %v686 = vadd.f32 %v614, %v685
        %v687 = vpop.f32.mrb[0].mxu0
        %688 = vdwg.mxu0
        %v689 = vld [vmem:[%s0] sm:$0x1]
        %v690 = vmul.f32 %v689, 0.088388346
        %v691 = vpack.c.bf16 %v690, %v690
        %v692 = vpack.c.bf16 %v550, %v547
        %v693 = vpack.c.bf16 %v558, %v555
        %v694 = vpack.c.bf16 %v566, %v563
        %v695 = vpack.c.bf16 %v574, %v571
        %v696 = vpack.c.bf16 %v582, %v579
        %v697 = vpack.c.bf16 %v654, %v651
        %v698 = vpack.c.bf16 %v662, %v659
        %v699 = vpack.c.bf16 %v670, %v667
        %v700 = vpack.c.bf16 %v678, %v675
        %v701 = vpack.c.bf16 %v686, %v683
        %vm702 = vcmask 261120
        %v704 = vsel %vm702, %v691, 0
        %v707 = vsel %vm702, %v692, 0
        %v710 = vsel %vm702, %v693, 0
        %v713 = vsel %vm702, %v694, 0
        %v716 = vsel %vm702, %v695, 0
        %v719 = vsel %vm702, %v696, 0
        %721 = vmatprep.subr.bf16.mxu0 0
        %722 = vmatpush1.bf16.xpose.msra.mxu0 %v707
        %723 = vmatprep.subr.bf16.mxu0 0
        %724 = vmatpush1.bf16.xpose.msra.mxu0 %v710
        %725 = vmatprep.subr.bf16.mxu0 0
        %726 = vmatpush1.bf16.xpose.msra.mxu0 %v713
        %727 = vmatprep.subr.bf16.mxu0 0
        %728 = vmatpush1.bf16.xpose.msra.mxu0 %v716
        %729 = vmatprep.subr.bf16.mxu0 0
        %730 = vmatpush1.bf16.xpose.msra.mxu0 %v719
        %731 = vmatprep.subr.bf16.mxu0 0
        %732 = vmatpush1.bf16.xpose.msra.mxu0 0
        %733 = vmatprep.subr.bf16.mxu0 0
        %734 = vmatpush1.bf16.xpose.msra.mxu0 0
        %735 = vmatprep.subr.bf16.mxu0 0
        %736 = vmatpush1.bf16.xpose.msra.mxu0 0
        %737 = vmatprep.subr.bf16.mxu0 0
        %738 = vmatpush1.bf16.xpose.msra.mxu0 0
        %739 = vmatprep.subr.bf16.mxu0 0
        %740 = vmatpush1.bf16.xpose.msra.mxu0 0
        %741 = vmatprep.subr.bf16.mxu0 0
        %742 = vmatpush1.bf16.xpose.msra.mxu0 0
        %743 = vmatprep.subr.bf16.mxu0 0
        %744 = vmatpush1.bf16.xpose.msra.mxu0 0
        %745 = vmatprep.subr.bf16.mxu0 0
        %746 = vmatpush1.bf16.xpose.msra.mxu0 0
        %747 = vmatprep.subr.bf16.mxu0 0
        %748 = vmatpush1.bf16.xpose.msra.mxu0 0
        %749 = vmatprep.subr.bf16.mxu0 0
        %750 = vmatpush1.bf16.xpose.msra.mxu0 0
        %751 = vmatprep.subr.bf16.mxu0 0
        %752 = vmatpush1.bf16.xpose.msra.mxu0 0
        %753 = vmatprep.mubr.bf16.mxu0 0
        %754 = vmatmul.mubr.bf16.gmra.mrb[0].mxu0 %v704
        %v755 = vpop.f32.mrb[0].mxu0
        %v756 = vadd.f32 0.0, %v755
        %v757 = vpop.f32.mrb[0].mxu0
        %v758 = vpop.f32.mrb[0].mxu0
        %v759 = vpop.f32.mrb[0].mxu0
        %760 = vdwg.mxu0
        %v761 = vsub.f32 %v756, %v756
        %v762 = vmul.f32 %v761, 1.442695
        %v763 = vpow.pop %v762
        %v764 = vadd.f32 %v763, 0.0
        %v765 = vrcp.pop %v764
        %v766 = vmul.f32 %v763, %v765
        %v767 = vpack.c.bf16 %v766, %v766
        %vm768 = vcmask 613376
        %v770 = vsel %vm768, %v767, 0
        %vm772 = vcmask 1044480
        %vm773 = vcmask 1045504
        %v774 = vsel %vm772, 4294967295, 65535
        %v775 = vsel %vm773, %v774, 0
        %v777 = vand.u32 %v701, %v775
        %779 = vmatprep.subr.bf16.mxu0 0
        %780 = vmatpush1.bf16.msra.mxu0 %v697
        %781 = vmatprep.subr.bf16.mxu0 0
        %782 = vmatpush1.bf16.msra.mxu0 %v698
        %783 = vmatprep.subr.bf16.mxu0 0
        %784 = vmatpush1.bf16.msra.mxu0 %v699
        %785 = vmatprep.subr.bf16.mxu0 0
        %786 = vmatpush1.bf16.msra.mxu0 %v700
        %787 = vmatprep.subr.bf16.mxu0 0
        %788 = vmatpush1.bf16.msra.mxu0 %v777
        %789 = vmatprep.subr.bf16.mxu0 0
        %790 = vmatpush1.bf16.msra.mxu0 0
        %791 = vmatprep.subr.bf16.mxu0 0
        %792 = vmatpush1.bf16.msra.mxu0 0
        %793 = vmatprep.subr.bf16.mxu0 0
        %794 = vmatpush1.bf16.msra.mxu0 0
        %795 = vmatprep.subr.bf16.mxu0 0
        %796 = vmatpush1.bf16.msra.mxu0 0
        %797 = vmatprep.subr.bf16.mxu0 0
        %798 = vmatpush1.bf16.msra.mxu0 0
        %799 = vmatprep.subr.bf16.mxu0 0
        %800 = vmatpush1.bf16.msra.mxu0 0
        %801 = vmatprep.subr.bf16.mxu0 0
        %802 = vmatpush1.bf16.msra.mxu0 0
        %803 = vmatprep.subr.bf16.mxu0 0
        %804 = vmatpush1.bf16.msra.mxu0 0
        %805 = vmatprep.subr.bf16.mxu0 0
        %806 = vmatpush1.bf16.msra.mxu0 0
        %807 = vmatprep.subr.bf16.mxu0 0
        %808 = vmatpush1.bf16.msra.mxu0 0
        %809 = vmatprep.subr.bf16.mxu0 0
        %810 = vmatpush1.bf16.msra.mxu0 0
        %811 = vmatprep.mubr.bf16.mxu0 0
        %812 = vmatmul.mubr.bf16.gmra.mrb[0].mxu0 %v770
        %v813 = vpop.f32.mrb[0].mxu0
        %v814 = vadd.f32 0.0, %v813
        %v815 = vpop.f32.mrb[0].mxu0
        %v816 = vpop.f32.mrb[0].mxu0
        %v817 = vpop.f32.mrb[0].mxu0
        %818 = vdwg.mxu0
        %v819 = vadd.f32 %v689, %v814
        %821 = vrot.lane.b32.xlu0 %v691, 96
        %v822 = vpop.permute.xlu0 %821
        %828 = vrot.lane.b32.xlu0 %v692, 96
        %v829 = vpop.permute.xlu0 %828
        %830 = vrot.lane.b32.xlu0 %v693, 96
        %v831 = vpop.permute.xlu0 %830
        %832 = vrot.lane.b32.xlu0 %v694, 96
        %v833 = vpop.permute.xlu0 %832
        %834 = vrot.lane.b32.xlu0 %v695, 96
        %v835 = vpop.permute.xlu0 %834
        %836 = vrot.lane.b32.xlu0 %v696, 96
        %v837 = vpop.permute.xlu0 %836
        %v839 = vsel %vm702, %v822, 0
        %v842 = vsel %vm702, %v829, 0
        %v845 = vsel %vm702, %v831, 0
        %v848 = vsel %vm702, %v833, 0
        %v851 = vsel %vm702, %v835, 0
        %v854 = vsel %vm702, %v837, 0
        %856 = vmatprep.subr.bf16.mxu0 0
        %857 = vmatpush1.bf16.xpose.msra.mxu0 %v842
        %858 = vmatprep.subr.bf16.mxu0 0
        %859 = vmatpush1.bf16.xpose.msra.mxu0 %v845
        %860 = vmatprep.subr.bf16.mxu0 0
        %861 = vmatpush1.bf16.xpose.msra.mxu0 %v848
        %862 = vmatprep.subr.bf16.mxu0 0
        %863 = vmatpush1.bf16.xpose.msra.mxu0 %v851
        %864 = vmatprep.subr.bf16.mxu0 0
        %865 = vmatpush1.bf16.xpose.msra.mxu0 %v854
        %866 = vmatprep.subr.bf16.mxu0 0
        %867 = vmatpush1.bf16.xpose.msra.mxu0 0
        %868 = vmatprep.subr.bf16.mxu0 0
        %869 = vmatpush1.bf16.xpose.msra.mxu0 0
        %870 = vmatprep.subr.bf16.mxu0 0
        %871 = vmatpush1.bf16.xpose.msra.mxu0 0
        %872 = vmatprep.subr.bf16.mxu0 0
        %873 = vmatpush1.bf16.xpose.msra.mxu0 0
        %874 = vmatprep.subr.bf16.mxu0 0
        %875 = vmatpush1.bf16.xpose.msra.mxu0 0
        %876 = vmatprep.subr.bf16.mxu0 0
        %877 = vmatpush1.bf16.xpose.msra.mxu0 0
        %878 = vmatprep.subr.bf16.mxu0 0
        %879 = vmatpush1.bf16.xpose.msra.mxu0 0
        %880 = vmatprep.subr.bf16.mxu0 0
        %881 = vmatpush1.bf16.xpose.msra.mxu0 0
        %882 = vmatprep.subr.bf16.mxu0 0
        %883 = vmatpush1.bf16.xpose.msra.mxu0 0
        %884 = vmatprep.subr.bf16.mxu0 0
        %885 = vmatpush1.bf16.xpose.msra.mxu0 0
        %886 = vmatprep.subr.bf16.mxu0 0
        %887 = vmatpush1.bf16.xpose.msra.mxu0 0
        %888 = vmatprep.mubr.bf16.mxu0 0
        %889 = vmatmul.mubr.bf16.gmra.mrb[0].mxu0 %v839
        %v890 = vpop.f32.mrb[0].mxu0
        %v891 = vadd.f32 0.0, %v890
        %v892 = vpop.f32.mrb[0].mxu0
        %v893 = vpop.f32.mrb[0].mxu0
        %v894 = vpop.f32.mrb[0].mxu0
        %895 = vdwg.mxu0
        %v896 = vsub.f32 %v891, %v891
        %v897 = vmul.f32 %v896, 1.442695
        %v898 = vpow.pop %v897
        %v899 = vadd.f32 %v898, 0.0
        %v900 = vrcp.pop %v899
        %v901 = vmul.f32 %v898, %v900
        %v902 = vpack.c.bf16 %v901, %v901
        %908 = vrot.lane.b32.xlu0 %v697, 96
        %v909 = vpop.permute.xlu0 %908
        %910 = vrot.lane.b32.xlu0 %v698, 96
        %v911 = vpop.permute.xlu0 %910
        %912 = vrot.lane.b32.xlu0 %v699, 96
        %v913 = vpop.permute.xlu0 %912
        %914 = vrot.lane.b32.xlu0 %v700, 96
        %v915 = vpop.permute.xlu0 %914
        %916 = vrot.lane.b32.xlu0 %v701, 96
        %v917 = vpop.permute.xlu0 %916
        %v923 = vsel %vm768, %v902, 0
        %v926 = vand.u32 %v917, %v775
        %928 = vmatprep.subr.bf16.mxu0 0
        %929 = vmatpush1.bf16.msra.mxu0 %v909
        %930 = vmatprep.subr.bf16.mxu0 0
        %931 = vmatpush1.bf16.msra.mxu0 %v911
        %932 = vmatprep.subr.bf16.mxu0 0
        %933 = vmatpush1.bf16.msra.mxu0 %v913
        %934 = vmatprep.subr.bf16.mxu0 0
        %935 = vmatpush1.bf16.msra.mxu0 %v915
        %936 = vmatprep.subr.bf16.mxu0 0
        %937 = vmatpush1.bf16.msra.mxu0 %v926
        %938 = vmatprep.subr.bf16.mxu0 0
        %939 = vmatpush1.bf16.msra.mxu0 0
        %940 = vmatprep.subr.bf16.mxu0 0
        %941 = vmatpush1.bf16.msra.mxu0 0
        %942 = vmatprep.subr.bf16.mxu0 0
        %943 = vmatpush1.bf16.msra.mxu0 0
        %944 = vmatprep.subr.bf16.mxu0 0
        %945 = vmatpush1.bf16.msra.mxu0 0
        %946 = vmatprep.subr.bf16.mxu0 0
        %947 = vmatpush1.bf16.msra.mxu0 0
        %948 = vmatprep.subr.bf16.mxu0 0
        %949 = vmatpush1.bf16.msra.mxu0 0
        %950 = vmatprep.subr.bf16.mxu0 0
        %951 = vmatpush1.bf16.msra.mxu0 0
        %952 = vmatprep.subr.bf16.mxu0 0
        %953 = vmatpush1.bf16.msra.mxu0 0
        %954 = vmatprep.subr.bf16.mxu0 0
        %955 = vmatpush1.bf16.msra.mxu0 0
        %956 = vmatprep.subr.bf16.mxu0 0
        %957 = vmatpush1.bf16.msra.mxu0 0
        %958 = vmatprep.subr.bf16.mxu0 0
        %959 = vmatpush1.bf16.msra.mxu0 0
        %960 = vmatprep.mubr.bf16.mxu0 0
        %961 = vmatmul.mubr.bf16.gmra.mrb[0].mxu0 %v923
        %v962 = vpop.f32.mrb[0].mxu0
        %v963 = vadd.f32 0.0, %v962
        %v964 = vpop.f32.mrb[0].mxu0
        %v965 = vpop.f32.mrb[0].mxu0
        %v966 = vpop.f32.mrb[0].mxu0
        %967 = vdwg.mxu0
        %v970 = vunpack.c.l.s4 1966171168
        %v971 = vunpack.c.0.s8 %v970
        %v972 = vlaneseq
        %v973 = vshrl.u32 %v972, 7
        %v974 = vsub.s32 %v971, %v973
        %v975 = vrot.slane %v963, %v974
        %v977 = vunpack.c.l.s4 1966171168
        %v978 = vunpack.c.0.s8 %v977
        %v979 = vlaneseq
        %v980 = vshrl.u32 %v979, 7
        %v981 = vsub.s32 %v978, %v980
        %v982 = vrot.slane %v975, %v981
        %983 = vrot.lane.b32.xlu0 %v982, 32
        %v984 = vpop.permute.xlu0 %983
        %v986 = vadd.f32 %v689, %v984
        %987 = vrot.lane.b32.xlu0 %v691, 64
        %v988 = vpop.permute.xlu0 %987
        %989 = vrot.lane.b32.xlu0 %v692, 64
        %v990 = vpop.permute.xlu0 %989
        %991 = vrot.lane.b32.xlu0 %v693, 64
        %v992 = vpop.permute.xlu0 %991
        %993 = vrot.lane.b32.xlu0 %v694, 64
        %v994 = vpop.permute.xlu0 %993
        %995 = vrot.lane.b32.xlu0 %v695, 64
        %v996 = vpop.permute.xlu0 %995
        %997 = vrot.lane.b32.xlu0 %v696, 64
        %v998 = vpop.permute.xlu0 %997
        %v1000 = vsel %vm702, %v988, 0
        %v1003 = vsel %vm702, %v990, 0
        %v1006 = vsel %vm702, %v992, 0
        %v1009 = vsel %vm702, %v994, 0
        %v1012 = vsel %vm702, %v996, 0
        %v1015 = vsel %vm702, %v998, 0
        %1017 = vmatprep.subr.bf16.mxu0 0
        %1018 = vmatpush1.bf16.xpose.msra.mxu0 %v1003
        %1019 = vmatprep.subr.bf16.mxu0 0
        %1020 = vmatpush1.bf16.xpose.msra.mxu0 %v1006
        %1021 = vmatprep.subr.bf16.mxu0 0
        %1022 = vmatpush1.bf16.xpose.msra.mxu0 %v1009
        %1023 = vmatprep.subr.bf16.mxu0 0
        %1024 = vmatpush1.bf16.xpose.msra.mxu0 %v1012
        %1025 = vmatprep.subr.bf16.mxu0 0
        %1026 = vmatpush1.bf16.xpose.msra.mxu0 %v1015
        %1027 = vmatprep.subr.bf16.mxu0 0
        %1028 = vmatpush1.bf16.xpose.msra.mxu0 0
        %1029 = vmatprep.subr.bf16.mxu0 0
        %1030 = vmatpush1.bf16.xpose.msra.mxu0 0
        %1031 = vmatprep.subr.bf16.mxu0 0
        %1032 = vmatpush1.bf16.xpose.msra.mxu0 0
        %1033 = vmatprep.subr.bf16.mxu0 0
        %1034 = vmatpush1.bf16.xpose.msra.mxu0 0
        %1035 = vmatprep.subr.bf16.mxu0 0
        %1036 = vmatpush1.bf16.xpose.msra.mxu0 0
        %1037 = vmatprep.subr.bf16.mxu0 0
        %1038 = vmatpush1.bf16.xpose.msra.mxu0 0
        %1039 = vmatprep.subr.bf16.mxu0 0
        %1040 = vmatpush1.bf16.xpose.msra.mxu0 0
        %1041 = vmatprep.subr.bf16.mxu0 0
        %1042 = vmatpush1.bf16.xpose.msra.mxu0 0
        %1043 = vmatprep.subr.bf16.mxu0 0
        %1044 = vmatpush1.bf16.xpose.msra.mxu0 0
        %1045 = vmatprep.subr.bf16.mxu0 0
        %1046 = vmatpush1.bf16.xpose.msra.mxu0 0
        %1047 = vmatprep.subr.bf16.mxu0 0
        %1048 = vmatpush1.bf16.xpose.msra.mxu0 0
        %1049 = vmatprep.mubr.bf16.mxu0 0
        %1050 = vmatmul.mubr.bf16.gmra.mrb[0].mxu0 %v1000
        %v1051 = vpop.f32.mrb[0].mxu0
        %v1052 = vadd.f32 0.0, %v1051
        %v1053 = vpop.f32.mrb[0].mxu0
        %v1054 = vpop.f32.mrb[0].mxu0
        %v1055 = vpop.f32.mrb[0].mxu0
        %1056 = vdwg.mxu0
        %v1057 = vsub.f32 %v1052, %v1052
        %v1058 = vmul.f32 %v1057, 1.442695
        %v1059 = vpow.pop %v1058
        %v1060 = vadd.f32 %v1059, 0.0
        %v1061 = vrcp.pop %v1060
        %v1062 = vmul.f32 %v1059, %v1061
        %v1063 = vpack.c.bf16 %v1062, %v1062
        %1064 = vrot.lane.b32.xlu0 %v697, 64
        %v1065 = vpop.permute.xlu0 %1064
        %1066 = vrot.lane.b32.xlu0 %v698, 64
        %v1067 = vpop.permute.xlu0 %1066
        %1068 = vrot.lane.b32.xlu0 %v699, 64
        %v1069 = vpop.permute.xlu0 %1068
        %1070 = vrot.lane.b32.xlu0 %v700, 64
        %v1071 = vpop.permute.xlu0 %1070
        %1072 = vrot.lane.b32.xlu0 %v701, 64
        %v1073 = vpop.permute.xlu0 %1072
        %v1079 = vsel %vm768, %v1063, 0
        %v1082 = vand.u32 %v1073, %v775
        %1084 = vmatprep.subr.bf16.mxu0 0
        %1085 = vmatpush1.bf16.msra.mxu0 %v1065
        %1086 = vmatprep.subr.bf16.mxu0 0
        %1087 = vmatpush1.bf16.msra.mxu0 %v1067
        %1088 = vmatprep.subr.bf16.mxu0 0
        %1089 = vmatpush1.bf16.msra.mxu0 %v1069
        %1090 = vmatprep.subr.bf16.mxu0 0
        %1091 = vmatpush1.bf16.msra.mxu0 %v1071
        %1092 = vmatprep.subr.bf16.mxu0 0
        %1093 = vmatpush1.bf16.msra.mxu0 %v1082
        %1094 = vmatprep.subr.bf16.mxu0 0
        %1095 = vmatpush1.bf16.msra.mxu0 0
        %1096 = vmatprep.subr.bf16.mxu0 0
        %1097 = vmatpush1.bf16.msra.mxu0 0
        %1098 = vmatprep.subr.bf16.mxu0 0
        %1099 = vmatpush1.bf16.msra.mxu0 0
        %1100 = vmatprep.subr.bf16.mxu0 0
        %1101 = vmatpush1.bf16.msra.mxu0 0
        %1102 = vmatprep.subr.bf16.mxu0 0
        %1103 = vmatpush1.bf16.msra.mxu0 0
        %1104 = vmatprep.subr.bf16.mxu0 0
        %1105 = vmatpush1.bf16.msra.mxu0 0
        %1106 = vmatprep.subr.bf16.mxu0 0
        %1107 = vmatpush1.bf16.msra.mxu0 0
        %1108 = vmatprep.subr.bf16.mxu0 0
        %1109 = vmatpush1.bf16.msra.mxu0 0
        %1110 = vmatprep.subr.bf16.mxu0 0
        %1111 = vmatpush1.bf16.msra.mxu0 0
        %1112 = vmatprep.subr.bf16.mxu0 0
        %1113 = vmatpush1.bf16.msra.mxu0 0
        %1114 = vmatprep.subr.bf16.mxu0 0
        %1115 = vmatpush1.bf16.msra.mxu0 0
        %1116 = vmatprep.mubr.bf16.mxu0 0
        %1117 = vmatmul.mubr.bf16.gmra.mrb[0].mxu0 %v1079
        %v1118 = vpop.f32.mrb[0].mxu0
        %v1119 = vadd.f32 0.0, %v1118
        %v1120 = vpop.f32.mrb[0].mxu0
        %v1121 = vpop.f32.mrb[0].mxu0
        %v1122 = vpop.f32.mrb[0].mxu0
        %1123 = vdwg.mxu0
        %v1126 = vunpack.c.l.s4 1966171168
        %v1127 = vunpack.c.0.s8 %v1126
        %v1128 = vlaneseq
        %v1129 = vshrl.u32 %v1128, 7
        %v1130 = vsub.s32 %v1127, %v1129
        %v1131 = vrot.slane %v1119, %v1130
        %v1133 = vunpack.c.l.s4 1966171168
        %v1134 = vunpack.c.0.s8 %v1133
        %v1135 = vlaneseq
        %v1136 = vshrl.u32 %v1135, 7
        %v1137 = vsub.s32 %v1134, %v1136
        %v1138 = vrot.slane %v1131, %v1137
        %1139 = vrot.lane.b32.xlu0 %v1138, 64
        %v1140 = vpop.permute.xlu0 %1139
        %v1142 = vadd.f32 %v689, %v1140
        %1143 = vrot.lane.b32.xlu0 %v691, 32
        %v1144 = vpop.permute.xlu0 %1143
        %1145 = vrot.lane.b32.xlu0 %v692, 32
        %v1146 = vpop.permute.xlu0 %1145
        %1147 = vrot.lane.b32.xlu0 %v693, 32
        %v1148 = vpop.permute.xlu0 %1147
        %1149 = vrot.lane.b32.xlu0 %v694, 32
        %v1150 = vpop.permute.xlu0 %1149
        %1151 = vrot.lane.b32.xlu0 %v695, 32
        %v1152 = vpop.permute.xlu0 %1151
        %1153 = vrot.lane.b32.xlu0 %v696, 32
        %v1154 = vpop.permute.xlu0 %1153
        %v1156 = vsel %vm702, %v1144, 0
        %v1159 = vsel %vm702, %v1146, 0
        %v1162 = vsel %vm702, %v1148, 0
        %v1165 = vsel %vm702, %v1150, 0
        %v1168 = vsel %vm702, %v1152, 0
        %v1171 = vsel %vm702, %v1154, 0
        %1173 = vmatprep.subr.bf16.mxu0 0
        %1174 = vmatpush1.bf16.xpose.msra.mxu0 %v1159
        %1175 = vmatprep.subr.bf16.mxu0 0
        %1176 = vmatpush1.bf16.xpose.msra.mxu0 %v1162
        %1177 = vmatprep.subr.bf16.mxu0 0
        %1178 = vmatpush1.bf16.xpose.msra.mxu0 %v1165
        %1179 = vmatprep.subr.bf16.mxu0 0
        %1180 = vmatpush1.bf16.xpose.msra.mxu0 %v1168
        %1181 = vmatprep.subr.bf16.mxu0 0
        %1182 = vmatpush1.bf16.xpose.msra.mxu0 %v1171
        %1183 = vmatprep.subr.bf16.mxu0 0
        %1184 = vmatpush1.bf16.xpose.msra.mxu0 0
        %1185 = vmatprep.subr.bf16.mxu0 0
        %1186 = vmatpush1.bf16.xpose.msra.mxu0 0
        %1187 = vmatprep.subr.bf16.mxu0 0
        %1188 = vmatpush1.bf16.xpose.msra.mxu0 0
        %1189 = vmatprep.subr.bf16.mxu0 0
        %1190 = vmatpush1.bf16.xpose.msra.mxu0 0
        %1191 = vmatprep.subr.bf16.mxu0 0
        %1192 = vmatpush1.bf16.xpose.msra.mxu0 0
        %1193 = vmatprep.subr.bf16.mxu0 0
        %1194 = vmatpush1.bf16.xpose.msra.mxu0 0
        %1195 = vmatprep.subr.bf16.mxu0 0
        %1196 = vmatpush1.bf16.xpose.msra.mxu0 0
        %1197 = vmatprep.subr.bf16.mxu0 0
        %1198 = vmatpush1.bf16.xpose.msra.mxu0 0
        %1199 = vmatprep.subr.bf16.mxu0 0
        %1200 = vmatpush1.bf16.xpose.msra.mxu0 0
        %1201 = vmatprep.subr.bf16.mxu0 0
        %1202 = vmatpush1.bf16.xpose.msra.mxu0 0
        %1203 = vmatprep.subr.bf16.mxu0 0
        %1204 = vmatpush1.bf16.xpose.msra.mxu0 0
        %1205 = vmatprep.mubr.bf16.mxu0 0
        %1206 = vmatmul.mubr.bf16.gmra.mrb[0].mxu0 %v1156
        %v1207 = vpop.f32.mrb[0].mxu0
        %v1208 = vadd.f32 0.0, %v1207
        %v1209 = vpop.f32.mrb[0].mxu0
        %v1210 = vpop.f32.mrb[0].mxu0
        %v1211 = vpop.f32.mrb[0].mxu0
        %1212 = vdwg.mxu0
        %v1213 = vsub.f32 %v1208, %v1208
        %v1214 = vmul.f32 %v1213, 1.442695
        %v1215 = vpow.pop %v1214
        %v1216 = vadd.f32 %v1215, 0.0
        %v1217 = vrcp.pop %v1216
        %v1218 = vmul.f32 %v1215, %v1217
        %v1219 = vpack.c.bf16 %v1218, %v1218
        %1220 = vrot.lane.b32.xlu0 %v697, 32
        %v1221 = vpop.permute.xlu0 %1220
        %1222 = vrot.lane.b32.xlu0 %v698, 32
        %v1223 = vpop.permute.xlu0 %1222
        %1224 = vrot.lane.b32.xlu0 %v699, 32
        %v1225 = vpop.permute.xlu0 %1224
        %1226 = vrot.lane.b32.xlu0 %v700, 32
        %v1227 = vpop.permute.xlu0 %1226
        %1228 = vrot.lane.b32.xlu0 %v701, 32
        %v1229 = vpop.permute.xlu0 %1228
        %v1235 = vsel %vm768, %v1219, 0
        %v1238 = vand.u32 %v1229, %v775
        %1240 = vmatprep.subr.bf16.mxu0 0
        %1241 = vmatpush1.bf16.msra.mxu0 %v1221
        %1242 = vmatprep.subr.bf16.mxu0 0
        %1243 = vmatpush1.bf16.msra.mxu0 %v1223
        %1244 = vmatprep.subr.bf16.mxu0 0
        %1245 = vmatpush1.bf16.msra.mxu0 %v1225
        %1246 = vmatprep.subr.bf16.mxu0 0
        %1247 = vmatpush1.bf16.msra.mxu0 %v1227
        %1248 = vmatprep.subr.bf16.mxu0 0
        %1249 = vmatpush1.bf16.msra.mxu0 %v1238
        %1250 = vmatprep.subr.bf16.mxu0 0
        %1251 = vmatpush1.bf16.msra.mxu0 0
        %1252 = vmatprep.subr.bf16.mxu0 0
        %1253 = vmatpush1.bf16.msra.mxu0 0
        %1254 = vmatprep.subr.bf16.mxu0 0
        %1255 = vmatpush1.bf16.msra.mxu0 0
        %1256 = vmatprep.subr.bf16.mxu0 0
        %1257 = vmatpush1.bf16.msra.mxu0 0
        %1258 = vmatprep.subr.bf16.mxu0 0
        %1259 = vmatpush1.bf16.msra.mxu0 0
        %1260 = vmatprep.subr.bf16.mxu0 0
        %1261 = vmatpush1.bf16.msra.mxu0 0
        %1262 = vmatprep.subr.bf16.mxu0 0
        %1263 = vmatpush1.bf16.msra.mxu0 0
        %1264 = vmatprep.subr.bf16.mxu0 0
        %1265 = vmatpush1.bf16.msra.mxu0 0
        %1266 = vmatprep.subr.bf16.mxu0 0
        %1267 = vmatpush1.bf16.msra.mxu0 0
        %1268 = vmatprep.subr.bf16.mxu0 0
        %1269 = vmatpush1.bf16.msra.mxu0 0
        %1270 = vmatprep.subr.bf16.mxu0 0
        %1271 = vmatpush1.bf16.msra.mxu0 0
        %1272 = vmatprep.mubr.bf16.mxu0 0
        %1273 = vmatmul.mubr.bf16.gmra.mrb[0].mxu0 %v1235
        %v1274 = vpop.f32.mrb[0].mxu0
        %v1275 = vadd.f32 0.0, %v1274
        %v1276 = vpop.f32.mrb[0].mxu0
        %v1277 = vpop.f32.mrb[0].mxu0
        %v1278 = vpop.f32.mrb[0].mxu0
        %1279 = vdwg.mxu0
        %v1282 = vunpack.c.l.s4 1966171168
        %v1283 = vunpack.c.0.s8 %v1282
        %v1284 = vlaneseq
        %v1285 = vshrl.u32 %v1284, 7
        %v1286 = vsub.s32 %v1283, %v1285
        %v1287 = vrot.slane %v1275, %v1286
        %v1289 = vunpack.c.l.s4 1966171168
        %v1290 = vunpack.c.0.s8 %v1289
        %v1291 = vlaneseq
        %v1292 = vshrl.u32 %v1291, 7
        %v1293 = vsub.s32 %v1290, %v1292
        %v1294 = vrot.slane %v1287, %v1293
        %1295 = vrot.lane.b32.xlu0 %v1294, 96
        %v1296 = vpop.permute.xlu0 %1295
        %v1298 = vadd.f32 %v689, %v1296
        %v1299 = vsel %vm702, %v819, %v986
        %vm1300 = vcmask 523264
        %v1301 = vsel %vm1300, %v1299, %v1142
        %vm1302 = vcmask 785408
        %v1303 = vsel %vm1302, %v1301, %v1298
        %v1304 = vld [vmem:[%s6] sm:$0xff]
        %v1305 = vld [vmem:[%s6 + $0x8] sm:$0xff]
        %v1306 = vld [vmem:[%s6 + $0x10] sm:$0xff]
        %v1307 = vld [vmem:[%s6 + $0x18] sm:$0xff]
        %v1308 = vld [vmem:[%s6 + $0x20] sm:$0xff]
        %v1309 = vld [vmem:[%s6 + $0x28] sm:$0xff]
        %v1310 = vld [vmem:[%s6 + $0x30] sm:$0xff]
        %v1311 = vld [vmem:[%s6 + $0x38] sm:$0xff]
        %v1312 = vld [vmem:[%s6 + $0x40] sm:$0xff]
        %v1313 = vld [vmem:[%s6 + $0x48] sm:$0xff]
        %v1314 = vld [vmem:[%s6 + $0x50] sm:$0xff]
        %v1315 = vld [vmem:[%s6 + $0x58] sm:$0xff]
        %v1316 = vld [vmem:[%s6 + $0x60] sm:$0xff]
        %v1317 = vld [vmem:[%s6 + $0x68] sm:$0xff]
        %v1318 = vld [vmem:[%s6 + $0x70] sm:$0xff]
        %v1319 = vld [vmem:[%s6 + $0x78] sm:$0xff]
        %v1320 = vld [vmem:[%s7] sm:$0x1]
        %v1321 = vpack.c.bf16 %v1303, %v1303
        %v1322 = vpack.c.bf16 %v1305, %v1304
        %v1323 = vpack.c.bf16 %v1307, %v1306
        %v1324 = vpack.c.bf16 %v1309, %v1308
        %v1325 = vpack.c.bf16 %v1311, %v1310
        %v1326 = vpack.c.bf16 %v1313, %v1312
        %v1327 = vpack.c.bf16 %v1315, %v1314
        %v1328 = vpack.c.bf16 %v1317, %v1316
        %v1329 = vpack.c.bf16 %v1319, %v1318
        %1330 = vmatprep.subr.bf16.mxu0 0
        %1331 = vmatpush1.bf16.msra.mxu0 %v1322
        %1332 = vmatprep.subr.bf16.mxu0 0
        %1333 = vmatpush1.bf16.msra.mxu0 %v1323
        %1334 = vmatprep.subr.bf16.mxu0 0
        %1335 = vmatpush1.bf16.msra.mxu0 %v1324
        %1336 = vmatprep.subr.bf16.mxu0 0
        %1337 = vmatpush1.bf16.msra.mxu0 %v1325
        %1338 = vmatprep.subr.bf16.mxu0 0
        %1339 = vmatpush1.bf16.msra.mxu0 %v1326
        %1340 = vmatprep.subr.bf16.mxu0 0
        %1341 = vmatpush1.bf16.msra.mxu0 %v1327
        %1342 = vmatprep.subr.bf16.mxu0 0
        %1343 = vmatpush1.bf16.msra.mxu0 %v1328
        %1344 = vmatprep.subr.bf16.mxu0 0
        %1345 = vmatpush1.bf16.msra.mxu0 %v1329
        %1346 = vmatprep.subr.bf16.mxu0 0
        %1347 = vmatpush1.bf16.msra.mxu0 0
        %1348 = vmatprep.subr.bf16.mxu0 0
        %1349 = vmatpush1.bf16.msra.mxu0 0
        %1350 = vmatprep.subr.bf16.mxu0 0
        %1351 = vmatpush1.bf16.msra.mxu0 0
        %1352 = vmatprep.subr.bf16.mxu0 0
        %1353 = vmatpush1.bf16.msra.mxu0 0
        %1354 = vmatprep.subr.bf16.mxu0 0
        %1355 = vmatpush1.bf16.msra.mxu0 0
        %1356 = vmatprep.subr.bf16.mxu0 0
        %1357 = vmatpush1.bf16.msra.mxu0 0
        %1358 = vmatprep.subr.bf16.mxu0 0
        %1359 = vmatpush1.bf16.msra.mxu0 0
        %1360 = vmatprep.subr.bf16.mxu0 0
        %1361 = vmatpush1.bf16.msra.mxu0 0
        %1362 = vmatprep.mubr.bf16.mxu0 0
        %1363 = vmatmul.mubr.bf16.gmra.mrb[0].mxu0 %v1321
        %v1364 = vpop.f32.mrb[0].mxu0
        %v1365 = vadd.f32 %v1320, %v1364
        %v1366 = vpop.f32.mrb[0].mxu0
        %v1367 = vpop.f32.mrb[0].mxu0
        %v1368 = vpop.f32.mrb[0].mxu0
        %1369 = vdwg.mxu0
        %v1370 = vmax.f32 %v1365, 0.0
        %v1371 = vadd.f32 %v1303, %v1370
        %v1372 = vld [vmem:[%s8] sm:$0xff]
        %v1373 = vld [vmem:[%s8 + $0x8] sm:$0xff]
        %v1374 = vld [vmem:[%s8 + $0x10] sm:$0xff]
        %v1375 = vld [vmem:[%s8 + $0x18] sm:$0xff]
        %v1376 = vld [vmem:[%s8 + $0x20] sm:$0xff]
        %v1377 = vld [vmem:[%s8 + $0x28] sm:$0xff]
        %v1378 = vld [vmem:[%s8 + $0x30] sm:$0xff]
        %v1379 = vld [vmem:[%s8 + $0x38] sm:$0xff]
        %v1380 = vld [vmem:[%s8 + $0x40] sm:$0xff]
        %v1381 = vld [vmem:[%s8 + $0x48] sm:$0xff]
        %v1382 = vld [vmem:[%s8 + $0x50] sm:$0xff]
        %v1383 = vld [vmem:[%s8 + $0x58] sm:$0xff]
        %v1384 = vld [vmem:[%s8 + $0x60] sm:$0xff]
        %v1385 = vld [vmem:[%s8 + $0x68] sm:$0xff]
        %v1386 = vld [vmem:[%s8 + $0x70] sm:$0xff]
        %v1387 = vld [vmem:[%s8 + $0x78] sm:$0xff]
        %v1388 = vpack.c.bf16 %v1371, %v1371
        %v1389 = vpack.c.bf16 %v1373, %v1372
        %v1390 = vpack.c.bf16 %v1375, %v1374
        %v1391 = vpack.c.bf16 %v1377, %v1376
        %v1392 = vpack.c.bf16 %v1379, %v1378
        %v1393 = vpack.c.bf16 %v1381, %v1380
        %v1394 = vpack.c.bf16 %v1383, %v1382
        %v1395 = vpack.c.bf16 %v1385, %v1384
        %v1396 = vpack.c.bf16 %v1387, %v1386
        %v1397 = vld [vmem:[%s9] sm:$0x1]
        %1398 = vmatprep.subr.bf16.mxu0 0
        %1399 = vmatpush1.bf16.msra.mxu0 %v1389
        %1400 = vmatprep.subr.bf16.mxu0 0
        %1401 = vmatpush1.bf16.msra.mxu0 %v1390
        %1402 = vmatprep.subr.bf16.mxu0 0
        %1403 = vmatpush1.bf16.msra.mxu0 %v1391
        %1404 = vmatprep.subr.bf16.mxu0 0
        %1405 = vmatpush1.bf16.msra.mxu0 %v1392
        %1406 = vmatprep.subr.bf16.mxu0 0
        %1407 = vmatpush1.bf16.msra.mxu0 %v1393
        %1408 = vmatprep.subr.bf16.mxu0 0
        %1409 = vmatpush1.bf16.msra.mxu0 %v1394
        %1410 = vmatprep.subr.bf16.mxu0 0
        %1411 = vmatpush1.bf16.msra.mxu0 %v1395
        %1412 = vmatprep.subr.bf16.mxu0 0
        %1413 = vmatpush1.bf16.msra.mxu0 %v1396
        %1414 = vmatprep.subr.bf16.mxu0 0
        %1415 = vmatpush1.bf16.msra.mxu0 0
        %1416 = vmatprep.subr.bf16.mxu0 0
        %1417 = vmatpush1.bf16.msra.mxu0 0
        %1418 = vmatprep.subr.bf16.mxu0 0
        %1419 = vmatpush1.bf16.msra.mxu0 0
        %1420 = vmatprep.subr.bf16.mxu0 0
        %1421 = vmatpush1.bf16.msra.mxu0 0
        %1422 = vmatprep.subr.bf16.mxu0 0
        %1423 = vmatpush1.bf16.msra.mxu0 0
        %1424 = vmatprep.subr.bf16.mxu0 0
        %1425 = vmatpush1.bf16.msra.mxu0 0
        %1426 = vmatprep.subr.bf16.mxu0 0
        %1427 = vmatpush1.bf16.msra.mxu0 0
        %1428 = vmatprep.subr.bf16.mxu0 0
        %1429 = vmatpush1.bf16.msra.mxu0 0
        %1430 = vmatprep.mubr.bf16.mxu0 0
        %1431 = vmatmul.mubr.bf16.gmra.mrb[0].mxu0 %v1388
        %v1432 = vpop.f32.mrb[0].mxu0
        %v1433 = vadd.f32 %v1397, %v1432
        %v1434 = vpop.f32.mrb[0].mxu0
        %v1435 = vpop.f32.mrb[0].mxu0
        %v1436 = vpop.f32.mrb[0].mxu0
        %1437 = vdwg.mxu0
        %v1438 = vld [vmem:[%s10] sm:$0xff]
        %v1439 = vld [vmem:[%s10 + $0x8] sm:$0xff]
        %v1440 = vld [vmem:[%s10 + $0x10] sm:$0xff]
        %v1441 = vld [vmem:[%s10 + $0x18] sm:$0xff]
        %v1442 = vld [vmem:[%s10 + $0x20] sm:$0xff]
        %v1443 = vld [vmem:[%s10 + $0x28] sm:$0xff]
        %v1444 = vld [vmem:[%s10 + $0x30] sm:$0xff]
        %v1445 = vld [vmem:[%s10 + $0x38] sm:$0xff]
        %v1446 = vld [vmem:[%s10 + $0x40] sm:$0xff]
        %v1447 = vld [vmem:[%s10 + $0x48] sm:$0xff]
        %v1448 = vld [vmem:[%s10 + $0x50] sm:$0xff]
        %v1449 = vld [vmem:[%s10 + $0x58] sm:$0xff]
        %v1450 = vld [vmem:[%s10 + $0x60] sm:$0xff]
        %v1451 = vld [vmem:[%s10 + $0x68] sm:$0xff]
        %v1452 = vld [vmem:[%s10 + $0x70] sm:$0xff]
        %v1453 = vld [vmem:[%s10 + $0x78] sm:$0xff]
        %v1454 = vpack.c.bf16 %v1433, %v1433
        %v1455 = vpack.c.bf16 %v1439, %v1438
        %v1456 = vpack.c.bf16 %v1441, %v1440
        %v1457 = vpack.c.bf16 %v1443, %v1442
        %v1458 = vpack.c.bf16 %v1445, %v1444
        %v1459 = vpack.c.bf16 %v1447, %v1446
        %v1460 = vpack.c.bf16 %v1449, %v1448
        %v1461 = vpack.c.bf16 %v1451, %v1450
        %v1462 = vpack.c.bf16 %v1453, %v1452
        %v1463 = vld [vmem:[%s11] sm:$0x1]
        %1464 = vmatprep.subr.bf16.mxu0 0
        %1465 = vmatpush1.bf16.msra.mxu0 %v1455
        %1466 = vmatprep.subr.bf16.mxu0 0
        %1467 = vmatpush1.bf16.msra.mxu0 %v1456
        %1468 = vmatprep.subr.bf16.mxu0 0
        %1469 = vmatpush1.bf16.msra.mxu0 %v1457
        %1470 = vmatprep.subr.bf16.mxu0 0
        %1471 = vmatpush1.bf16.msra.mxu0 %v1458
        %1472 = vmatprep.subr.bf16.mxu0 0
        %1473 = vmatpush1.bf16.msra.mxu0 %v1459
        %1474 = vmatprep.subr.bf16.mxu0 0
        %1475 = vmatpush1.bf16.msra.mxu0 %v1460
        %1476 = vmatprep.subr.bf16.mxu0 0
        %1477 = vmatpush1.bf16.msra.mxu0 %v1461
        %1478 = vmatprep.subr.bf16.mxu0 0
        %1479 = vmatpush1.bf16.msra.mxu0 %v1462
        %1480 = vmatprep.subr.bf16.mxu0 0
        %1481 = vmatpush1.bf16.msra.mxu0 0
        %1482 = vmatprep.subr.bf16.mxu0 0
        %1483 = vmatpush1.bf16.msra.mxu0 0
        %1484 = vmatprep.subr.bf16.mxu0 0
        %1485 = vmatpush1.bf16.msra.mxu0 0
        %1486 = vmatprep.subr.bf16.mxu0 0
        %1487 = vmatpush1.bf16.msra.mxu0 0
        %1488 = vmatprep.subr.bf16.mxu0 0
        %1489 = vmatpush1.bf16.msra.mxu0 0
        %1490 = vmatprep.subr.bf16.mxu0 0
        %1491 = vmatpush1.bf16.msra.mxu0 0
        %1492 = vmatprep.subr.bf16.mxu0 0
        %1493 = vmatpush1.bf16.msra.mxu0 0
        %1494 = vmatprep.subr.bf16.mxu0 0
        %1495 = vmatpush1.bf16.msra.mxu0 0
        %1496 = vmatprep.mubr.bf16.mxu0 0
        %1497 = vmatmul.mubr.bf16.gmra.mrb[0].mxu0 %v1454
        %v1498 = vpop.f32.mrb[0].mxu0
        %v1499 = vadd.f32 %v1463, %v1498
        %v1500 = vpop.f32.mrb[0].mxu0
        %v1501 = vpop.f32.mrb[0].mxu0
        %v1502 = vpop.f32.mrb[0].mxu0
        %1503 = vdwg.mxu0
        %v1504 = vmax.f32 %v1499, 0.0
        %v1505 = vld [vmem:[%s12] sm:$0xff]
        %v1506 = vld [vmem:[%s12 + $0x8] sm:$0xff]
        %v1507 = vld [vmem:[%s12 + $0x10] sm:$0xff]
        %v1508 = vld [vmem:[%s12 + $0x18] sm:$0xff]
        %v1509 = vld [vmem:[%s12 + $0x20] sm:$0xff]
        %v1510 = vld [vmem:[%s12 + $0x28] sm:$0xff]
        %v1511 = vld [vmem:[%s12 + $0x30] sm:$0xff]
        %v1512 = vld [vmem:[%s12 + $0x38] sm:$0xff]
        %v1513 = vld [vmem:[%s12 + $0x40] sm:$0xff]
        %v1514 = vld [vmem:[%s12 + $0x48] sm:$0xff]
        %v1515 = vld [vmem:[%s12 + $0x50] sm:$0xff]
        %v1516 = vld [vmem:[%s12 + $0x58] sm:$0xff]
        %v1517 = vld [vmem:[%s12 + $0x60] sm:$0xff]
        %v1518 = vld [vmem:[%s12 + $0x68] sm:$0xff]
        %v1519 = vld [vmem:[%s12 + $0x70] sm:$0xff]
        %v1520 = vld [vmem:[%s12 + $0x78] sm:$0xff]
        %v1521 = vpack.c.bf16 %v1504, %v1504
        %v1522 = vpack.c.bf16 %v1506, %v1505
        %v1523 = vpack.c.bf16 %v1508, %v1507
        %v1524 = vpack.c.bf16 %v1510, %v1509
        %v1525 = vpack.c.bf16 %v1512, %v1511
        %v1526 = vpack.c.bf16 %v1514, %v1513
        %v1527 = vpack.c.bf16 %v1516, %v1515
        %v1528 = vpack.c.bf16 %v1518, %v1517
        %v1529 = vpack.c.bf16 %v1520, %v1519
        %v1530 = vld [vmem:[%s13] sm:$0x1]
        %1531 = vmatprep.subr.bf16.mxu0 0
        %1532 = vmatpush1.bf16.msra.mxu0 %v1522
        %1533 = vmatprep.subr.bf16.mxu0 0
        %1534 = vmatpush1.bf16.msra.mxu0 %v1523
        %1535 = vmatprep.subr.bf16.mxu0 0
        %1536 = vmatpush1.bf16.msra.mxu0 %v1524
        %1537 = vmatprep.subr.bf16.mxu0 0
        %1538 = vmatpush1.bf16.msra.mxu0 %v1525
        %1539 = vmatprep.subr.bf16.mxu0 0
        %1540 = vmatpush1.bf16.msra.mxu0 %v1526
        %1541 = vmatprep.subr.bf16.mxu0 0
        %1542 = vmatpush1.bf16.msra.mxu0 %v1527
        %1543 = vmatprep.subr.bf16.mxu0 0
        %1544 = vmatpush1.bf16.msra.mxu0 %v1528
        %1545 = vmatprep.subr.bf16.mxu0 0
        %1546 = vmatpush1.bf16.msra.mxu0 %v1529
        %1547 = vmatprep.subr.bf16.mxu0 0
        %1548 = vmatpush1.bf16.msra.mxu0 0
        %1549 = vmatprep.subr.bf16.mxu0 0
        %1550 = vmatpush1.bf16.msra.mxu0 0
        %1551 = vmatprep.subr.bf16.mxu0 0
        %1552 = vmatpush1.bf16.msra.mxu0 0
        %1553 = vmatprep.subr.bf16.mxu0 0
        %1554 = vmatpush1.bf16.msra.mxu0 0
        %1555 = vmatprep.subr.bf16.mxu0 0
        %1556 = vmatpush1.bf16.msra.mxu0 0
        %1557 = vmatprep.subr.bf16.mxu0 0
        %1558 = vmatpush1.bf16.msra.mxu0 0
        %1559 = vmatprep.subr.bf16.mxu0 0
        %1560 = vmatpush1.bf16.msra.mxu0 0
        %1561 = vmatprep.subr.bf16.mxu0 0
        %1562 = vmatpush1.bf16.msra.mxu0 0
        %1563 = vmatprep.mubr.bf16.mxu0 0
        %1564 = vmatmul.mubr.bf16.gmra.mrb[0].mxu0 %v1521
        %v1565 = vpop.f32.mrb[0].mxu0
        %v1566 = vadd.f32 %v1530, %v1565
        %v1567 = vpop.f32.mrb[0].mxu0
        %v1568 = vpop.f32.mrb[0].mxu0
        %v1569 = vpop.f32.mrb[0].mxu0
        %1570 = vdwg.mxu0
        %vm1571 = vcmask 253952
        %1572 = vst.msk [vmem:[%s459] sm:$0x1] %vm1571, %v1566
        %s1573 = sand.u32 %s335, 1
        %s1574 = scalar_lea.sflag [#allocation3], %s1573
        %s1575 = sand.u32 %s335, 1
        %s1576 = scalar_lea.vmem [#allocation2], %s1575
        // Predicated region
        $region77: #{gma_forward.7} parent=75 // pred_check
          %p1577 = pneg %p345
        $region78: #{gma_forward.7} parent=75 // pred_check_branch
          %1579 = sbr.rel (%p1577) target = $region80
        $region79: #{gma_forward.7} parent=75 // pred_region
          %s1581 = ssub.s32 16, 16
          %1582 = vsyncadd %s1574, %s1581
          %s1583 = smul.addr %s28, 16
          %s1584 = scalar_lea.hbm %s14, %s1583
          %s1586 = sshll.u32 %s1576, 4
          %s1587 = int_to_ptr.vmem [resolvable:$true] %s1586
          %1589 = dma.vmem_to_hbm [thread:$0]  %s1587, 16, %s1584, %s1574
        $region80: #{gma_forward.7} parent=75 // pred_fallthru
          _
      $region76: #{gma_forward.7} parent=5 // pred_fallthru
        _
      %p1590 = scmp.le.s32.totalorder 2, %s23
      // Predicated region
      $region81: #{gma_forward.7} parent=5 // pred_check
        %p1591 = pneg %p1590
      $region82: #{gma_forward.7} parent=5 // pred_check_branch
        %1593 = sbr.rel (%p1591) target = $region84
      $region83: #{gma_forward.7} parent=5 // pred_region
        %s1594 = ssub.s32 %s23, 2
        // Predicated region
        $region85: #{gma_forward.7} parent=83 // pred_check
          %p1595 = pneg %p351
        $region86: #{gma_forward.7} parent=83 // pred_check_branch
          %1597 = sbr.rel (%p1595) target = $region88
        $region87: #{gma_forward.7} parent=83 // pred_region
          %s1598 = sand.u32 %s336, 1
          %s1599 = scalar_lea.sflag [#allocation3], %s1598
          %s1600 = sand.u32 %s336, 1
          %s1601 = scalar_lea.vmem [#allocation2], %s1600
          %1602 = dma.done %s1599, 16
        $region88: #{gma_forward.7} parent=83 // pred_fallthru
          _
      $region84: #{gma_forward.7} parent=5 // pred_fallthru
        _
    $region6: #{gma_forward.7} parent=1 // loop_footer
      %s27 = sadd.s32 1, %s23
    $region7: #{gma_forward.7} parent=1 // loop_footer_branch
      %22 = sbr.rel target = $region3
    $region8: #{gma_forward.7} parent=1 // loop_exit
      _
    %1603 = vsyncpa [#allocation3], 1
    %s1604 = scalar_lea.sflag [#allocation3], 1
    %1605 = vsyncpa %s1604, 1

</llo_original>
